<compile_context>
chip_gen: v5e
topology: v5e:2x2
jax: 0.10.0
libtpu: 0.0.40
codegen_flags: <defaults>
</compile_context>

<pallas_src>
import jax
import jax.numpy as jnp
from jax.experimental import pallas as pl
from jax.experimental.pallas import tpu as pltpu


# --------------------------------------------------------------------------
# In-kernel helpers.
# --------------------------------------------------------------------------
def _sigmoid(v):
    # exp and the approximate reciprocal both go to the EUP slot.
    return pl.reciprocal(1.0 + jnp.exp(-v), approx=True)


def _leaky(v):
    return jnp.where(v >= 0.0, v, 0.2 * v)


def _cbam(y, caw1_ref, cab1_ref, caw2_ref, cab2_ref, tt_ref, sas_ref):
    """CBAM on a (P, C) feature matrix (rows = spatial positions, lanes = C)."""
    f32, bf16 = jnp.float32, jnp.bfloat16
    C = y.shape[1]

    # -- channel attention: stack [avg; max] -> ONE 2-layer MLP pass on the MXU
    avg_c = jnp.mean(y, axis=0, keepdims=True)              # (1, C)
    max_c = jnp.max(y, axis=0, keepdims=True)               # (1, C)
    row = jax.lax.broadcasted_iota(jnp.int32, (2, C), 0)    # stack w/o sublane concat
    s = jnp.where(row == 0,
                  jnp.broadcast_to(avg_c, (2, C)),
                  jnp.broadcast_to(max_c, (2, C)))
    h = jnp.dot(s.astype(bf16), caw1_ref[...], preferred_element_type=f32)
    h = jnp.maximum(h + cab1_ref[...], 0.0)
    o = jnp.dot(h.astype(bf16), caw2_ref[...], preferred_element_type=f32)
    o = o + cab2_ref[...]                                   # (2, C)
    catt = _sigmoid(o[0:1, :] + o[1:2, :])                  # (1, C)
    y = y * catt

    # -- spatial attention: channel mean/max, 7x7 conv lowered to one MXU
    #    matmul against a precomputed unrolled-conv matrix (BN gamma folded).
    avg_s = jnp.mean(y, axis=1, keepdims=True)              # (P, 1)
    max_s = jnp.max(y, axis=1, keepdims=True)               # (P, 1)
    a = jnp.concatenate([avg_s, max_s], axis=0)             # (2P, 1): c=0 avg, c=1 max
    att = jnp.dot(tt_ref[...], a.astype(bf16),
                  preferred_element_type=f32)               # (P, 1)
    satt = _sigmoid(att + sas_ref[...])                     # + folded BN shift
    return y * satt


# --------------------------------------------------------------------------
# Fused forward kernel (one grid step == one image).
# --------------------------------------------------------------------------
def _discriminator_kernel(xpad_ref, w1_ref,
                          caw1a_ref, cab1a_ref, caw2a_ref, cab2a_ref,
                          t1t_ref, sa1s_ref,
                          wp_ref, bnps_ref,
                          caw1b_ref, cab1b_ref, caw2b_ref, cab2b_ref,
                          t2t_ref, sa2s_ref,
                          wf_ref,
                          feat_ref, cls_ref,
                          dein_ref):
    f32, bf16 = jnp.float32, jnp.bfloat16
    _, Hp, Wp, Cin = xpad_ref.shape
    H, W = Hp - 2, Wp - 2
    C1 = w1_ref.shape[3]
    C2 = wp_ref.shape[3]
    H2, W2 = H // 2, W // 2
    Hc, Wc = H2 - 2, W2 - 2

    xp = xpad_ref[0]                                        # (H+2, W+2, Cin) f32

    # ---- initial conv 3x3 s1 p1 (no bias): 9 shifted MXU matmuls -----------
    acc1 = jnp.zeros((H * W, C1), f32)
    for dy in range(3):
        for dx in range(3):
            win = xp[dy:dy + H, dx:dx + W, :].reshape(H * W, Cin)
            acc1 = acc1 + jnp.dot(win.astype(bf16), w1_ref[dy, dx],
                                  preferred_element_type=f32)
    y1 = _leaky(acc1)                                       # (H*W, C1)

    # ---- CBAM(n_features) --------------------------------------------------
    y1 = _cbam(y1, caw1a_ref, cab1a_ref, caw2a_ref, cab2a_ref,
               t1t_ref, sa1s_ref)

    # ---- pyramid conv 4x4 s2 p1 (BN scale folded) + LeakyReLU --------------
    # Deinterleave the zero-padded map by W-parity into VMEM scratch so every
    # stride-2 tap becomes a contiguous static slice feeding the MXU.
    y1c4 = y1.reshape(H, W, C1)
    dein_ref[...] = jnp.zeros(dein_ref.shape, f32)
    for m in range(W):
        pw = (m + 1) % 2
        j = (m + 1) // 2
        dein_ref[pw, 1:1 + H, j:j + 1, :] = y1c4[:, m:m + 1, :]

    acc2 = jnp.zeros((H2 * W2, C2), f32)
    for dy in range(4):
        for dx in range(4):
            win = dein_ref[dx % 2, dy:dy + H, dx // 2:dx // 2 + W2, :]  # (H, W2, C1)
            win = win.reshape(H2, 2, W2, C1)[:, 0]                      # stride-2 rows
            acc2 = acc2 + jnp.dot(win.reshape(H2 * W2, C1).astype(bf16),
                                  wp_ref[dy, dx], preferred_element_type=f32)
    y2 = _leaky(acc2 + bnps_ref[...])                       # folded BN shift

    # ---- CBAM(2*n_features) ------------------------------------------------
    y2 = _cbam(y2, caw1b_ref, cab1b_ref, caw2b_ref, cab2b_ref,
               t2t_ref, sa2s_ref)

    feat_ref[...] = y2                                      # features (H2*W2, C2)

    # ---- classifier: 3x3 valid conv (C2 -> 1, no bias) + Sigmoid -----------
    # Single output channel -> VPU multiply + lane reduce (no N=1 matmul).
    y2f = y2.reshape(H2, W2, C2)
    wf = wf_ref[...]                                        # (9, C2) f32
    acc3 = jnp.zeros((Hc, Wc), f32)
    for dy in range(3):
        for dx in range(3):
            win = y2f[dy:dy + Hc, dx:dx + Wc, :]            # (Hc, Wc, C2)
            wrow = wf[3 * dy + dx:3 * dy + dx + 1, :]       # (1, C2)
            acc3 = acc3 + jnp.sum(win * wrow[None, :, :], axis=-1)
    cls_ref[0] = _sigmoid(acc3)


# --------------------------------------------------------------------------
# Wrapper-side weight preparation.
# --------------------------------------------------------------------------
def _spatial_conv_matrix(w7, Hs, Ws):
    """Unrolled 7x7 'same' conv (2->1 channels, no bias) as a dense matrix.

    Returns T of shape (Hs*Ws, 2*Hs*Ws) with
      att[p_out] = sum_{c, p_in} T[p_out, c*Hs*Ws + p_in] * pooled[c, p_in],
    channel order c=0 -> channel-mean, c=1 -> channel-max.
    """
    yi = jnp.arange(Hs)
    yo = jnp.arange(Hs)
    xi = jnp.arange(Ws)
    xo = jnp.arange(Ws)
    dy = yi[:, None] - yo[None, :] + 3                      # (Hs, Hs)
    dx = xi[:, None] - xo[None, :] + 3                      # (Ws, Ws)
    vy = (dy >= 0) & (dy < 7)
    vx = (dx >= 0) & (dx < 7)
    t = w7[:, jnp.clip(dy, 0, 6)[:, :, None, None],
           jnp.clip(dx, 0, 6)[None, None, :, :]]            # (2, Hs, Hs, Ws, Ws)
    t = t * (vy[:, :, None, None] & vx[None, None, :, :]).astype(w7.dtype)
    t = jnp.transpose(t, (2, 4, 0, 1, 3))                   # (yo, xo, c, yi, xi)
    return t.reshape(Hs * Ws, 2 * Hs * Ws)


def _const_spec(shape):
    zero = (0,) * len(shape)
    return pl.BlockSpec(shape, lambda b, _z=zero: _z)


def discriminator_forward(x_nchw, params):
    x = jnp.transpose(x_nchw, (0, 2, 3, 1)).astype(jnp.float32)   # NCHW -> NHWC
    B, H, W, Cin = x.shape
    assert (H, W) == (16, 16), "network topology assumes 16x16 inputs"
    C1 = params["conv1_w"].shape[-1]
    C2 = params["convp_w"].shape[-1]
    H2, W2 = H // 2, W // 2
    Hc, Wc = H2 - 2, W2 - 2
    eps = 1e-5
    f32, bf16 = jnp.float32, jnp.bfloat16

    xpad = jnp.pad(x, ((0, 0), (1, 1), (1, 1), (0, 0)))

    # conv1 (HWIO) in bf16 for the MXU.
    w1 = params["conv1_w"].astype(bf16)

    # CBAM-1 channel attention MLP.
    caw1a = params["ca1_w1"].astype(bf16)
    cab1a = params["ca1_b1"].reshape(1, -1).astype(f32)
    caw2a = params["ca1_w2"].astype(bf16)
    cab2a = params["ca1_b2"].reshape(1, -1).astype(f32)

    # CBAM-1 spatial attention: unrolled 7x7 conv matrix, BN(1) folded.
    g1 = params["sa1_bn"]["gamma"] / jnp.sqrt(params["sa1_bn"]["var"] + eps)
    t1t = (_spatial_conv_matrix(params["sa1_w"], H, W) * g1).astype(bf16)
    sa1_shift = (params["sa1_bn"]["beta"]
                 - params["sa1_bn"]["mean"] * g1).reshape(1, 1).astype(f32)

    # Pyramid conv with BN(C2) scale folded into the bf16 weights.
    sp = params["bnp"]["gamma"] / jnp.sqrt(params["bnp"]["var"] + eps)
    wp = (params["convp_w"] * sp[None, None, None, :]).astype(bf16)
    bnp_shift = (params["bnp"]["beta"]
                 - params["bnp"]["mean"] * sp).reshape(1, -1).astype(f32)

    # CBAM-2.
    caw1b = params["ca2_w1"].astype(bf16)
    cab1b = params["ca2_b1"].reshape(1, -1).astype(f32)
    caw2b = params["ca2_w2"].astype(bf16)
    cab2b = params["ca2_b2"].reshape(1, -1).astype(f32)
    g2 = params["sa2_bn"]["gamma"] / jnp.sqrt(params["sa2_bn"]["var"] + eps)
    t2t = (_spatial_conv_matrix(params["sa2_w"], H2, W2) * g2).astype(bf16)
    sa2_shift = (params["sa2_bn"]["beta"]
                 - params["sa2_bn"]["mean"] * g2).reshape(1, 1).astype(f32)

    # Classifier conv weight, flattened to (9, C2) for the VPU path.
    wf = params["convf_w"].reshape(9, C2).astype(f32)

    operands = [xpad, w1, caw1a, cab1a, caw2a, cab2a, t1t, sa1_shift,
                wp, bnp_shift, caw1b, cab1b, caw2b, cab2b, t2t, sa2_shift, wf]

    in_specs = [pl.BlockSpec((1, H + 2, W + 2, Cin), lambda b: (b, 0, 0, 0))]
    in_specs += [_const_spec(op.shape) for op in operands[1:]]
    out_specs = [pl.BlockSpec((H2 * W2, C2), lambda b: (b, 0)),
                 pl.BlockSpec((1, Hc, Wc), lambda b: (b, 0, 0))]
    out_shape = (jax.ShapeDtypeStruct((B * H2 * W2, C2), f32),
                 jax.ShapeDtypeStruct((B, Hc, Wc), f32))

    flops = 2 * B * (H * W * 9 * Cin * C1 + H2 * W2 * 16 * C1 * C2
                     + (H * W) * (2 * H * W) + (H2 * W2) * (2 * H2 * W2)
                     + Hc * Wc * 9 * C2
                     + 4 * C1 * max(C1 // 16, 1) + 4 * C2 * max(C2 // 16, 1))
    transcendentals = 2 * B * (H * W + H2 * W2 + C1 + C2 + Hc * Wc)
    bytes_accessed = (sum(int(op.size) * op.dtype.itemsize for op in operands)
                      + B * H2 * W2 * C2 * 4 + B * Hc * Wc * 4)

    feat2d, cls3 = pl.pallas_call(
        _discriminator_kernel,
        out_shape=out_shape,
        grid_spec=pltpu.PrefetchScalarGridSpec(
            num_scalar_prefetch=0,
            grid=(B,),
            in_specs=in_specs,
            out_specs=out_specs,
            scratch_shapes=[pltpu.VMEM((2, H + 3, W // 2 + 1, C1), f32)]),
        compiler_params=pltpu.CompilerParams(
            dimension_semantics=("parallel",),        # 2 TCs on v7x, no-op on v5e/v6e
            vmem_limit_bytes=32 * 1024 * 1024),
        cost_estimate=pl.CostEstimate(flops=flops,
                                      transcendentals=transcendentals,
                                      bytes_accessed=bytes_accessed),
    )(*operands)

    features = jnp.transpose(feat2d.reshape(B, H2, W2, C2), (0, 3, 1, 2))
    cls = cls3.reshape(B * Hc * Wc)                         # view(-1, 1).squeeze(1)
    return cls, features


# --------------------------------------------------------------------------
# Deterministic synthetic parameters (HWIO convs, (in,out) linears).
# --------------------------------------------------------------------------
def init_params(key, num_input_channels=3, n_features=32):
    C1, C2, r = n_features, n_features * 2, 16
    keys = iter(jax.random.split(key, 40))

    def nrm(shape, scale=0.1):
        return scale * jax.random.normal(next(keys), shape, dtype=jnp.float32)

    def bn(shape):
        return dict(
            gamma=1.0 + 0.1 * jax.random.normal(next(keys), shape, dtype=jnp.float32),
            beta=nrm(shape),
            mean=nrm(shape),
            var=0.5 + jax.random.uniform(next(keys), shape, dtype=jnp.float32))

    return dict(
        conv1_w=nrm((3, 3, num_input_channels, C1)),
        ca1_w1=nrm((C1, C1 // r)), ca1_b1=nrm((C1 // r,)),
        ca1_w2=nrm((C1 // r, C1)), ca1_b2=nrm((C1,)),
        sa1_w=nrm((2, 7, 7)),          # channel 0 = avg map, 1 = max map
        sa1_bn=bn(()),
        convp_w=nrm((4, 4, C1, C2)),
        bnp=bn((C2,)),
        ca2_w1=nrm((C2, C2 // r)), ca2_b1=nrm((C2 // r,)),
        ca2_w2=nrm((C2 // r, C2)), ca2_b2=nrm((C2,)),
        sa2_w=nrm((2, 7, 7)),
        sa2_bn=bn(()),
        convf_w=nrm((3, 3, C2, 1)),
    )


if __name__ == "__main__":
    key = jax.random.PRNGKey(0)
    kp, kx = jax.random.split(key)
    B, C, Hin, Win = 2, 3, 16, 16
    n_features = 32
    params = init_params(kp, num_input_channels=C, n_features=n_features)
    x = jax.random.normal(kx, (B, C, Hin, Win), dtype=jnp.float32)   # NCHW input

    fwd = jax.jit(discriminator_forward)
    cls, feats = fwd(x, params)
    jax.block_until_ready((cls, feats))

    assert cls.shape == (B * 6 * 6,), cls.shape
    assert feats.shape == (B, 2 * n_features, 8, 8), feats.shape
    assert bool(jnp.all(jnp.isfinite(cls))) and bool(jnp.all(jnp.isfinite(feats)))
    print("KERNEL_OK")
</pallas_src>

<mosaic_0001>
module attributes {stable_mosaic.version = 11 : i64} {
  func.func @_discriminator_kernel(%arg0: i32, %arg1: memref<1x18x18x3xf32, #tpu.memory_space<vmem>>, %arg2: memref<3x3x3x32xbf16, #tpu.memory_space<vmem>>, %arg3: memref<32x2xbf16, #tpu.memory_space<vmem>>, %arg4: memref<1x2xf32, #tpu.memory_space<vmem>>, %arg5: memref<2x32xbf16, #tpu.memory_space<vmem>>, %arg6: memref<1x32xf32, #tpu.memory_space<vmem>>, %arg7: memref<256x512xbf16, #tpu.memory_space<vmem>>, %arg8: memref<1x1xf32, #tpu.memory_space<vmem>>, %arg9: memref<4x4x32x64xbf16, #tpu.memory_space<vmem>>, %arg10: memref<1x64xf32, #tpu.memory_space<vmem>>, %arg11: memref<64x4xbf16, #tpu.memory_space<vmem>>, %arg12: memref<1x4xf32, #tpu.memory_space<vmem>>, %arg13: memref<4x64xbf16, #tpu.memory_space<vmem>>, %arg14: memref<1x64xf32, #tpu.memory_space<vmem>>, %arg15: memref<64x128xbf16, #tpu.memory_space<vmem>>, %arg16: memref<1x1xf32, #tpu.memory_space<vmem>>, %arg17: memref<9x64xf32, #tpu.memory_space<vmem>>, %arg18: memref<64x64xf32, #tpu.memory_space<vmem>>, %arg19: memref<1x6x6xf32, #tpu.memory_space<vmem>>, %arg20: memref<2x19x9x32xf32, #tpu.memory_space<vmem>>) attributes {dimension_semantics = [#tpu.dimension_semantics<parallel>], iteration_bounds = array<i64: 2>, scalar_prefetch = 0 : i64, scratch_operands = 1 : i64, tpu.core_type = #tpu.core_type<tc>, window_params = [{transform_indices = @transform_0, window_bounds = array<i64: 1, 18, 18, 3>}, {pipeline_mode = #tpu.pipeline_mode<synchronous>, transform_indices = @transform_1, window_bounds = array<i64: 3, 3, 3, 32>}, {pipeline_mode = #tpu.pipeline_mode<synchronous>, transform_indices = @transform_2, window_bounds = array<i64: 32, 2>}, {pipeline_mode = #tpu.pipeline_mode<synchronous>, transform_indices = @transform_3, window_bounds = array<i64: 1, 2>}, {pipeline_mode = #tpu.pipeline_mode<synchronous>, transform_indices = @transform_4, window_bounds = array<i64: 2, 32>}, {pipeline_mode = #tpu.pipeline_mode<synchronous>, transform_indices = @transform_5, window_bounds = array<i64: 1, 32>}, {pipeline_mode = #tpu.pipeline_mode<synchronous>, transform_indices = @transform_6, window_bounds = array<i64: 256, 512>}, {pipeline_mode = #tpu.pipeline_mode<synchronous>, transform_indices = @transform_7, window_bounds = array<i64: 1, 1>}, {pipeline_mode = #tpu.pipeline_mode<synchronous>, transform_indices = @transform_8, window_bounds = array<i64: 4, 4, 32, 64>}, {pipeline_mode = #tpu.pipeline_mode<synchronous>, transform_indices = @transform_9, window_bounds = array<i64: 1, 64>}, {pipeline_mode = #tpu.pipeline_mode<synchronous>, transform_indices = @transform_10, window_bounds = array<i64: 64, 4>}, {pipeline_mode = #tpu.pipeline_mode<synchronous>, transform_indices = @transform_11, window_bounds = array<i64: 1, 4>}, {pipeline_mode = #tpu.pipeline_mode<synchronous>, transform_indices = @transform_12, window_bounds = array<i64: 4, 64>}, {pipeline_mode = #tpu.pipeline_mode<synchronous>, transform_indices = @transform_13, window_bounds = array<i64: 1, 64>}, {pipeline_mode = #tpu.pipeline_mode<synchronous>, transform_indices = @transform_14, window_bounds = array<i64: 64, 128>}, {pipeline_mode = #tpu.pipeline_mode<synchronous>, transform_indices = @transform_15, window_bounds = array<i64: 1, 1>}, {pipeline_mode = #tpu.pipeline_mode<synchronous>, transform_indices = @transform_16, window_bounds = array<i64: 9, 64>}, {transform_indices = @transform_17, window_bounds = array<i64: 64, 64>}, {transform_indices = @transform_18, window_bounds = array<i64: 1, 6, 6>}]} {
    %c0 = arith.constant 0 : index
    %c0_0 = arith.constant 0 : index
    %c0_1 = arith.constant 0 : index
    %c0_2 = arith.constant 0 : index
    %0 = vector.load %arg1[%c0, %c0_0, %c0_1, %c0_2] : memref<1x18x18x3xf32, #tpu.memory_space<vmem>>, vector<1x18x18x3xf32>
    %1 = vector.shape_cast %0 : vector<1x18x18x3xf32> to vector<18x18x3xf32>
    %cst = arith.constant 0.000000e+00 : f32
    %2 = vector.broadcast %cst : f32 to vector<256x32xf32>
    %3 = vector.extract_strided_slice %1 {offsets = [0, 0, 0], sizes = [16, 16, 3], strides = [1, 1, 1]} : vector<18x18x3xf32> to vector<16x16x3xf32>
    %4 = vector.shape_cast %3 : vector<16x16x3xf32> to vector<256x3xf32>
    %5 = arith.truncf %4 : vector<256x3xf32> to vector<256x3xbf16>
    %c0_3 = arith.constant 0 : index
    %c0_4 = arith.constant 0 : index
    %c0_5 = arith.constant 0 : index
    %c0_6 = arith.constant 0 : index
    %6 = vector.load %arg2[%c0_3, %c0_4, %c0_5, %c0_6] : memref<3x3x3x32xbf16, #tpu.memory_space<vmem>>, vector<1x1x3x32xbf16>
    %7 = vector.shape_cast %6 : vector<1x1x3x32xbf16> to vector<3x32xbf16>
    %cst_7 = arith.constant dense<0.000000e+00> : vector<256x32xf32>
    %8 = tpu.matmul %5, %7, %cst_7 {dimension_numbers = #tpu.dot_dimension_numbers<[1], [0], [0], [1], [0, 0, 1, 1], [], []>} : vector<256x3xbf16>, vector<3x32xbf16>, vector<256x32xf32> -> vector<256x32xf32>
    %9 = arith.addf %2, %8 : vector<256x32xf32>
    %10 = vector.extract_strided_slice %1 {offsets = [0, 1, 0], sizes = [16, 16, 3], strides = [1, 1, 1]} : vector<18x18x3xf32> to vector<16x16x3xf32>
    %11 = vector.shape_cast %10 : vector<16x16x3xf32> to vector<256x3xf32>
    %12 = arith.truncf %11 : vector<256x3xf32> to vector<256x3xbf16>
    %c0_8 = arith.constant 0 : index
    %c1 = arith.constant 1 : index
    %c0_9 = arith.constant 0 : index
    %c0_10 = arith.constant 0 : index
    %13 = vector.load %arg2[%c0_8, %c1, %c0_9, %c0_10] : memref<3x3x3x32xbf16, #tpu.memory_space<vmem>>, vector<1x1x3x32xbf16>
    %14 = vector.shape_cast %13 : vector<1x1x3x32xbf16> to vector<3x32xbf16>
    %cst_11 = arith.constant dense<0.000000e+00> : vector<256x32xf32>
    %15 = tpu.matmul %12, %14, %cst_11 {dimension_numbers = #tpu.dot_dimension_numbers<[1], [0], [0], [1], [0, 0, 1, 1], [], []>} : vector<256x3xbf16>, vector<3x32xbf16>, vector<256x32xf32> -> vector<256x32xf32>
    %16 = arith.addf %9, %15 : vector<256x32xf32>
    %17 = vector.extract_strided_slice %1 {offsets = [0, 2, 0], sizes = [16, 16, 3], strides = [1, 1, 1]} : vector<18x18x3xf32> to vector<16x16x3xf32>
    %18 = vector.shape_cast %17 : vector<16x16x3xf32> to vector<256x3xf32>
    %19 = arith.truncf %18 : vector<256x3xf32> to vector<256x3xbf16>
    %c0_12 = arith.constant 0 : index
    %c2 = arith.constant 2 : index
    %c0_13 = arith.constant 0 : index
    %c0_14 = arith.constant 0 : index
    %20 = vector.load %arg2[%c0_12, %c2, %c0_13, %c0_14] : memref<3x3x3x32xbf16, #tpu.memory_space<vmem>>, vector<1x1x3x32xbf16>
    %21 = vector.shape_cast %20 : vector<1x1x3x32xbf16> to vector<3x32xbf16>
    %cst_15 = arith.constant dense<0.000000e+00> : vector<256x32xf32>
    %22 = tpu.matmul %19, %21, %cst_15 {dimension_numbers = #tpu.dot_dimension_numbers<[1], [0], [0], [1], [0, 0, 1, 1], [], []>} : vector<256x3xbf16>, vector<3x32xbf16>, vector<256x32xf32> -> vector<256x32xf32>
    %23 = arith.addf %16, %22 : vector<256x32xf32>
    %24 = vector.extract_strided_slice %1 {offsets = [1, 0, 0], sizes = [16, 16, 3], strides = [1, 1, 1]} : vector<18x18x3xf32> to vector<16x16x3xf32>
    %25 = vector.shape_cast %24 : vector<16x16x3xf32> to vector<256x3xf32>
    %26 = arith.truncf %25 : vector<256x3xf32> to vector<256x3xbf16>
    %c1_16 = arith.constant 1 : index
    %c0_17 = arith.constant 0 : index
    %c0_18 = arith.constant 0 : index
    %c0_19 = arith.constant 0 : index
    %27 = vector.load %arg2[%c1_16, %c0_17, %c0_18, %c0_19] : memref<3x3x3x32xbf16, #tpu.memory_space<vmem>>, vector<1x1x3x32xbf16>
    %28 = vector.shape_cast %27 : vector<1x1x3x32xbf16> to vector<3x32xbf16>
    %cst_20 = arith.constant dense<0.000000e+00> : vector<256x32xf32>
    %29 = tpu.matmul %26, %28, %cst_20 {dimension_numbers = #tpu.dot_dimension_numbers<[1], [0], [0], [1], [0, 0, 1, 1], [], []>} : vector<256x3xbf16>, vector<3x32xbf16>, vector<256x32xf32> -> vector<256x32xf32>
    %30 = arith.addf %23, %29 : vector<256x32xf32>
    %31 = vector.extract_strided_slice %1 {offsets = [1, 1, 0], sizes = [16, 16, 3], strides = [1, 1, 1]} : vector<18x18x3xf32> to vector<16x16x3xf32>
    %32 = vector.shape_cast %31 : vector<16x16x3xf32> to vector<256x3xf32>
    %33 = arith.truncf %32 : vector<256x3xf32> to vector<256x3xbf16>
    %c1_21 = arith.constant 1 : index
    %c1_22 = arith.constant 1 : index
    %c0_23 = arith.constant 0 : index
    %c0_24 = arith.constant 0 : index
    %34 = vector.load %arg2[%c1_21, %c1_22, %c0_23, %c0_24] : memref<3x3x3x32xbf16, #tpu.memory_space<vmem>>, vector<1x1x3x32xbf16>
    %35 = vector.shape_cast %34 : vector<1x1x3x32xbf16> to vector<3x32xbf16>
    %cst_25 = arith.constant dense<0.000000e+00> : vector<256x32xf32>
    %36 = tpu.matmul %33, %35, %cst_25 {dimension_numbers = #tpu.dot_dimension_numbers<[1], [0], [0], [1], [0, 0, 1, 1], [], []>} : vector<256x3xbf16>, vector<3x32xbf16>, vector<256x32xf32> -> vector<256x32xf32>
    %37 = arith.addf %30, %36 : vector<256x32xf32>
    %38 = vector.extract_strided_slice %1 {offsets = [1, 2, 0], sizes = [16, 16, 3], strides = [1, 1, 1]} : vector<18x18x3xf32> to vector<16x16x3xf32>
    %39 = vector.shape_cast %38 : vector<16x16x3xf32> to vector<256x3xf32>
    %40 = arith.truncf %39 : vector<256x3xf32> to vector<256x3xbf16>
    %c1_26 = arith.constant 1 : index
    %c2_27 = arith.constant 2 : index
    %c0_28 = arith.constant 0 : index
    %c0_29 = arith.constant 0 : index
    %41 = vector.load %arg2[%c1_26, %c2_27, %c0_28, %c0_29] : memref<3x3x3x32xbf16, #tpu.memory_space<vmem>>, vector<1x1x3x32xbf16>
    %42 = vector.shape_cast %41 : vector<1x1x3x32xbf16> to vector<3x32xbf16>
    %cst_30 = arith.constant dense<0.000000e+00> : vector<256x32xf32>
    %43 = tpu.matmul %40, %42, %cst_30 {dimension_numbers = #tpu.dot_dimension_numbers<[1], [0], [0], [1], [0, 0, 1, 1], [], []>} : vector<256x3xbf16>, vector<3x32xbf16>, vector<256x32xf32> -> vector<256x32xf32>
    %44 = arith.addf %37, %43 : vector<256x32xf32>
    %45 = vector.extract_strided_slice %1 {offsets = [2, 0, 0], sizes = [16, 16, 3], strides = [1, 1, 1]} : vector<18x18x3xf32> to vector<16x16x3xf32>
    %46 = vector.shape_cast %45 : vector<16x16x3xf32> to vector<256x3xf32>
    %47 = arith.truncf %46 : vector<256x3xf32> to vector<256x3xbf16>
    %c2_31 = arith.constant 2 : index
    %c0_32 = arith.constant 0 : index
    %c0_33 = arith.constant 0 : index
    %c0_34 = arith.constant 0 : index
    %48 = vector.load %arg2[%c2_31, %c0_32, %c0_33, %c0_34] : memref<3x3x3x32xbf16, #tpu.memory_space<vmem>>, vector<1x1x3x32xbf16>
    %49 = vector.shape_cast %48 : vector<1x1x3x32xbf16> to vector<3x32xbf16>
    %cst_35 = arith.constant dense<0.000000e+00> : vector<256x32xf32>
    %50 = tpu.matmul %47, %49, %cst_35 {dimension_numbers = #tpu.dot_dimension_numbers<[1], [0], [0], [1], [0, 0, 1, 1], [], []>} : vector<256x3xbf16>, vector<3x32xbf16>, vector<256x32xf32> -> vector<256x32xf32>
    %51 = arith.addf %44, %50 : vector<256x32xf32>
    %52 = vector.extract_strided_slice %1 {offsets = [2, 1, 0], sizes = [16, 16, 3], strides = [1, 1, 1]} : vector<18x18x3xf32> to vector<16x16x3xf32>
    %53 = vector.shape_cast %52 : vector<16x16x3xf32> to vector<256x3xf32>
    %54 = arith.truncf %53 : vector<256x3xf32> to vector<256x3xbf16>
    %c2_36 = arith.constant 2 : index
    %c1_37 = arith.constant 1 : index
    %c0_38 = arith.constant 0 : index
    %c0_39 = arith.constant 0 : index
    %55 = vector.load %arg2[%c2_36, %c1_37, %c0_38, %c0_39] : memref<3x3x3x32xbf16, #tpu.memory_space<vmem>>, vector<1x1x3x32xbf16>
    %56 = vector.shape_cast %55 : vector<1x1x3x32xbf16> to vector<3x32xbf16>
    %cst_40 = arith.constant dense<0.000000e+00> : vector<256x32xf32>
    %57 = tpu.matmul %54, %56, %cst_40 {dimension_numbers = #tpu.dot_dimension_numbers<[1], [0], [0], [1], [0, 0, 1, 1], [], []>} : vector<256x3xbf16>, vector<3x32xbf16>, vector<256x32xf32> -> vector<256x32xf32>
    %58 = arith.addf %51, %57 : vector<256x32xf32>
    %59 = vector.extract_strided_slice %1 {offsets = [2, 2, 0], sizes = [16, 16, 3], strides = [1, 1, 1]} : vector<18x18x3xf32> to vector<16x16x3xf32>
    %60 = vector.shape_cast %59 : vector<16x16x3xf32> to vector<256x3xf32>
    %61 = arith.truncf %60 : vector<256x3xf32> to vector<256x3xbf16>
    %c2_41 = arith.constant 2 : index
    %c2_42 = arith.constant 2 : index
    %c0_43 = arith.constant 0 : index
    %c0_44 = arith.constant 0 : index
    %62 = vector.load %arg2[%c2_41, %c2_42, %c0_43, %c0_44] : memref<3x3x3x32xbf16, #tpu.memory_space<vmem>>, vector<1x1x3x32xbf16>
    %63 = vector.shape_cast %62 : vector<1x1x3x32xbf16> to vector<3x32xbf16>
    %cst_45 = arith.constant dense<0.000000e+00> : vector<256x32xf32>
    %64 = tpu.matmul %61, %63, %cst_45 {dimension_numbers = #tpu.dot_dimension_numbers<[1], [0], [0], [1], [0, 0, 1, 1], [], []>} : vector<256x3xbf16>, vector<3x32xbf16>, vector<256x32xf32> -> vector<256x32xf32>
    %65 = arith.addf %58, %64 : vector<256x32xf32>
    %cst_46 = arith.constant 0.000000e+00 : f32
    %66 = vector.broadcast %cst_46 : f32 to vector<256x32xf32>
    %67 = arith.cmpf oge, %65, %66 : vector<256x32xf32>
    %cst_47 = arith.constant 2.000000e-01 : f32
    %68 = vector.broadcast %cst_47 : f32 to vector<256x32xf32>
    %69 = arith.mulf %68, %65 : vector<256x32xf32>
    %70 = arith.select %67, %65, %69 : vector<256x32xi1>, vector<256x32xf32>
    %cst_48 = arith.constant dense<0.000000e+00> : vector<32xf32>
    %71 = vector.multi_reduction <add>, %70, %cst_48 [0] : vector<256x32xf32> to vector<32xf32>
    %72 = vector.shape_cast %71 : vector<32xf32> to vector<1x32xf32>
    %cst_49 = arith.constant 2.560000e+02 : f32
    %73 = vector.broadcast %cst_49 : f32 to vector<1x32xf32>
    %74 = arith.divf %72, %73 : vector<1x32xf32>
    %cst_50 = arith.constant dense<0xFF800000> : vector<32xf32>
    %75 = vector.multi_reduction <maximumf>, %70, %cst_50 [0] : vector<256x32xf32> to vector<32xf32>
    %76 = vector.shape_cast %75 : vector<32xf32> to vector<1x32xf32>
    %77 = tpu.iota {dimensions = array<i32: 0>} : vector<2x32xi32>
    %c0_i32 = arith.constant 0 : i32
    %78 = vector.broadcast %c0_i32 : i32 to vector<2x32xi32>
    %79 = arith.cmpi eq, %77, %78 : vector<2x32xi32>
    %80 = vector.shape_cast %74 : vector<1x32xf32> to vector<1x32xf32>
    %81 = vector.broadcast %80 : vector<1x32xf32> to vector<2x32xf32>
    %82 = vector.shape_cast %76 : vector<1x32xf32> to vector<1x32xf32>
    %83 = vector.broadcast %82 : vector<1x32xf32> to vector<2x32xf32>
    %84 = arith.select %79, %81, %83 : vector<2x32xi1>, vector<2x32xf32>
    %85 = arith.truncf %84 : vector<2x32xf32> to vector<2x32xbf16>
    %c0_51 = arith.constant 0 : index
    %c0_52 = arith.constant 0 : index
    %86 = vector.load %arg3[%c0_51, %c0_52] : memref<32x2xbf16, #tpu.memory_space<vmem>>, vector<32x2xbf16>
    %cst_53 = arith.constant dense<0.000000e+00> : vector<2x2xf32>
    %87 = tpu.matmul %85, %86, %cst_53 {dimension_numbers = #tpu.dot_dimension_numbers<[1], [0], [0], [1], [0, 0, 1, 1], [], []>} : vector<2x32xbf16>, vector<32x2xbf16>, vector<2x2xf32> -> vector<2x2xf32>
    %c0_54 = arith.constant 0 : index
    %c0_55 = arith.constant 0 : index
    %88 = vector.load %arg4[%c0_54, %c0_55] : memref<1x2xf32, #tpu.memory_space<vmem>>, vector<1x2xf32>
    %89 = vector.broadcast %88 : vector<1x2xf32> to vector<2x2xf32>
    %90 = arith.addf %87, %89 : vector<2x2xf32>
    %cst_56 = arith.constant 0.000000e+00 : f32
    %91 = vector.broadcast %cst_56 : f32 to vector<2x2xf32>
    %92 = arith.maximumf %90, %91 : vector<2x2xf32>
    %93 = arith.truncf %92 : vector<2x2xf32> to vector<2x2xbf16>
    %c0_57 = arith.constant 0 : index
    %c0_58 = arith.constant 0 : index
    %94 = vector.load %arg5[%c0_57, %c0_58] : memref<2x32xbf16, #tpu.memory_space<vmem>>, vector<2x32xbf16>
    %cst_59 = arith.constant dense<0.000000e+00> : vector<2x32xf32>
    %95 = tpu.matmul %93, %94, %cst_59 {dimension_numbers = #tpu.dot_dimension_numbers<[1], [0], [0], [1], [0, 0, 1, 1], [], []>} : vector<2x2xbf16>, vector<2x32xbf16>, vector<2x32xf32> -> vector<2x32xf32>
    %c0_60 = arith.constant 0 : index
    %c0_61 = arith.constant 0 : index
    %96 = vector.load %arg6[%c0_60, %c0_61] : memref<1x32xf32, #tpu.memory_space<vmem>>, vector<1x32xf32>
    %97 = vector.broadcast %96 : vector<1x32xf32> to vector<2x32xf32>
    %98 = arith.addf %95, %97 : vector<2x32xf32>
    %99 = vector.extract_strided_slice %98 {offsets = [0, 0], sizes = [1, 32], strides = [1, 1]} : vector<2x32xf32> to vector<1x32xf32>
    %100 = vector.extract_strided_slice %98 {offsets = [1, 0], sizes = [1, 32], strides = [1, 1]} : vector<2x32xf32> to vector<1x32xf32>
    %101 = arith.addf %99, %100 : vector<1x32xf32>
    %cst_62 = arith.constant 0.000000e+00 : f32
    %102 = vector.broadcast %cst_62 : f32 to vector<1x32xf32>
    %103 = arith.subf %102, %101 : vector<1x32xf32>
    %104 = math.exp %103 : vector<1x32xf32>
    %cst_63 = arith.constant 1.000000e+00 : f32
    %105 = vector.broadcast %cst_63 : f32 to vector<1x32xf32>
    %106 = arith.addf %105, %104 : vector<1x32xf32>
    %107 = tpu.reciprocal %106 {approx = true} : vector<1x32xf32> -> vector<1x32xf32>
    %108 = vector.broadcast %107 : vector<1x32xf32> to vector<256x32xf32>
    %109 = arith.mulf %70, %108 : vector<256x32xf32>
    %cst_64 = arith.constant dense<0.000000e+00> : vector<256xf32>
    %110 = vector.multi_reduction <add>, %109, %cst_64 [1] : vector<256x32xf32> to vector<256xf32>
    %111 = vector.shape_cast %110 : vector<256xf32> to vector<256x1xf32>
    %cst_65 = arith.constant 3.200000e+01 : f32
    %112 = vector.broadcast %cst_65 : f32 to vector<256x1xf32>
    %113 = arith.divf %111, %112 : vector<256x1xf32>
    %cst_66 = arith.constant dense<0xFF800000> : vector<256xf32>
    %114 = vector.multi_reduction <maximumf>, %109, %cst_66 [1] : vector<256x32xf32> to vector<256xf32>
    %115 = vector.shape_cast %114 : vector<256xf32> to vector<256x1xf32>
    %116 = tpu.concatenate %113, %115 in 0 : vector<256x1xf32>, vector<256x1xf32> -> vector<512x1xf32>
    %c0_67 = arith.constant 0 : index
    %c0_68 = arith.constant 0 : index
    %117 = vector.load %arg7[%c0_67, %c0_68] : memref<256x512xbf16, #tpu.memory_space<vmem>>, vector<256x512xbf16>
    %118 = arith.truncf %116 : vector<512x1xf32> to vector<512x1xbf16>
    %cst_69 = arith.constant dense<0.000000e+00> : vector<256x1xf32>
    %119 = tpu.matmul %117, %118, %cst_69 {dimension_numbers = #tpu.dot_dimension_numbers<[1], [0], [0], [1], [0, 0, 1, 1], [], []>} : vector<256x512xbf16>, vector<512x1xbf16>, vector<256x1xf32> -> vector<256x1xf32>
    %c0_70 = arith.constant 0 : index
    %c0_71 = arith.constant 0 : index
    %120 = vector.load %arg8[%c0_70, %c0_71] : memref<1x1xf32, #tpu.memory_space<vmem>>, vector<1x1xf32>
    %121 = vector.broadcast %120 : vector<1x1xf32> to vector<256x1xf32>
    %122 = arith.addf %119, %121 : vector<256x1xf32>
    %cst_72 = arith.constant 0.000000e+00 : f32
    %123 = vector.broadcast %cst_72 : f32 to vector<256x1xf32>
    %124 = arith.subf %123, %122 : vector<256x1xf32>
    %125 = math.exp %124 : vector<256x1xf32>
    %cst_73 = arith.constant 1.000000e+00 : f32
    %126 = vector.broadcast %cst_73 : f32 to vector<256x1xf32>
    %127 = arith.addf %126, %125 : vector<256x1xf32>
    %128 = tpu.reciprocal %127 {approx = true} : vector<256x1xf32> -> vector<256x1xf32>
    %129 = vector.broadcast %128 : vector<256x1xf32> to vector<256x32xf32>
    %130 = arith.mulf %109, %129 : vector<256x32xf32>
    %131 = vector.shape_cast %130 : vector<256x32xf32> to vector<16x16x32xf32>
    %cst_74 = arith.constant 0.000000e+00 : f32
    %132 = vector.broadcast %cst_74 : f32 to vector<2x19x9x32xf32>
    %c0_75 = arith.constant 0 : index
    %c0_76 = arith.constant 0 : index
    %c0_77 = arith.constant 0 : index
    %c0_78 = arith.constant 0 : index
    %133 = vector.load %arg20[%c0_75, %c0_76, %c0_77, %c0_78] : memref<2x19x9x32xf32, #tpu.memory_space<vmem>>, vector<2x19x9x32xf32>
    tpu.vector_store %arg20[%c0_75, %c0_76, %c0_77, %c0_78], %132 {strides = array<i32>} : memref<2x19x9x32xf32, #tpu.memory_space<vmem>>, vector<2x19x9x32xf32>,
    %134 = vector.extract_strided_slice %131 {offsets = [0, 0, 0], sizes = [16, 1, 32], strides = [1, 1, 1]} : vector<16x16x32xf32> to vector<16x1x32xf32>
    %c1_79 = arith.constant 1 : index
    %c1_80 = arith.constant 1 : index
    %c0_81 = arith.constant 0 : index
    %c0_82 = arith.constant 0 : index
    %135 = vector.load %arg20[%c1_79, %c1_80, %c0_81, %c0_82] : memref<2x19x9x32xf32, #tpu.memory_space<vmem>>, vector<1x16x1x32xf32>
    %136 = vector.shape_cast %135 : vector<1x16x1x32xf32> to vector<16x1x32xf32>
    %137 = vector.shape_cast %134 : vector<16x1x32xf32> to vector<1x16x1x32xf32>
    tpu.vector_store %arg20[%c1_79, %c1_80, %c0_81, %c0_82], %137 {strides = array<i32>} : memref<2x19x9x32xf32, #tpu.memory_space<vmem>>, vector<1x16x1x32xf32>,
    %138 = vector.extract_strided_slice %131 {offsets = [0, 1, 0], sizes = [16, 1, 32], strides = [1, 1, 1]} : vector<16x16x32xf32> to vector<16x1x32xf32>
    %c0_83 = arith.constant 0 : index
    %c1_84 = arith.constant 1 : index
    %c1_85 = arith.constant 1 : index
    %c0_86 = arith.constant 0 : index
    %139 = vector.load %arg20[%c0_83, %c1_84, %c1_85, %c0_86] : memref<2x19x9x32xf32, #tpu.memory_space<vmem>>, vector<1x16x1x32xf32>
    %140 = vector.shape_cast %139 : vector<1x16x1x32xf32> to vector<16x1x32xf32>
    %141 = vector.shape_cast %138 : vector<16x1x32xf32> to vector<1x16x1x32xf32>
    tpu.vector_store %arg20[%c0_83, %c1_84, %c1_85, %c0_86], %141 {strides = array<i32>} : memref<2x19x9x32xf32, #tpu.memory_space<vmem>>, vector<1x16x1x32xf32>,
    %142 = vector.extract_strided_slice %131 {offsets = [0, 2, 0], sizes = [16, 1, 32], strides = [1, 1, 1]} : vector<16x16x32xf32> to vector<16x1x32xf32>
    %c1_87 = arith.constant 1 : index
    %c1_88 = arith.constant 1 : index
    %c1_89 = arith.constant 1 : index
    %c0_90 = arith.constant 0 : index
    %143 = vector.load %arg20[%c1_87, %c1_88, %c1_89, %c0_90] : memref<2x19x9x32xf32, #tpu.memory_space<vmem>>, vector<1x16x1x32xf32>
    %144 = vector.shape_cast %143 : vector<1x16x1x32xf32> to vector<16x1x32xf32>
    %145 = vector.shape_cast %142 : vector<16x1x32xf32> to vector<1x16x1x32xf32>
    tpu.vector_store %arg20[%c1_87, %c1_88, %c1_89, %c0_90], %145 {strides = array<i32>} : memref<2x19x9x32xf32, #tpu.memory_space<vmem>>, vector<1x16x1x32xf32>,
    %146 = vector.extract_strided_slice %131 {offsets = [0, 3, 0], sizes = [16, 1, 32], strides = [1, 1, 1]} : vector<16x16x32xf32> to vector<16x1x32xf32>
    %c0_91 = arith.constant 0 : index
    %c1_92 = arith.constant 1 : index
    %c2_93 = arith.constant 2 : index
    %c0_94 = arith.constant 0 : index
    %147 = vector.load %arg20[%c0_91, %c1_92, %c2_93, %c0_94] : memref<2x19x9x32xf32, #tpu.memory_space<vmem>>, vector<1x16x1x32xf32>
    %148 = vector.shape_cast %147 : vector<1x16x1x32xf32> to vector<16x1x32xf32>
    %149 = vector.shape_cast %146 : vector<16x1x32xf32> to vector<1x16x1x32xf32>
    tpu.vector_store %arg20[%c0_91, %c1_92, %c2_93, %c0_94], %149 {strides = array<i32>} : memref<2x19x9x32xf32, #tpu.memory_space<vmem>>, vector<1x16x1x32xf32>,
    %150 = vector.extract_strided_slice %131 {offsets = [0, 4, 0], sizes = [16, 1, 32], strides = [1, 1, 1]} : vector<16x16x32xf32> to vector<16x1x32xf32>
    %c1_95 = arith.constant 1 : index
    %c1_96 = arith.constant 1 : index
    %c2_97 = arith.constant 2 : index
    %c0_98 = arith.constant 0 : index
    %151 = vector.load %arg20[%c1_95, %c1_96, %c2_97, %c0_98] : memref<2x19x9x32xf32, #tpu.memory_space<vmem>>, vector<1x16x1x32xf32>
    %152 = vector.shape_cast %151 : vector<1x16x1x32xf32> to vector<16x1x32xf32>
    %153 = vector.shape_cast %150 : vector<16x1x32xf32> to vector<1x16x1x32xf32>
    tpu.vector_store %arg20[%c1_95, %c1_96, %c2_97, %c0_98], %153 {strides = array<i32>} : memref<2x19x9x32xf32, #tpu.memory_space<vmem>>, vector<1x16x1x32xf32>,
    %154 = vector.extract_strided_slice %131 {offsets = [0, 5, 0], sizes = [16, 1, 32], strides = [1, 1, 1]} : vector<16x16x32xf32> to vector<16x1x32xf32>
    %c0_99 = arith.constant 0 : index
    %c1_100 = arith.constant 1 : index
    %c3 = arith.constant 3 : index
    %c0_101 = arith.constant 0 : index
    %155 = vector.load %arg20[%c0_99, %c1_100, %c3, %c0_101] : memref<2x19x9x32xf32, #tpu.memory_space<vmem>>, vector<1x16x1x32xf32>
    %156 = vector.shape_cast %155 : vector<1x16x1x32xf32> to vector<16x1x32xf32>
    %157 = vector.shape_cast %154 : vector<16x1x32xf32> to vector<1x16x1x32xf32>
    tpu.vector_store %arg20[%c0_99, %c1_100, %c3, %c0_101], %157 {strides = array<i32>} : memref<2x19x9x32xf32, #tpu.memory_space<vmem>>, vector<1x16x1x32xf32>,
    %158 = vector.extract_strided_slice %131 {offsets = [0, 6, 0], sizes = [16, 1, 32], strides = [1, 1, 1]} : vector<16x16x32xf32> to vector<16x1x32xf32>
    %c1_102 = arith.constant 1 : index
    %c1_103 = arith.constant 1 : index
    %c3_104 = arith.constant 3 : index
    %c0_105 = arith.constant 0 : index
    %159 = vector.load %arg20[%c1_102, %c1_103, %c3_104, %c0_105] : memref<2x19x9x32xf32, #tpu.memory_space<vmem>>, vector<1x16x1x32xf32>
    %160 = vector.shape_cast %159 : vector<1x16x1x32xf32> to vector<16x1x32xf32>
    %161 = vector.shape_cast %158 : vector<16x1x32xf32> to vector<1x16x1x32xf32>
    tpu.vector_store %arg20[%c1_102, %c1_103, %c3_104, %c0_105], %161 {strides = array<i32>} : memref<2x19x9x32xf32, #tpu.memory_space<vmem>>, vector<1x16x1x32xf32>,
    %162 = vector.extract_strided_slice %131 {offsets = [0, 7, 0], sizes = [16, 1, 32], strides = [1, 1, 1]} : vector<16x16x32xf32> to vector<16x1x32xf32>
    %c0_106 = arith.constant 0 : index
    %c1_107 = arith.constant 1 : index
    %c4 = arith.constant 4 : index
    %c0_108 = arith.constant 0 : index
    %163 = vector.load %arg20[%c0_106, %c1_107, %c4, %c0_108] : memref<2x19x9x32xf32, #tpu.memory_space<vmem>>, vector<1x16x1x32xf32>
    %164 = vector.shape_cast %163 : vector<1x16x1x32xf32> to vector<16x1x32xf32>
    %165 = vector.shape_cast %162 : vector<16x1x32xf32> to vector<1x16x1x32xf32>
    tpu.vector_store %arg20[%c0_106, %c1_107, %c4, %c0_108], %165 {strides = array<i32>} : memref<2x19x9x32xf32, #tpu.memory_space<vmem>>, vector<1x16x1x32xf32>,
    %166 = vector.extract_strided_slice %131 {offsets = [0, 8, 0], sizes = [16, 1, 32], strides = [1, 1, 1]} : vector<16x16x32xf32> to vector<16x1x32xf32>
    %c1_109 = arith.constant 1 : index
    %c1_110 = arith.constant 1 : index
    %c4_111 = arith.constant 4 : index
    %c0_112 = arith.constant 0 : index
    %167 = vector.load %arg20[%c1_109, %c1_110, %c4_111, %c0_112] : memref<2x19x9x32xf32, #tpu.memory_space<vmem>>, vector<1x16x1x32xf32>
    %168 = vector.shape_cast %167 : vector<1x16x1x32xf32> to vector<16x1x32xf32>
    %169 = vector.shape_cast %166 : vector<16x1x32xf32> to vector<1x16x1x32xf32>
    tpu.vector_store %arg20[%c1_109, %c1_110, %c4_111, %c0_112], %169 {strides = array<i32>} : memref<2x19x9x32xf32, #tpu.memory_space<vmem>>, vector<1x16x1x32xf32>,
    %170 = vector.extract_strided_slice %131 {offsets = [0, 9, 0], sizes = [16, 1, 32], strides = [1, 1, 1]} : vector<16x16x32xf32> to vector<16x1x32xf32>
    %c0_113 = arith.constant 0 : index
    %c1_114 = arith.constant 1 : index
    %c5 = arith.constant 5 : index
    %c0_115 = arith.constant 0 : index
    %171 = vector.load %arg20[%c0_113, %c1_114, %c5, %c0_115] : memref<2x19x9x32xf32, #tpu.memory_space<vmem>>, vector<1x16x1x32xf32>
    %172 = vector.shape_cast %171 : vector<1x16x1x32xf32> to vector<16x1x32xf32>
    %173 = vector.shape_cast %170 : vector<16x1x32xf32> to vector<1x16x1x32xf32>
    tpu.vector_store %arg20[%c0_113, %c1_114, %c5, %c0_115], %173 {strides = array<i32>} : memref<2x19x9x32xf32, #tpu.memory_space<vmem>>, vector<1x16x1x32xf32>,
    %174 = vector.extract_strided_slice %131 {offsets = [0, 10, 0], sizes = [16, 1, 32], strides = [1, 1, 1]} : vector<16x16x32xf32> to vector<16x1x32xf32>
    %c1_116 = arith.constant 1 : index
    %c1_117 = arith.constant 1 : index
    %c5_118 = arith.constant 5 : index
    %c0_119 = arith.constant 0 : index
    %175 = vector.load %arg20[%c1_116, %c1_117, %c5_118, %c0_119] : memref<2x19x9x32xf32, #tpu.memory_space<vmem>>, vector<1x16x1x32xf32>
    %176 = vector.shape_cast %175 : vector<1x16x1x32xf32> to vector<16x1x32xf32>
    %177 = vector.shape_cast %174 : vector<16x1x32xf32> to vector<1x16x1x32xf32>
    tpu.vector_store %arg20[%c1_116, %c1_117, %c5_118, %c0_119], %177 {strides = array<i32>} : memref<2x19x9x32xf32, #tpu.memory_space<vmem>>, vector<1x16x1x32xf32>,
    %178 = vector.extract_strided_slice %131 {offsets = [0, 11, 0], sizes = [16, 1, 32], strides = [1, 1, 1]} : vector<16x16x32xf32> to vector<16x1x32xf32>
    %c0_120 = arith.constant 0 : index
    %c1_121 = arith.constant 1 : index
    %c6 = arith.constant 6 : index
    %c0_122 = arith.constant 0 : index
    %179 = vector.load %arg20[%c0_120, %c1_121, %c6, %c0_122] : memref<2x19x9x32xf32, #tpu.memory_space<vmem>>, vector<1x16x1x32xf32>
    %180 = vector.shape_cast %179 : vector<1x16x1x32xf32> to vector<16x1x32xf32>
    %181 = vector.shape_cast %178 : vector<16x1x32xf32> to vector<1x16x1x32xf32>
    tpu.vector_store %arg20[%c0_120, %c1_121, %c6, %c0_122], %181 {strides = array<i32>} : memref<2x19x9x32xf32, #tpu.memory_space<vmem>>, vector<1x16x1x32xf32>,
    %182 = vector.extract_strided_slice %131 {offsets = [0, 12, 0], sizes = [16, 1, 32], strides = [1, 1, 1]} : vector<16x16x32xf32> to vector<16x1x32xf32>
    %c1_123 = arith.constant 1 : index
    %c1_124 = arith.constant 1 : index
    %c6_125 = arith.constant 6 : index
    %c0_126 = arith.constant 0 : index
    %183 = vector.load %arg20[%c1_123, %c1_124, %c6_125, %c0_126] : memref<2x19x9x32xf32, #tpu.memory_space<vmem>>, vector<1x16x1x32xf32>
    %184 = vector.shape_cast %183 : vector<1x16x1x32xf32> to vector<16x1x32xf32>
    %185 = vector.shape_cast %182 : vector<16x1x32xf32> to vector<1x16x1x32xf32>
    tpu.vector_store %arg20[%c1_123, %c1_124, %c6_125, %c0_126], %185 {strides = array<i32>} : memref<2x19x9x32xf32, #tpu.memory_space<vmem>>, vector<1x16x1x32xf32>,
    %186 = vector.extract_strided_slice %131 {offsets = [0, 13, 0], sizes = [16, 1, 32], strides = [1, 1, 1]} : vector<16x16x32xf32> to vector<16x1x32xf32>
    %c0_127 = arith.constant 0 : index
    %c1_128 = arith.constant 1 : index
    %c7 = arith.constant 7 : index
    %c0_129 = arith.constant 0 : index
    %187 = vector.load %arg20[%c0_127, %c1_128, %c7, %c0_129] : memref<2x19x9x32xf32, #tpu.memory_space<vmem>>, vector<1x16x1x32xf32>
    %188 = vector.shape_cast %187 : vector<1x16x1x32xf32> to vector<16x1x32xf32>
    %189 = vector.shape_cast %186 : vector<16x1x32xf32> to vector<1x16x1x32xf32>
    tpu.vector_store %arg20[%c0_127, %c1_128, %c7, %c0_129], %189 {strides = array<i32>} : memref<2x19x9x32xf32, #tpu.memory_space<vmem>>, vector<1x16x1x32xf32>,
    %190 = vector.extract_strided_slice %131 {offsets = [0, 14, 0], sizes = [16, 1, 32], strides = [1, 1, 1]} : vector<16x16x32xf32> to vector<16x1x32xf32>
    %c1_130 = arith.constant 1 : index
    %c1_131 = arith.constant 1 : index
    %c7_132 = arith.constant 7 : index
    %c0_133 = arith.constant 0 : index
    %191 = vector.load %arg20[%c1_130, %c1_131, %c7_132, %c0_133] : memref<2x19x9x32xf32, #tpu.memory_space<vmem>>, vector<1x16x1x32xf32>
    %192 = vector.shape_cast %191 : vector<1x16x1x32xf32> to vector<16x1x32xf32>
    %193 = vector.shape_cast %190 : vector<16x1x32xf32> to vector<1x16x1x32xf32>
    tpu.vector_store %arg20[%c1_130, %c1_131, %c7_132, %c0_133], %193 {strides = array<i32>} : memref<2x19x9x32xf32, #tpu.memory_space<vmem>>, vector<1x16x1x32xf32>,
    %194 = vector.extract_strided_slice %131 {offsets = [0, 15, 0], sizes = [16, 1, 32], strides = [1, 1, 1]} : vector<16x16x32xf32> to vector<16x1x32xf32>
    %c0_134 = arith.constant 0 : index
    %c1_135 = arith.constant 1 : index
    %c8 = arith.constant 8 : index
    %c0_136 = arith.constant 0 : index
    %195 = vector.load %arg20[%c0_134, %c1_135, %c8, %c0_136] : memref<2x19x9x32xf32, #tpu.memory_space<vmem>>, vector<1x16x1x32xf32>
    %196 = vector.shape_cast %195 : vector<1x16x1x32xf32> to vector<16x1x32xf32>
    %197 = vector.shape_cast %194 : vector<16x1x32xf32> to vector<1x16x1x32xf32>
    tpu.vector_store %arg20[%c0_134, %c1_135, %c8, %c0_136], %197 {strides = array<i32>} : memref<2x19x9x32xf32, #tpu.memory_space<vmem>>, vector<1x16x1x32xf32>,
    %cst_137 = arith.constant 0.000000e+00 : f32
    %198 = vector.broadcast %cst_137 : f32 to vector<64x64xf32>
    %c0_138 = arith.constant 0 : index
    %c0_139 = arith.constant 0 : index
    %c0_140 = arith.constant 0 : index
    %c0_141 = arith.constant 0 : index
    %199 = vector.load %arg20[%c0_138, %c0_139, %c0_140, %c0_141] : memref<2x19x9x32xf32, #tpu.memory_space<vmem>>, vector<1x16x8x32xf32>
    %200 = vector.shape_cast %199 : vector<1x16x8x32xf32> to vector<16x8x32xf32>
    %201 = vector.shape_cast %200 : vector<16x8x32xf32> to vector<8x2x8x32xf32>
    %202 = vector.extract_strided_slice %201 {offsets = [0, 0, 0, 0], sizes = [8, 1, 8, 32], strides = [1, 1, 1, 1]} : vector<8x2x8x32xf32> to vector<8x1x8x32xf32>
    %203 = vector.shape_cast %202 : vector<8x1x8x32xf32> to vector<8x8x32xf32>
    %204 = vector.shape_cast %203 : vector<8x8x32xf32> to vector<64x32xf32>
    %205 = arith.truncf %204 : vector<64x32xf32> to vector<64x32xbf16>
    %c0_142 = arith.constant 0 : index
    %c0_143 = arith.constant 0 : index
    %c0_144 = arith.constant 0 : index
    %c0_145 = arith.constant 0 : index
    %206 = vector.load %arg9[%c0_142, %c0_143, %c0_144, %c0_145] : memref<4x4x32x64xbf16, #tpu.memory_space<vmem>>, vector<1x1x32x64xbf16>
    %207 = vector.shape_cast %206 : vector<1x1x32x64xbf16> to vector<32x64xbf16>
    %cst_146 = arith.constant dense<0.000000e+00> : vector<64x64xf32>
    %208 = tpu.matmul %205, %207, %cst_146 {dimension_numbers = #tpu.dot_dimension_numbers<[1], [0], [0], [1], [0, 0, 1, 1], [], []>} : vector<64x32xbf16>, vector<32x64xbf16>, vector<64x64xf32> -> vector<64x64xf32>
    %209 = arith.addf %198, %208 : vector<64x64xf32>
    %c1_147 = arith.constant 1 : index
    %c0_148 = arith.constant 0 : index
    %c0_149 = arith.constant 0 : index
    %c0_150 = arith.constant 0 : index
    %210 = vector.load %arg20[%c1_147, %c0_148, %c0_149, %c0_150] : memref<2x19x9x32xf32, #tpu.memory_space<vmem>>, vector<1x16x8x32xf32>
    %211 = vector.shape_cast %210 : vector<1x16x8x32xf32> to vector<16x8x32xf32>
    %212 = vector.shape_cast %211 : vector<16x8x32xf32> to vector<8x2x8x32xf32>
    %213 = vector.extract_strided_slice %212 {offsets = [0, 0, 0, 0], sizes = [8, 1, 8, 32], strides = [1, 1, 1, 1]} : vector<8x2x8x32xf32> to vector<8x1x8x32xf32>
    %214 = vector.shape_cast %213 : vector<8x1x8x32xf32> to vector<8x8x32xf32>
    %215 = vector.shape_cast %214 : vector<8x8x32xf32> to vector<64x32xf32>
    %216 = arith.truncf %215 : vector<64x32xf32> to vector<64x32xbf16>
    %c0_151 = arith.constant 0 : index
    %c1_152 = arith.constant 1 : index
    %c0_153 = arith.constant 0 : index
    %c0_154 = arith.constant 0 : index
    %217 = vector.load %arg9[%c0_151, %c1_152, %c0_153, %c0_154] : memref<4x4x32x64xbf16, #tpu.memory_space<vmem>>, vector<1x1x32x64xbf16>
    %218 = vector.shape_cast %217 : vector<1x1x32x64xbf16> to vector<32x64xbf16>
    %cst_155 = arith.constant dense<0.000000e+00> : vector<64x64xf32>
    %219 = tpu.matmul %216, %218, %cst_155 {dimension_numbers = #tpu.dot_dimension_numbers<[1], [0], [0], [1], [0, 0, 1, 1], [], []>} : vector<64x32xbf16>, vector<32x64xbf16>, vector<64x64xf32> -> vector<64x64xf32>
    %220 = arith.addf %209, %219 : vector<64x64xf32>
    %c0_156 = arith.constant 0 : index
    %c0_157 = arith.constant 0 : index
    %c1_158 = arith.constant 1 : index
    %c0_159 = arith.constant 0 : index
    %221 = vector.load %arg20[%c0_156, %c0_157, %c1_158, %c0_159] : memref<2x19x9x32xf32, #tpu.memory_space<vmem>>, vector<1x16x8x32xf32>
    %222 = vector.shape_cast %221 : vector<1x16x8x32xf32> to vector<16x8x32xf32>
    %223 = vector.shape_cast %222 : vector<16x8x32xf32> to vector<8x2x8x32xf32>
    %224 = vector.extract_strided_slice %223 {offsets = [0, 0, 0, 0], sizes = [8, 1, 8, 32], strides = [1, 1, 1, 1]} : vector<8x2x8x32xf32> to vector<8x1x8x32xf32>
    %225 = vector.shape_cast %224 : vector<8x1x8x32xf32> to vector<8x8x32xf32>
    %226 = vector.shape_cast %225 : vector<8x8x32xf32> to vector<64x32xf32>
    %227 = arith.truncf %226 : vector<64x32xf32> to vector<64x32xbf16>
    %c0_160 = arith.constant 0 : index
    %c2_161 = arith.constant 2 : index
    %c0_162 = arith.constant 0 : index
    %c0_163 = arith.constant 0 : index
    %228 = vector.load %arg9[%c0_160, %c2_161, %c0_162, %c0_163] : memref<4x4x32x64xbf16, #tpu.memory_space<vmem>>, vector<1x1x32x64xbf16>
    %229 = vector.shape_cast %228 : vector<1x1x32x64xbf16> to vector<32x64xbf16>
    %cst_164 = arith.constant dense<0.000000e+00> : vector<64x64xf32>
    %230 = tpu.matmul %227, %229, %cst_164 {dimension_numbers = #tpu.dot_dimension_numbers<[1], [0], [0], [1], [0, 0, 1, 1], [], []>} : vector<64x32xbf16>, vector<32x64xbf16>, vector<64x64xf32> -> vector<64x64xf32>
    %231 = arith.addf %220, %230 : vector<64x64xf32>
    %c1_165 = arith.constant 1 : index
    %c0_166 = arith.constant 0 : index
    %c1_167 = arith.constant 1 : index
    %c0_168 = arith.constant 0 : index
    %232 = vector.load %arg20[%c1_165, %c0_166, %c1_167, %c0_168] : memref<2x19x9x32xf32, #tpu.memory_space<vmem>>, vector<1x16x8x32xf32>
    %233 = vector.shape_cast %232 : vector<1x16x8x32xf32> to vector<16x8x32xf32>
    %234 = vector.shape_cast %233 : vector<16x8x32xf32> to vector<8x2x8x32xf32>
    %235 = vector.extract_strided_slice %234 {offsets = [0, 0, 0, 0], sizes = [8, 1, 8, 32], strides = [1, 1, 1, 1]} : vector<8x2x8x32xf32> to vector<8x1x8x32xf32>
    %236 = vector.shape_cast %235 : vector<8x1x8x32xf32> to vector<8x8x32xf32>
    %237 = vector.shape_cast %236 : vector<8x8x32xf32> to vector<64x32xf32>
    %238 = arith.truncf %237 : vector<64x32xf32> to vector<64x32xbf16>
    %c0_169 = arith.constant 0 : index
    %c3_170 = arith.constant 3 : index
    %c0_171 = arith.constant 0 : index
    %c0_172 = arith.constant 0 : index
    %239 = vector.load %arg9[%c0_169, %c3_170, %c0_171, %c0_172] : memref<4x4x32x64xbf16, #tpu.memory_space<vmem>>, vector<1x1x32x64xbf16>
    %240 = vector.shape_cast %239 : vector<1x1x32x64xbf16> to vector<32x64xbf16>
    %cst_173 = arith.constant dense<0.000000e+00> : vector<64x64xf32>
    %241 = tpu.matmul %238, %240, %cst_173 {dimension_numbers = #tpu.dot_dimension_numbers<[1], [0], [0], [1], [0, 0, 1, 1], [], []>} : vector<64x32xbf16>, vector<32x64xbf16>, vector<64x64xf32> -> vector<64x64xf32>
    %242 = arith.addf %231, %241 : vector<64x64xf32>
    %c0_174 = arith.constant 0 : index
    %c1_175 = arith.constant 1 : index
    %c0_176 = arith.constant 0 : index
    %c0_177 = arith.constant 0 : index
    %243 = vector.load %arg20[%c0_174, %c1_175, %c0_176, %c0_177] : memref<2x19x9x32xf32, #tpu.memory_space<vmem>>, vector<1x16x8x32xf32>
    %244 = vector.shape_cast %243 : vector<1x16x8x32xf32> to vector<16x8x32xf32>
    %245 = vector.shape_cast %244 : vector<16x8x32xf32> to vector<8x2x8x32xf32>
    %246 = vector.extract_strided_slice %245 {offsets = [0, 0, 0, 0], sizes = [8, 1, 8, 32], strides = [1, 1, 1, 1]} : vector<8x2x8x32xf32> to vector<8x1x8x32xf32>
    %247 = vector.shape_cast %246 : vector<8x1x8x32xf32> to vector<8x8x32xf32>
    %248 = vector.shape_cast %247 : vector<8x8x32xf32> to vector<64x32xf32>
    %249 = arith.truncf %248 : vector<64x32xf32> to vector<64x32xbf16>
    %c1_178 = arith.constant 1 : index
    %c0_179 = arith.constant 0 : index
    %c0_180 = arith.constant 0 : index
    %c0_181 = arith.constant 0 : index
    %250 = vector.load %arg9[%c1_178, %c0_179, %c0_180, %c0_181] : memref<4x4x32x64xbf16, #tpu.memory_space<vmem>>, vector<1x1x32x64xbf16>
    %251 = vector.shape_cast %250 : vector<1x1x32x64xbf16> to vector<32x64xbf16>
    %cst_182 = arith.constant dense<0.000000e+00> : vector<64x64xf32>
    %252 = tpu.matmul %249, %251, %cst_182 {dimension_numbers = #tpu.dot_dimension_numbers<[1], [0], [0], [1], [0, 0, 1, 1], [], []>} : vector<64x32xbf16>, vector<32x64xbf16>, vector<64x64xf32> -> vector<64x64xf32>
    %253 = arith.addf %242, %252 : vector<64x64xf32>
    %c1_183 = arith.constant 1 : index
    %c1_184 = arith.constant 1 : index
    %c0_185 = arith.constant 0 : index
    %c0_186 = arith.constant 0 : index
    %254 = vector.load %arg20[%c1_183, %c1_184, %c0_185, %c0_186] : memref<2x19x9x32xf32, #tpu.memory_space<vmem>>, vector<1x16x8x32xf32>
    %255 = vector.shape_cast %254 : vector<1x16x8x32xf32> to vector<16x8x32xf32>
    %256 = vector.shape_cast %255 : vector<16x8x32xf32> to vector<8x2x8x32xf32>
    %257 = vector.extract_strided_slice %256 {offsets = [0, 0, 0, 0], sizes = [8, 1, 8, 32], strides = [1, 1, 1, 1]} : vector<8x2x8x32xf32> to vector<8x1x8x32xf32>
    %258 = vector.shape_cast %257 : vector<8x1x8x32xf32> to vector<8x8x32xf32>
    %259 = vector.shape_cast %258 : vector<8x8x32xf32> to vector<64x32xf32>
    %260 = arith.truncf %259 : vector<64x32xf32> to vector<64x32xbf16>
    %c1_187 = arith.constant 1 : index
    %c1_188 = arith.constant 1 : index
    %c0_189 = arith.constant 0 : index
    %c0_190 = arith.constant 0 : index
    %261 = vector.load %arg9[%c1_187, %c1_188, %c0_189, %c0_190] : memref<4x4x32x64xbf16, #tpu.memory_space<vmem>>, vector<1x1x32x64xbf16>
    %262 = vector.shape_cast %261 : vector<1x1x32x64xbf16> to vector<32x64xbf16>
    %cst_191 = arith.constant dense<0.000000e+00> : vector<64x64xf32>
    %263 = tpu.matmul %260, %262, %cst_191 {dimension_numbers = #tpu.dot_dimension_numbers<[1], [0], [0], [1], [0, 0, 1, 1], [], []>} : vector<64x32xbf16>, vector<32x64xbf16>, vector<64x64xf32> -> vector<64x64xf32>
    %264 = arith.addf %253, %263 : vector<64x64xf32>
    %c0_192 = arith.constant 0 : index
    %c1_193 = arith.constant 1 : index
    %c1_194 = arith.constant 1 : index
    %c0_195 = arith.constant 0 : index
    %265 = vector.load %arg20[%c0_192, %c1_193, %c1_194, %c0_195] : memref<2x19x9x32xf32, #tpu.memory_space<vmem>>, vector<1x16x8x32xf32>
    %266 = vector.shape_cast %265 : vector<1x16x8x32xf32> to vector<16x8x32xf32>
    %267 = vector.shape_cast %266 : vector<16x8x32xf32> to vector<8x2x8x32xf32>
    %268 = vector.extract_strided_slice %267 {offsets = [0, 0, 0, 0], sizes = [8, 1, 8, 32], strides = [1, 1, 1, 1]} : vector<8x2x8x32xf32> to vector<8x1x8x32xf32>
    %269 = vector.shape_cast %268 : vector<8x1x8x32xf32> to vector<8x8x32xf32>
    %270 = vector.shape_cast %269 : vector<8x8x32xf32> to vector<64x32xf32>
    %271 = arith.truncf %270 : vector<64x32xf32> to vector<64x32xbf16>
    %c1_196 = arith.constant 1 : index
    %c2_197 = arith.constant 2 : index
    %c0_198 = arith.constant 0 : index
    %c0_199 = arith.constant 0 : index
    %272 = vector.load %arg9[%c1_196, %c2_197, %c0_198, %c0_199] : memref<4x4x32x64xbf16, #tpu.memory_space<vmem>>, vector<1x1x32x64xbf16>
    %273 = vector.shape_cast %272 : vector<1x1x32x64xbf16> to vector<32x64xbf16>
    %cst_200 = arith.constant dense<0.000000e+00> : vector<64x64xf32>
    %274 = tpu.matmul %271, %273, %cst_200 {dimension_numbers = #tpu.dot_dimension_numbers<[1], [0], [0], [1], [0, 0, 1, 1], [], []>} : vector<64x32xbf16>, vector<32x64xbf16>, vector<64x64xf32> -> vector<64x64xf32>
    %275 = arith.addf %264, %274 : vector<64x64xf32>
    %c1_201 = arith.constant 1 : index
    %c1_202 = arith.constant 1 : index
    %c1_203 = arith.constant 1 : index
    %c0_204 = arith.constant 0 : index
    %276 = vector.load %arg20[%c1_201, %c1_202, %c1_203, %c0_204] : memref<2x19x9x32xf32, #tpu.memory_space<vmem>>, vector<1x16x8x32xf32>
    %277 = vector.shape_cast %276 : vector<1x16x8x32xf32> to vector<16x8x32xf32>
    %278 = vector.shape_cast %277 : vector<16x8x32xf32> to vector<8x2x8x32xf32>
    %279 = vector.extract_strided_slice %278 {offsets = [0, 0, 0, 0], sizes = [8, 1, 8, 32], strides = [1, 1, 1, 1]} : vector<8x2x8x32xf32> to vector<8x1x8x32xf32>
    %280 = vector.shape_cast %279 : vector<8x1x8x32xf32> to vector<8x8x32xf32>
    %281 = vector.shape_cast %280 : vector<8x8x32xf32> to vector<64x32xf32>
    %282 = arith.truncf %281 : vector<64x32xf32> to vector<64x32xbf16>
    %c1_205 = arith.constant 1 : index
    %c3_206 = arith.constant 3 : index
    %c0_207 = arith.constant 0 : index
    %c0_208 = arith.constant 0 : index
    %283 = vector.load %arg9[%c1_205, %c3_206, %c0_207, %c0_208] : memref<4x4x32x64xbf16, #tpu.memory_space<vmem>>, vector<1x1x32x64xbf16>
    %284 = vector.shape_cast %283 : vector<1x1x32x64xbf16> to vector<32x64xbf16>
    %cst_209 = arith.constant dense<0.000000e+00> : vector<64x64xf32>
    %285 = tpu.matmul %282, %284, %cst_209 {dimension_numbers = #tpu.dot_dimension_numbers<[1], [0], [0], [1], [0, 0, 1, 1], [], []>} : vector<64x32xbf16>, vector<32x64xbf16>, vector<64x64xf32> -> vector<64x64xf32>
    %286 = arith.addf %275, %285 : vector<64x64xf32>
    %c0_210 = arith.constant 0 : index
    %c2_211 = arith.constant 2 : index
    %c0_212 = arith.constant 0 : index
    %c0_213 = arith.constant 0 : index
    %287 = vector.load %arg20[%c0_210, %c2_211, %c0_212, %c0_213] : memref<2x19x9x32xf32, #tpu.memory_space<vmem>>, vector<1x16x8x32xf32>
    %288 = vector.shape_cast %287 : vector<1x16x8x32xf32> to vector<16x8x32xf32>
    %289 = vector.shape_cast %288 : vector<16x8x32xf32> to vector<8x2x8x32xf32>
    %290 = vector.extract_strided_slice %289 {offsets = [0, 0, 0, 0], sizes = [8, 1, 8, 32], strides = [1, 1, 1, 1]} : vector<8x2x8x32xf32> to vector<8x1x8x32xf32>
    %291 = vector.shape_cast %290 : vector<8x1x8x32xf32> to vector<8x8x32xf32>
    %292 = vector.shape_cast %291 : vector<8x8x32xf32> to vector<64x32xf32>
    %293 = arith.truncf %292 : vector<64x32xf32> to vector<64x32xbf16>
    %c2_214 = arith.constant 2 : index
    %c0_215 = arith.constant 0 : index
    %c0_216 = arith.constant 0 : index
    %c0_217 = arith.constant 0 : index
    %294 = vector.load %arg9[%c2_214, %c0_215, %c0_216, %c0_217] : memref<4x4x32x64xbf16, #tpu.memory_space<vmem>>, vector<1x1x32x64xbf16>
    %295 = vector.shape_cast %294 : vector<1x1x32x64xbf16> to vector<32x64xbf16>
    %cst_218 = arith.constant dense<0.000000e+00> : vector<64x64xf32>
    %296 = tpu.matmul %293, %295, %cst_218 {dimension_numbers = #tpu.dot_dimension_numbers<[1], [0], [0], [1], [0, 0, 1, 1], [], []>} : vector<64x32xbf16>, vector<32x64xbf16>, vector<64x64xf32> -> vector<64x64xf32>
    %297 = arith.addf %286, %296 : vector<64x64xf32>
    %c1_219 = arith.constant 1 : index
    %c2_220 = arith.constant 2 : index
    %c0_221 = arith.constant 0 : index
    %c0_222 = arith.constant 0 : index
    %298 = vector.load %arg20[%c1_219, %c2_220, %c0_221, %c0_222] : memref<2x19x9x32xf32, #tpu.memory_space<vmem>>, vector<1x16x8x32xf32>
    %299 = vector.shape_cast %298 : vector<1x16x8x32xf32> to vector<16x8x32xf32>
    %300 = vector.shape_cast %299 : vector<16x8x32xf32> to vector<8x2x8x32xf32>
    %301 = vector.extract_strided_slice %300 {offsets = [0, 0, 0, 0], sizes = [8, 1, 8, 32], strides = [1, 1, 1, 1]} : vector<8x2x8x32xf32> to vector<8x1x8x32xf32>
    %302 = vector.shape_cast %301 : vector<8x1x8x32xf32> to vector<8x8x32xf32>
    %303 = vector.shape_cast %302 : vector<8x8x32xf32> to vector<64x32xf32>
    %304 = arith.truncf %303 : vector<64x32xf32> to vector<64x32xbf16>
    %c2_223 = arith.constant 2 : index
    %c1_224 = arith.constant 1 : index
    %c0_225 = arith.constant 0 : index
    %c0_226 = arith.constant 0 : index
    %305 = vector.load %arg9[%c2_223, %c1_224, %c0_225, %c0_226] : memref<4x4x32x64xbf16, #tpu.memory_space<vmem>>, vector<1x1x32x64xbf16>
    %306 = vector.shape_cast %305 : vector<1x1x32x64xbf16> to vector<32x64xbf16>
    %cst_227 = arith.constant dense<0.000000e+00> : vector<64x64xf32>
    %307 = tpu.matmul %304, %306, %cst_227 {dimension_numbers = #tpu.dot_dimension_numbers<[1], [0], [0], [1], [0, 0, 1, 1], [], []>} : vector<64x32xbf16>, vector<32x64xbf16>, vector<64x64xf32> -> vector<64x64xf32>
    %308 = arith.addf %297, %307 : vector<64x64xf32>
    %c0_228 = arith.constant 0 : index
    %c2_229 = arith.constant 2 : index
    %c1_230 = arith.constant 1 : index
    %c0_231 = arith.constant 0 : index
    %309 = vector.load %arg20[%c0_228, %c2_229, %c1_230, %c0_231] : memref<2x19x9x32xf32, #tpu.memory_space<vmem>>, vector<1x16x8x32xf32>
    %310 = vector.shape_cast %309 : vector<1x16x8x32xf32> to vector<16x8x32xf32>
    %311 = vector.shape_cast %310 : vector<16x8x32xf32> to vector<8x2x8x32xf32>
    %312 = vector.extract_strided_slice %311 {offsets = [0, 0, 0, 0], sizes = [8, 1, 8, 32], strides = [1, 1, 1, 1]} : vector<8x2x8x32xf32> to vector<8x1x8x32xf32>
    %313 = vector.shape_cast %312 : vector<8x1x8x32xf32> to vector<8x8x32xf32>
    %314 = vector.shape_cast %313 : vector<8x8x32xf32> to vector<64x32xf32>
    %315 = arith.truncf %314 : vector<64x32xf32> to vector<64x32xbf16>
    %c2_232 = arith.constant 2 : index
    %c2_233 = arith.constant 2 : index
    %c0_234 = arith.constant 0 : index
    %c0_235 = arith.constant 0 : index
    %316 = vector.load %arg9[%c2_232, %c2_233, %c0_234, %c0_235] : memref<4x4x32x64xbf16, #tpu.memory_space<vmem>>, vector<1x1x32x64xbf16>
    %317 = vector.shape_cast %316 : vector<1x1x32x64xbf16> to vector<32x64xbf16>
    %cst_236 = arith.constant dense<0.000000e+00> : vector<64x64xf32>
    %318 = tpu.matmul %315, %317, %cst_236 {dimension_numbers = #tpu.dot_dimension_numbers<[1], [0], [0], [1], [0, 0, 1, 1], [], []>} : vector<64x32xbf16>, vector<32x64xbf16>, vector<64x64xf32> -> vector<64x64xf32>
    %319 = arith.addf %308, %318 : vector<64x64xf32>
    %c1_237 = arith.constant 1 : index
    %c2_238 = arith.constant 2 : index
    %c1_239 = arith.constant 1 : index
    %c0_240 = arith.constant 0 : index
    %320 = vector.load %arg20[%c1_237, %c2_238, %c1_239, %c0_240] : memref<2x19x9x32xf32, #tpu.memory_space<vmem>>, vector<1x16x8x32xf32>
    %321 = vector.shape_cast %320 : vector<1x16x8x32xf32> to vector<16x8x32xf32>
    %322 = vector.shape_cast %321 : vector<16x8x32xf32> to vector<8x2x8x32xf32>
    %323 = vector.extract_strided_slice %322 {offsets = [0, 0, 0, 0], sizes = [8, 1, 8, 32], strides = [1, 1, 1, 1]} : vector<8x2x8x32xf32> to vector<8x1x8x32xf32>
    %324 = vector.shape_cast %323 : vector<8x1x8x32xf32> to vector<8x8x32xf32>
    %325 = vector.shape_cast %324 : vector<8x8x32xf32> to vector<64x32xf32>
    %326 = arith.truncf %325 : vector<64x32xf32> to vector<64x32xbf16>
    %c2_241 = arith.constant 2 : index
    %c3_242 = arith.constant 3 : index
    %c0_243 = arith.constant 0 : index
    %c0_244 = arith.constant 0 : index
    %327 = vector.load %arg9[%c2_241, %c3_242, %c0_243, %c0_244] : memref<4x4x32x64xbf16, #tpu.memory_space<vmem>>, vector<1x1x32x64xbf16>
    %328 = vector.shape_cast %327 : vector<1x1x32x64xbf16> to vector<32x64xbf16>
    %cst_245 = arith.constant dense<0.000000e+00> : vector<64x64xf32>
    %329 = tpu.matmul %326, %328, %cst_245 {dimension_numbers = #tpu.dot_dimension_numbers<[1], [0], [0], [1], [0, 0, 1, 1], [], []>} : vector<64x32xbf16>, vector<32x64xbf16>, vector<64x64xf32> -> vector<64x64xf32>
    %330 = arith.addf %319, %329 : vector<64x64xf32>
    %c0_246 = arith.constant 0 : index
    %c3_247 = arith.constant 3 : index
    %c0_248 = arith.constant 0 : index
    %c0_249 = arith.constant 0 : index
    %331 = vector.load %arg20[%c0_246, %c3_247, %c0_248, %c0_249] : memref<2x19x9x32xf32, #tpu.memory_space<vmem>>, vector<1x16x8x32xf32>
    %332 = vector.shape_cast %331 : vector<1x16x8x32xf32> to vector<16x8x32xf32>
    %333 = vector.shape_cast %332 : vector<16x8x32xf32> to vector<8x2x8x32xf32>
    %334 = vector.extract_strided_slice %333 {offsets = [0, 0, 0, 0], sizes = [8, 1, 8, 32], strides = [1, 1, 1, 1]} : vector<8x2x8x32xf32> to vector<8x1x8x32xf32>
    %335 = vector.shape_cast %334 : vector<8x1x8x32xf32> to vector<8x8x32xf32>
    %336 = vector.shape_cast %335 : vector<8x8x32xf32> to vector<64x32xf32>
    %337 = arith.truncf %336 : vector<64x32xf32> to vector<64x32xbf16>
    %c3_250 = arith.constant 3 : index
    %c0_251 = arith.constant 0 : index
    %c0_252 = arith.constant 0 : index
    %c0_253 = arith.constant 0 : index
    %338 = vector.load %arg9[%c3_250, %c0_251, %c0_252, %c0_253] : memref<4x4x32x64xbf16, #tpu.memory_space<vmem>>, vector<1x1x32x64xbf16>
    %339 = vector.shape_cast %338 : vector<1x1x32x64xbf16> to vector<32x64xbf16>
    %cst_254 = arith.constant dense<0.000000e+00> : vector<64x64xf32>
    %340 = tpu.matmul %337, %339, %cst_254 {dimension_numbers = #tpu.dot_dimension_numbers<[1], [0], [0], [1], [0, 0, 1, 1], [], []>} : vector<64x32xbf16>, vector<32x64xbf16>, vector<64x64xf32> -> vector<64x64xf32>
    %341 = arith.addf %330, %340 : vector<64x64xf32>
    %c1_255 = arith.constant 1 : index
    %c3_256 = arith.constant 3 : index
    %c0_257 = arith.constant 0 : index
    %c0_258 = arith.constant 0 : index
    %342 = vector.load %arg20[%c1_255, %c3_256, %c0_257, %c0_258] : memref<2x19x9x32xf32, #tpu.memory_space<vmem>>, vector<1x16x8x32xf32>
    %343 = vector.shape_cast %342 : vector<1x16x8x32xf32> to vector<16x8x32xf32>
    %344 = vector.shape_cast %343 : vector<16x8x32xf32> to vector<8x2x8x32xf32>
    %345 = vector.extract_strided_slice %344 {offsets = [0, 0, 0, 0], sizes = [8, 1, 8, 32], strides = [1, 1, 1, 1]} : vector<8x2x8x32xf32> to vector<8x1x8x32xf32>
    %346 = vector.shape_cast %345 : vector<8x1x8x32xf32> to vector<8x8x32xf32>
    %347 = vector.shape_cast %346 : vector<8x8x32xf32> to vector<64x32xf32>
    %348 = arith.truncf %347 : vector<64x32xf32> to vector<64x32xbf16>
    %c3_259 = arith.constant 3 : index
    %c1_260 = arith.constant 1 : index
    %c0_261 = arith.constant 0 : index
    %c0_262 = arith.constant 0 : index
    %349 = vector.load %arg9[%c3_259, %c1_260, %c0_261, %c0_262] : memref<4x4x32x64xbf16, #tpu.memory_space<vmem>>, vector<1x1x32x64xbf16>
    %350 = vector.shape_cast %349 : vector<1x1x32x64xbf16> to vector<32x64xbf16>
    %cst_263 = arith.constant dense<0.000000e+00> : vector<64x64xf32>
    %351 = tpu.matmul %348, %350, %cst_263 {dimension_numbers = #tpu.dot_dimension_numbers<[1], [0], [0], [1], [0, 0, 1, 1], [], []>} : vector<64x32xbf16>, vector<32x64xbf16>, vector<64x64xf32> -> vector<64x64xf32>
    %352 = arith.addf %341, %351 : vector<64x64xf32>
    %c0_264 = arith.constant 0 : index
    %c3_265 = arith.constant 3 : index
    %c1_266 = arith.constant 1 : index
    %c0_267 = arith.constant 0 : index
    %353 = vector.load %arg20[%c0_264, %c3_265, %c1_266, %c0_267] : memref<2x19x9x32xf32, #tpu.memory_space<vmem>>, vector<1x16x8x32xf32>
    %354 = vector.shape_cast %353 : vector<1x16x8x32xf32> to vector<16x8x32xf32>
    %355 = vector.shape_cast %354 : vector<16x8x32xf32> to vector<8x2x8x32xf32>
    %356 = vector.extract_strided_slice %355 {offsets = [0, 0, 0, 0], sizes = [8, 1, 8, 32], strides = [1, 1, 1, 1]} : vector<8x2x8x32xf32> to vector<8x1x8x32xf32>
    %357 = vector.shape_cast %356 : vector<8x1x8x32xf32> to vector<8x8x32xf32>
    %358 = vector.shape_cast %357 : vector<8x8x32xf32> to vector<64x32xf32>
    %359 = arith.truncf %358 : vector<64x32xf32> to vector<64x32xbf16>
    %c3_268 = arith.constant 3 : index
    %c2_269 = arith.constant 2 : index
    %c0_270 = arith.constant 0 : index
    %c0_271 = arith.constant 0 : index
    %360 = vector.load %arg9[%c3_268, %c2_269, %c0_270, %c0_271] : memref<4x4x32x64xbf16, #tpu.memory_space<vmem>>, vector<1x1x32x64xbf16>
    %361 = vector.shape_cast %360 : vector<1x1x32x64xbf16> to vector<32x64xbf16>
    %cst_272 = arith.constant dense<0.000000e+00> : vector<64x64xf32>
    %362 = tpu.matmul %359, %361, %cst_272 {dimension_numbers = #tpu.dot_dimension_numbers<[1], [0], [0], [1], [0, 0, 1, 1], [], []>} : vector<64x32xbf16>, vector<32x64xbf16>, vector<64x64xf32> -> vector<64x64xf32>
    %363 = arith.addf %352, %362 : vector<64x64xf32>
    %c1_273 = arith.constant 1 : index
    %c3_274 = arith.constant 3 : index
    %c1_275 = arith.constant 1 : index
    %c0_276 = arith.constant 0 : index
    %364 = vector.load %arg20[%c1_273, %c3_274, %c1_275, %c0_276] : memref<2x19x9x32xf32, #tpu.memory_space<vmem>>, vector<1x16x8x32xf32>
    %365 = vector.shape_cast %364 : vector<1x16x8x32xf32> to vector<16x8x32xf32>
    %366 = vector.shape_cast %365 : vector<16x8x32xf32> to vector<8x2x8x32xf32>
    %367 = vector.extract_strided_slice %366 {offsets = [0, 0, 0, 0], sizes = [8, 1, 8, 32], strides = [1, 1, 1, 1]} : vector<8x2x8x32xf32> to vector<8x1x8x32xf32>
    %368 = vector.shape_cast %367 : vector<8x1x8x32xf32> to vector<8x8x32xf32>
    %369 = vector.shape_cast %368 : vector<8x8x32xf32> to vector<64x32xf32>
    %370 = arith.truncf %369 : vector<64x32xf32> to vector<64x32xbf16>
    %c3_277 = arith.constant 3 : index
    %c3_278 = arith.constant 3 : index
    %c0_279 = arith.constant 0 : index
    %c0_280 = arith.constant 0 : index
    %371 = vector.load %arg9[%c3_277, %c3_278, %c0_279, %c0_280] : memref<4x4x32x64xbf16, #tpu.memory_space<vmem>>, vector<1x1x32x64xbf16>
    %372 = vector.shape_cast %371 : vector<1x1x32x64xbf16> to vector<32x64xbf16>
    %cst_281 = arith.constant dense<0.000000e+00> : vector<64x64xf32>
    %373 = tpu.matmul %370, %372, %cst_281 {dimension_numbers = #tpu.dot_dimension_numbers<[1], [0], [0], [1], [0, 0, 1, 1], [], []>} : vector<64x32xbf16>, vector<32x64xbf16>, vector<64x64xf32> -> vector<64x64xf32>
    %374 = arith.addf %363, %373 : vector<64x64xf32>
    %c0_282 = arith.constant 0 : index
    %c0_283 = arith.constant 0 : index
    %375 = vector.load %arg10[%c0_282, %c0_283] : memref<1x64xf32, #tpu.memory_space<vmem>>, vector<1x64xf32>
    %376 = vector.broadcast %375 : vector<1x64xf32> to vector<64x64xf32>
    %377 = arith.addf %374, %376 : vector<64x64xf32>
    %cst_284 = arith.constant 0.000000e+00 : f32
    %378 = vector.broadcast %cst_284 : f32 to vector<64x64xf32>
    %379 = arith.cmpf oge, %377, %378 : vector<64x64xf32>
    %cst_285 = arith.constant 2.000000e-01 : f32
    %380 = vector.broadcast %cst_285 : f32 to vector<64x64xf32>
    %381 = arith.mulf %380, %377 : vector<64x64xf32>
    %382 = arith.select %379, %377, %381 : vector<64x64xi1>, vector<64x64xf32>
    %cst_286 = arith.constant dense<0.000000e+00> : vector<64xf32>
    %383 = vector.multi_reduction <add>, %382, %cst_286 [0] : vector<64x64xf32> to vector<64xf32>
    %384 = vector.shape_cast %383 : vector<64xf32> to vector<1x64xf32>
    %cst_287 = arith.constant 6.400000e+01 : f32
    %385 = vector.broadcast %cst_287 : f32 to vector<1x64xf32>
    %386 = arith.divf %384, %385 : vector<1x64xf32>
    %cst_288 = arith.constant dense<0xFF800000> : vector<64xf32>
    %387 = vector.multi_reduction <maximumf>, %382, %cst_288 [0] : vector<64x64xf32> to vector<64xf32>
    %388 = vector.shape_cast %387 : vector<64xf32> to vector<1x64xf32>
    %389 = tpu.iota {dimensions = array<i32: 0>} : vector<2x64xi32>
    %c0_i32_289 = arith.constant 0 : i32
    %390 = vector.broadcast %c0_i32_289 : i32 to vector<2x64xi32>
    %391 = arith.cmpi eq, %389, %390 : vector<2x64xi32>
    %392 = vector.shape_cast %386 : vector<1x64xf32> to vector<1x64xf32>
    %393 = vector.broadcast %392 : vector<1x64xf32> to vector<2x64xf32>
    %394 = vector.shape_cast %388 : vector<1x64xf32> to vector<1x64xf32>
    %395 = vector.broadcast %394 : vector<1x64xf32> to vector<2x64xf32>
    %396 = arith.select %391, %393, %395 : vector<2x64xi1>, vector<2x64xf32>
    %397 = arith.truncf %396 : vector<2x64xf32> to vector<2x64xbf16>
    %c0_290 = arith.constant 0 : index
    %c0_291 = arith.constant 0 : index
    %398 = vector.load %arg11[%c0_290, %c0_291] : memref<64x4xbf16, #tpu.memory_space<vmem>>, vector<64x4xbf16>
    %cst_292 = arith.constant dense<0.000000e+00> : vector<2x4xf32>
    %399 = tpu.matmul %397, %398, %cst_292 {dimension_numbers = #tpu.dot_dimension_numbers<[1], [0], [0], [1], [0, 0, 1, 1], [], []>} : vector<2x64xbf16>, vector<64x4xbf16>, vector<2x4xf32> -> vector<2x4xf32>
    %c0_293 = arith.constant 0 : index
    %c0_294 = arith.constant 0 : index
    %400 = vector.load %arg12[%c0_293, %c0_294] : memref<1x4xf32, #tpu.memory_space<vmem>>, vector<1x4xf32>
    %401 = vector.broadcast %400 : vector<1x4xf32> to vector<2x4xf32>
    %402 = arith.addf %399, %401 : vector<2x4xf32>
    %cst_295 = arith.constant 0.000000e+00 : f32
    %403 = vector.broadcast %cst_295 : f32 to vector<2x4xf32>
    %404 = arith.maximumf %402, %403 : vector<2x4xf32>
    %405 = arith.truncf %404 : vector<2x4xf32> to vector<2x4xbf16>
    %c0_296 = arith.constant 0 : index
    %c0_297 = arith.constant 0 : index
    %406 = vector.load %arg13[%c0_296, %c0_297] : memref<4x64xbf16, #tpu.memory_space<vmem>>, vector<4x64xbf16>
    %cst_298 = arith.constant dense<0.000000e+00> : vector<2x64xf32>
    %407 = tpu.matmul %405, %406, %cst_298 {dimension_numbers = #tpu.dot_dimension_numbers<[1], [0], [0], [1], [0, 0, 1, 1], [], []>} : vector<2x4xbf16>, vector<4x64xbf16>, vector<2x64xf32> -> vector<2x64xf32>
    %c0_299 = arith.constant 0 : index
    %c0_300 = arith.constant 0 : index
    %408 = vector.load %arg14[%c0_299, %c0_300] : memref<1x64xf32, #tpu.memory_space<vmem>>, vector<1x64xf32>
    %409 = vector.broadcast %408 : vector<1x64xf32> to vector<2x64xf32>
    %410 = arith.addf %407, %409 : vector<2x64xf32>
    %411 = vector.extract_strided_slice %410 {offsets = [0, 0], sizes = [1, 64], strides = [1, 1]} : vector<2x64xf32> to vector<1x64xf32>
    %412 = vector.extract_strided_slice %410 {offsets = [1, 0], sizes = [1, 64], strides = [1, 1]} : vector<2x64xf32> to vector<1x64xf32>
    %413 = arith.addf %411, %412 : vector<1x64xf32>
    %cst_301 = arith.constant 0.000000e+00 : f32
    %414 = vector.broadcast %cst_301 : f32 to vector<1x64xf32>
    %415 = arith.subf %414, %413 : vector<1x64xf32>
    %416 = math.exp %415 : vector<1x64xf32>
    %cst_302 = arith.constant 1.000000e+00 : f32
    %417 = vector.broadcast %cst_302 : f32 to vector<1x64xf32>
    %418 = arith.addf %417, %416 : vector<1x64xf32>
    %419 = tpu.reciprocal %418 {approx = true} : vector<1x64xf32> -> vector<1x64xf32>
    %420 = vector.broadcast %419 : vector<1x64xf32> to vector<64x64xf32>
    %421 = arith.mulf %382, %420 : vector<64x64xf32>
    %cst_303 = arith.constant dense<0.000000e+00> : vector<64xf32>
    %422 = vector.multi_reduction <add>, %421, %cst_303 [1] : vector<64x64xf32> to vector<64xf32>
    %423 = vector.shape_cast %422 : vector<64xf32> to vector<64x1xf32>
    %cst_304 = arith.constant 6.400000e+01 : f32
    %424 = vector.broadcast %cst_304 : f32 to vector<64x1xf32>
    %425 = arith.divf %423, %424 : vector<64x1xf32>
    %cst_305 = arith.constant dense<0xFF800000> : vector<64xf32>
    %426 = vector.multi_reduction <maximumf>, %421, %cst_305 [1] : vector<64x64xf32> to vector<64xf32>
    %427 = vector.shape_cast %426 : vector<64xf32> to vector<64x1xf32>
    %428 = tpu.concatenate %425, %427 in 0 : vector<64x1xf32>, vector<64x1xf32> -> vector<128x1xf32>
    %c0_306 = arith.constant 0 : index
    %c0_307 = arith.constant 0 : index
    %429 = vector.load %arg15[%c0_306, %c0_307] : memref<64x128xbf16, #tpu.memory_space<vmem>>, vector<64x128xbf16>
    %430 = arith.truncf %428 : vector<128x1xf32> to vector<128x1xbf16>
    %cst_308 = arith.constant dense<0.000000e+00> : vector<64x1xf32>
    %431 = tpu.matmul %429, %430, %cst_308 {dimension_numbers = #tpu.dot_dimension_numbers<[1], [0], [0], [1], [0, 0, 1, 1], [], []>} : vector<64x128xbf16>, vector<128x1xbf16>, vector<64x1xf32> -> vector<64x1xf32>
    %c0_309 = arith.constant 0 : index
    %c0_310 = arith.constant 0 : index
    %432 = vector.load %arg16[%c0_309, %c0_310] : memref<1x1xf32, #tpu.memory_space<vmem>>, vector<1x1xf32>
    %433 = vector.broadcast %432 : vector<1x1xf32> to vector<64x1xf32>
    %434 = arith.addf %431, %433 : vector<64x1xf32>
    %cst_311 = arith.constant 0.000000e+00 : f32
    %435 = vector.broadcast %cst_311 : f32 to vector<64x1xf32>
    %436 = arith.subf %435, %434 : vector<64x1xf32>
    %437 = math.exp %436 : vector<64x1xf32>
    %cst_312 = arith.constant 1.000000e+00 : f32
    %438 = vector.broadcast %cst_312 : f32 to vector<64x1xf32>
    %439 = arith.addf %438, %437 : vector<64x1xf32>
    %440 = tpu.reciprocal %439 {approx = true} : vector<64x1xf32> -> vector<64x1xf32>
    %441 = vector.broadcast %440 : vector<64x1xf32> to vector<64x64xf32>
    %442 = arith.mulf %421, %441 : vector<64x64xf32>
    %c0_313 = arith.constant 0 : index
    %c0_314 = arith.constant 0 : index
    %443 = vector.load %arg18[%c0_313, %c0_314] : memref<64x64xf32, #tpu.memory_space<vmem>>, vector<64x64xf32>
    tpu.vector_store %arg18[%c0_313, %c0_314], %442 {strides = array<i32>} : memref<64x64xf32, #tpu.memory_space<vmem>>, vector<64x64xf32>,
    %444 = vector.shape_cast %442 : vector<64x64xf32> to vector<8x8x64xf32>
    %c0_315 = arith.constant 0 : index
    %c0_316 = arith.constant 0 : index
    %445 = vector.load %arg17[%c0_315, %c0_316] : memref<9x64xf32, #tpu.memory_space<vmem>>, vector<9x64xf32>
    %cst_317 = arith.constant 0.000000e+00 : f32
    %446 = vector.broadcast %cst_317 : f32 to vector<6x6xf32>
    %447 = vector.extract_strided_slice %444 {offsets = [0, 0, 0], sizes = [6, 6, 64], strides = [1, 1, 1]} : vector<8x8x64xf32> to vector<6x6x64xf32>
    %448 = vector.extract_strided_slice %445 {offsets = [0, 0], sizes = [1, 64], strides = [1, 1]} : vector<9x64xf32> to vector<1x64xf32>
    %449 = vector.shape_cast %448 : vector<1x64xf32> to vector<1x1x64xf32>
    %450 = vector.broadcast %449 : vector<1x1x64xf32> to vector<6x6x64xf32>
    %451 = arith.mulf %447, %450 : vector<6x6x64xf32>
    %cst_318 = arith.constant dense<0.000000e+00> : vector<6x6xf32>
    %452 = vector.multi_reduction <add>, %451, %cst_318 [2] : vector<6x6x64xf32> to vector<6x6xf32>
    %453 = arith.addf %446, %452 : vector<6x6xf32>
    %454 = vector.extract_strided_slice %444 {offsets = [0, 1, 0], sizes = [6, 6, 64], strides = [1, 1, 1]} : vector<8x8x64xf32> to vector<6x6x64xf32>
    %455 = vector.extract_strided_slice %445 {offsets = [1, 0], sizes = [1, 64], strides = [1, 1]} : vector<9x64xf32> to vector<1x64xf32>
    %456 = vector.shape_cast %455 : vector<1x64xf32> to vector<1x1x64xf32>
    %457 = vector.broadcast %456 : vector<1x1x64xf32> to vector<6x6x64xf32>
    %458 = arith.mulf %454, %457 : vector<6x6x64xf32>
    %cst_319 = arith.constant dense<0.000000e+00> : vector<6x6xf32>
    %459 = vector.multi_reduction <add>, %458, %cst_319 [2] : vector<6x6x64xf32> to vector<6x6xf32>
    %460 = arith.addf %453, %459 : vector<6x6xf32>
    %461 = vector.extract_strided_slice %444 {offsets = [0, 2, 0], sizes = [6, 6, 64], strides = [1, 1, 1]} : vector<8x8x64xf32> to vector<6x6x64xf32>
    %462 = vector.extract_strided_slice %445 {offsets = [2, 0], sizes = [1, 64], strides = [1, 1]} : vector<9x64xf32> to vector<1x64xf32>
    %463 = vector.shape_cast %462 : vector<1x64xf32> to vector<1x1x64xf32>
    %464 = vector.broadcast %463 : vector<1x1x64xf32> to vector<6x6x64xf32>
    %465 = arith.mulf %461, %464 : vector<6x6x64xf32>
    %cst_320 = arith.constant dense<0.000000e+00> : vector<6x6xf32>
    %466 = vector.multi_reduction <add>, %465, %cst_320 [2] : vector<6x6x64xf32> to vector<6x6xf32>
    %467 = arith.addf %460, %466 : vector<6x6xf32>
    %468 = vector.extract_strided_slice %444 {offsets = [1, 0, 0], sizes = [6, 6, 64], strides = [1, 1, 1]} : vector<8x8x64xf32> to vector<6x6x64xf32>
    %469 = vector.extract_strided_slice %445 {offsets = [3, 0], sizes = [1, 64], strides = [1, 1]} : vector<9x64xf32> to vector<1x64xf32>
    %470 = vector.shape_cast %469 : vector<1x64xf32> to vector<1x1x64xf32>
    %471 = vector.broadcast %470 : vector<1x1x64xf32> to vector<6x6x64xf32>
    %472 = arith.mulf %468, %471 : vector<6x6x64xf32>
    %cst_321 = arith.constant dense<0.000000e+00> : vector<6x6xf32>
    %473 = vector.multi_reduction <add>, %472, %cst_321 [2] : vector<6x6x64xf32> to vector<6x6xf32>
    %474 = arith.addf %467, %473 : vector<6x6xf32>
    %475 = vector.extract_strided_slice %444 {offsets = [1, 1, 0], sizes = [6, 6, 64], strides = [1, 1, 1]} : vector<8x8x64xf32> to vector<6x6x64xf32>
    %476 = vector.extract_strided_slice %445 {offsets = [4, 0], sizes = [1, 64], strides = [1, 1]} : vector<9x64xf32> to vector<1x64xf32>
    %477 = vector.shape_cast %476 : vector<1x64xf32> to vector<1x1x64xf32>
    %478 = vector.broadcast %477 : vector<1x1x64xf32> to vector<6x6x64xf32>
    %479 = arith.mulf %475, %478 : vector<6x6x64xf32>
    %cst_322 = arith.constant dense<0.000000e+00> : vector<6x6xf32>
    %480 = vector.multi_reduction <add>, %479, %cst_322 [2] : vector<6x6x64xf32> to vector<6x6xf32>
    %481 = arith.addf %474, %480 : vector<6x6xf32>
    %482 = vector.extract_strided_slice %444 {offsets = [1, 2, 0], sizes = [6, 6, 64], strides = [1, 1, 1]} : vector<8x8x64xf32> to vector<6x6x64xf32>
    %483 = vector.extract_strided_slice %445 {offsets = [5, 0], sizes = [1, 64], strides = [1, 1]} : vector<9x64xf32> to vector<1x64xf32>
    %484 = vector.shape_cast %483 : vector<1x64xf32> to vector<1x1x64xf32>
    %485 = vector.broadcast %484 : vector<1x1x64xf32> to vector<6x6x64xf32>
    %486 = arith.mulf %482, %485 : vector<6x6x64xf32>
    %cst_323 = arith.constant dense<0.000000e+00> : vector<6x6xf32>
    %487 = vector.multi_reduction <add>, %486, %cst_323 [2] : vector<6x6x64xf32> to vector<6x6xf32>
    %488 = arith.addf %481, %487 : vector<6x6xf32>
    %489 = vector.extract_strided_slice %444 {offsets = [2, 0, 0], sizes = [6, 6, 64], strides = [1, 1, 1]} : vector<8x8x64xf32> to vector<6x6x64xf32>
    %490 = vector.extract_strided_slice %445 {offsets = [6, 0], sizes = [1, 64], strides = [1, 1]} : vector<9x64xf32> to vector<1x64xf32>
    %491 = vector.shape_cast %490 : vector<1x64xf32> to vector<1x1x64xf32>
    %492 = vector.broadcast %491 : vector<1x1x64xf32> to vector<6x6x64xf32>
    %493 = arith.mulf %489, %492 : vector<6x6x64xf32>
    %cst_324 = arith.constant dense<0.000000e+00> : vector<6x6xf32>
    %494 = vector.multi_reduction <add>, %493, %cst_324 [2] : vector<6x6x64xf32> to vector<6x6xf32>
    %495 = arith.addf %488, %494 : vector<6x6xf32>
    %496 = vector.extract_strided_slice %444 {offsets = [2, 1, 0], sizes = [6, 6, 64], strides = [1, 1, 1]} : vector<8x8x64xf32> to vector<6x6x64xf32>
    %497 = vector.extract_strided_slice %445 {offsets = [7, 0], sizes = [1, 64], strides = [1, 1]} : vector<9x64xf32> to vector<1x64xf32>
    %498 = vector.shape_cast %497 : vector<1x64xf32> to vector<1x1x64xf32>
    %499 = vector.broadcast %498 : vector<1x1x64xf32> to vector<6x6x64xf32>
    %500 = arith.mulf %496, %499 : vector<6x6x64xf32>
    %cst_325 = arith.constant dense<0.000000e+00> : vector<6x6xf32>
    %501 = vector.multi_reduction <add>, %500, %cst_325 [2] : vector<6x6x64xf32> to vector<6x6xf32>
    %502 = arith.addf %495, %501 : vector<6x6xf32>
    %503 = vector.extract_strided_slice %444 {offsets = [2, 2, 0], sizes = [6, 6, 64], strides = [1, 1, 1]} : vector<8x8x64xf32> to vector<6x6x64xf32>
    %504 = vector.extract_strided_slice %445 {offsets = [8, 0], sizes = [1, 64], strides = [1, 1]} : vector<9x64xf32> to vector<1x64xf32>
    %505 = vector.shape_cast %504 : vector<1x64xf32> to vector<1x1x64xf32>
    %506 = vector.broadcast %505 : vector<1x1x64xf32> to vector<6x6x64xf32>
    %507 = arith.mulf %503, %506 : vector<6x6x64xf32>
    %cst_326 = arith.constant dense<0.000000e+00> : vector<6x6xf32>
    %508 = vector.multi_reduction <add>, %507, %cst_326 [2] : vector<6x6x64xf32> to vector<6x6xf32>
    %509 = arith.addf %502, %508 : vector<6x6xf32>
    %cst_327 = arith.constant 0.000000e+00 : f32
    %510 = vector.broadcast %cst_327 : f32 to vector<6x6xf32>
    %511 = arith.subf %510, %509 : vector<6x6xf32>
    %512 = math.exp %511 : vector<6x6xf32>
    %cst_328 = arith.constant 1.000000e+00 : f32
    %513 = vector.broadcast %cst_328 : f32 to vector<6x6xf32>
    %514 = arith.addf %513, %512 : vector<6x6xf32>
    %515 = tpu.reciprocal %514 {approx = true} : vector<6x6xf32> -> vector<6x6xf32>
    %c0_329 = arith.constant 0 : index
    %c0_330 = arith.constant 0 : index
    %c0_331 = arith.constant 0 : index
    %516 = vector.load %arg19[%c0_329, %c0_330, %c0_331] : memref<1x6x6xf32, #tpu.memory_space<vmem>>, vector<1x6x6xf32>
    %517 = vector.shape_cast %516 : vector<1x6x6xf32> to vector<6x6xf32>
    %518 = vector.shape_cast %515 : vector<6x6xf32> to vector<1x6x6xf32>
    tpu.vector_store %arg19[%c0_329, %c0_330, %c0_331], %518 {strides = array<i32>} : memref<1x6x6xf32, #tpu.memory_space<vmem>>, vector<1x6x6xf32>,
    return
  }
  func.func @transform_0(%arg0: i32) -> (i32, i32, i32, i32) {
    %c0_i32 = arith.constant 0 : i32
    %c0_i32_0 = arith.constant 0 : i32
    %c0_i32_1 = arith.constant 0 : i32
    %c0_i32_2 = arith.constant 0 : i32
    return %arg0, %c0_i32, %c0_i32_0, %c0_i32_1 : i32, i32, i32, i32
  }
  func.func @transform_1(%arg0: i32) -> (i32, i32, i32, i32) {
    %c0_i32 = arith.constant 0 : i32
    %c0_i32_0 = arith.constant 0 : i32
    %c0_i32_1 = arith.constant 0 : i32
    %c0_i32_2 = arith.constant 0 : i32
    %c0_i32_3 = arith.constant 0 : i32
    return %c0_i32, %c0_i32_0, %c0_i32_1, %c0_i32_2 : i32, i32, i32, i32
  }
  func.func @transform_2(%arg0: i32) -> (i32, i32) {
    %c0_i32 = arith.constant 0 : i32
    %c0_i32_0 = arith.constant 0 : i32
    %c0_i32_1 = arith.constant 0 : i32
    return %c0_i32, %c0_i32_0 : i32, i32
  }
  func.func @transform_3(%arg0: i32) -> (i32, i32) {
    %c0_i32 = arith.constant 0 : i32
    %c0_i32_0 = arith.constant 0 : i32
    %c0_i32_1 = arith.constant 0 : i32
    return %c0_i32, %c0_i32_0 : i32, i32
  }
  func.func @transform_4(%arg0: i32) -> (i32, i32) {
    %c0_i32 = arith.constant 0 : i32
    %c0_i32_0 = arith.constant 0 : i32
    %c0_i32_1 = arith.constant 0 : i32
    return %c0_i32, %c0_i32_0 : i32, i32
  }
  func.func @transform_5(%arg0: i32) -> (i32, i32) {
    %c0_i32 = arith.constant 0 : i32
    %c0_i32_0 = arith.constant 0 : i32
    %c0_i32_1 = arith.constant 0 : i32
    return %c0_i32, %c0_i32_0 : i32, i32
  }
  func.func @transform_6(%arg0: i32) -> (i32, i32) {
    %c0_i32 = arith.constant 0 : i32
    %c0_i32_0 = arith.constant 0 : i32
    %c0_i32_1 = arith.constant 0 : i32
    return %c0_i32, %c0_i32_0 : i32, i32
  }
  func.func @transform_7(%arg0: i32) -> (i32, i32) {
    %c0_i32 = arith.constant 0 : i32
    %c0_i32_0 = arith.constant 0 : i32
    %c0_i32_1 = arith.constant 0 : i32
    return %c0_i32, %c0_i32_0 : i32, i32
  }
  func.func @transform_8(%arg0: i32) -> (i32, i32, i32, i32) {
    %c0_i32 = arith.constant 0 : i32
    %c0_i32_0 = arith.constant 0 : i32
    %c0_i32_1 = arith.constant 0 : i32
    %c0_i32_2 = arith.constant 0 : i32
    %c0_i32_3 = arith.constant 0 : i32
    return %c0_i32, %c0_i32_0, %c0_i32_1, %c0_i32_2 : i32, i32, i32, i32
  }
  func.func @transform_9(%arg0: i32) -> (i32, i32) {
    %c0_i32 = arith.constant 0 : i32
    %c0_i32_0 = arith.constant 0 : i32
    %c0_i32_1 = arith.constant 0 : i32
    return %c0_i32, %c0_i32_0 : i32, i32
  }
  func.func @transform_10(%arg0: i32) -> (i32, i32) {
    %c0_i32 = arith.constant 0 : i32
    %c0_i32_0 = arith.constant 0 : i32
    %c0_i32_1 = arith.constant 0 : i32
    return %c0_i32, %c0_i32_0 : i32, i32
  }
  func.func @transform_11(%arg0: i32) -> (i32, i32) {
    %c0_i32 = arith.constant 0 : i32
    %c0_i32_0 = arith.constant 0 : i32
    %c0_i32_1 = arith.constant 0 : i32
    return %c0_i32, %c0_i32_0 : i32, i32
  }
  func.func @transform_12(%arg0: i32) -> (i32, i32) {
    %c0_i32 = arith.constant 0 : i32
    %c0_i32_0 = arith.constant 0 : i32
    %c0_i32_1 = arith.constant 0 : i32
    return %c0_i32, %c0_i32_0 : i32, i32
  }
  func.func @transform_13(%arg0: i32) -> (i32, i32) {
    %c0_i32 = arith.constant 0 : i32
    %c0_i32_0 = arith.constant 0 : i32
    %c0_i32_1 = arith.constant 0 : i32
    return %c0_i32, %c0_i32_0 : i32, i32
  }
  func.func @transform_14(%arg0: i32) -> (i32, i32) {
    %c0_i32 = arith.constant 0 : i32
    %c0_i32_0 = arith.constant 0 : i32
    %c0_i32_1 = arith.constant 0 : i32
    return %c0_i32, %c0_i32_0 : i32, i32
  }
  func.func @transform_15(%arg0: i32) -> (i32, i32) {
    %c0_i32 = arith.constant 0 : i32
    %c0_i32_0 = arith.constant 0 : i32
    %c0_i32_1 = arith.constant 0 : i32
    return %c0_i32, %c0_i32_0 : i32, i32
  }
  func.func @transform_16(%arg0: i32) -> (i32, i32) {
    %c0_i32 = arith.constant 0 : i32
    %c0_i32_0 = arith.constant 0 : i32
    %c0_i32_1 = arith.constant 0 : i32
    return %c0_i32, %c0_i32_0 : i32, i32
  }
  func.func @transform_17(%arg0: i32) -> (i32, i32) {
    %c0_i32 = arith.constant 0 : i32
    %c0_i32_0 = arith.constant 0 : i32
    return %arg0, %c0_i32 : i32, i32
  }
  func.func @transform_18(%arg0: i32) -> (i32, i32, i32) {
    %c0_i32 = arith.constant 0 : i32
    %c0_i32_0 = arith.constant 0 : i32
    %c0_i32_1 = arith.constant 0 : i32
    return %arg0, %c0_i32, %c0_i32_0 : i32, i32, i32
  }
}

</mosaic_0001>

<llo_original>
// kernel: discriminator_forward.1
$region0: #{discriminator_forward.1}
  #allocation0 [shape = 'u32[]', space=smem, size = 0x4, offset = 0x4, fixed_abs, tag = 'smem constant byte address 0x4 - core index']
  #allocation1 [shape = 'u32[72,128]{1,0:T(1,128)}', space=vmem, size = 0x9000, scoped, tag = 'internal scratch']
  #allocation2 [shape = 'f32[2,19,9,32]{3,2,1,0:T(8,128)}', space=vmem, size = 0x4c000, scoped, tag = 'scratch operand']
  #allocation3 [shape = 'f32[1,1]{1,0:T(1,128)S(1)}', space=vmem, size = 0x200, scoped, tag = 'scoped memory for discriminator_forward.1']
  #allocation4 [shape = 'f32[1,1]{1,0:T(1,128)S(1)}', space=vmem, size = 0x200, scoped, tag = 'scoped memory for discriminator_forward.1']
  %s0 = inlined_call_operand.vmem [shape: f32[2,18,18,3], index: 0, kind: input, shape index: {}]
  %s1 = inlined_call_operand.vmem [shape: bf16[3,3,3,32], index: 1, kind: input, shape index: {}]
  %s2 = inlined_call_operand.vmem [shape: bf16[32,2], index: 2, kind: input, shape index: {}]
  %s3 = inlined_call_operand.vmem [shape: f32[1,2], index: 3, kind: input, shape index: {}]
  %s4 = inlined_call_operand.vmem [shape: bf16[2,32], index: 4, kind: input, shape index: {}]
  %s5 = inlined_call_operand.vmem [shape: f32[1,32], index: 5, kind: input, shape index: {}]
  %s6 = inlined_call_operand.vmem [shape: bf16[256,512], index: 6, kind: input, shape index: {}]
  %s7 = inlined_call_operand.<no memory space> [shape: f32[1,1], index: 7, kind: input, shape index: {}]
  %s8 = inlined_call_operand.vmem [shape: bf16[4,4,32,64], index: 8, kind: input, shape index: {}]
  %s9 = inlined_call_operand.vmem [shape: f32[1,64], index: 9, kind: input, shape index: {}]
  %s10 = inlined_call_operand.vmem [shape: bf16[64,4], index: 10, kind: input, shape index: {}]
  %s11 = inlined_call_operand.vmem [shape: f32[1,4], index: 11, kind: input, shape index: {}]
  %s12 = inlined_call_operand.vmem [shape: bf16[4,64], index: 12, kind: input, shape index: {}]
  %s13 = inlined_call_operand.vmem [shape: f32[1,64], index: 13, kind: input, shape index: {}]
  %s14 = inlined_call_operand.vmem [shape: bf16[64,128], index: 14, kind: input, shape index: {}]
  %s15 = inlined_call_operand.<no memory space> [shape: f32[1,1], index: 15, kind: input, shape index: {}]
  %s16 = inlined_call_operand.vmem [shape: f32[9,64], index: 16, kind: input, shape index: {}]
  %s17 = inlined_call_operand.hbm [shape: f32[128,64], index: 17, kind: output, shape index: {0}]
  %s18 = inlined_call_operand.vmem [shape: f32[2,6,6], index: 18, kind: output, shape index: {1}]
  %19 = xla_tuple %s17, %s18
  %s20 = sld [smem:[#allocation0]]
  $region109: #{discriminator_forward.1} parent=0
    _
  %s22 = ssub.s32 1, %s20
  %s23 = scalar_select 0, %s22, %s20
  %v24 = vstv %s7
  %25 = vst [vmem:[#allocation3] sm:$0x1] %v24
  %v26 = vstv %s15
  %27 = vst [vmem:[#allocation4] sm:$0x1] %v26
  $region1: #{discriminator_forward.1} parent=0
    #allocation5 [shape = 'u8[65536]{0}', space=vmem, size = 0x10000, scoped, tag = 'output window, operand 0']
    #allocation6 [shape = 's32[2]{0}', space=sflag, size = 0x8, scoped, tag = 'scoped memory for discriminator_forward.1']
    %28 = vsyncpa [#allocation6], 0
    %s29 = scalar_lea.sflag [#allocation6], 1
    %30 = vsyncpa %s29, 0
    loop: start=0, step=1, limit=4
    $region2: #{discriminator_forward.1} parent=1 // loop_pre_header
      _
    $region3: #{discriminator_forward.1} parent=1 // loop_header
      %s32 = sphi 0, %s36
      %p33 = scmp.ge.s32.totalorder %s32, 4
      %s42 = sphi 0, %s44
      %s45 = sphi 0, %s42
      %s46 = sphi 0, %s45
      %s62 = sphi 0, %s46
      %s66 = sphi 0, %s66
      %s68 = sphi 0, %s66
      %s69 = sphi 0, %s68
      %s83 = sphi 0, %s69
      %s87 = sphi 0, %s87
      %s89 = sphi 0, %s87
      %s90 = sphi 0, %s89
      %s104 = sphi 0, %s90
      %s108 = sphi 0, %s108
      %s110 = sphi 0, %s108
      %s111 = sphi 0, %s110
      %s125 = sphi 0, %s111
      %s129 = sphi 0, %s129
      %s131 = sphi 0, %s129
      %s132 = sphi 0, %s131
      %s146 = sphi 0, %s132
      %s150 = sphi 0, %s150
      %s152 = sphi 0, %s150
      %s153 = sphi 0, %s152
      %s167 = sphi 0, %s153
      %s171 = sphi 0, %s171
      %s173 = sphi 0, %s171
      %s174 = sphi 0, %s173
      %s188 = sphi 0, %s174
      %s192 = sphi 0, %s192
      %s194 = sphi 0, %s192
      %s195 = sphi 0, %s194
      %s209 = sphi 0, %s195
      %s213 = sphi 0, %s213
      %s215 = sphi 0, %s213
      %s216 = sphi 0, %s215
      %s230 = sphi 0, %s216
      %s234 = sphi 0, %s234
      %s236 = sphi 0, %s234
      %s237 = sphi 0, %s236
      %s251 = sphi 0, %s237
      %s255 = sphi 0, %s255
      %s257 = sphi 0, %s255
      %s258 = sphi 0, %s257
      %s272 = sphi 0, %s258
      %s276 = sphi 0, %s276
      %s278 = sphi 0, %s276
      %s279 = sphi 0, %s278
      %s293 = sphi 0, %s279
      %s297 = sphi 0, %s297
      %s299 = sphi 0, %s297
      %s300 = sphi 0, %s299
      %s314 = sphi 0, %s300
      %s318 = sphi 0, %s318
      %s320 = sphi 0, %s318
      %s321 = sphi 0, %s320
      %s335 = sphi 0, %s321
      %s339 = sphi 0, %s339
      %s341 = sphi 0, %s339
      %s342 = sphi 0, %s341
      %s356 = sphi 0, %s342
      %s360 = sphi 0, %s360
      %s362 = sphi 0, %s360
      %s363 = sphi 0, %s362
      %s377 = sphi 0, %s363
      %s381 = sphi 0, %s381
      %s383 = sphi 0, %s381
      %s384 = sphi 0, %s383
      %s398 = sphi 0, %s384
      %s404 = sphi 0, %s406
      %s407 = sphi 0, %s404
      %s408 = sphi 0, %s407
      %s424 = sphi 0, %s408
      %s430 = sphi 0, %s432
      %s433 = sphi 0, %s430
      %s434 = sphi 0, %s433
      %s450 = sphi 0, %s434
    $region4: #{discriminator_forward.1} parent=1 // loop_header_branch
      %35 = sbr.rel (%p33) target = $region8
    $region5: #{discriminator_forward.1} parent=1 // loop_body
      %s37 = ssub.s32 %s32, 1
      %s38 = ssub.s32 %s32, 2
      %s39 = sadd.s32 %s32, 1
      %s40 = ssub.s32 %s32, %s39
      %p41 = scmp.eq.s32.totalorder %s40, 0
      %s43 = sadd.s32 %s42, 1
      %s44 = scalar_select %p41, %s42, %s43
      %p47 = pneg %p41
      %p48 = scmp.eq.s32.totalorder %s32, 1
      %p49 = por %p47, %p48
      %p50 = scmp.ne.s32.totalorder %s42, %s45
      %p51 = scmp.eq.s32.totalorder %s32, 0
      %p52 = por %p50, %p51
      %p53 = scmp.ne.s32.totalorder %s42, %s45
      %p54 = scmp.eq.s32.totalorder %s37, 1
      %p55 = por %p53, %p54
      %p56 = scmp.ne.s32.totalorder %s45, %s46
      %p57 = scmp.eq.s32.totalorder %s37, 0
      %p58 = por %p56, %p57
      %p59 = scmp.ne.s32.totalorder %s45, %s46
      %p60 = scmp.eq.s32.totalorder %s38, 1
      %p61 = por %p59, %p60
      %p63 = scmp.ne.s32.totalorder %s46, %s62
      %p64 = scmp.eq.s32.totalorder %s38, 0
      %p65 = por %p63, %p64
      %s67 = sadd.s32 %s66, 1
      %p70 = scmp.eq.s32.totalorder %s32, 1
      %p71 = scmp.ne.s32.totalorder %s66, %s68
      %p72 = scmp.eq.s32.totalorder %s32, 0
      %p73 = por %p71, %p72
      %p74 = scmp.ne.s32.totalorder %s66, %s68
      %p75 = scmp.eq.s32.totalorder %s37, 1
      %p76 = por %p74, %p75
      %p77 = scmp.ne.s32.totalorder %s68, %s69
      %p78 = scmp.eq.s32.totalorder %s37, 0
      %p79 = por %p77, %p78
      %p80 = scmp.ne.s32.totalorder %s68, %s69
      %p81 = scmp.eq.s32.totalorder %s38, 1
      %p82 = por %p80, %p81
      %p84 = scmp.ne.s32.totalorder %s69, %s83
      %p85 = scmp.eq.s32.totalorder %s38, 0
      %p86 = por %p84, %p85
      %s88 = sadd.s32 %s87, 1
      %p91 = scmp.eq.s32.totalorder %s32, 1
      %p92 = scmp.ne.s32.totalorder %s87, %s89
      %p93 = scmp.eq.s32.totalorder %s32, 0
      %p94 = por %p92, %p93
      %p95 = scmp.ne.s32.totalorder %s87, %s89
      %p96 = scmp.eq.s32.totalorder %s37, 1
      %p97 = por %p95, %p96
      %p98 = scmp.ne.s32.totalorder %s89, %s90
      %p99 = scmp.eq.s32.totalorder %s37, 0
      %p100 = por %p98, %p99
      %p101 = scmp.ne.s32.totalorder %s89, %s90
      %p102 = scmp.eq.s32.totalorder %s38, 1
      %p103 = por %p101, %p102
      %p105 = scmp.ne.s32.totalorder %s90, %s104
      %p106 = scmp.eq.s32.totalorder %s38, 0
      %p107 = por %p105, %p106
      %s109 = sadd.s32 %s108, 1
      %p112 = scmp.eq.s32.totalorder %s32, 1
      %p113 = scmp.ne.s32.totalorder %s108, %s110
      %p114 = scmp.eq.s32.totalorder %s32, 0
      %p115 = por %p113, %p114
      %p116 = scmp.ne.s32.totalorder %s108, %s110
      %p117 = scmp.eq.s32.totalorder %s37, 1
      %p118 = por %p116, %p117
      %p119 = scmp.ne.s32.totalorder %s110, %s111
      %p120 = scmp.eq.s32.totalorder %s37, 0
      %p121 = por %p119, %p120
      %p122 = scmp.ne.s32.totalorder %s110, %s111
      %p123 = scmp.eq.s32.totalorder %s38, 1
      %p124 = por %p122, %p123
      %p126 = scmp.ne.s32.totalorder %s111, %s125
      %p127 = scmp.eq.s32.totalorder %s38, 0
      %p128 = por %p126, %p127
      %s130 = sadd.s32 %s129, 1
      %p133 = scmp.eq.s32.totalorder %s32, 1
      %p134 = scmp.ne.s32.totalorder %s129, %s131
      %p135 = scmp.eq.s32.totalorder %s32, 0
      %p136 = por %p134, %p135
      %p137 = scmp.ne.s32.totalorder %s129, %s131
      %p138 = scmp.eq.s32.totalorder %s37, 1
      %p139 = por %p137, %p138
      %p140 = scmp.ne.s32.totalorder %s131, %s132
      %p141 = scmp.eq.s32.totalorder %s37, 0
      %p142 = por %p140, %p141
      %p143 = scmp.ne.s32.totalorder %s131, %s132
      %p144 = scmp.eq.s32.totalorder %s38, 1
      %p145 = por %p143, %p144
      %p147 = scmp.ne.s32.totalorder %s132, %s146
      %p148 = scmp.eq.s32.totalorder %s38, 0
      %p149 = por %p147, %p148
      %s151 = sadd.s32 %s150, 1
      %p154 = scmp.eq.s32.totalorder %s32, 1
      %p155 = scmp.ne.s32.totalorder %s150, %s152
      %p156 = scmp.eq.s32.totalorder %s32, 0
      %p157 = por %p155, %p156
      %p158 = scmp.ne.s32.totalorder %s150, %s152
      %p159 = scmp.eq.s32.totalorder %s37, 1
      %p160 = por %p158, %p159
      %p161 = scmp.ne.s32.totalorder %s152, %s153
      %p162 = scmp.eq.s32.totalorder %s37, 0
      %p163 = por %p161, %p162
      %p164 = scmp.ne.s32.totalorder %s152, %s153
      %p165 = scmp.eq.s32.totalorder %s38, 1
      %p166 = por %p164, %p165
      %p168 = scmp.ne.s32.totalorder %s153, %s167
      %p169 = scmp.eq.s32.totalorder %s38, 0
      %p170 = por %p168, %p169
      %s172 = sadd.s32 %s171, 1
      %p175 = scmp.eq.s32.totalorder %s32, 1
      %p176 = scmp.ne.s32.totalorder %s171, %s173
      %p177 = scmp.eq.s32.totalorder %s32, 0
      %p178 = por %p176, %p177
      %p179 = scmp.ne.s32.totalorder %s171, %s173
      %p180 = scmp.eq.s32.totalorder %s37, 1
      %p181 = por %p179, %p180
      %p182 = scmp.ne.s32.totalorder %s173, %s174
      %p183 = scmp.eq.s32.totalorder %s37, 0
      %p184 = por %p182, %p183
      %p185 = scmp.ne.s32.totalorder %s173, %s174
      %p186 = scmp.eq.s32.totalorder %s38, 1
      %p187 = por %p185, %p186
      %p189 = scmp.ne.s32.totalorder %s174, %s188
      %p190 = scmp.eq.s32.totalorder %s38, 0
      %p191 = por %p189, %p190
      %s193 = sadd.s32 %s192, 1
      %p196 = scmp.eq.s32.totalorder %s32, 1
      %p197 = scmp.ne.s32.totalorder %s192, %s194
      %p198 = scmp.eq.s32.totalorder %s32, 0
      %p199 = por %p197, %p198
      %p200 = scmp.ne.s32.totalorder %s192, %s194
      %p201 = scmp.eq.s32.totalorder %s37, 1
      %p202 = por %p200, %p201
      %p203 = scmp.ne.s32.totalorder %s194, %s195
      %p204 = scmp.eq.s32.totalorder %s37, 0
      %p205 = por %p203, %p204
      %p206 = scmp.ne.s32.totalorder %s194, %s195
      %p207 = scmp.eq.s32.totalorder %s38, 1
      %p208 = por %p206, %p207
      %p210 = scmp.ne.s32.totalorder %s195, %s209
      %p211 = scmp.eq.s32.totalorder %s38, 0
      %p212 = por %p210, %p211
      %s214 = sadd.s32 %s213, 1
      %p217 = scmp.eq.s32.totalorder %s32, 1
      %p218 = scmp.ne.s32.totalorder %s213, %s215
      %p219 = scmp.eq.s32.totalorder %s32, 0
      %p220 = por %p218, %p219
      %p221 = scmp.ne.s32.totalorder %s213, %s215
      %p222 = scmp.eq.s32.totalorder %s37, 1
      %p223 = por %p221, %p222
      %p224 = scmp.ne.s32.totalorder %s215, %s216
      %p225 = scmp.eq.s32.totalorder %s37, 0
      %p226 = por %p224, %p225
      %p227 = scmp.ne.s32.totalorder %s215, %s216
      %p228 = scmp.eq.s32.totalorder %s38, 1
      %p229 = por %p227, %p228
      %p231 = scmp.ne.s32.totalorder %s216, %s230
      %p232 = scmp.eq.s32.totalorder %s38, 0
      %p233 = por %p231, %p232
      %s235 = sadd.s32 %s234, 1
      %p238 = scmp.eq.s32.totalorder %s32, 1
      %p239 = scmp.ne.s32.totalorder %s234, %s236
      %p240 = scmp.eq.s32.totalorder %s32, 0
      %p241 = por %p239, %p240
      %p242 = scmp.ne.s32.totalorder %s234, %s236
      %p243 = scmp.eq.s32.totalorder %s37, 1
      %p244 = por %p242, %p243
      %p245 = scmp.ne.s32.totalorder %s236, %s237
      %p246 = scmp.eq.s32.totalorder %s37, 0
      %p247 = por %p245, %p246
      %p248 = scmp.ne.s32.totalorder %s236, %s237
      %p249 = scmp.eq.s32.totalorder %s38, 1
      %p250 = por %p248, %p249
      %p252 = scmp.ne.s32.totalorder %s237, %s251
      %p253 = scmp.eq.s32.totalorder %s38, 0
      %p254 = por %p252, %p253
      %s256 = sadd.s32 %s255, 1
      %p259 = scmp.eq.s32.totalorder %s32, 1
      %p260 = scmp.ne.s32.totalorder %s255, %s257
      %p261 = scmp.eq.s32.totalorder %s32, 0
      %p262 = por %p260, %p261
      %p263 = scmp.ne.s32.totalorder %s255, %s257
      %p264 = scmp.eq.s32.totalorder %s37, 1
      %p265 = por %p263, %p264
      %p266 = scmp.ne.s32.totalorder %s257, %s258
      %p267 = scmp.eq.s32.totalorder %s37, 0
      %p268 = por %p266, %p267
      %p269 = scmp.ne.s32.totalorder %s257, %s258
      %p270 = scmp.eq.s32.totalorder %s38, 1
      %p271 = por %p269, %p270
      %p273 = scmp.ne.s32.totalorder %s258, %s272
      %p274 = scmp.eq.s32.totalorder %s38, 0
      %p275 = por %p273, %p274
      %s277 = sadd.s32 %s276, 1
      %p280 = scmp.eq.s32.totalorder %s32, 1
      %p281 = scmp.ne.s32.totalorder %s276, %s278
      %p282 = scmp.eq.s32.totalorder %s32, 0
      %p283 = por %p281, %p282
      %p284 = scmp.ne.s32.totalorder %s276, %s278
      %p285 = scmp.eq.s32.totalorder %s37, 1
      %p286 = por %p284, %p285
      %p287 = scmp.ne.s32.totalorder %s278, %s279
      %p288 = scmp.eq.s32.totalorder %s37, 0
      %p289 = por %p287, %p288
      %p290 = scmp.ne.s32.totalorder %s278, %s279
      %p291 = scmp.eq.s32.totalorder %s38, 1
      %p292 = por %p290, %p291
      %p294 = scmp.ne.s32.totalorder %s279, %s293
      %p295 = scmp.eq.s32.totalorder %s38, 0
      %p296 = por %p294, %p295
      %s298 = sadd.s32 %s297, 1
      %p301 = scmp.eq.s32.totalorder %s32, 1
      %p302 = scmp.ne.s32.totalorder %s297, %s299
      %p303 = scmp.eq.s32.totalorder %s32, 0
      %p304 = por %p302, %p303
      %p305 = scmp.ne.s32.totalorder %s297, %s299
      %p306 = scmp.eq.s32.totalorder %s37, 1
      %p307 = por %p305, %p306
      %p308 = scmp.ne.s32.totalorder %s299, %s300
      %p309 = scmp.eq.s32.totalorder %s37, 0
      %p310 = por %p308, %p309
      %p311 = scmp.ne.s32.totalorder %s299, %s300
      %p312 = scmp.eq.s32.totalorder %s38, 1
      %p313 = por %p311, %p312
      %p315 = scmp.ne.s32.totalorder %s300, %s314
      %p316 = scmp.eq.s32.totalorder %s38, 0
      %p317 = por %p315, %p316
      %s319 = sadd.s32 %s318, 1
      %p322 = scmp.eq.s32.totalorder %s32, 1
      %p323 = scmp.ne.s32.totalorder %s318, %s320
      %p324 = scmp.eq.s32.totalorder %s32, 0
      %p325 = por %p323, %p324
      %p326 = scmp.ne.s32.totalorder %s318, %s320
      %p327 = scmp.eq.s32.totalorder %s37, 1
      %p328 = por %p326, %p327
      %p329 = scmp.ne.s32.totalorder %s320, %s321
      %p330 = scmp.eq.s32.totalorder %s37, 0
      %p331 = por %p329, %p330
      %p332 = scmp.ne.s32.totalorder %s320, %s321
      %p333 = scmp.eq.s32.totalorder %s38, 1
      %p334 = por %p332, %p333
      %p336 = scmp.ne.s32.totalorder %s321, %s335
      %p337 = scmp.eq.s32.totalorder %s38, 0
      %p338 = por %p336, %p337
      %s340 = sadd.s32 %s339, 1
      %p343 = scmp.eq.s32.totalorder %s32, 1
      %p344 = scmp.ne.s32.totalorder %s339, %s341
      %p345 = scmp.eq.s32.totalorder %s32, 0
      %p346 = por %p344, %p345
      %p347 = scmp.ne.s32.totalorder %s339, %s341
      %p348 = scmp.eq.s32.totalorder %s37, 1
      %p349 = por %p347, %p348
      %p350 = scmp.ne.s32.totalorder %s341, %s342
      %p351 = scmp.eq.s32.totalorder %s37, 0
      %p352 = por %p350, %p351
      %p353 = scmp.ne.s32.totalorder %s341, %s342
      %p354 = scmp.eq.s32.totalorder %s38, 1
      %p355 = por %p353, %p354
      %p357 = scmp.ne.s32.totalorder %s342, %s356
      %p358 = scmp.eq.s32.totalorder %s38, 0
      %p359 = por %p357, %p358
      %s361 = sadd.s32 %s360, 1
      %p364 = scmp.eq.s32.totalorder %s32, 1
      %p365 = scmp.ne.s32.totalorder %s360, %s362
      %p366 = scmp.eq.s32.totalorder %s32, 0
      %p367 = por %p365, %p366
      %p368 = scmp.ne.s32.totalorder %s360, %s362
      %p369 = scmp.eq.s32.totalorder %s37, 1
      %p370 = por %p368, %p369
      %p371 = scmp.ne.s32.totalorder %s362, %s363
      %p372 = scmp.eq.s32.totalorder %s37, 0
      %p373 = por %p371, %p372
      %p374 = scmp.ne.s32.totalorder %s362, %s363
      %p375 = scmp.eq.s32.totalorder %s38, 1
      %p376 = por %p374, %p375
      %p378 = scmp.ne.s32.totalorder %s363, %s377
      %p379 = scmp.eq.s32.totalorder %s38, 0
      %p380 = por %p378, %p379
      %s382 = sadd.s32 %s381, 1
      %p385 = scmp.eq.s32.totalorder %s32, 1
      %p386 = scmp.ne.s32.totalorder %s381, %s383
      %p387 = scmp.eq.s32.totalorder %s32, 0
      %p388 = por %p386, %p387
      %p389 = scmp.ne.s32.totalorder %s381, %s383
      %p390 = scmp.eq.s32.totalorder %s37, 1
      %p391 = por %p389, %p390
      %p392 = scmp.ne.s32.totalorder %s383, %s384
      %p393 = scmp.eq.s32.totalorder %s37, 0
      %p394 = por %p392, %p393
      %p395 = scmp.ne.s32.totalorder %s383, %s384
      %p396 = scmp.eq.s32.totalorder %s38, 1
      %p397 = por %p395, %p396
      %p399 = scmp.ne.s32.totalorder %s384, %s398
      %p400 = scmp.eq.s32.totalorder %s38, 0
      %p401 = por %p399, %p400
      %s402 = ssub.s32 %s32, %s39
      %p403 = scmp.eq.s32.totalorder %s402, 0
      %s405 = sadd.s32 %s404, 1
      %s406 = scalar_select %p403, %s404, %s405
      %p409 = pneg %p403
      %p410 = scmp.eq.s32.totalorder %s32, 1
      %p411 = por %p409, %p410
      %p412 = scmp.ne.s32.totalorder %s404, %s407
      %p413 = scmp.eq.s32.totalorder %s32, 0
      %p414 = por %p412, %p413
      %p415 = scmp.ne.s32.totalorder %s404, %s407
      %p416 = scmp.eq.s32.totalorder %s37, 1
      %p417 = por %p415, %p416
      %p418 = scmp.ne.s32.totalorder %s407, %s408
      %p419 = scmp.eq.s32.totalorder %s37, 0
      %p420 = por %p418, %p419
      %p421 = scmp.ne.s32.totalorder %s407, %s408
      %p422 = scmp.eq.s32.totalorder %s38, 1
      %p423 = por %p421, %p422
      %p425 = scmp.ne.s32.totalorder %s408, %s424
      %p426 = scmp.eq.s32.totalorder %s38, 0
      %p427 = por %p425, %p426
      %s428 = ssub.s32 %s32, %s39
      %p429 = scmp.eq.s32.totalorder %s428, 0
      %s431 = sadd.s32 %s430, 1
      %s432 = scalar_select %p429, %s430, %s431
      %p435 = pneg %p429
      %p436 = scmp.eq.s32.totalorder %s32, 1
      %p437 = por %p435, %p436
      %p438 = scmp.ne.s32.totalorder %s430, %s433
      %p439 = scmp.eq.s32.totalorder %s32, 0
      %p440 = por %p438, %p439
      %p441 = scmp.ne.s32.totalorder %s430, %s433
      %p442 = scmp.eq.s32.totalorder %s37, 1
      %p443 = por %p441, %p442
      %p444 = scmp.ne.s32.totalorder %s433, %s434
      %p445 = scmp.eq.s32.totalorder %s37, 0
      %p446 = por %p444, %p445
      %p447 = scmp.ne.s32.totalorder %s433, %s434
      %p448 = scmp.eq.s32.totalorder %s38, 1
      %p449 = por %p447, %p448
      %p451 = scmp.ne.s32.totalorder %s434, %s450
      %p452 = scmp.eq.s32.totalorder %s38, 0
      %p453 = por %p451, %p452
      %p454 = scmp.le.s32.totalorder 1, %s32
      %p455 = scmp.lt.s32.totalorder %s32, 3
      %p456 = pnand %p454, %p455
      %p457 = pneg %p456
      // Predicated region
      $region9: #{discriminator_forward.1} parent=5 // pred_check
        _
      $region10: #{discriminator_forward.1} parent=5 // pred_check_branch
        %459 = sbr.rel (%p456) target = $region12
      $region11: #{discriminator_forward.1} parent=5 // pred_region
        %s460 = ssub.s32 %s32, 1
        // Predicated region
        $region13: #{discriminator_forward.1} parent=11 // pred_check
          %p461 = pneg %p79
        $region14: #{discriminator_forward.1} parent=11 // pred_check_branch
          %463 = sbr.rel (%p461) target = $region16
        $region15: #{discriminator_forward.1} parent=11 // pred_region
          _
        $region16: #{discriminator_forward.1} parent=11 // pred_fallthru
          _
        // Predicated region
        $region17: #{discriminator_forward.1} parent=11 // pred_check
          %p464 = pneg %p100
        $region18: #{discriminator_forward.1} parent=11 // pred_check_branch
          %466 = sbr.rel (%p464) target = $region20
        $region19: #{discriminator_forward.1} parent=11 // pred_region
          _
        $region20: #{discriminator_forward.1} parent=11 // pred_fallthru
          _
        // Predicated region
        $region21: #{discriminator_forward.1} parent=11 // pred_check
          %p467 = pneg %p121
        $region22: #{discriminator_forward.1} parent=11 // pred_check_branch
          %469 = sbr.rel (%p467) target = $region24
        $region23: #{discriminator_forward.1} parent=11 // pred_region
          _
        $region24: #{discriminator_forward.1} parent=11 // pred_fallthru
          _
        // Predicated region
        $region25: #{discriminator_forward.1} parent=11 // pred_check
          %p470 = pneg %p142
        $region26: #{discriminator_forward.1} parent=11 // pred_check_branch
          %472 = sbr.rel (%p470) target = $region28
        $region27: #{discriminator_forward.1} parent=11 // pred_region
          _
        $region28: #{discriminator_forward.1} parent=11 // pred_fallthru
          _
        // Predicated region
        $region29: #{discriminator_forward.1} parent=11 // pred_check
          %p473 = pneg %p163
        $region30: #{discriminator_forward.1} parent=11 // pred_check_branch
          %475 = sbr.rel (%p473) target = $region32
        $region31: #{discriminator_forward.1} parent=11 // pred_region
          _
        $region32: #{discriminator_forward.1} parent=11 // pred_fallthru
          _
        // Predicated region
        $region33: #{discriminator_forward.1} parent=11 // pred_check
          %p476 = pneg %p184
        $region34: #{discriminator_forward.1} parent=11 // pred_check_branch
          %478 = sbr.rel (%p476) target = $region36
        $region35: #{discriminator_forward.1} parent=11 // pred_region
          _
        $region36: #{discriminator_forward.1} parent=11 // pred_fallthru
          _
        // Predicated region
        $region37: #{discriminator_forward.1} parent=11 // pred_check
          %p479 = pneg %p205
        $region38: #{discriminator_forward.1} parent=11 // pred_check_branch
          %481 = sbr.rel (%p479) target = $region40
        $region39: #{discriminator_forward.1} parent=11 // pred_region
          _
        $region40: #{discriminator_forward.1} parent=11 // pred_fallthru
          _
        // Predicated region
        $region41: #{discriminator_forward.1} parent=11 // pred_check
          %p482 = pneg %p226
        $region42: #{discriminator_forward.1} parent=11 // pred_check_branch
          %484 = sbr.rel (%p482) target = $region44
        $region43: #{discriminator_forward.1} parent=11 // pred_region
          _
        $region44: #{discriminator_forward.1} parent=11 // pred_fallthru
          _
        // Predicated region
        $region45: #{discriminator_forward.1} parent=11 // pred_check
          %p485 = pneg %p247
        $region46: #{discriminator_forward.1} parent=11 // pred_check_branch
          %487 = sbr.rel (%p485) target = $region48
        $region47: #{discriminator_forward.1} parent=11 // pred_region
          _
        $region48: #{discriminator_forward.1} parent=11 // pred_fallthru
          _
        // Predicated region
        $region49: #{discriminator_forward.1} parent=11 // pred_check
          %p488 = pneg %p268
        $region50: #{discriminator_forward.1} parent=11 // pred_check_branch
          %490 = sbr.rel (%p488) target = $region52
        $region51: #{discriminator_forward.1} parent=11 // pred_region
          _
        $region52: #{discriminator_forward.1} parent=11 // pred_fallthru
          _
        // Predicated region
        $region53: #{discriminator_forward.1} parent=11 // pred_check
          %p491 = pneg %p289
        $region54: #{discriminator_forward.1} parent=11 // pred_check_branch
          %493 = sbr.rel (%p491) target = $region56
        $region55: #{discriminator_forward.1} parent=11 // pred_region
          _
        $region56: #{discriminator_forward.1} parent=11 // pred_fallthru
          _
        // Predicated region
        $region57: #{discriminator_forward.1} parent=11 // pred_check
          %p494 = pneg %p310
        $region58: #{discriminator_forward.1} parent=11 // pred_check_branch
          %496 = sbr.rel (%p494) target = $region60
        $region59: #{discriminator_forward.1} parent=11 // pred_region
          _
        $region60: #{discriminator_forward.1} parent=11 // pred_fallthru
          _
        // Predicated region
        $region61: #{discriminator_forward.1} parent=11 // pred_check
          %p497 = pneg %p331
        $region62: #{discriminator_forward.1} parent=11 // pred_check_branch
          %499 = sbr.rel (%p497) target = $region64
        $region63: #{discriminator_forward.1} parent=11 // pred_region
          _
        $region64: #{discriminator_forward.1} parent=11 // pred_fallthru
          _
        // Predicated region
        $region65: #{discriminator_forward.1} parent=11 // pred_check
          %p500 = pneg %p352
        $region66: #{discriminator_forward.1} parent=11 // pred_check_branch
          %502 = sbr.rel (%p500) target = $region68
        $region67: #{discriminator_forward.1} parent=11 // pred_region
          _
        $region68: #{discriminator_forward.1} parent=11 // pred_fallthru
          _
        // Predicated region
        $region69: #{discriminator_forward.1} parent=11 // pred_check
          %p503 = pneg %p373
        $region70: #{discriminator_forward.1} parent=11 // pred_check_branch
          %505 = sbr.rel (%p503) target = $region72
        $region71: #{discriminator_forward.1} parent=11 // pred_region
          _
        $region72: #{discriminator_forward.1} parent=11 // pred_fallthru
          _
        // Predicated region
        $region73: #{discriminator_forward.1} parent=11 // pred_check
          %p506 = pneg %p394
        $region74: #{discriminator_forward.1} parent=11 // pred_check_branch
          %508 = sbr.rel (%p506) target = $region76
        $region75: #{discriminator_forward.1} parent=11 // pred_region
          _
        $region76: #{discriminator_forward.1} parent=11 // pred_fallthru
          _
      $region12: #{discriminator_forward.1} parent=5 // pred_fallthru
        _
      %p509 = scmp.lt.s32.totalorder %s32, 2
      // Predicated region
      $region77: #{discriminator_forward.1} parent=5 // pred_check
        %p510 = pneg %p509
      $region78: #{discriminator_forward.1} parent=5 // pred_check_branch
        %512 = sbr.rel (%p510) target = $region80
      $region79: #{discriminator_forward.1} parent=5 // pred_region
        // Predicated region
        $region81: #{discriminator_forward.1} parent=79 // pred_check
          %p513 = pneg %p52
        $region82: #{discriminator_forward.1} parent=79 // pred_check_branch
          %515 = sbr.rel (%p513) target = $region84
        $region83: #{discriminator_forward.1} parent=79 // pred_region
          %p516 = scmp.lt.s32.totalorder %s32, 1
          %s517 = scalar_select %p516, %s32, 1
          %s518 = smul.addr %s517, 54
          %s519 = smul.addr %s518, 8
          %s520 = scalar_lea.vmem %s0, %s519
        $region84: #{discriminator_forward.1} parent=79 // pred_fallthru
          _
      $region80: #{discriminator_forward.1} parent=5 // pred_fallthru
        _
      %p521 = scmp.le.s32.totalorder 1, %s32
      %p522 = scmp.lt.s32.totalorder %s32, 3
      %p523 = pnand %p521, %p522
      %p524 = pneg %p523
      // Predicated region
      $region85: #{discriminator_forward.1} parent=5 // pred_check
        _
      $region86: #{discriminator_forward.1} parent=5 // pred_check_branch
        %526 = sbr.rel (%p523) target = $region88
      $region87: #{discriminator_forward.1} parent=5 // pred_region
        %s527 = ssub.s32 %s32, 1
        %p528 = scmp.lt.s32.totalorder %s37, 1
        %s529 = scalar_select %p528, %s37, 1
        %s530 = smul.addr %s529, 54
        %s531 = smul.addr %s530, 8
        %s532 = scalar_lea.vmem %s0, %s531
        %p533 = pneg %p58
        %p534 = pneg %p55
        %p535 = pneg %p79
        %p536 = pneg %p76
        %p537 = pneg %p100
        %p538 = pneg %p97
        %p539 = pneg %p121
        %p540 = pneg %p118
        %p541 = pneg %p142
        %p542 = pneg %p139
        %p543 = pneg %p163
        %p544 = pneg %p160
        %p545 = pneg %p184
        %p546 = pneg %p181
        %p547 = pneg %p205
        %p548 = pneg %p202
        %p549 = pneg %p226
        %p550 = pneg %p223
        %p551 = pneg %p247
        %p552 = pneg %p244
        %p553 = pneg %p268
        %p554 = pneg %p265
        %p555 = pneg %p289
        %p556 = pneg %p286
        %p557 = pneg %p310
        %p558 = pneg %p307
        %p559 = pneg %p331
        %p560 = pneg %p328
        %p561 = pneg %p352
        %p562 = pneg %p349
        %p563 = pneg %p373
        %p564 = pneg %p370
        %p565 = pneg %p394
        %p566 = pneg %p391
        %p567 = pneg %p420
        %p568 = pneg %p417
        %s569 = sand.u32 %s407, 1
        %s570 = scalar_lea.sflag [#allocation6], %s569
        %s571 = sand.u32 %s407, 1
        %s572 = smul.addr %s571, 64
        %s573 = scalar_lea.vmem [#allocation5], %s572
        %p574 = pneg %p446
        %p575 = pneg %p443
        %p576 = scmp.lt.s32.totalorder %s37, 1
        %s577 = scalar_select %p576, %s37, 1
        %s578 = smul.addr %s577, 8
        %s579 = scalar_lea.vmem %s18, %s578
        %p580 = scmp.lt.s32.totalorder %s37, 1
        %s581 = scalar_select %p580, %s37, 1
        %s582 = smul.addr %s581, 54
        %s583 = smul.addr %s582, 8
        %s584 = scalar_lea.vmem %s0, %s583
        %s585 = smul.u32 8, %s37
        %p586 = scmp.lt.s32.totalorder %s37, 1
        %s587 = scalar_select %p586, %s37, 1
        %s588 = smul.addr %s587, 8
        %s589 = scalar_lea.vmem %s18, %s588
        %v591 = vld [vmem:[%s584] sm:$0xff]
        %v592 = vld [vmem:[%s584 + $0x8] sm:$0xff]
        %v593 = vld [vmem:[%s584 + $0x10] sm:$0x3]
        %v594 = vld [vmem:[%s584 + $0x18] sm:$0xff]
        %v595 = vld [vmem:[%s584 + $0x20] sm:$0xff]
        %v596 = vld [vmem:[%s584 + $0x28] sm:$0x3]
        %v597 = vld [vmem:[%s584 + $0x30] sm:$0xff]
        %v598 = vld [vmem:[%s584 + $0x38] sm:$0xff]
        %v599 = vld [vmem:[%s584 + $0x40] sm:$0x3]
        %v600 = vld [vmem:[%s584 + $0x48] sm:$0xff]
        %v601 = vld [vmem:[%s584 + $0x50] sm:$0xff]
        %v602 = vld [vmem:[%s584 + $0x58] sm:$0x3]
        %v603 = vld [vmem:[%s584 + $0x60] sm:$0xff]
        %v604 = vld [vmem:[%s584 + $0x68] sm:$0xff]
        %v605 = vld [vmem:[%s584 + $0x70] sm:$0x3]
        %v606 = vld [vmem:[%s584 + $0x78] sm:$0xff]
        %v607 = vld [vmem:[%s584 + $0x80] sm:$0xff]
        %v608 = vld [vmem:[%s584 + $0x88] sm:$0x3]
        %v609 = vld [vmem:[%s584 + $0x90] sm:$0xff]
        %v610 = vld [vmem:[%s584 + $0x98] sm:$0xff]
        %v611 = vld [vmem:[%s584 + $0xa0] sm:$0x3]
        %v612 = vld [vmem:[%s584 + $0xa8] sm:$0xff]
        %v613 = vld [vmem:[%s584 + $0xb0] sm:$0xff]
        %v614 = vld [vmem:[%s584 + $0xb8] sm:$0x3]
        %v615 = vld [vmem:[%s584 + $0xc0] sm:$0xff]
        %v616 = vld [vmem:[%s584 + $0xc8] sm:$0xff]
        %v617 = vld [vmem:[%s584 + $0xd0] sm:$0x3]
        %v618 = vld [vmem:[%s584 + $0xd8] sm:$0xff]
        %v619 = vld [vmem:[%s584 + $0xe0] sm:$0xff]
        %v620 = vld [vmem:[%s584 + $0xe8] sm:$0x3]
        %v621 = vld [vmem:[%s584 + $0xf0] sm:$0xff]
        %v622 = vld [vmem:[%s584 + $0xf8] sm:$0xff]
        %v623 = vld [vmem:[%s584 + $0x100] sm:$0x3]
        %v624 = vld [vmem:[%s584 + $0x108] sm:$0xff]
        %v625 = vld [vmem:[%s584 + $0x110] sm:$0xff]
        %v626 = vld [vmem:[%s584 + $0x118] sm:$0x3]
        %v627 = vld [vmem:[%s584 + $0x120] sm:$0xff]
        %v628 = vld [vmem:[%s584 + $0x128] sm:$0xff]
        %v629 = vld [vmem:[%s584 + $0x130] sm:$0x3]
        %v630 = vld [vmem:[%s584 + $0x138] sm:$0xff]
        %v631 = vld [vmem:[%s584 + $0x140] sm:$0xff]
        %v632 = vld [vmem:[%s584 + $0x148] sm:$0x3]
        %v633 = vld [vmem:[%s584 + $0x150] sm:$0xff]
        %v634 = vld [vmem:[%s584 + $0x158] sm:$0xff]
        %v635 = vld [vmem:[%s584 + $0x160] sm:$0x3]
        %v636 = vld [vmem:[%s584 + $0x168] sm:$0xff]
        %v637 = vld [vmem:[%s584 + $0x170] sm:$0xff]
        %v638 = vld [vmem:[%s584 + $0x178] sm:$0x3]
        %v639 = vld [vmem:[%s584 + $0x180] sm:$0xff]
        %v640 = vld [vmem:[%s584 + $0x188] sm:$0xff]
        %v641 = vld [vmem:[%s584 + $0x190] sm:$0x3]
        %v642 = vld [vmem:[%s584 + $0x198] sm:$0xff]
        %v643 = vld [vmem:[%s584 + $0x1a0] sm:$0xff]
        %v644 = vld [vmem:[%s584 + $0x1a8] sm:$0x3]
        %v645 = vpack.c.bf16 %v592, %v591
        %v646 = vpack.c.bf16 %v595, %v594
        %v647 = vpack.c.bf16 %v598, %v597
        %v648 = vpack.c.bf16 %v601, %v600
        %v649 = vpack.c.bf16 %v604, %v603
        %v650 = vpack.c.bf16 %v607, %v606
        %v651 = vpack.c.bf16 %v610, %v609
        %v652 = vpack.c.bf16 %v613, %v612
        %v653 = vpack.c.bf16 %v616, %v615
        %v654 = vpack.c.bf16 %v619, %v618
        %v655 = vpack.c.bf16 %v622, %v621
        %v656 = vpack.c.bf16 %v625, %v624
        %v657 = vpack.c.bf16 %v628, %v627
        %v658 = vpack.c.bf16 %v631, %v630
        %v659 = vpack.c.bf16 %v634, %v633
        %v660 = vpack.c.bf16 %v637, %v636
        %v661 = vld [vmem:[%s1] sm:$0x3]
        %vm710 = vcmask 1046528
        %v711 = vrot.slane %v591, 1
        %v712 = vrot.slane %v592, 1
        %v713 = vsel %vm710, %v711, %v712
        %v714 = vrot.slane %v593, 1
        %v715 = vsel %vm710, %v712, %v714
        %v716 = vrot.slane %v594, 1
        %v717 = vrot.slane %v595, 1
        %v718 = vsel %vm710, %v716, %v717
        %v719 = vrot.slane %v596, 1
        %v720 = vsel %vm710, %v717, %v719
        %v721 = vrot.slane %v597, 1
        %v722 = vrot.slane %v598, 1
        %v723 = vsel %vm710, %v721, %v722
        %v724 = vrot.slane %v599, 1
        %v725 = vsel %vm710, %v722, %v724
        %v726 = vrot.slane %v600, 1
        %v727 = vrot.slane %v601, 1
        %v728 = vsel %vm710, %v726, %v727
        %v729 = vrot.slane %v602, 1
        %v730 = vsel %vm710, %v727, %v729
        %v731 = vrot.slane %v603, 1
        %v732 = vrot.slane %v604, 1
        %v733 = vsel %vm710, %v731, %v732
        %v734 = vrot.slane %v605, 1
        %v735 = vsel %vm710, %v732, %v734
        %v736 = vrot.slane %v606, 1
        %v737 = vrot.slane %v607, 1
        %v738 = vsel %vm710, %v736, %v737
        %v739 = vrot.slane %v608, 1
        %v740 = vsel %vm710, %v737, %v739
        %v741 = vrot.slane %v609, 1
        %v742 = vrot.slane %v610, 1
        %v743 = vsel %vm710, %v741, %v742
        %v744 = vrot.slane %v611, 1
        %v745 = vsel %vm710, %v742, %v744
        %v746 = vrot.slane %v612, 1
        %v747 = vrot.slane %v613, 1
        %v748 = vsel %vm710, %v746, %v747
        %v749 = vrot.slane %v614, 1
        %v750 = vsel %vm710, %v747, %v749
        %v751 = vrot.slane %v615, 1
        %v752 = vrot.slane %v616, 1
        %v753 = vsel %vm710, %v751, %v752
        %v754 = vrot.slane %v617, 1
        %v755 = vsel %vm710, %v752, %v754
        %v756 = vrot.slane %v618, 1
        %v757 = vrot.slane %v619, 1
        %v758 = vsel %vm710, %v756, %v757
        %v759 = vrot.slane %v620, 1
        %v760 = vsel %vm710, %v757, %v759
        %v761 = vrot.slane %v621, 1
        %v762 = vrot.slane %v622, 1
        %v763 = vsel %vm710, %v761, %v762
        %v764 = vrot.slane %v623, 1
        %v765 = vsel %vm710, %v762, %v764
        %v766 = vrot.slane %v624, 1
        %v767 = vrot.slane %v625, 1
        %v768 = vsel %vm710, %v766, %v767
        %v769 = vrot.slane %v626, 1
        %v770 = vsel %vm710, %v767, %v769
        %v771 = vrot.slane %v627, 1
        %v772 = vrot.slane %v628, 1
        %v773 = vsel %vm710, %v771, %v772
        %v774 = vrot.slane %v629, 1
        %v775 = vsel %vm710, %v772, %v774
        %v776 = vrot.slane %v630, 1
        %v777 = vrot.slane %v631, 1
        %v778 = vsel %vm710, %v776, %v777
        %v779 = vrot.slane %v632, 1
        %v780 = vsel %vm710, %v777, %v779
        %v781 = vrot.slane %v633, 1
        %v782 = vrot.slane %v634, 1
        %v783 = vsel %vm710, %v781, %v782
        %v784 = vrot.slane %v635, 1
        %v785 = vsel %vm710, %v782, %v784
        %v786 = vrot.slane %v636, 1
        %v787 = vrot.slane %v637, 1
        %v788 = vsel %vm710, %v786, %v787
        %v789 = vrot.slane %v638, 1
        %v790 = vsel %vm710, %v787, %v789
        %v823 = vpack.c.bf16 %v715, %v713
        %v824 = vpack.c.bf16 %v720, %v718
        %v825 = vpack.c.bf16 %v725, %v723
        %v826 = vpack.c.bf16 %v730, %v728
        %v827 = vpack.c.bf16 %v735, %v733
        %v828 = vpack.c.bf16 %v740, %v738
        %v829 = vpack.c.bf16 %v745, %v743
        %v830 = vpack.c.bf16 %v750, %v748
        %v831 = vpack.c.bf16 %v755, %v753
        %v832 = vpack.c.bf16 %v760, %v758
        %v833 = vpack.c.bf16 %v765, %v763
        %v834 = vpack.c.bf16 %v770, %v768
        %v835 = vpack.c.bf16 %v775, %v773
        %v836 = vpack.c.bf16 %v780, %v778
        %v837 = vpack.c.bf16 %v785, %v783
        %v838 = vpack.c.bf16 %v790, %v788
        %s839 = scalar_lea.vmem %s1, 2
        %v840 = vld [vmem:[%s839] sm:$0x3]
        %vm841 = vcmask 23552
        %v843 = vsel %vm841, %v823, 0
        %v846 = vsel %vm841, %v824, 0
        %v849 = vsel %vm841, %v825, 0
        %v852 = vsel %vm841, %v826, 0
        %v855 = vsel %vm841, %v827, 0
        %v858 = vsel %vm841, %v828, 0
        %v861 = vsel %vm841, %v829, 0
        %v864 = vsel %vm841, %v830, 0
        %v867 = vsel %vm841, %v831, 0
        %v870 = vsel %vm841, %v832, 0
        %v873 = vsel %vm841, %v833, 0
        %v876 = vsel %vm841, %v834, 0
        %v879 = vsel %vm841, %v835, 0
        %v882 = vsel %vm841, %v836, 0
        %v885 = vsel %vm841, %v837, 0
        %v888 = vsel %vm841, %v838, 0
        %vm890 = vcmask 1040384
        %vm891 = vcmask 1041408
        %v892 = vsel %vm890, 4294967295, 65535
        %v893 = vsel %vm891, %v892, 0
        %v895 = vand.u32 %v840, %v893
        %897 = vmatpush.bf16.msra.mxu0 0
        %898 = vmatpush.bf16.msra.mxu0 0
        %899 = vmatpush.bf16.msra.mxu0 0
        %900 = vmatpush.bf16.msra.mxu0 0
        %901 = vmatpush.bf16.msra.mxu0 0
        %902 = vmatpush.bf16.msra.mxu0 0
        %903 = vmatpush.bf16.msra.mxu0 0
        %904 = vmatpush.bf16.msra.mxu0 %v895
        %905 = vmatmul.bf16.gmra.mxu0 %v843
        %v906 = vpop.f32.mrf.mxu0
        %v907 = vadd.f32 0.0, %v906
        %v908 = vpop.f32.mrf.mxu0
        %v909 = vadd.f32 0.0, %v908
        %910 = vmatmul.bf16.gmra.mxu0 %v846
        %v911 = vpop.f32.mrf.mxu0
        %v912 = vadd.f32 0.0, %v911
        %v913 = vpop.f32.mrf.mxu0
        %v914 = vadd.f32 0.0, %v913
        %915 = vmatmul.bf16.gmra.mxu0 %v849
        %v916 = vpop.f32.mrf.mxu0
        %v917 = vadd.f32 0.0, %v916
        %v918 = vpop.f32.mrf.mxu0
        %v919 = vadd.f32 0.0, %v918
        %920 = vmatmul.bf16.gmra.mxu0 %v852
        %v921 = vpop.f32.mrf.mxu0
        %v922 = vadd.f32 0.0, %v921
        %v923 = vpop.f32.mrf.mxu0
        %v924 = vadd.f32 0.0, %v923
        %925 = vmatmul.bf16.gmra.mxu0 %v855
        %v926 = vpop.f32.mrf.mxu0
        %v927 = vadd.f32 0.0, %v926
        %v928 = vpop.f32.mrf.mxu0
        %v929 = vadd.f32 0.0, %v928
        %930 = vmatmul.bf16.gmra.mxu0 %v858
        %v931 = vpop.f32.mrf.mxu0
        %v932 = vadd.f32 0.0, %v931
        %v933 = vpop.f32.mrf.mxu0
        %v934 = vadd.f32 0.0, %v933
        %935 = vmatmul.bf16.gmra.mxu0 %v861
        %v936 = vpop.f32.mrf.mxu0
        %v937 = vadd.f32 0.0, %v936
        %v938 = vpop.f32.mrf.mxu0
        %v939 = vadd.f32 0.0, %v938
        %940 = vmatmul.bf16.gmra.mxu0 %v864
        %v941 = vpop.f32.mrf.mxu0
        %v942 = vadd.f32 0.0, %v941
        %v943 = vpop.f32.mrf.mxu0
        %v944 = vadd.f32 0.0, %v943
        %945 = vmatmul.bf16.gmra.mxu0 %v867
        %v946 = vpop.f32.mrf.mxu0
        %v947 = vadd.f32 0.0, %v946
        %v948 = vpop.f32.mrf.mxu0
        %v949 = vadd.f32 0.0, %v948
        %950 = vmatmul.bf16.gmra.mxu0 %v870
        %v951 = vpop.f32.mrf.mxu0
        %v952 = vadd.f32 0.0, %v951
        %v953 = vpop.f32.mrf.mxu0
        %v954 = vadd.f32 0.0, %v953
        %955 = vmatmul.bf16.gmra.mxu0 %v873
        %v956 = vpop.f32.mrf.mxu0
        %v957 = vadd.f32 0.0, %v956
        %v958 = vpop.f32.mrf.mxu0
        %v959 = vadd.f32 0.0, %v958
        %960 = vmatmul.bf16.gmra.mxu0 %v876
        %v961 = vpop.f32.mrf.mxu0
        %v962 = vadd.f32 0.0, %v961
        %v963 = vpop.f32.mrf.mxu0
        %v964 = vadd.f32 0.0, %v963
        %965 = vmatmul.bf16.gmra.mxu0 %v879
        %v966 = vpop.f32.mrf.mxu0
        %v967 = vadd.f32 0.0, %v966
        %v968 = vpop.f32.mrf.mxu0
        %v969 = vadd.f32 0.0, %v968
        %970 = vmatmul.bf16.gmra.mxu0 %v882
        %v971 = vpop.f32.mrf.mxu0
        %v972 = vadd.f32 0.0, %v971
        %v973 = vpop.f32.mrf.mxu0
        %v974 = vadd.f32 0.0, %v973
        %975 = vmatmul.bf16.gmra.mxu0 %v885
        %v976 = vpop.f32.mrf.mxu0
        %v977 = vadd.f32 0.0, %v976
        %v978 = vpop.f32.mrf.mxu0
        %v979 = vadd.f32 0.0, %v978
        %980 = vmatmul.bf16.gmra.mxu0 %v888
        %v981 = vpop.f32.mrf.mxu0
        %v982 = vadd.f32 0.0, %v981
        %v983 = vpop.f32.mrf.mxu0
        %v984 = vadd.f32 0.0, %v983
        %985 = vdwg.mxu0
        %v987 = vsel %vm841, %v645, 0
        %v990 = vsel %vm841, %v646, 0
        %v993 = vsel %vm841, %v647, 0
        %v996 = vsel %vm841, %v648, 0
        %v999 = vsel %vm841, %v649, 0
        %v1002 = vsel %vm841, %v650, 0
        %v1005 = vsel %vm841, %v651, 0
        %v1008 = vsel %vm841, %v652, 0
        %v1011 = vsel %vm841, %v653, 0
        %v1014 = vsel %vm841, %v654, 0
        %v1017 = vsel %vm841, %v655, 0
        %v1020 = vsel %vm841, %v656, 0
        %v1023 = vsel %vm841, %v657, 0
        %v1026 = vsel %vm841, %v658, 0
        %v1029 = vsel %vm841, %v659, 0
        %v1032 = vsel %vm841, %v660, 0
        %v1035 = vand.u32 %v661, %v893
        %1037 = vmatpush.bf16.msra.mxu0 0
        %1038 = vmatpush.bf16.msra.mxu0 0
        %1039 = vmatpush.bf16.msra.mxu0 0
        %1040 = vmatpush.bf16.msra.mxu0 0
        %1041 = vmatpush.bf16.msra.mxu0 0
        %1042 = vmatpush.bf16.msra.mxu0 0
        %1043 = vmatpush.bf16.msra.mxu0 0
        %1044 = vmatpush.bf16.msra.mxu0 %v1035
        %1045 = vmatmul.bf16.gmra.mxu0 %v987
        %v1046 = vpop.f32.mrf.mxu0
        %v1047 = vadd.f32 %v907, %v1046
        %v1048 = vpop.f32.mrf.mxu0
        %v1049 = vadd.f32 %v909, %v1048
        %1050 = vmatmul.bf16.gmra.mxu0 %v990
        %v1051 = vpop.f32.mrf.mxu0
        %v1052 = vadd.f32 %v912, %v1051
        %v1053 = vpop.f32.mrf.mxu0
        %v1054 = vadd.f32 %v914, %v1053
        %1055 = vmatmul.bf16.gmra.mxu0 %v993
        %v1056 = vpop.f32.mrf.mxu0
        %v1057 = vadd.f32 %v917, %v1056
        %v1058 = vpop.f32.mrf.mxu0
        %v1059 = vadd.f32 %v919, %v1058
        %1060 = vmatmul.bf16.gmra.mxu0 %v996
        %v1061 = vpop.f32.mrf.mxu0
        %v1062 = vadd.f32 %v922, %v1061
        %v1063 = vpop.f32.mrf.mxu0
        %v1064 = vadd.f32 %v924, %v1063
        %1065 = vmatmul.bf16.gmra.mxu0 %v999
        %v1066 = vpop.f32.mrf.mxu0
        %v1067 = vadd.f32 %v927, %v1066
        %v1068 = vpop.f32.mrf.mxu0
        %v1069 = vadd.f32 %v929, %v1068
        %1070 = vmatmul.bf16.gmra.mxu0 %v1002
        %v1071 = vpop.f32.mrf.mxu0
        %v1072 = vadd.f32 %v932, %v1071
        %v1073 = vpop.f32.mrf.mxu0
        %v1074 = vadd.f32 %v934, %v1073
        %1075 = vmatmul.bf16.gmra.mxu0 %v1005
        %v1076 = vpop.f32.mrf.mxu0
        %v1077 = vadd.f32 %v937, %v1076
        %v1078 = vpop.f32.mrf.mxu0
        %v1079 = vadd.f32 %v939, %v1078
        %1080 = vmatmul.bf16.gmra.mxu0 %v1008
        %v1081 = vpop.f32.mrf.mxu0
        %v1082 = vadd.f32 %v942, %v1081
        %v1083 = vpop.f32.mrf.mxu0
        %v1084 = vadd.f32 %v944, %v1083
        %1085 = vmatmul.bf16.gmra.mxu0 %v1011
        %v1086 = vpop.f32.mrf.mxu0
        %v1087 = vadd.f32 %v947, %v1086
        %v1088 = vpop.f32.mrf.mxu0
        %v1089 = vadd.f32 %v949, %v1088
        %1090 = vmatmul.bf16.gmra.mxu0 %v1014
        %v1091 = vpop.f32.mrf.mxu0
        %v1092 = vadd.f32 %v952, %v1091
        %v1093 = vpop.f32.mrf.mxu0
        %v1094 = vadd.f32 %v954, %v1093
        %1095 = vmatmul.bf16.gmra.mxu0 %v1017
        %v1096 = vpop.f32.mrf.mxu0
        %v1097 = vadd.f32 %v957, %v1096
        %v1098 = vpop.f32.mrf.mxu0
        %v1099 = vadd.f32 %v959, %v1098
        %1100 = vmatmul.bf16.gmra.mxu0 %v1020
        %v1101 = vpop.f32.mrf.mxu0
        %v1102 = vadd.f32 %v962, %v1101
        %v1103 = vpop.f32.mrf.mxu0
        %v1104 = vadd.f32 %v964, %v1103
        %1105 = vmatmul.bf16.gmra.mxu0 %v1023
        %v1106 = vpop.f32.mrf.mxu0
        %v1107 = vadd.f32 %v967, %v1106
        %v1108 = vpop.f32.mrf.mxu0
        %v1109 = vadd.f32 %v969, %v1108
        %1110 = vmatmul.bf16.gmra.mxu0 %v1026
        %v1111 = vpop.f32.mrf.mxu0
        %v1112 = vadd.f32 %v972, %v1111
        %v1113 = vpop.f32.mrf.mxu0
        %v1114 = vadd.f32 %v974, %v1113
        %1115 = vmatmul.bf16.gmra.mxu0 %v1029
        %v1116 = vpop.f32.mrf.mxu0
        %v1117 = vadd.f32 %v977, %v1116
        %v1118 = vpop.f32.mrf.mxu0
        %v1119 = vadd.f32 %v979, %v1118
        %1120 = vmatmul.bf16.gmra.mxu0 %v1032
        %v1121 = vpop.f32.mrf.mxu0
        %v1122 = vadd.f32 %v982, %v1121
        %v1123 = vpop.f32.mrf.mxu0
        %v1124 = vadd.f32 %v984, %v1123
        %1125 = vdwg.mxu0
        %vm1126 = vcmask 1045504
        %v1127 = vrot.slane %v591, 2
        %v1128 = vrot.slane %v592, 2
        %v1129 = vsel %vm1126, %v1127, %v1128
        %v1130 = vrot.slane %v593, 2
        %v1131 = vsel %vm1126, %v1128, %v1130
        %v1132 = vrot.slane %v594, 2
        %v1133 = vrot.slane %v595, 2
        %v1134 = vsel %vm1126, %v1132, %v1133
        %v1135 = vrot.slane %v596, 2
        %v1136 = vsel %vm1126, %v1133, %v1135
        %v1137 = vrot.slane %v597, 2
        %v1138 = vrot.slane %v598, 2
        %v1139 = vsel %vm1126, %v1137, %v1138
        %v1140 = vrot.slane %v599, 2
        %v1141 = vsel %vm1126, %v1138, %v1140
        %v1142 = vrot.slane %v600, 2
        %v1143 = vrot.slane %v601, 2
        %v1144 = vsel %vm1126, %v1142, %v1143
        %v1145 = vrot.slane %v602, 2
        %v1146 = vsel %vm1126, %v1143, %v1145
        %v1147 = vrot.slane %v603, 2
        %v1148 = vrot.slane %v604, 2
        %v1149 = vsel %vm1126, %v1147, %v1148
        %v1150 = vrot.slane %v605, 2
        %v1151 = vsel %vm1126, %v1148, %v1150
        %v1152 = vrot.slane %v606, 2
        %v1153 = vrot.slane %v607, 2
        %v1154 = vsel %vm1126, %v1152, %v1153
        %v1155 = vrot.slane %v608, 2
        %v1156 = vsel %vm1126, %v1153, %v1155
        %v1157 = vrot.slane %v609, 2
        %v1158 = vrot.slane %v610, 2
        %v1159 = vsel %vm1126, %v1157, %v1158
        %v1160 = vrot.slane %v611, 2
        %v1161 = vsel %vm1126, %v1158, %v1160
        %v1162 = vrot.slane %v612, 2
        %v1163 = vrot.slane %v613, 2
        %v1164 = vsel %vm1126, %v1162, %v1163
        %v1165 = vrot.slane %v614, 2
        %v1166 = vsel %vm1126, %v1163, %v1165
        %v1167 = vrot.slane %v615, 2
        %v1168 = vrot.slane %v616, 2
        %v1169 = vsel %vm1126, %v1167, %v1168
        %v1170 = vrot.slane %v617, 2
        %v1171 = vsel %vm1126, %v1168, %v1170
        %v1172 = vrot.slane %v618, 2
        %v1173 = vrot.slane %v619, 2
        %v1174 = vsel %vm1126, %v1172, %v1173
        %v1175 = vrot.slane %v620, 2
        %v1176 = vsel %vm1126, %v1173, %v1175
        %v1177 = vrot.slane %v621, 2
        %v1178 = vrot.slane %v622, 2
        %v1179 = vsel %vm1126, %v1177, %v1178
        %v1180 = vrot.slane %v623, 2
        %v1181 = vsel %vm1126, %v1178, %v1180
        %v1182 = vrot.slane %v624, 2
        %v1183 = vrot.slane %v625, 2
        %v1184 = vsel %vm1126, %v1182, %v1183
        %v1185 = vrot.slane %v626, 2
        %v1186 = vsel %vm1126, %v1183, %v1185
        %v1187 = vrot.slane %v627, 2
        %v1188 = vrot.slane %v628, 2
        %v1189 = vsel %vm1126, %v1187, %v1188
        %v1190 = vrot.slane %v629, 2
        %v1191 = vsel %vm1126, %v1188, %v1190
        %v1192 = vrot.slane %v630, 2
        %v1193 = vrot.slane %v631, 2
        %v1194 = vsel %vm1126, %v1192, %v1193
        %v1195 = vrot.slane %v632, 2
        %v1196 = vsel %vm1126, %v1193, %v1195
        %v1197 = vrot.slane %v633, 2
        %v1198 = vrot.slane %v634, 2
        %v1199 = vsel %vm1126, %v1197, %v1198
        %v1200 = vrot.slane %v635, 2
        %v1201 = vsel %vm1126, %v1198, %v1200
        %v1202 = vrot.slane %v636, 2
        %v1203 = vrot.slane %v637, 2
        %v1204 = vsel %vm1126, %v1202, %v1203
        %v1205 = vrot.slane %v638, 2
        %v1206 = vsel %vm1126, %v1203, %v1205
        %v1239 = vpack.c.bf16 %v1131, %v1129
        %v1240 = vpack.c.bf16 %v1136, %v1134
        %v1241 = vpack.c.bf16 %v1141, %v1139
        %v1242 = vpack.c.bf16 %v1146, %v1144
        %v1243 = vpack.c.bf16 %v1151, %v1149
        %v1244 = vpack.c.bf16 %v1156, %v1154
        %v1245 = vpack.c.bf16 %v1161, %v1159
        %v1246 = vpack.c.bf16 %v1166, %v1164
        %v1247 = vpack.c.bf16 %v1171, %v1169
        %v1248 = vpack.c.bf16 %v1176, %v1174
        %v1249 = vpack.c.bf16 %v1181, %v1179
        %v1250 = vpack.c.bf16 %v1186, %v1184
        %v1251 = vpack.c.bf16 %v1191, %v1189
        %v1252 = vpack.c.bf16 %v1196, %v1194
        %v1253 = vpack.c.bf16 %v1201, %v1199
        %v1254 = vpack.c.bf16 %v1206, %v1204
        %s1255 = scalar_lea.vmem %s1, 4
        %v1256 = vld [vmem:[%s1255] sm:$0x3]
        %v1258 = vsel %vm841, %v1239, 0
        %v1261 = vsel %vm841, %v1240, 0
        %v1264 = vsel %vm841, %v1241, 0
        %v1267 = vsel %vm841, %v1242, 0
        %v1270 = vsel %vm841, %v1243, 0
        %v1273 = vsel %vm841, %v1244, 0
        %v1276 = vsel %vm841, %v1245, 0
        %v1279 = vsel %vm841, %v1246, 0
        %v1282 = vsel %vm841, %v1247, 0
        %v1285 = vsel %vm841, %v1248, 0
        %v1288 = vsel %vm841, %v1249, 0
        %v1291 = vsel %vm841, %v1250, 0
        %v1294 = vsel %vm841, %v1251, 0
        %v1297 = vsel %vm841, %v1252, 0
        %v1300 = vsel %vm841, %v1253, 0
        %v1303 = vsel %vm841, %v1254, 0
        %v1306 = vand.u32 %v1256, %v893
        %1308 = vmatpush.bf16.msra.mxu0 0
        %1309 = vmatpush.bf16.msra.mxu0 0
        %1310 = vmatpush.bf16.msra.mxu0 0
        %1311 = vmatpush.bf16.msra.mxu0 0
        %1312 = vmatpush.bf16.msra.mxu0 0
        %1313 = vmatpush.bf16.msra.mxu0 0
        %1314 = vmatpush.bf16.msra.mxu0 0
        %1315 = vmatpush.bf16.msra.mxu0 %v1306
        %1316 = vmatmul.bf16.gmra.mxu0 %v1258
        %v1317 = vpop.f32.mrf.mxu0
        %v1318 = vadd.f32 0.0, %v1317
        %v1319 = vpop.f32.mrf.mxu0
        %v1320 = vadd.f32 0.0, %v1319
        %1321 = vmatmul.bf16.gmra.mxu0 %v1261
        %v1322 = vpop.f32.mrf.mxu0
        %v1323 = vadd.f32 0.0, %v1322
        %v1324 = vpop.f32.mrf.mxu0
        %v1325 = vadd.f32 0.0, %v1324
        %1326 = vmatmul.bf16.gmra.mxu0 %v1264
        %v1327 = vpop.f32.mrf.mxu0
        %v1328 = vadd.f32 0.0, %v1327
        %v1329 = vpop.f32.mrf.mxu0
        %v1330 = vadd.f32 0.0, %v1329
        %1331 = vmatmul.bf16.gmra.mxu0 %v1267
        %v1332 = vpop.f32.mrf.mxu0
        %v1333 = vadd.f32 0.0, %v1332
        %v1334 = vpop.f32.mrf.mxu0
        %v1335 = vadd.f32 0.0, %v1334
        %1336 = vmatmul.bf16.gmra.mxu0 %v1270
        %v1337 = vpop.f32.mrf.mxu0
        %v1338 = vadd.f32 0.0, %v1337
        %v1339 = vpop.f32.mrf.mxu0
        %v1340 = vadd.f32 0.0, %v1339
        %1341 = vmatmul.bf16.gmra.mxu0 %v1273
        %v1342 = vpop.f32.mrf.mxu0
        %v1343 = vadd.f32 0.0, %v1342
        %v1344 = vpop.f32.mrf.mxu0
        %v1345 = vadd.f32 0.0, %v1344
        %1346 = vmatmul.bf16.gmra.mxu0 %v1276
        %v1347 = vpop.f32.mrf.mxu0
        %v1348 = vadd.f32 0.0, %v1347
        %v1349 = vpop.f32.mrf.mxu0
        %v1350 = vadd.f32 0.0, %v1349
        %1351 = vmatmul.bf16.gmra.mxu0 %v1279
        %v1352 = vpop.f32.mrf.mxu0
        %v1353 = vadd.f32 0.0, %v1352
        %v1354 = vpop.f32.mrf.mxu0
        %v1355 = vadd.f32 0.0, %v1354
        %1356 = vmatmul.bf16.gmra.mxu0 %v1282
        %v1357 = vpop.f32.mrf.mxu0
        %v1358 = vadd.f32 0.0, %v1357
        %v1359 = vpop.f32.mrf.mxu0
        %v1360 = vadd.f32 0.0, %v1359
        %1361 = vmatmul.bf16.gmra.mxu0 %v1285
        %v1362 = vpop.f32.mrf.mxu0
        %v1363 = vadd.f32 0.0, %v1362
        %v1364 = vpop.f32.mrf.mxu0
        %v1365 = vadd.f32 0.0, %v1364
        %1366 = vmatmul.bf16.gmra.mxu0 %v1288
        %v1367 = vpop.f32.mrf.mxu0
        %v1368 = vadd.f32 0.0, %v1367
        %v1369 = vpop.f32.mrf.mxu0
        %v1370 = vadd.f32 0.0, %v1369
        %1371 = vmatmul.bf16.gmra.mxu0 %v1291
        %v1372 = vpop.f32.mrf.mxu0
        %v1373 = vadd.f32 0.0, %v1372
        %v1374 = vpop.f32.mrf.mxu0
        %v1375 = vadd.f32 0.0, %v1374
        %1376 = vmatmul.bf16.gmra.mxu0 %v1294
        %v1377 = vpop.f32.mrf.mxu0
        %v1378 = vadd.f32 0.0, %v1377
        %v1379 = vpop.f32.mrf.mxu0
        %v1380 = vadd.f32 0.0, %v1379
        %1381 = vmatmul.bf16.gmra.mxu0 %v1297
        %v1382 = vpop.f32.mrf.mxu0
        %v1383 = vadd.f32 0.0, %v1382
        %v1384 = vpop.f32.mrf.mxu0
        %v1385 = vadd.f32 0.0, %v1384
        %1386 = vmatmul.bf16.gmra.mxu0 %v1300
        %v1387 = vpop.f32.mrf.mxu0
        %v1388 = vadd.f32 0.0, %v1387
        %v1389 = vpop.f32.mrf.mxu0
        %v1390 = vadd.f32 0.0, %v1389
        %1391 = vmatmul.bf16.gmra.mxu0 %v1303
        %v1392 = vpop.f32.mrf.mxu0
        %v1393 = vadd.f32 0.0, %v1392
        %v1394 = vpop.f32.mrf.mxu0
        %v1395 = vadd.f32 0.0, %v1394
        %1396 = vdwg.mxu0
        %v1397 = vadd.f32 %v1047, %v1318
        %v1398 = vadd.f32 %v1049, %v1320
        %v1399 = vadd.f32 %v1052, %v1323
        %v1400 = vadd.f32 %v1054, %v1325
        %v1401 = vadd.f32 %v1057, %v1328
        %v1402 = vadd.f32 %v1059, %v1330
        %v1403 = vadd.f32 %v1062, %v1333
        %v1404 = vadd.f32 %v1064, %v1335
        %v1405 = vadd.f32 %v1067, %v1338
        %v1406 = vadd.f32 %v1069, %v1340
        %v1407 = vadd.f32 %v1072, %v1343
        %v1408 = vadd.f32 %v1074, %v1345
        %v1409 = vadd.f32 %v1077, %v1348
        %v1410 = vadd.f32 %v1079, %v1350
        %v1411 = vadd.f32 %v1082, %v1353
        %v1412 = vadd.f32 %v1084, %v1355
        %v1413 = vadd.f32 %v1087, %v1358
        %v1414 = vadd.f32 %v1089, %v1360
        %v1415 = vadd.f32 %v1092, %v1363
        %v1416 = vadd.f32 %v1094, %v1365
        %v1417 = vadd.f32 %v1097, %v1368
        %v1418 = vadd.f32 %v1099, %v1370
        %v1419 = vadd.f32 %v1102, %v1373
        %v1420 = vadd.f32 %v1104, %v1375
        %v1421 = vadd.f32 %v1107, %v1378
        %v1422 = vadd.f32 %v1109, %v1380
        %v1423 = vadd.f32 %v1112, %v1383
        %v1424 = vadd.f32 %v1114, %v1385
        %v1425 = vadd.f32 %v1117, %v1388
        %v1426 = vadd.f32 %v1119, %v1390
        %v1427 = vadd.f32 %v1122, %v1393
        %v1428 = vadd.f32 %v1124, %v1395
        %v1429 = vpack.c.bf16 %v640, %v639
        %s1430 = scalar_lea.vmem %s1, 6
        %v1431 = vld [vmem:[%s1430] sm:$0x3]
        %v1433 = vsel %vm841, %v1429, 0
        %v1436 = vand.u32 %v1431, %v893
        %1438 = vmatpush.bf16.msra.mxu0 0
        %1439 = vmatpush.bf16.msra.mxu0 0
        %1440 = vmatpush.bf16.msra.mxu0 0
        %1441 = vmatpush.bf16.msra.mxu0 0
        %1442 = vmatpush.bf16.msra.mxu0 0
        %1443 = vmatpush.bf16.msra.mxu0 0
        %1444 = vmatpush.bf16.msra.mxu0 0
        %1445 = vmatpush.bf16.msra.mxu0 %v1436
        %1446 = vmatmul.bf16.gmra.mxu0 %v990
        %v1447 = vpop.f32.mrf.mxu0
        %v1448 = vadd.f32 0.0, %v1447
        %v1449 = vpop.f32.mrf.mxu0
        %v1450 = vadd.f32 0.0, %v1449
        %1451 = vmatmul.bf16.gmra.mxu0 %v993
        %v1452 = vpop.f32.mrf.mxu0
        %v1453 = vadd.f32 0.0, %v1452
        %v1454 = vpop.f32.mrf.mxu0
        %v1455 = vadd.f32 0.0, %v1454
        %1456 = vmatmul.bf16.gmra.mxu0 %v996
        %v1457 = vpop.f32.mrf.mxu0
        %v1458 = vadd.f32 0.0, %v1457
        %v1459 = vpop.f32.mrf.mxu0
        %v1460 = vadd.f32 0.0, %v1459
        %1461 = vmatmul.bf16.gmra.mxu0 %v999
        %v1462 = vpop.f32.mrf.mxu0
        %v1463 = vadd.f32 0.0, %v1462
        %v1464 = vpop.f32.mrf.mxu0
        %v1465 = vadd.f32 0.0, %v1464
        %1466 = vmatmul.bf16.gmra.mxu0 %v1002
        %v1467 = vpop.f32.mrf.mxu0
        %v1468 = vadd.f32 0.0, %v1467
        %v1469 = vpop.f32.mrf.mxu0
        %v1470 = vadd.f32 0.0, %v1469
        %1471 = vmatmul.bf16.gmra.mxu0 %v1005
        %v1472 = vpop.f32.mrf.mxu0
        %v1473 = vadd.f32 0.0, %v1472
        %v1474 = vpop.f32.mrf.mxu0
        %v1475 = vadd.f32 0.0, %v1474
        %1476 = vmatmul.bf16.gmra.mxu0 %v1008
        %v1477 = vpop.f32.mrf.mxu0
        %v1478 = vadd.f32 0.0, %v1477
        %v1479 = vpop.f32.mrf.mxu0
        %v1480 = vadd.f32 0.0, %v1479
        %1481 = vmatmul.bf16.gmra.mxu0 %v1011
        %v1482 = vpop.f32.mrf.mxu0
        %v1483 = vadd.f32 0.0, %v1482
        %v1484 = vpop.f32.mrf.mxu0
        %v1485 = vadd.f32 0.0, %v1484
        %1486 = vmatmul.bf16.gmra.mxu0 %v1014
        %v1487 = vpop.f32.mrf.mxu0
        %v1488 = vadd.f32 0.0, %v1487
        %v1489 = vpop.f32.mrf.mxu0
        %v1490 = vadd.f32 0.0, %v1489
        %1491 = vmatmul.bf16.gmra.mxu0 %v1017
        %v1492 = vpop.f32.mrf.mxu0
        %v1493 = vadd.f32 0.0, %v1492
        %v1494 = vpop.f32.mrf.mxu0
        %v1495 = vadd.f32 0.0, %v1494
        %1496 = vmatmul.bf16.gmra.mxu0 %v1020
        %v1497 = vpop.f32.mrf.mxu0
        %v1498 = vadd.f32 0.0, %v1497
        %v1499 = vpop.f32.mrf.mxu0
        %v1500 = vadd.f32 0.0, %v1499
        %1501 = vmatmul.bf16.gmra.mxu0 %v1023
        %v1502 = vpop.f32.mrf.mxu0
        %v1503 = vadd.f32 0.0, %v1502
        %v1504 = vpop.f32.mrf.mxu0
        %v1505 = vadd.f32 0.0, %v1504
        %1506 = vmatmul.bf16.gmra.mxu0 %v1026
        %v1507 = vpop.f32.mrf.mxu0
        %v1508 = vadd.f32 0.0, %v1507
        %v1509 = vpop.f32.mrf.mxu0
        %v1510 = vadd.f32 0.0, %v1509
        %1511 = vmatmul.bf16.gmra.mxu0 %v1029
        %v1512 = vpop.f32.mrf.mxu0
        %v1513 = vadd.f32 0.0, %v1512
        %v1514 = vpop.f32.mrf.mxu0
        %v1515 = vadd.f32 0.0, %v1514
        %1516 = vmatmul.bf16.gmra.mxu0 %v1032
        %v1517 = vpop.f32.mrf.mxu0
        %v1518 = vadd.f32 0.0, %v1517
        %v1519 = vpop.f32.mrf.mxu0
        %v1520 = vadd.f32 0.0, %v1519
        %1521 = vmatmul.bf16.gmra.mxu0 %v1433
        %v1522 = vpop.f32.mrf.mxu0
        %v1523 = vadd.f32 0.0, %v1522
        %v1524 = vpop.f32.mrf.mxu0
        %v1525 = vadd.f32 0.0, %v1524
        %1526 = vdwg.mxu0
        %v1527 = vadd.f32 %v1397, %v1448
        %v1528 = vadd.f32 %v1398, %v1450
        %v1529 = vadd.f32 %v1399, %v1453
        %v1530 = vadd.f32 %v1400, %v1455
        %v1531 = vadd.f32 %v1401, %v1458
        %v1532 = vadd.f32 %v1402, %v1460
        %v1533 = vadd.f32 %v1403, %v1463
        %v1534 = vadd.f32 %v1404, %v1465
        %v1535 = vadd.f32 %v1405, %v1468
        %v1536 = vadd.f32 %v1406, %v1470
        %v1537 = vadd.f32 %v1407, %v1473
        %v1538 = vadd.f32 %v1408, %v1475
        %v1539 = vadd.f32 %v1409, %v1478
        %v1540 = vadd.f32 %v1410, %v1480
        %v1541 = vadd.f32 %v1411, %v1483
        %v1542 = vadd.f32 %v1412, %v1485
        %v1543 = vadd.f32 %v1413, %v1488
        %v1544 = vadd.f32 %v1414, %v1490
        %v1545 = vadd.f32 %v1415, %v1493
        %v1546 = vadd.f32 %v1416, %v1495
        %v1547 = vadd.f32 %v1417, %v1498
        %v1548 = vadd.f32 %v1418, %v1500
        %v1549 = vadd.f32 %v1419, %v1503
        %v1550 = vadd.f32 %v1420, %v1505
        %v1551 = vadd.f32 %v1421, %v1508
        %v1552 = vadd.f32 %v1422, %v1510
        %v1553 = vadd.f32 %v1423, %v1513
        %v1554 = vadd.f32 %v1424, %v1515
        %v1555 = vadd.f32 %v1425, %v1518
        %v1556 = vadd.f32 %v1426, %v1520
        %v1557 = vadd.f32 %v1427, %v1523
        %v1558 = vadd.f32 %v1428, %v1525
        %v1562 = vrot.slane %v639, 1
        %v1563 = vrot.slane %v640, 1
        %v1564 = vsel %vm710, %v1562, %v1563
        %v1565 = vrot.slane %v641, 1
        %v1566 = vsel %vm710, %v1563, %v1565
        %v1569 = vpack.c.bf16 %v1566, %v1564
        %s1570 = scalar_lea.vmem %s1, 8
        %v1571 = vld [vmem:[%s1570] sm:$0x3]
        %v1573 = vsel %vm841, %v1569, 0
        %v1576 = vand.u32 %v1571, %v893
        %1578 = vmatpush.bf16.msra.mxu0 0
        %1579 = vmatpush.bf16.msra.mxu0 0
        %1580 = vmatpush.bf16.msra.mxu0 0
        %1581 = vmatpush.bf16.msra.mxu0 0
        %1582 = vmatpush.bf16.msra.mxu0 0
        %1583 = vmatpush.bf16.msra.mxu0 0
        %1584 = vmatpush.bf16.msra.mxu0 0
        %1585 = vmatpush.bf16.msra.mxu0 %v1576
        %1586 = vmatmul.bf16.gmra.mxu0 %v846
        %v1587 = vpop.f32.mrf.mxu0
        %v1588 = vadd.f32 0.0, %v1587
        %v1589 = vpop.f32.mrf.mxu0
        %v1590 = vadd.f32 0.0, %v1589
        %1591 = vmatmul.bf16.gmra.mxu0 %v849
        %v1592 = vpop.f32.mrf.mxu0
        %v1593 = vadd.f32 0.0, %v1592
        %v1594 = vpop.f32.mrf.mxu0
        %v1595 = vadd.f32 0.0, %v1594
        %1596 = vmatmul.bf16.gmra.mxu0 %v852
        %v1597 = vpop.f32.mrf.mxu0
        %v1598 = vadd.f32 0.0, %v1597
        %v1599 = vpop.f32.mrf.mxu0
        %v1600 = vadd.f32 0.0, %v1599
        %1601 = vmatmul.bf16.gmra.mxu0 %v855
        %v1602 = vpop.f32.mrf.mxu0
        %v1603 = vadd.f32 0.0, %v1602
        %v1604 = vpop.f32.mrf.mxu0
        %v1605 = vadd.f32 0.0, %v1604
        %1606 = vmatmul.bf16.gmra.mxu0 %v858
        %v1607 = vpop.f32.mrf.mxu0
        %v1608 = vadd.f32 0.0, %v1607
        %v1609 = vpop.f32.mrf.mxu0
        %v1610 = vadd.f32 0.0, %v1609
        %1611 = vmatmul.bf16.gmra.mxu0 %v861
        %v1612 = vpop.f32.mrf.mxu0
        %v1613 = vadd.f32 0.0, %v1612
        %v1614 = vpop.f32.mrf.mxu0
        %v1615 = vadd.f32 0.0, %v1614
        %1616 = vmatmul.bf16.gmra.mxu0 %v864
        %v1617 = vpop.f32.mrf.mxu0
        %v1618 = vadd.f32 0.0, %v1617
        %v1619 = vpop.f32.mrf.mxu0
        %v1620 = vadd.f32 0.0, %v1619
        %1621 = vmatmul.bf16.gmra.mxu0 %v867
        %v1622 = vpop.f32.mrf.mxu0
        %v1623 = vadd.f32 0.0, %v1622
        %v1624 = vpop.f32.mrf.mxu0
        %v1625 = vadd.f32 0.0, %v1624
        %1626 = vmatmul.bf16.gmra.mxu0 %v870
        %v1627 = vpop.f32.mrf.mxu0
        %v1628 = vadd.f32 0.0, %v1627
        %v1629 = vpop.f32.mrf.mxu0
        %v1630 = vadd.f32 0.0, %v1629
        %1631 = vmatmul.bf16.gmra.mxu0 %v873
        %v1632 = vpop.f32.mrf.mxu0
        %v1633 = vadd.f32 0.0, %v1632
        %v1634 = vpop.f32.mrf.mxu0
        %v1635 = vadd.f32 0.0, %v1634
        %1636 = vmatmul.bf16.gmra.mxu0 %v876
        %v1637 = vpop.f32.mrf.mxu0
        %v1638 = vadd.f32 0.0, %v1637
        %v1639 = vpop.f32.mrf.mxu0
        %v1640 = vadd.f32 0.0, %v1639
        %1641 = vmatmul.bf16.gmra.mxu0 %v879
        %v1642 = vpop.f32.mrf.mxu0
        %v1643 = vadd.f32 0.0, %v1642
        %v1644 = vpop.f32.mrf.mxu0
        %v1645 = vadd.f32 0.0, %v1644
        %1646 = vmatmul.bf16.gmra.mxu0 %v882
        %v1647 = vpop.f32.mrf.mxu0
        %v1648 = vadd.f32 0.0, %v1647
        %v1649 = vpop.f32.mrf.mxu0
        %v1650 = vadd.f32 0.0, %v1649
        %1651 = vmatmul.bf16.gmra.mxu0 %v885
        %v1652 = vpop.f32.mrf.mxu0
        %v1653 = vadd.f32 0.0, %v1652
        %v1654 = vpop.f32.mrf.mxu0
        %v1655 = vadd.f32 0.0, %v1654
        %1656 = vmatmul.bf16.gmra.mxu0 %v888
        %v1657 = vpop.f32.mrf.mxu0
        %v1658 = vadd.f32 0.0, %v1657
        %v1659 = vpop.f32.mrf.mxu0
        %v1660 = vadd.f32 0.0, %v1659
        %1661 = vmatmul.bf16.gmra.mxu0 %v1573
        %v1662 = vpop.f32.mrf.mxu0
        %v1663 = vadd.f32 0.0, %v1662
        %v1664 = vpop.f32.mrf.mxu0
        %v1665 = vadd.f32 0.0, %v1664
        %1666 = vdwg.mxu0
        %v1667 = vadd.f32 %v1527, %v1588
        %v1668 = vadd.f32 %v1528, %v1590
        %v1669 = vadd.f32 %v1529, %v1593
        %v1670 = vadd.f32 %v1530, %v1595
        %v1671 = vadd.f32 %v1531, %v1598
        %v1672 = vadd.f32 %v1532, %v1600
        %v1673 = vadd.f32 %v1533, %v1603
        %v1674 = vadd.f32 %v1534, %v1605
        %v1675 = vadd.f32 %v1535, %v1608
        %v1676 = vadd.f32 %v1536, %v1610
        %v1677 = vadd.f32 %v1537, %v1613
        %v1678 = vadd.f32 %v1538, %v1615
        %v1679 = vadd.f32 %v1539, %v1618
        %v1680 = vadd.f32 %v1540, %v1620
        %v1681 = vadd.f32 %v1541, %v1623
        %v1682 = vadd.f32 %v1542, %v1625
        %v1683 = vadd.f32 %v1543, %v1628
        %v1684 = vadd.f32 %v1544, %v1630
        %v1685 = vadd.f32 %v1545, %v1633
        %v1686 = vadd.f32 %v1546, %v1635
        %v1687 = vadd.f32 %v1547, %v1638
        %v1688 = vadd.f32 %v1548, %v1640
        %v1689 = vadd.f32 %v1549, %v1643
        %v1690 = vadd.f32 %v1550, %v1645
        %v1691 = vadd.f32 %v1551, %v1648
        %v1692 = vadd.f32 %v1552, %v1650
        %v1693 = vadd.f32 %v1553, %v1653
        %v1694 = vadd.f32 %v1554, %v1655
        %v1695 = vadd.f32 %v1555, %v1658
        %v1696 = vadd.f32 %v1556, %v1660
        %v1697 = vadd.f32 %v1557, %v1663
        %v1698 = vadd.f32 %v1558, %v1665
        %v1699 = vrot.slane %v639, 2
        %v1700 = vrot.slane %v640, 2
        %v1701 = vsel %vm1126, %v1699, %v1700
        %v1702 = vrot.slane %v641, 2
        %v1703 = vsel %vm1126, %v1700, %v1702
        %v1706 = vpack.c.bf16 %v1703, %v1701
        %s1707 = scalar_lea.vmem %s1, 10
        %v1708 = vld [vmem:[%s1707] sm:$0x3]
        %v1710 = vsel %vm841, %v1706, 0
        %v1713 = vand.u32 %v1708, %v893
        %1715 = vmatpush.bf16.msra.mxu0 0
        %1716 = vmatpush.bf16.msra.mxu0 0
        %1717 = vmatpush.bf16.msra.mxu0 0
        %1718 = vmatpush.bf16.msra.mxu0 0
        %1719 = vmatpush.bf16.msra.mxu0 0
        %1720 = vmatpush.bf16.msra.mxu0 0
        %1721 = vmatpush.bf16.msra.mxu0 0
        %1722 = vmatpush.bf16.msra.mxu0 %v1713
        %1723 = vmatmul.bf16.gmra.mxu0 %v1261
        %v1724 = vpop.f32.mrf.mxu0
        %v1725 = vadd.f32 0.0, %v1724
        %v1726 = vpop.f32.mrf.mxu0
        %v1727 = vadd.f32 0.0, %v1726
        %1728 = vmatmul.bf16.gmra.mxu0 %v1264
        %v1729 = vpop.f32.mrf.mxu0
        %v1730 = vadd.f32 0.0, %v1729
        %v1731 = vpop.f32.mrf.mxu0
        %v1732 = vadd.f32 0.0, %v1731
        %1733 = vmatmul.bf16.gmra.mxu0 %v1267
        %v1734 = vpop.f32.mrf.mxu0
        %v1735 = vadd.f32 0.0, %v1734
        %v1736 = vpop.f32.mrf.mxu0
        %v1737 = vadd.f32 0.0, %v1736
        %1738 = vmatmul.bf16.gmra.mxu0 %v1270
        %v1739 = vpop.f32.mrf.mxu0
        %v1740 = vadd.f32 0.0, %v1739
        %v1741 = vpop.f32.mrf.mxu0
        %v1742 = vadd.f32 0.0, %v1741
        %1743 = vmatmul.bf16.gmra.mxu0 %v1273
        %v1744 = vpop.f32.mrf.mxu0
        %v1745 = vadd.f32 0.0, %v1744
        %v1746 = vpop.f32.mrf.mxu0
        %v1747 = vadd.f32 0.0, %v1746
        %1748 = vmatmul.bf16.gmra.mxu0 %v1276
        %v1749 = vpop.f32.mrf.mxu0
        %v1750 = vadd.f32 0.0, %v1749
        %v1751 = vpop.f32.mrf.mxu0
        %v1752 = vadd.f32 0.0, %v1751
        %1753 = vmatmul.bf16.gmra.mxu0 %v1279
        %v1754 = vpop.f32.mrf.mxu0
        %v1755 = vadd.f32 0.0, %v1754
        %v1756 = vpop.f32.mrf.mxu0
        %v1757 = vadd.f32 0.0, %v1756
        %1758 = vmatmul.bf16.gmra.mxu0 %v1282
        %v1759 = vpop.f32.mrf.mxu0
        %v1760 = vadd.f32 0.0, %v1759
        %v1761 = vpop.f32.mrf.mxu0
        %v1762 = vadd.f32 0.0, %v1761
        %1763 = vmatmul.bf16.gmra.mxu0 %v1285
        %v1764 = vpop.f32.mrf.mxu0
        %v1765 = vadd.f32 0.0, %v1764
        %v1766 = vpop.f32.mrf.mxu0
        %v1767 = vadd.f32 0.0, %v1766
        %1768 = vmatmul.bf16.gmra.mxu0 %v1288
        %v1769 = vpop.f32.mrf.mxu0
        %v1770 = vadd.f32 0.0, %v1769
        %v1771 = vpop.f32.mrf.mxu0
        %v1772 = vadd.f32 0.0, %v1771
        %1773 = vmatmul.bf16.gmra.mxu0 %v1291
        %v1774 = vpop.f32.mrf.mxu0
        %v1775 = vadd.f32 0.0, %v1774
        %v1776 = vpop.f32.mrf.mxu0
        %v1777 = vadd.f32 0.0, %v1776
        %1778 = vmatmul.bf16.gmra.mxu0 %v1294
        %v1779 = vpop.f32.mrf.mxu0
        %v1780 = vadd.f32 0.0, %v1779
        %v1781 = vpop.f32.mrf.mxu0
        %v1782 = vadd.f32 0.0, %v1781
        %1783 = vmatmul.bf16.gmra.mxu0 %v1297
        %v1784 = vpop.f32.mrf.mxu0
        %v1785 = vadd.f32 0.0, %v1784
        %v1786 = vpop.f32.mrf.mxu0
        %v1787 = vadd.f32 0.0, %v1786
        %1788 = vmatmul.bf16.gmra.mxu0 %v1300
        %v1789 = vpop.f32.mrf.mxu0
        %v1790 = vadd.f32 0.0, %v1789
        %v1791 = vpop.f32.mrf.mxu0
        %v1792 = vadd.f32 0.0, %v1791
        %1793 = vmatmul.bf16.gmra.mxu0 %v1303
        %v1794 = vpop.f32.mrf.mxu0
        %v1795 = vadd.f32 0.0, %v1794
        %v1796 = vpop.f32.mrf.mxu0
        %v1797 = vadd.f32 0.0, %v1796
        %1798 = vmatmul.bf16.gmra.mxu0 %v1710
        %v1799 = vpop.f32.mrf.mxu0
        %v1800 = vadd.f32 0.0, %v1799
        %v1801 = vpop.f32.mrf.mxu0
        %v1802 = vadd.f32 0.0, %v1801
        %1803 = vdwg.mxu0
        %v1804 = vadd.f32 %v1667, %v1725
        %v1805 = vadd.f32 %v1668, %v1727
        %v1806 = vadd.f32 %v1669, %v1730
        %v1807 = vadd.f32 %v1670, %v1732
        %v1808 = vadd.f32 %v1671, %v1735
        %v1809 = vadd.f32 %v1672, %v1737
        %v1810 = vadd.f32 %v1673, %v1740
        %v1811 = vadd.f32 %v1674, %v1742
        %v1812 = vadd.f32 %v1675, %v1745
        %v1813 = vadd.f32 %v1676, %v1747
        %v1814 = vadd.f32 %v1677, %v1750
        %v1815 = vadd.f32 %v1678, %v1752
        %v1816 = vadd.f32 %v1679, %v1755
        %v1817 = vadd.f32 %v1680, %v1757
        %v1818 = vadd.f32 %v1681, %v1760
        %v1819 = vadd.f32 %v1682, %v1762
        %v1820 = vadd.f32 %v1683, %v1765
        %v1821 = vadd.f32 %v1684, %v1767
        %v1822 = vadd.f32 %v1685, %v1770
        %v1823 = vadd.f32 %v1686, %v1772
        %v1824 = vadd.f32 %v1687, %v1775
        %v1825 = vadd.f32 %v1688, %v1777
        %v1826 = vadd.f32 %v1689, %v1780
        %v1827 = vadd.f32 %v1690, %v1782
        %v1828 = vadd.f32 %v1691, %v1785
        %v1829 = vadd.f32 %v1692, %v1787
        %v1830 = vadd.f32 %v1693, %v1790
        %v1831 = vadd.f32 %v1694, %v1792
        %v1832 = vadd.f32 %v1695, %v1795
        %v1833 = vadd.f32 %v1696, %v1797
        %v1834 = vadd.f32 %v1697, %v1800
        %v1835 = vadd.f32 %v1698, %v1802
        %v1836 = vpack.c.bf16 %v643, %v642
        %s1837 = scalar_lea.vmem %s1, 12
        %v1838 = vld [vmem:[%s1837] sm:$0x3]
        %v1840 = vsel %vm841, %v1836, 0
        %v1843 = vand.u32 %v1838, %v893
        %1845 = vmatpush.bf16.msra.mxu0 0
        %1846 = vmatpush.bf16.msra.mxu0 0
        %1847 = vmatpush.bf16.msra.mxu0 0
        %1848 = vmatpush.bf16.msra.mxu0 0
        %1849 = vmatpush.bf16.msra.mxu0 0
        %1850 = vmatpush.bf16.msra.mxu0 0
        %1851 = vmatpush.bf16.msra.mxu0 0
        %1852 = vmatpush.bf16.msra.mxu0 %v1843
        %1853 = vmatmul.bf16.gmra.mxu0 %v993
        %v1854 = vpop.f32.mrf.mxu0
        %v1855 = vadd.f32 0.0, %v1854
        %v1856 = vpop.f32.mrf.mxu0
        %v1857 = vadd.f32 0.0, %v1856
        %1858 = vmatmul.bf16.gmra.mxu0 %v996
        %v1859 = vpop.f32.mrf.mxu0
        %v1860 = vadd.f32 0.0, %v1859
        %v1861 = vpop.f32.mrf.mxu0
        %v1862 = vadd.f32 0.0, %v1861
        %1863 = vmatmul.bf16.gmra.mxu0 %v999
        %v1864 = vpop.f32.mrf.mxu0
        %v1865 = vadd.f32 0.0, %v1864
        %v1866 = vpop.f32.mrf.mxu0
        %v1867 = vadd.f32 0.0, %v1866
        %1868 = vmatmul.bf16.gmra.mxu0 %v1002
        %v1869 = vpop.f32.mrf.mxu0
        %v1870 = vadd.f32 0.0, %v1869
        %v1871 = vpop.f32.mrf.mxu0
        %v1872 = vadd.f32 0.0, %v1871
        %1873 = vmatmul.bf16.gmra.mxu0 %v1005
        %v1874 = vpop.f32.mrf.mxu0
        %v1875 = vadd.f32 0.0, %v1874
        %v1876 = vpop.f32.mrf.mxu0
        %v1877 = vadd.f32 0.0, %v1876
        %1878 = vmatmul.bf16.gmra.mxu0 %v1008
        %v1879 = vpop.f32.mrf.mxu0
        %v1880 = vadd.f32 0.0, %v1879
        %v1881 = vpop.f32.mrf.mxu0
        %v1882 = vadd.f32 0.0, %v1881
        %1883 = vmatmul.bf16.gmra.mxu0 %v1011
        %v1884 = vpop.f32.mrf.mxu0
        %v1885 = vadd.f32 0.0, %v1884
        %v1886 = vpop.f32.mrf.mxu0
        %v1887 = vadd.f32 0.0, %v1886
        %1888 = vmatmul.bf16.gmra.mxu0 %v1014
        %v1889 = vpop.f32.mrf.mxu0
        %v1890 = vadd.f32 0.0, %v1889
        %v1891 = vpop.f32.mrf.mxu0
        %v1892 = vadd.f32 0.0, %v1891
        %1893 = vmatmul.bf16.gmra.mxu0 %v1017
        %v1894 = vpop.f32.mrf.mxu0
        %v1895 = vadd.f32 0.0, %v1894
        %v1896 = vpop.f32.mrf.mxu0
        %v1897 = vadd.f32 0.0, %v1896
        %1898 = vmatmul.bf16.gmra.mxu0 %v1020
        %v1899 = vpop.f32.mrf.mxu0
        %v1900 = vadd.f32 0.0, %v1899
        %v1901 = vpop.f32.mrf.mxu0
        %v1902 = vadd.f32 0.0, %v1901
        %1903 = vmatmul.bf16.gmra.mxu0 %v1023
        %v1904 = vpop.f32.mrf.mxu0
        %v1905 = vadd.f32 0.0, %v1904
        %v1906 = vpop.f32.mrf.mxu0
        %v1907 = vadd.f32 0.0, %v1906
        %1908 = vmatmul.bf16.gmra.mxu0 %v1026
        %v1909 = vpop.f32.mrf.mxu0
        %v1910 = vadd.f32 0.0, %v1909
        %v1911 = vpop.f32.mrf.mxu0
        %v1912 = vadd.f32 0.0, %v1911
        %1913 = vmatmul.bf16.gmra.mxu0 %v1029
        %v1914 = vpop.f32.mrf.mxu0
        %v1915 = vadd.f32 0.0, %v1914
        %v1916 = vpop.f32.mrf.mxu0
        %v1917 = vadd.f32 0.0, %v1916
        %1918 = vmatmul.bf16.gmra.mxu0 %v1032
        %v1919 = vpop.f32.mrf.mxu0
        %v1920 = vadd.f32 0.0, %v1919
        %v1921 = vpop.f32.mrf.mxu0
        %v1922 = vadd.f32 0.0, %v1921
        %1923 = vmatmul.bf16.gmra.mxu0 %v1433
        %v1924 = vpop.f32.mrf.mxu0
        %v1925 = vadd.f32 0.0, %v1924
        %v1926 = vpop.f32.mrf.mxu0
        %v1927 = vadd.f32 0.0, %v1926
        %1928 = vmatmul.bf16.gmra.mxu0 %v1840
        %v1929 = vpop.f32.mrf.mxu0
        %v1930 = vadd.f32 0.0, %v1929
        %v1931 = vpop.f32.mrf.mxu0
        %v1932 = vadd.f32 0.0, %v1931
        %1933 = vdwg.mxu0
        %v1934 = vadd.f32 %v1804, %v1855
        %v1935 = vadd.f32 %v1805, %v1857
        %v1936 = vadd.f32 %v1806, %v1860
        %v1937 = vadd.f32 %v1807, %v1862
        %v1938 = vadd.f32 %v1808, %v1865
        %v1939 = vadd.f32 %v1809, %v1867
        %v1940 = vadd.f32 %v1810, %v1870
        %v1941 = vadd.f32 %v1811, %v1872
        %v1942 = vadd.f32 %v1812, %v1875
        %v1943 = vadd.f32 %v1813, %v1877
        %v1944 = vadd.f32 %v1814, %v1880
        %v1945 = vadd.f32 %v1815, %v1882
        %v1946 = vadd.f32 %v1816, %v1885
        %v1947 = vadd.f32 %v1817, %v1887
        %v1948 = vadd.f32 %v1818, %v1890
        %v1949 = vadd.f32 %v1819, %v1892
        %v1950 = vadd.f32 %v1820, %v1895
        %v1951 = vadd.f32 %v1821, %v1897
        %v1952 = vadd.f32 %v1822, %v1900
        %v1953 = vadd.f32 %v1823, %v1902
        %v1954 = vadd.f32 %v1824, %v1905
        %v1955 = vadd.f32 %v1825, %v1907
        %v1956 = vadd.f32 %v1826, %v1910
        %v1957 = vadd.f32 %v1827, %v1912
        %v1958 = vadd.f32 %v1828, %v1915
        %v1959 = vadd.f32 %v1829, %v1917
        %v1960 = vadd.f32 %v1830, %v1920
        %v1961 = vadd.f32 %v1831, %v1922
        %v1962 = vadd.f32 %v1832, %v1925
        %v1963 = vadd.f32 %v1833, %v1927
        %v1964 = vadd.f32 %v1834, %v1930
        %v1965 = vadd.f32 %v1835, %v1932
        %v1969 = vrot.slane %v642, 1
        %v1970 = vrot.slane %v643, 1
        %v1971 = vsel %vm710, %v1969, %v1970
        %v1972 = vrot.slane %v644, 1
        %v1973 = vsel %vm710, %v1970, %v1972
        %v1976 = vpack.c.bf16 %v1973, %v1971
        %s1977 = scalar_lea.vmem %s1, 14
        %v1978 = vld [vmem:[%s1977] sm:$0x3]
        %v1980 = vsel %vm841, %v1976, 0
        %v1983 = vand.u32 %v1978, %v893
        %1985 = vmatpush.bf16.msra.mxu0 0
        %1986 = vmatpush.bf16.msra.mxu0 0
        %1987 = vmatpush.bf16.msra.mxu0 0
        %1988 = vmatpush.bf16.msra.mxu0 0
        %1989 = vmatpush.bf16.msra.mxu0 0
        %1990 = vmatpush.bf16.msra.mxu0 0
        %1991 = vmatpush.bf16.msra.mxu0 0
        %1992 = vmatpush.bf16.msra.mxu0 %v1983
        %1993 = vmatmul.bf16.gmra.mxu0 %v849
        %v1994 = vpop.f32.mrf.mxu0
        %v1995 = vadd.f32 0.0, %v1994
        %v1996 = vpop.f32.mrf.mxu0
        %v1997 = vadd.f32 0.0, %v1996
        %1998 = vmatmul.bf16.gmra.mxu0 %v852
        %v1999 = vpop.f32.mrf.mxu0
        %v2000 = vadd.f32 0.0, %v1999
        %v2001 = vpop.f32.mrf.mxu0
        %v2002 = vadd.f32 0.0, %v2001
        %2003 = vmatmul.bf16.gmra.mxu0 %v855
        %v2004 = vpop.f32.mrf.mxu0
        %v2005 = vadd.f32 0.0, %v2004
        %v2006 = vpop.f32.mrf.mxu0
        %v2007 = vadd.f32 0.0, %v2006
        %2008 = vmatmul.bf16.gmra.mxu0 %v858
        %v2009 = vpop.f32.mrf.mxu0
        %v2010 = vadd.f32 0.0, %v2009
        %v2011 = vpop.f32.mrf.mxu0
        %v2012 = vadd.f32 0.0, %v2011
        %2013 = vmatmul.bf16.gmra.mxu0 %v861
        %v2014 = vpop.f32.mrf.mxu0
        %v2015 = vadd.f32 0.0, %v2014
        %v2016 = vpop.f32.mrf.mxu0
        %v2017 = vadd.f32 0.0, %v2016
        %2018 = vmatmul.bf16.gmra.mxu0 %v864
        %v2019 = vpop.f32.mrf.mxu0
        %v2020 = vadd.f32 0.0, %v2019
        %v2021 = vpop.f32.mrf.mxu0
        %v2022 = vadd.f32 0.0, %v2021
        %2023 = vmatmul.bf16.gmra.mxu0 %v867
        %v2024 = vpop.f32.mrf.mxu0
        %v2025 = vadd.f32 0.0, %v2024
        %v2026 = vpop.f32.mrf.mxu0
        %v2027 = vadd.f32 0.0, %v2026
        %2028 = vmatmul.bf16.gmra.mxu0 %v870
        %v2029 = vpop.f32.mrf.mxu0
        %v2030 = vadd.f32 0.0, %v2029
        %v2031 = vpop.f32.mrf.mxu0
        %v2032 = vadd.f32 0.0, %v2031
        %2033 = vmatmul.bf16.gmra.mxu0 %v873
        %v2034 = vpop.f32.mrf.mxu0
        %v2035 = vadd.f32 0.0, %v2034
        %v2036 = vpop.f32.mrf.mxu0
        %v2037 = vadd.f32 0.0, %v2036
        %2038 = vmatmul.bf16.gmra.mxu0 %v876
        %v2039 = vpop.f32.mrf.mxu0
        %v2040 = vadd.f32 0.0, %v2039
        %v2041 = vpop.f32.mrf.mxu0
        %v2042 = vadd.f32 0.0, %v2041
        %2043 = vmatmul.bf16.gmra.mxu0 %v879
        %v2044 = vpop.f32.mrf.mxu0
        %v2045 = vadd.f32 0.0, %v2044
        %v2046 = vpop.f32.mrf.mxu0
        %v2047 = vadd.f32 0.0, %v2046
        %2048 = vmatmul.bf16.gmra.mxu0 %v882
        %v2049 = vpop.f32.mrf.mxu0
        %v2050 = vadd.f32 0.0, %v2049
        %v2051 = vpop.f32.mrf.mxu0
        %v2052 = vadd.f32 0.0, %v2051
        %2053 = vmatmul.bf16.gmra.mxu0 %v885
        %v2054 = vpop.f32.mrf.mxu0
        %v2055 = vadd.f32 0.0, %v2054
        %v2056 = vpop.f32.mrf.mxu0
        %v2057 = vadd.f32 0.0, %v2056
        %2058 = vmatmul.bf16.gmra.mxu0 %v888
        %v2059 = vpop.f32.mrf.mxu0
        %v2060 = vadd.f32 0.0, %v2059
        %v2061 = vpop.f32.mrf.mxu0
        %v2062 = vadd.f32 0.0, %v2061
        %2063 = vmatmul.bf16.gmra.mxu0 %v1573
        %v2064 = vpop.f32.mrf.mxu0
        %v2065 = vadd.f32 0.0, %v2064
        %v2066 = vpop.f32.mrf.mxu0
        %v2067 = vadd.f32 0.0, %v2066
        %2068 = vmatmul.bf16.gmra.mxu0 %v1980
        %v2069 = vpop.f32.mrf.mxu0
        %v2070 = vadd.f32 0.0, %v2069
        %v2071 = vpop.f32.mrf.mxu0
        %v2072 = vadd.f32 0.0, %v2071
        %2073 = vdwg.mxu0
        %v2074 = vadd.f32 %v1934, %v1995
        %v2075 = vadd.f32 %v1935, %v1997
        %v2076 = vadd.f32 %v1936, %v2000
        %v2077 = vadd.f32 %v1937, %v2002
        %v2078 = vadd.f32 %v1938, %v2005
        %v2079 = vadd.f32 %v1939, %v2007
        %v2080 = vadd.f32 %v1940, %v2010
        %v2081 = vadd.f32 %v1941, %v2012
        %v2082 = vadd.f32 %v1942, %v2015
        %v2083 = vadd.f32 %v1943, %v2017
        %v2084 = vadd.f32 %v1944, %v2020
        %v2085 = vadd.f32 %v1945, %v2022
        %v2086 = vadd.f32 %v1946, %v2025
        %v2087 = vadd.f32 %v1947, %v2027
        %v2088 = vadd.f32 %v1948, %v2030
        %v2089 = vadd.f32 %v1949, %v2032
        %v2090 = vadd.f32 %v1950, %v2035
        %v2091 = vadd.f32 %v1951, %v2037
        %v2092 = vadd.f32 %v1952, %v2040
        %v2093 = vadd.f32 %v1953, %v2042
        %v2094 = vadd.f32 %v1954, %v2045
        %v2095 = vadd.f32 %v1955, %v2047
        %v2096 = vadd.f32 %v1956, %v2050
        %v2097 = vadd.f32 %v1957, %v2052
        %v2098 = vadd.f32 %v1958, %v2055
        %v2099 = vadd.f32 %v1959, %v2057
        %v2100 = vadd.f32 %v1960, %v2060
        %v2101 = vadd.f32 %v1961, %v2062
        %v2102 = vadd.f32 %v1962, %v2065
        %v2103 = vadd.f32 %v1963, %v2067
        %v2104 = vadd.f32 %v1964, %v2070
        %v2105 = vadd.f32 %v1965, %v2072
        %v2106 = vrot.slane %v642, 2
        %v2107 = vrot.slane %v643, 2
        %v2108 = vsel %vm1126, %v2106, %v2107
        %v2109 = vrot.slane %v644, 2
        %v2110 = vsel %vm1126, %v2107, %v2109
        %v2113 = vpack.c.bf16 %v2110, %v2108
        %s2114 = scalar_lea.vmem %s1, 16
        %v2115 = vld [vmem:[%s2114] sm:$0x3]
        %v2117 = vsel %vm841, %v2113, 0
        %v2120 = vand.u32 %v2115, %v893
        %2122 = vmatpush.bf16.msra.mxu0 0
        %2123 = vmatpush.bf16.msra.mxu0 0
        %2124 = vmatpush.bf16.msra.mxu0 0
        %2125 = vmatpush.bf16.msra.mxu0 0
        %2126 = vmatpush.bf16.msra.mxu0 0
        %2127 = vmatpush.bf16.msra.mxu0 0
        %2128 = vmatpush.bf16.msra.mxu0 0
        %2129 = vmatpush.bf16.msra.mxu0 %v2120
        %2130 = vmatmul.bf16.gmra.mxu0 %v1264
        %v2131 = vpop.f32.mrf.mxu0
        %v2132 = vadd.f32 0.0, %v2131
        %v2133 = vpop.f32.mrf.mxu0
        %v2134 = vadd.f32 0.0, %v2133
        %2135 = vmatmul.bf16.gmra.mxu0 %v1267
        %v2136 = vpop.f32.mrf.mxu0
        %v2137 = vadd.f32 0.0, %v2136
        %v2138 = vpop.f32.mrf.mxu0
        %v2139 = vadd.f32 0.0, %v2138
        %2140 = vmatmul.bf16.gmra.mxu0 %v1270
        %v2141 = vpop.f32.mrf.mxu0
        %v2142 = vadd.f32 0.0, %v2141
        %v2143 = vpop.f32.mrf.mxu0
        %v2144 = vadd.f32 0.0, %v2143
        %2145 = vmatmul.bf16.gmra.mxu0 %v1273
        %v2146 = vpop.f32.mrf.mxu0
        %v2147 = vadd.f32 0.0, %v2146
        %v2148 = vpop.f32.mrf.mxu0
        %v2149 = vadd.f32 0.0, %v2148
        %2150 = vmatmul.bf16.gmra.mxu0 %v1276
        %v2151 = vpop.f32.mrf.mxu0
        %v2152 = vadd.f32 0.0, %v2151
        %v2153 = vpop.f32.mrf.mxu0
        %v2154 = vadd.f32 0.0, %v2153
        %2155 = vmatmul.bf16.gmra.mxu0 %v1279
        %v2156 = vpop.f32.mrf.mxu0
        %v2157 = vadd.f32 0.0, %v2156
        %v2158 = vpop.f32.mrf.mxu0
        %v2159 = vadd.f32 0.0, %v2158
        %2160 = vmatmul.bf16.gmra.mxu0 %v1282
        %v2161 = vpop.f32.mrf.mxu0
        %v2162 = vadd.f32 0.0, %v2161
        %v2163 = vpop.f32.mrf.mxu0
        %v2164 = vadd.f32 0.0, %v2163
        %2165 = vmatmul.bf16.gmra.mxu0 %v1285
        %v2166 = vpop.f32.mrf.mxu0
        %v2167 = vadd.f32 0.0, %v2166
        %v2168 = vpop.f32.mrf.mxu0
        %v2169 = vadd.f32 0.0, %v2168
        %2170 = vmatmul.bf16.gmra.mxu0 %v1288
        %v2171 = vpop.f32.mrf.mxu0
        %v2172 = vadd.f32 0.0, %v2171
        %v2173 = vpop.f32.mrf.mxu0
        %v2174 = vadd.f32 0.0, %v2173
        %2175 = vmatmul.bf16.gmra.mxu0 %v1291
        %v2176 = vpop.f32.mrf.mxu0
        %v2177 = vadd.f32 0.0, %v2176
        %v2178 = vpop.f32.mrf.mxu0
        %v2179 = vadd.f32 0.0, %v2178
        %2180 = vmatmul.bf16.gmra.mxu0 %v1294
        %v2181 = vpop.f32.mrf.mxu0
        %v2182 = vadd.f32 0.0, %v2181
        %v2183 = vpop.f32.mrf.mxu0
        %v2184 = vadd.f32 0.0, %v2183
        %2185 = vmatmul.bf16.gmra.mxu0 %v1297
        %v2186 = vpop.f32.mrf.mxu0
        %v2187 = vadd.f32 0.0, %v2186
        %v2188 = vpop.f32.mrf.mxu0
        %v2189 = vadd.f32 0.0, %v2188
        %2190 = vmatmul.bf16.gmra.mxu0 %v1300
        %v2191 = vpop.f32.mrf.mxu0
        %v2192 = vadd.f32 0.0, %v2191
        %v2193 = vpop.f32.mrf.mxu0
        %v2194 = vadd.f32 0.0, %v2193
        %2195 = vmatmul.bf16.gmra.mxu0 %v1303
        %v2196 = vpop.f32.mrf.mxu0
        %v2197 = vadd.f32 0.0, %v2196
        %v2198 = vpop.f32.mrf.mxu0
        %v2199 = vadd.f32 0.0, %v2198
        %2200 = vmatmul.bf16.gmra.mxu0 %v1710
        %v2201 = vpop.f32.mrf.mxu0
        %v2202 = vadd.f32 0.0, %v2201
        %v2203 = vpop.f32.mrf.mxu0
        %v2204 = vadd.f32 0.0, %v2203
        %2205 = vmatmul.bf16.gmra.mxu0 %v2117
        %v2206 = vpop.f32.mrf.mxu0
        %v2207 = vadd.f32 0.0, %v2206
        %v2208 = vpop.f32.mrf.mxu0
        %v2209 = vadd.f32 0.0, %v2208
        %2210 = vdwg.mxu0
        %v2211 = vadd.f32 %v2074, %v2132
        %v2212 = vadd.f32 %v2075, %v2134
        %v2213 = vadd.f32 %v2076, %v2137
        %v2214 = vadd.f32 %v2077, %v2139
        %v2215 = vadd.f32 %v2078, %v2142
        %v2216 = vadd.f32 %v2079, %v2144
        %v2217 = vadd.f32 %v2080, %v2147
        %v2218 = vadd.f32 %v2081, %v2149
        %v2219 = vadd.f32 %v2082, %v2152
        %v2220 = vadd.f32 %v2083, %v2154
        %v2221 = vadd.f32 %v2084, %v2157
        %v2222 = vadd.f32 %v2085, %v2159
        %v2223 = vadd.f32 %v2086, %v2162
        %v2224 = vadd.f32 %v2087, %v2164
        %v2225 = vadd.f32 %v2088, %v2167
        %v2226 = vadd.f32 %v2089, %v2169
        %v2227 = vadd.f32 %v2090, %v2172
        %v2228 = vadd.f32 %v2091, %v2174
        %v2229 = vadd.f32 %v2092, %v2177
        %v2230 = vadd.f32 %v2093, %v2179
        %v2231 = vadd.f32 %v2094, %v2182
        %v2232 = vadd.f32 %v2095, %v2184
        %v2233 = vadd.f32 %v2096, %v2187
        %v2234 = vadd.f32 %v2097, %v2189
        %v2235 = vadd.f32 %v2098, %v2192
        %v2236 = vadd.f32 %v2099, %v2194
        %v2237 = vadd.f32 %v2100, %v2197
        %v2238 = vadd.f32 %v2101, %v2199
        %v2239 = vadd.f32 %v2102, %v2202
        %v2240 = vadd.f32 %v2103, %v2204
        %v2241 = vadd.f32 %v2104, %v2207
        %v2242 = vadd.f32 %v2105, %v2209
        %vm2243 = vcmp.ge.f32.partialorder %v2211, 0.0
        %vm2244 = vcmp.ge.f32.partialorder %v2212, 0.0
        %vm2245 = vcmp.ge.f32.partialorder %v2213, 0.0
        %vm2246 = vcmp.ge.f32.partialorder %v2214, 0.0
        %vm2247 = vcmp.ge.f32.partialorder %v2215, 0.0
        %vm2248 = vcmp.ge.f32.partialorder %v2216, 0.0
        %vm2249 = vcmp.ge.f32.partialorder %v2217, 0.0
        %vm2250 = vcmp.ge.f32.partialorder %v2218, 0.0
        %vm2251 = vcmp.ge.f32.partialorder %v2219, 0.0
        %vm2252 = vcmp.ge.f32.partialorder %v2220, 0.0
        %vm2253 = vcmp.ge.f32.partialorder %v2221, 0.0
        %vm2254 = vcmp.ge.f32.partialorder %v2222, 0.0
        %vm2255 = vcmp.ge.f32.partialorder %v2223, 0.0
        %vm2256 = vcmp.ge.f32.partialorder %v2224, 0.0
        %vm2257 = vcmp.ge.f32.partialorder %v2225, 0.0
        %vm2258 = vcmp.ge.f32.partialorder %v2226, 0.0
        %vm2259 = vcmp.ge.f32.partialorder %v2227, 0.0
        %vm2260 = vcmp.ge.f32.partialorder %v2228, 0.0
        %vm2261 = vcmp.ge.f32.partialorder %v2229, 0.0
        %vm2262 = vcmp.ge.f32.partialorder %v2230, 0.0
        %vm2263 = vcmp.ge.f32.partialorder %v2231, 0.0
        %vm2264 = vcmp.ge.f32.partialorder %v2232, 0.0
        %vm2265 = vcmp.ge.f32.partialorder %v2233, 0.0
        %vm2266 = vcmp.ge.f32.partialorder %v2234, 0.0
        %vm2267 = vcmp.ge.f32.partialorder %v2235, 0.0
        %vm2268 = vcmp.ge.f32.partialorder %v2236, 0.0
        %vm2269 = vcmp.ge.f32.partialorder %v2237, 0.0
        %vm2270 = vcmp.ge.f32.partialorder %v2238, 0.0
        %vm2271 = vcmp.ge.f32.partialorder %v2239, 0.0
        %vm2272 = vcmp.ge.f32.partialorder %v2240, 0.0
        %vm2273 = vcmp.ge.f32.partialorder %v2241, 0.0
        %vm2274 = vcmp.ge.f32.partialorder %v2242, 0.0
        %v2275 = vmul.f32 %v2211, 0.2
        %v2276 = vmul.f32 %v2212, 0.2
        %v2277 = vmul.f32 %v2213, 0.2
        %v2278 = vmul.f32 %v2214, 0.2
        %v2279 = vmul.f32 %v2215, 0.2
        %v2280 = vmul.f32 %v2216, 0.2
        %v2281 = vmul.f32 %v2217, 0.2
        %v2282 = vmul.f32 %v2218, 0.2
        %v2283 = vmul.f32 %v2219, 0.2
        %v2284 = vmul.f32 %v2220, 0.2
        %v2285 = vmul.f32 %v2221, 0.2
        %v2286 = vmul.f32 %v2222, 0.2
        %v2287 = vmul.f32 %v2223, 0.2
        %v2288 = vmul.f32 %v2224, 0.2
        %v2289 = vmul.f32 %v2225, 0.2
        %v2290 = vmul.f32 %v2226, 0.2
        %v2291 = vmul.f32 %v2227, 0.2
        %v2292 = vmul.f32 %v2228, 0.2
        %v2293 = vmul.f32 %v2229, 0.2
        %v2294 = vmul.f32 %v2230, 0.2
        %v2295 = vmul.f32 %v2231, 0.2
        %v2296 = vmul.f32 %v2232, 0.2
        %v2297 = vmul.f32 %v2233, 0.2
        %v2298 = vmul.f32 %v2234, 0.2
        %v2299 = vmul.f32 %v2235, 0.2
        %v2300 = vmul.f32 %v2236, 0.2
        %v2301 = vmul.f32 %v2237, 0.2
        %v2302 = vmul.f32 %v2238, 0.2
        %v2303 = vmul.f32 %v2239, 0.2
        %v2304 = vmul.f32 %v2240, 0.2
        %v2305 = vmul.f32 %v2241, 0.2
        %v2306 = vmul.f32 %v2242, 0.2
        %v2307 = vsel %vm2243, %v2211, %v2275
        %v2308 = vsel %vm2244, %v2212, %v2276
        %v2309 = vsel %vm2245, %v2213, %v2277
        %v2310 = vsel %vm2246, %v2214, %v2278
        %v2311 = vsel %vm2247, %v2215, %v2279
        %v2312 = vsel %vm2248, %v2216, %v2280
        %v2313 = vsel %vm2249, %v2217, %v2281
        %v2314 = vsel %vm2250, %v2218, %v2282
        %v2315 = vsel %vm2251, %v2219, %v2283
        %v2316 = vsel %vm2252, %v2220, %v2284
        %v2317 = vsel %vm2253, %v2221, %v2285
        %v2318 = vsel %vm2254, %v2222, %v2286
        %v2319 = vsel %vm2255, %v2223, %v2287
        %v2320 = vsel %vm2256, %v2224, %v2288
        %v2321 = vsel %vm2257, %v2225, %v2289
        %v2322 = vsel %vm2258, %v2226, %v2290
        %v2323 = vsel %vm2259, %v2227, %v2291
        %v2324 = vsel %vm2260, %v2228, %v2292
        %v2325 = vsel %vm2261, %v2229, %v2293
        %v2326 = vsel %vm2262, %v2230, %v2294
        %v2327 = vsel %vm2263, %v2231, %v2295
        %v2328 = vsel %vm2264, %v2232, %v2296
        %v2329 = vsel %vm2265, %v2233, %v2297
        %v2330 = vsel %vm2266, %v2234, %v2298
        %v2331 = vsel %vm2267, %v2235, %v2299
        %v2332 = vsel %vm2268, %v2236, %v2300
        %v2333 = vsel %vm2269, %v2237, %v2301
        %v2334 = vsel %vm2270, %v2238, %v2302
        %v2335 = vsel %vm2271, %v2239, %v2303
        %v2336 = vsel %vm2272, %v2240, %v2304
        %v2337 = vsel %vm2273, %v2241, %v2305
        %v2338 = vsel %vm2274, %v2242, %v2306
        %vm2339 = vcmask 261120
        %v2340 = vsel %vm2339, %v2307, 0.0
        %v2341 = vsel %vm2339, %v2308, 0.0
        %v2342 = vadd.f32 %v2340, %v2341
        %v2343 = vsel %vm2339, %v2309, 0.0
        %v2344 = vadd.f32 %v2342, %v2343
        %v2345 = vsel %vm2339, %v2310, 0.0
        %v2346 = vadd.f32 %v2344, %v2345
        %v2347 = vsel %vm2339, %v2311, 0.0
        %v2348 = vadd.f32 %v2346, %v2347
        %v2349 = vsel %vm2339, %v2312, 0.0
        %v2350 = vadd.f32 %v2348, %v2349
        %v2351 = vsel %vm2339, %v2313, 0.0
        %v2352 = vadd.f32 %v2350, %v2351
        %v2353 = vsel %vm2339, %v2314, 0.0
        %v2354 = vadd.f32 %v2352, %v2353
        %v2355 = vsel %vm2339, %v2315, 0.0
        %v2356 = vadd.f32 %v2354, %v2355
        %v2357 = vsel %vm2339, %v2316, 0.0
        %v2358 = vadd.f32 %v2356, %v2357
        %v2359 = vsel %vm2339, %v2317, 0.0
        %v2360 = vadd.f32 %v2358, %v2359
        %v2361 = vsel %vm2339, %v2318, 0.0
        %v2362 = vadd.f32 %v2360, %v2361
        %v2363 = vsel %vm2339, %v2319, 0.0
        %v2364 = vadd.f32 %v2362, %v2363
        %v2365 = vsel %vm2339, %v2320, 0.0
        %v2366 = vadd.f32 %v2364, %v2365
        %v2367 = vsel %vm2339, %v2321, 0.0
        %v2368 = vadd.f32 %v2366, %v2367
        %v2369 = vsel %vm2339, %v2322, 0.0
        %v2370 = vadd.f32 %v2368, %v2369
        %v2371 = vsel %vm2339, %v2323, 0.0
        %v2372 = vadd.f32 %v2370, %v2371
        %v2373 = vsel %vm2339, %v2324, 0.0
        %v2374 = vadd.f32 %v2372, %v2373
        %v2375 = vsel %vm2339, %v2325, 0.0
        %v2376 = vadd.f32 %v2374, %v2375
        %v2377 = vsel %vm2339, %v2326, 0.0
        %v2378 = vadd.f32 %v2376, %v2377
        %v2379 = vsel %vm2339, %v2327, 0.0
        %v2380 = vadd.f32 %v2378, %v2379
        %v2381 = vsel %vm2339, %v2328, 0.0
        %v2382 = vadd.f32 %v2380, %v2381
        %v2383 = vsel %vm2339, %v2329, 0.0
        %v2384 = vadd.f32 %v2382, %v2383
        %v2385 = vsel %vm2339, %v2330, 0.0
        %v2386 = vadd.f32 %v2384, %v2385
        %v2387 = vsel %vm2339, %v2331, 0.0
        %v2388 = vadd.f32 %v2386, %v2387
        %v2389 = vsel %vm2339, %v2332, 0.0
        %v2390 = vadd.f32 %v2388, %v2389
        %v2391 = vsel %vm2339, %v2333, 0.0
        %v2392 = vadd.f32 %v2390, %v2391
        %v2393 = vsel %vm2339, %v2334, 0.0
        %v2394 = vadd.f32 %v2392, %v2393
        %v2395 = vsel %vm2339, %v2335, 0.0
        %v2396 = vadd.f32 %v2394, %v2395
        %v2397 = vsel %vm2339, %v2336, 0.0
        %v2398 = vadd.f32 %v2396, %v2397
        %v2399 = vsel %vm2339, %v2337, 0.0
        %v2400 = vadd.f32 %v2398, %v2399
        %v2401 = vsel %vm2339, %v2338, 0.0
        %v2402 = vadd.f32 %v2400, %v2401
        %v2403 = vrot.slane %v2402, 4
        %v2404 = vadd.f32 %v2402, %v2403
        %v2405 = vrot.slane %v2404, 2
        %v2406 = vadd.f32 %v2404, %v2405
        %v2407 = vrot.slane %v2406, 1
        %v2408 = vadd.f32 %v2406, %v2407
        %v2409 = vrcp.pop 256.0
        %v2410 = vmul.f32 256.0, %v2409
        %v2411 = vsub.f32 1.0, %v2410
        %v2412 = vmul.f32 %v2409, %v2411
        %v2413 = vadd.f32 %v2409, %v2412
        %vm2414 = vweird.f32 %v2409
        %v2415 = vsel %vm2414, %v2409, %v2413
        %v2416 = vmul.f32 %v2408, %v2415
        %v2417 = vsel %vm2339, %v2307, -inf
        %v2418 = vsel %vm2339, %v2308, -inf
        %v2419 = vsel %vm2339, %v2309, -inf
        %v2420 = vsel %vm2339, %v2310, -inf
        %v2421 = vsel %vm2339, %v2311, -inf
        %v2422 = vmax.f32 %v2417, %v2421
        %v2423 = vsel %vm2339, %v2312, -inf
        %v2424 = vmax.f32 %v2418, %v2423
        %v2425 = vsel %vm2339, %v2313, -inf
        %v2426 = vmax.f32 %v2419, %v2425
        %v2427 = vsel %vm2339, %v2314, -inf
        %v2428 = vmax.f32 %v2420, %v2427
        %v2429 = vsel %vm2339, %v2315, -inf
        %v2430 = vmax.f32 %v2422, %v2429
        %v2431 = vsel %vm2339, %v2316, -inf
        %v2432 = vmax.f32 %v2424, %v2431
        %v2433 = vsel %vm2339, %v2317, -inf
        %v2434 = vmax.f32 %v2426, %v2433
        %v2435 = vsel %vm2339, %v2318, -inf
        %v2436 = vmax.f32 %v2428, %v2435
        %v2437 = vsel %vm2339, %v2319, -inf
        %v2438 = vmax.f32 %v2430, %v2437
        %v2439 = vsel %vm2339, %v2320, -inf
        %v2440 = vmax.f32 %v2432, %v2439
        %v2441 = vsel %vm2339, %v2321, -inf
        %v2442 = vmax.f32 %v2434, %v2441
        %v2443 = vsel %vm2339, %v2322, -inf
        %v2444 = vmax.f32 %v2436, %v2443
        %v2445 = vsel %vm2339, %v2323, -inf
        %v2446 = vmax.f32 %v2438, %v2445
        %v2447 = vsel %vm2339, %v2324, -inf
        %v2448 = vmax.f32 %v2440, %v2447
        %v2449 = vsel %vm2339, %v2325, -inf
        %v2450 = vmax.f32 %v2442, %v2449
        %v2451 = vsel %vm2339, %v2326, -inf
        %v2452 = vmax.f32 %v2444, %v2451
        %v2453 = vsel %vm2339, %v2327, -inf
        %v2454 = vmax.f32 %v2446, %v2453
        %v2455 = vsel %vm2339, %v2328, -inf
        %v2456 = vmax.f32 %v2448, %v2455
        %v2457 = vsel %vm2339, %v2329, -inf
        %v2458 = vmax.f32 %v2450, %v2457
        %v2459 = vsel %vm2339, %v2330, -inf
        %v2460 = vmax.f32 %v2452, %v2459
        %v2461 = vsel %vm2339, %v2331, -inf
        %v2462 = vmax.f32 %v2454, %v2461
        %v2463 = vsel %vm2339, %v2332, -inf
        %v2464 = vmax.f32 %v2456, %v2463
        %v2465 = vsel %vm2339, %v2333, -inf
        %v2466 = vmax.f32 %v2458, %v2465
        %v2467 = vsel %vm2339, %v2334, -inf
        %v2468 = vmax.f32 %v2460, %v2467
        %v2469 = vsel %vm2339, %v2335, -inf
        %v2470 = vmax.f32 %v2462, %v2469
        %v2471 = vsel %vm2339, %v2336, -inf
        %v2472 = vmax.f32 %v2464, %v2471
        %v2473 = vsel %vm2339, %v2337, -inf
        %v2474 = vmax.f32 %v2466, %v2473
        %v2475 = vsel %vm2339, %v2338, -inf
        %v2476 = vmax.f32 %v2468, %v2475
        %v2477 = vmax.f32 %v2470, %v2472
        %v2478 = vmax.f32 %v2474, %v2476
        %v2479 = vmax.f32 %v2477, %v2478
        %v2480 = vrot.slane %v2479, 4
        %v2481 = vmax.f32 %v2479, %v2480
        %v2482 = vrot.slane %v2481, 2
        %v2483 = vmax.f32 %v2481, %v2482
        %v2484 = vrot.slane %v2483, 1
        %v2485 = vmax.f32 %v2483, %v2484
        %v2486 = vlaneseq
        %v2487 = vshrl.u32 %v2486, 7
        %vm2488 = vcmp.eq.s32.totalorder %v2487, 0
        %v2489 = vsel %vm2488, %v2416, %v2485
        %v2490 = vpack.c.bf16 %v2489, %v2489
        %v2491 = vld [vmem:[%s2] sm:$0xf]
        %v2492 = vld [vmem:[%s2 + $0x4] sm:$0xf]
        %v2493 = vld [vmem:[%s2 + $0x8] sm:$0xf]
        %v2494 = vld [vmem:[%s2 + $0xc] sm:$0xf]
        %v2495 = vld [vmem:[%s3] sm:$0x1]
        %v2497 = vperm.slane %v2495, 0
        %v2503 = vunpack.c.l.b16 %v2491
        %v2504 = vunpack.c.l.b16 %v2492
        %v2505 = vunpack.c.l.b16 %v2493
        %v2506 = vunpack.c.l.b16 %v2494
        %v2507 = vpack.c.b16 %v2504, %v2503
        %v2508 = vpack.c.b16 %v2506, %v2505
        %v2512 = vsel %vm2339, %v2490, 0
        %2514 = vmatpush.bf16.msra.mxu0 0
        %2515 = vmatpush.bf16.msra.mxu0 0
        %2516 = vmatpush.bf16.msra.mxu0 0
        %2517 = vmatpush.bf16.msra.mxu0 0
        %2518 = vmatpush.bf16.msra.mxu0 0
        %2519 = vmatpush.bf16.msra.mxu0 0
        %2520 = vmatpush.bf16.msra.mxu0 %v2508
        %2521 = vmatpush.bf16.msra.mxu0 %v2507
        %2522 = vmatmul.bf16.gmra.mxu0 %v2512
        %v2523 = vpop.f32.mrf.mxu0
        %v2524 = vadd.f32 %v2497, %v2523
        %v2525 = vpop.f32.mrf.mxu0
        %2526 = vdwg.mxu0
        %v2527 = vmax.f32 %v2524, 0.0
        %v2528 = vpack.c.bf16 %v2527, %v2527
        %v2529 = vld [vmem:[%s4] sm:$0x1]
        %v2530 = vld [vmem:[%s5] sm:$0x1]
        %v2532 = vperm.slane %v2530, 0
        %vm2534 = vcmask 15360
        %v2536 = vsel %vm2534, %v2528, 0
        %v2539 = vsel %vm890, %v2529, 0
        %2541 = vmatpush.bf16.msra.mxu0 0
        %2542 = vmatpush.bf16.msra.mxu0 0
        %2543 = vmatpush.bf16.msra.mxu0 0
        %2544 = vmatpush.bf16.msra.mxu0 0
        %2545 = vmatpush.bf16.msra.mxu0 0
        %2546 = vmatpush.bf16.msra.mxu0 0
        %2547 = vmatpush.bf16.msra.mxu0 0
        %2548 = vmatpush.bf16.msra.mxu0 %v2539
        %2549 = vmatmul.bf16.gmra.mxu0 %v2536
        %v2550 = vpop.f32.mrf.mxu0
        %v2551 = vadd.f32 %v2532, %v2550
        %v2552 = vpop.f32.mrf.mxu0
        %2553 = vdwg.mxu0
        %v2555 = vrot.slane %v2551, 1
        %v2557 = vadd.f32 %v2551, %v2555
        %v2558 = vsub.f32 0.0, %v2557
        %v2559 = vmul.f32 %v2558, 1.442695
        %v2560 = vpow.pop %v2559
        %v2561 = vadd.f32 %v2560, 1.0
        %v2562 = vrcp.pop %v2561
        %v2563 = vperm.slane %v2562, 0
        %v2564 = vmul.f32 %v2307, %v2563
        %v2565 = vmul.f32 %v2308, %v2563
        %v2566 = vmul.f32 %v2309, %v2563
        %v2567 = vmul.f32 %v2310, %v2563
        %v2568 = vmul.f32 %v2311, %v2563
        %v2569 = vmul.f32 %v2312, %v2563
        %v2570 = vmul.f32 %v2313, %v2563
        %v2571 = vmul.f32 %v2314, %v2563
        %v2572 = vmul.f32 %v2315, %v2563
        %v2573 = vmul.f32 %v2316, %v2563
        %v2574 = vmul.f32 %v2317, %v2563
        %v2575 = vmul.f32 %v2318, %v2563
        %v2576 = vmul.f32 %v2319, %v2563
        %v2577 = vmul.f32 %v2320, %v2563
        %v2578 = vmul.f32 %v2321, %v2563
        %v2579 = vmul.f32 %v2322, %v2563
        %v2580 = vmul.f32 %v2323, %v2563
        %v2581 = vmul.f32 %v2324, %v2563
        %v2582 = vmul.f32 %v2325, %v2563
        %v2583 = vmul.f32 %v2326, %v2563
        %v2584 = vmul.f32 %v2327, %v2563
        %v2585 = vmul.f32 %v2328, %v2563
        %v2586 = vmul.f32 %v2329, %v2563
        %v2587 = vmul.f32 %v2330, %v2563
        %v2588 = vmul.f32 %v2331, %v2563
        %v2589 = vmul.f32 %v2332, %v2563
        %v2590 = vmul.f32 %v2333, %v2563
        %v2591 = vmul.f32 %v2334, %v2563
        %v2592 = vmul.f32 %v2335, %v2563
        %v2593 = vmul.f32 %v2336, %v2563
        %v2594 = vmul.f32 %v2337, %v2563
        %v2595 = vmul.f32 %v2338, %v2563
        %v2596 = vsel %vm2339, %v2564, 0.0
        %2597 = vadd.xlane.f32.xlu0 %v2596
        %v2598 = vpop.xlane.xlu0 %2597
        %v2599 = vsel %vm2339, %v2565, 0.0
        %2600 = vadd.xlane.f32.xlu0 %v2599
        %v2601 = vpop.xlane.xlu0 %2600
        %v2602 = vsel %vm2339, %v2566, 0.0
        %2603 = vadd.xlane.f32.xlu0 %v2602
        %v2604 = vpop.xlane.xlu0 %2603
        %v2605 = vsel %vm2339, %v2567, 0.0
        %2606 = vadd.xlane.f32.xlu0 %v2605
        %v2607 = vpop.xlane.xlu0 %2606
        %v2608 = vsel %vm2339, %v2568, 0.0
        %2609 = vadd.xlane.f32.xlu0 %v2608
        %v2610 = vpop.xlane.xlu0 %2609
        %v2611 = vsel %vm2339, %v2569, 0.0
        %2612 = vadd.xlane.f32.xlu0 %v2611
        %v2613 = vpop.xlane.xlu0 %2612
        %v2614 = vsel %vm2339, %v2570, 0.0
        %2615 = vadd.xlane.f32.xlu0 %v2614
        %v2616 = vpop.xlane.xlu0 %2615
        %v2617 = vsel %vm2339, %v2571, 0.0
        %2618 = vadd.xlane.f32.xlu0 %v2617
        %v2619 = vpop.xlane.xlu0 %2618
        %v2620 = vsel %vm2339, %v2572, 0.0
        %2621 = vadd.xlane.f32.xlu0 %v2620
        %v2622 = vpop.xlane.xlu0 %2621
        %v2623 = vsel %vm2339, %v2573, 0.0
        %2624 = vadd.xlane.f32.xlu0 %v2623
        %v2625 = vpop.xlane.xlu0 %2624
        %v2626 = vsel %vm2339, %v2574, 0.0
        %2627 = vadd.xlane.f32.xlu0 %v2626
        %v2628 = vpop.xlane.xlu0 %2627
        %v2629 = vsel %vm2339, %v2575, 0.0
        %2630 = vadd.xlane.f32.xlu0 %v2629
        %v2631 = vpop.xlane.xlu0 %2630
        %v2632 = vsel %vm2339, %v2576, 0.0
        %2633 = vadd.xlane.f32.xlu0 %v2632
        %v2634 = vpop.xlane.xlu0 %2633
        %v2635 = vsel %vm2339, %v2577, 0.0
        %2636 = vadd.xlane.f32.xlu0 %v2635
        %v2637 = vpop.xlane.xlu0 %2636
        %v2638 = vsel %vm2339, %v2578, 0.0
        %2639 = vadd.xlane.f32.xlu0 %v2638
        %v2640 = vpop.xlane.xlu0 %2639
        %v2641 = vsel %vm2339, %v2579, 0.0
        %2642 = vadd.xlane.f32.xlu0 %v2641
        %v2643 = vpop.xlane.xlu0 %2642
        %v2644 = vsel %vm2339, %v2580, 0.0
        %2645 = vadd.xlane.f32.xlu0 %v2644
        %v2646 = vpop.xlane.xlu0 %2645
        %v2647 = vsel %vm2339, %v2581, 0.0
        %2648 = vadd.xlane.f32.xlu0 %v2647
        %v2649 = vpop.xlane.xlu0 %2648
        %v2650 = vsel %vm2339, %v2582, 0.0
        %2651 = vadd.xlane.f32.xlu0 %v2650
        %v2652 = vpop.xlane.xlu0 %2651
        %v2653 = vsel %vm2339, %v2583, 0.0
        %2654 = vadd.xlane.f32.xlu0 %v2653
        %v2655 = vpop.xlane.xlu0 %2654
        %v2656 = vsel %vm2339, %v2584, 0.0
        %2657 = vadd.xlane.f32.xlu0 %v2656
        %v2658 = vpop.xlane.xlu0 %2657
        %v2659 = vsel %vm2339, %v2585, 0.0
        %2660 = vadd.xlane.f32.xlu0 %v2659
        %v2661 = vpop.xlane.xlu0 %2660
        %v2662 = vsel %vm2339, %v2586, 0.0
        %2663 = vadd.xlane.f32.xlu0 %v2662
        %v2664 = vpop.xlane.xlu0 %2663
        %v2665 = vsel %vm2339, %v2587, 0.0
        %2666 = vadd.xlane.f32.xlu0 %v2665
        %v2667 = vpop.xlane.xlu0 %2666
        %v2668 = vsel %vm2339, %v2588, 0.0
        %2669 = vadd.xlane.f32.xlu0 %v2668
        %v2670 = vpop.xlane.xlu0 %2669
        %v2671 = vsel %vm2339, %v2589, 0.0
        %2672 = vadd.xlane.f32.xlu0 %v2671
        %v2673 = vpop.xlane.xlu0 %2672
        %v2674 = vsel %vm2339, %v2590, 0.0
        %2675 = vadd.xlane.f32.xlu0 %v2674
        %v2676 = vpop.xlane.xlu0 %2675
        %v2677 = vsel %vm2339, %v2591, 0.0
        %2678 = vadd.xlane.f32.xlu0 %v2677
        %v2679 = vpop.xlane.xlu0 %2678
        %v2680 = vsel %vm2339, %v2592, 0.0
        %2681 = vadd.xlane.f32.xlu0 %v2680
        %v2682 = vpop.xlane.xlu0 %2681
        %v2683 = vsel %vm2339, %v2593, 0.0
        %2684 = vadd.xlane.f32.xlu0 %v2683
        %v2685 = vpop.xlane.xlu0 %2684
        %v2686 = vsel %vm2339, %v2594, 0.0
        %2687 = vadd.xlane.f32.xlu0 %v2686
        %v2688 = vpop.xlane.xlu0 %2687
        %v2689 = vsel %vm2339, %v2595, 0.0
        %2690 = vadd.xlane.f32.xlu0 %v2689
        %v2691 = vpop.xlane.xlu0 %2690
        %v2692 = vrcp.pop 32.0
        %v2693 = vmul.f32 32.0, %v2692
        %v2694 = vsub.f32 1.0, %v2693
        %v2695 = vmul.f32 %v2692, %v2694
        %v2696 = vadd.f32 %v2692, %v2695
        %vm2697 = vweird.f32 %v2692
        %v2698 = vsel %vm2697, %v2692, %v2696
        %v2699 = vmul.f32 %v2598, %v2698
        %v2700 = vmul.f32 %v2601, %v2698
        %v2701 = vmul.f32 %v2604, %v2698
        %v2702 = vmul.f32 %v2607, %v2698
        %v2703 = vmul.f32 %v2610, %v2698
        %v2704 = vmul.f32 %v2613, %v2698
        %v2705 = vmul.f32 %v2616, %v2698
        %v2706 = vmul.f32 %v2619, %v2698
        %v2707 = vmul.f32 %v2622, %v2698
        %v2708 = vmul.f32 %v2625, %v2698
        %v2709 = vmul.f32 %v2628, %v2698
        %v2710 = vmul.f32 %v2631, %v2698
        %v2711 = vmul.f32 %v2634, %v2698
        %v2712 = vmul.f32 %v2637, %v2698
        %v2713 = vmul.f32 %v2640, %v2698
        %v2714 = vmul.f32 %v2643, %v2698
        %v2715 = vmul.f32 %v2646, %v2698
        %v2716 = vmul.f32 %v2649, %v2698
        %v2717 = vmul.f32 %v2652, %v2698
        %v2718 = vmul.f32 %v2655, %v2698
        %v2719 = vmul.f32 %v2658, %v2698
        %v2720 = vmul.f32 %v2661, %v2698
        %v2721 = vmul.f32 %v2664, %v2698
        %v2722 = vmul.f32 %v2667, %v2698
        %v2723 = vmul.f32 %v2670, %v2698
        %v2724 = vmul.f32 %v2673, %v2698
        %v2725 = vmul.f32 %v2676, %v2698
        %v2726 = vmul.f32 %v2679, %v2698
        %v2727 = vmul.f32 %v2682, %v2698
        %v2728 = vmul.f32 %v2685, %v2698
        %v2729 = vmul.f32 %v2688, %v2698
        %v2730 = vmul.f32 %v2691, %v2698
        %v2731 = vsel %vm2339, %v2564, -inf
        %2732 = vmax.xlane.f32.xlu0 %v2731
        %v2733 = vpop.xlane.xlu0 %2732
        %v2734 = vsel %vm2339, %v2565, -inf
        %2735 = vmax.xlane.f32.xlu0 %v2734
        %v2736 = vpop.xlane.xlu0 %2735
        %v2737 = vsel %vm2339, %v2566, -inf
        %2738 = vmax.xlane.f32.xlu0 %v2737
        %v2739 = vpop.xlane.xlu0 %2738
        %v2740 = vsel %vm2339, %v2567, -inf
        %2741 = vmax.xlane.f32.xlu0 %v2740
        %v2742 = vpop.xlane.xlu0 %2741
        %v2743 = vsel %vm2339, %v2568, -inf
        %2744 = vmax.xlane.f32.xlu0 %v2743
        %v2745 = vpop.xlane.xlu0 %2744
        %v2746 = vsel %vm2339, %v2569, -inf
        %2747 = vmax.xlane.f32.xlu0 %v2746
        %v2748 = vpop.xlane.xlu0 %2747
        %v2749 = vsel %vm2339, %v2570, -inf
        %2750 = vmax.xlane.f32.xlu0 %v2749
        %v2751 = vpop.xlane.xlu0 %2750
        %v2752 = vsel %vm2339, %v2571, -inf
        %2753 = vmax.xlane.f32.xlu0 %v2752
        %v2754 = vpop.xlane.xlu0 %2753
        %v2755 = vsel %vm2339, %v2572, -inf
        %2756 = vmax.xlane.f32.xlu0 %v2755
        %v2757 = vpop.xlane.xlu0 %2756
        %v2758 = vsel %vm2339, %v2573, -inf
        %2759 = vmax.xlane.f32.xlu0 %v2758
        %v2760 = vpop.xlane.xlu0 %2759
        %v2761 = vsel %vm2339, %v2574, -inf
        %2762 = vmax.xlane.f32.xlu0 %v2761
        %v2763 = vpop.xlane.xlu0 %2762
        %v2764 = vsel %vm2339, %v2575, -inf
        %2765 = vmax.xlane.f32.xlu0 %v2764
        %v2766 = vpop.xlane.xlu0 %2765
        %v2767 = vsel %vm2339, %v2576, -inf
        %2768 = vmax.xlane.f32.xlu0 %v2767
        %v2769 = vpop.xlane.xlu0 %2768
        %v2770 = vsel %vm2339, %v2577, -inf
        %2771 = vmax.xlane.f32.xlu0 %v2770
        %v2772 = vpop.xlane.xlu0 %2771
        %v2773 = vsel %vm2339, %v2578, -inf
        %2774 = vmax.xlane.f32.xlu0 %v2773
        %v2775 = vpop.xlane.xlu0 %2774
        %v2776 = vsel %vm2339, %v2579, -inf
        %2777 = vmax.xlane.f32.xlu0 %v2776
        %v2778 = vpop.xlane.xlu0 %2777
        %v2779 = vsel %vm2339, %v2580, -inf
        %2780 = vmax.xlane.f32.xlu0 %v2779
        %v2781 = vpop.xlane.xlu0 %2780
        %v2782 = vsel %vm2339, %v2581, -inf
        %2783 = vmax.xlane.f32.xlu0 %v2782
        %v2784 = vpop.xlane.xlu0 %2783
        %v2785 = vsel %vm2339, %v2582, -inf
        %2786 = vmax.xlane.f32.xlu0 %v2785
        %v2787 = vpop.xlane.xlu0 %2786
        %v2788 = vsel %vm2339, %v2583, -inf
        %2789 = vmax.xlane.f32.xlu0 %v2788
        %v2790 = vpop.xlane.xlu0 %2789
        %v2791 = vsel %vm2339, %v2584, -inf
        %2792 = vmax.xlane.f32.xlu0 %v2791
        %v2793 = vpop.xlane.xlu0 %2792
        %v2794 = vsel %vm2339, %v2585, -inf
        %2795 = vmax.xlane.f32.xlu0 %v2794
        %v2796 = vpop.xlane.xlu0 %2795
        %v2797 = vsel %vm2339, %v2586, -inf
        %2798 = vmax.xlane.f32.xlu0 %v2797
        %v2799 = vpop.xlane.xlu0 %2798
        %v2800 = vsel %vm2339, %v2587, -inf
        %2801 = vmax.xlane.f32.xlu0 %v2800
        %v2802 = vpop.xlane.xlu0 %2801
        %v2803 = vsel %vm2339, %v2588, -inf
        %2804 = vmax.xlane.f32.xlu0 %v2803
        %v2805 = vpop.xlane.xlu0 %2804
        %v2806 = vsel %vm2339, %v2589, -inf
        %2807 = vmax.xlane.f32.xlu0 %v2806
        %v2808 = vpop.xlane.xlu0 %2807
        %v2809 = vsel %vm2339, %v2590, -inf
        %2810 = vmax.xlane.f32.xlu0 %v2809
        %v2811 = vpop.xlane.xlu0 %2810
        %v2812 = vsel %vm2339, %v2591, -inf
        %2813 = vmax.xlane.f32.xlu0 %v2812
        %v2814 = vpop.xlane.xlu0 %2813
        %v2815 = vsel %vm2339, %v2592, -inf
        %2816 = vmax.xlane.f32.xlu0 %v2815
        %v2817 = vpop.xlane.xlu0 %2816
        %v2818 = vsel %vm2339, %v2593, -inf
        %2819 = vmax.xlane.f32.xlu0 %v2818
        %v2820 = vpop.xlane.xlu0 %2819
        %v2821 = vsel %vm2339, %v2594, -inf
        %2822 = vmax.xlane.f32.xlu0 %v2821
        %v2823 = vpop.xlane.xlu0 %2822
        %v2824 = vsel %vm2339, %v2595, -inf
        %2825 = vmax.xlane.f32.xlu0 %v2824
        %v2826 = vpop.xlane.xlu0 %2825
        %v2827 = vld [vmem:[%s6] sm:$0xff]
        %v2828 = vld [vmem:[%s6 + $0x8] sm:$0xff]
        %v2829 = vld [vmem:[%s6 + $0x10] sm:$0xff]
        %v2830 = vld [vmem:[%s6 + $0x18] sm:$0xff]
        %v2831 = vld [vmem:[%s6 + $0x20] sm:$0xff]
        %v2832 = vld [vmem:[%s6 + $0x28] sm:$0xff]
        %v2833 = vld [vmem:[%s6 + $0x30] sm:$0xff]
        %v2834 = vld [vmem:[%s6 + $0x38] sm:$0xff]
        %v2835 = vld [vmem:[%s6 + $0x40] sm:$0xff]
        %v2836 = vld [vmem:[%s6 + $0x48] sm:$0xff]
        %v2837 = vld [vmem:[%s6 + $0x50] sm:$0xff]
        %v2838 = vld [vmem:[%s6 + $0x58] sm:$0xff]
        %v2839 = vld [vmem:[%s6 + $0x60] sm:$0xff]
        %v2840 = vld [vmem:[%s6 + $0x68] sm:$0xff]
        %v2841 = vld [vmem:[%s6 + $0x70] sm:$0xff]
        %v2842 = vld [vmem:[%s6 + $0x78] sm:$0xff]
        %v2843 = vld [vmem:[%s6 + $0x80] sm:$0xff]
        %v2844 = vld [vmem:[%s6 + $0x88] sm:$0xff]
        %v2845 = vld [vmem:[%s6 + $0x90] sm:$0xff]
        %v2846 = vld [vmem:[%s6 + $0x98] sm:$0xff]
        %v2847 = vld [vmem:[%s6 + $0xa0] sm:$0xff]
        %v2848 = vld [vmem:[%s6 + $0xa8] sm:$0xff]
        %v2849 = vld [vmem:[%s6 + $0xb0] sm:$0xff]
        %v2850 = vld [vmem:[%s6 + $0xb8] sm:$0xff]
        %v2851 = vld [vmem:[%s6 + $0xc0] sm:$0xff]
        %v2852 = vld [vmem:[%s6 + $0xc8] sm:$0xff]
        %v2853 = vld [vmem:[%s6 + $0xd0] sm:$0xff]
        %v2854 = vld [vmem:[%s6 + $0xd8] sm:$0xff]
        %v2855 = vld [vmem:[%s6 + $0xe0] sm:$0xff]
        %v2856 = vld [vmem:[%s6 + $0xe8] sm:$0xff]
        %v2857 = vld [vmem:[%s6 + $0xf0] sm:$0xff]
        %v2858 = vld [vmem:[%s6 + $0xf8] sm:$0xff]
        %v2859 = vld [vmem:[%s6 + $0x100] sm:$0xff]
        %v2860 = vld [vmem:[%s6 + $0x108] sm:$0xff]
        %v2861 = vld [vmem:[%s6 + $0x110] sm:$0xff]
        %v2862 = vld [vmem:[%s6 + $0x118] sm:$0xff]
        %v2863 = vld [vmem:[%s6 + $0x120] sm:$0xff]
        %v2864 = vld [vmem:[%s6 + $0x128] sm:$0xff]
        %v2865 = vld [vmem:[%s6 + $0x130] sm:$0xff]
        %v2866 = vld [vmem:[%s6 + $0x138] sm:$0xff]
        %v2867 = vld [vmem:[%s6 + $0x140] sm:$0xff]
        %v2868 = vld [vmem:[%s6 + $0x148] sm:$0xff]
        %v2869 = vld [vmem:[%s6 + $0x150] sm:$0xff]
        %v2870 = vld [vmem:[%s6 + $0x158] sm:$0xff]
        %v2871 = vld [vmem:[%s6 + $0x160] sm:$0xff]
        %v2872 = vld [vmem:[%s6 + $0x168] sm:$0xff]
        %v2873 = vld [vmem:[%s6 + $0x170] sm:$0xff]
        %v2874 = vld [vmem:[%s6 + $0x178] sm:$0xff]
        %v2875 = vld [vmem:[%s6 + $0x180] sm:$0xff]
        %v2876 = vld [vmem:[%s6 + $0x188] sm:$0xff]
        %v2877 = vld [vmem:[%s6 + $0x190] sm:$0xff]
        %v2878 = vld [vmem:[%s6 + $0x198] sm:$0xff]
        %v2879 = vld [vmem:[%s6 + $0x1a0] sm:$0xff]
        %v2880 = vld [vmem:[%s6 + $0x1a8] sm:$0xff]
        %v2881 = vld [vmem:[%s6 + $0x1b0] sm:$0xff]
        %v2882 = vld [vmem:[%s6 + $0x1b8] sm:$0xff]
        %v2883 = vld [vmem:[%s6 + $0x1c0] sm:$0xff]
        %v2884 = vld [vmem:[%s6 + $0x1c8] sm:$0xff]
        %v2885 = vld [vmem:[%s6 + $0x1d0] sm:$0xff]
        %v2886 = vld [vmem:[%s6 + $0x1d8] sm:$0xff]
        %v2887 = vld [vmem:[%s6 + $0x1e0] sm:$0xff]
        %v2888 = vld [vmem:[%s6 + $0x1e8] sm:$0xff]
        %v2889 = vld [vmem:[%s6 + $0x1f0] sm:$0xff]
        %v2890 = vld [vmem:[%s6 + $0x1f8] sm:$0xff]
        %v2891 = vpack.c.bf16 %v2700, %v2699
        %v2892 = vpack.c.bf16 %v2702, %v2701
        %v2893 = vpack.c.bf16 %v2704, %v2703
        %v2894 = vpack.c.bf16 %v2706, %v2705
        %v2895 = vpack.c.bf16 %v2708, %v2707
        %v2896 = vpack.c.bf16 %v2710, %v2709
        %v2897 = vpack.c.bf16 %v2712, %v2711
        %v2898 = vpack.c.bf16 %v2714, %v2713
        %v2899 = vpack.c.bf16 %v2716, %v2715
        %v2900 = vpack.c.bf16 %v2718, %v2717
        %v2901 = vpack.c.bf16 %v2720, %v2719
        %v2902 = vpack.c.bf16 %v2722, %v2721
        %v2903 = vpack.c.bf16 %v2724, %v2723
        %v2904 = vpack.c.bf16 %v2726, %v2725
        %v2905 = vpack.c.bf16 %v2728, %v2727
        %v2906 = vpack.c.bf16 %v2730, %v2729
        %v2907 = vpack.c.bf16 %v2736, %v2733
        %v2908 = vpack.c.bf16 %v2742, %v2739
        %v2909 = vpack.c.bf16 %v2748, %v2745
        %v2910 = vpack.c.bf16 %v2754, %v2751
        %v2911 = vpack.c.bf16 %v2760, %v2757
        %v2912 = vpack.c.bf16 %v2766, %v2763
        %v2913 = vpack.c.bf16 %v2772, %v2769
        %v2914 = vpack.c.bf16 %v2778, %v2775
        %v2915 = vpack.c.bf16 %v2784, %v2781
        %v2916 = vpack.c.bf16 %v2790, %v2787
        %v2917 = vpack.c.bf16 %v2796, %v2793
        %v2918 = vpack.c.bf16 %v2802, %v2799
        %v2919 = vpack.c.bf16 %v2808, %v2805
        %v2920 = vpack.c.bf16 %v2814, %v2811
        %v2921 = vpack.c.bf16 %v2820, %v2817
        %v2922 = vpack.c.bf16 %v2826, %v2823
        %v2923 = vld [vmem:[#allocation3] sm:$0x1]
        %v2925 = vperm.slane %v2923, 0
        %v2991 = vunpack.c.l.b16 %v2827
        %v2992 = vunpack.c.h.b16 %v2827
        %v2993 = vunpack.c.l.b16 %v2828
        %v2994 = vunpack.c.h.b16 %v2828
        %v2995 = vunpack.c.l.b16 %v2829
        %v2996 = vunpack.c.h.b16 %v2829
        %v2997 = vunpack.c.l.b16 %v2830
        %v2998 = vunpack.c.h.b16 %v2830
        %v2999 = vunpack.c.l.b16 %v2831
        %v3000 = vunpack.c.h.b16 %v2831
        %v3001 = vunpack.c.l.b16 %v2832
        %v3002 = vunpack.c.h.b16 %v2832
        %v3003 = vunpack.c.l.b16 %v2833
        %v3004 = vunpack.c.h.b16 %v2833
        %v3005 = vunpack.c.l.b16 %v2834
        %v3006 = vunpack.c.h.b16 %v2834
        %v3007 = vunpack.c.l.b16 %v2835
        %v3008 = vunpack.c.h.b16 %v2835
        %v3009 = vunpack.c.l.b16 %v2836
        %v3010 = vunpack.c.h.b16 %v2836
        %v3011 = vunpack.c.l.b16 %v2837
        %v3012 = vunpack.c.h.b16 %v2837
        %v3013 = vunpack.c.l.b16 %v2838
        %v3014 = vunpack.c.h.b16 %v2838
        %v3015 = vunpack.c.l.b16 %v2839
        %v3016 = vunpack.c.h.b16 %v2839
        %v3017 = vunpack.c.l.b16 %v2840
        %v3018 = vunpack.c.h.b16 %v2840
        %v3019 = vunpack.c.l.b16 %v2841
        %v3020 = vunpack.c.h.b16 %v2841
        %v3021 = vunpack.c.l.b16 %v2842
        %v3022 = vunpack.c.h.b16 %v2842
        %v3023 = vunpack.c.l.b16 %v2843
        %v3024 = vunpack.c.h.b16 %v2843
        %v3025 = vunpack.c.l.b16 %v2844
        %v3026 = vunpack.c.h.b16 %v2844
        %v3027 = vunpack.c.l.b16 %v2845
        %v3028 = vunpack.c.h.b16 %v2845
        %v3029 = vunpack.c.l.b16 %v2846
        %v3030 = vunpack.c.h.b16 %v2846
        %v3031 = vunpack.c.l.b16 %v2847
        %v3032 = vunpack.c.h.b16 %v2847
        %v3033 = vunpack.c.l.b16 %v2848
        %v3034 = vunpack.c.h.b16 %v2848
        %v3035 = vunpack.c.l.b16 %v2849
        %v3036 = vunpack.c.h.b16 %v2849
        %v3037 = vunpack.c.l.b16 %v2850
        %v3038 = vunpack.c.h.b16 %v2850
        %v3039 = vunpack.c.l.b16 %v2851
        %v3040 = vunpack.c.h.b16 %v2851
        %v3041 = vunpack.c.l.b16 %v2852
        %v3042 = vunpack.c.h.b16 %v2852
        %v3043 = vunpack.c.l.b16 %v2853
        %v3044 = vunpack.c.h.b16 %v2853
        %v3045 = vunpack.c.l.b16 %v2854
        %v3046 = vunpack.c.h.b16 %v2854
        %v3047 = vunpack.c.l.b16 %v2855
        %v3048 = vunpack.c.h.b16 %v2855
        %v3049 = vunpack.c.l.b16 %v2856
        %v3050 = vunpack.c.h.b16 %v2856
        %v3051 = vunpack.c.l.b16 %v2857
        %v3052 = vunpack.c.h.b16 %v2857
        %v3053 = vunpack.c.l.b16 %v2858
        %v3054 = vunpack.c.h.b16 %v2858
        %v3055 = vunpack.c.l.b16 %v2859
        %v3056 = vunpack.c.h.b16 %v2859
        %v3057 = vunpack.c.l.b16 %v2860
        %v3058 = vunpack.c.h.b16 %v2860
        %v3059 = vunpack.c.l.b16 %v2861
        %v3060 = vunpack.c.h.b16 %v2861
        %v3061 = vunpack.c.l.b16 %v2862
        %v3062 = vunpack.c.h.b16 %v2862
        %v3063 = vunpack.c.l.b16 %v2863
        %v3064 = vunpack.c.h.b16 %v2863
        %v3065 = vunpack.c.l.b16 %v2864
        %v3066 = vunpack.c.h.b16 %v2864
        %v3067 = vunpack.c.l.b16 %v2865
        %v3068 = vunpack.c.h.b16 %v2865
        %v3069 = vunpack.c.l.b16 %v2866
        %v3070 = vunpack.c.h.b16 %v2866
        %v3071 = vunpack.c.l.b16 %v2867
        %v3072 = vunpack.c.h.b16 %v2867
        %v3073 = vunpack.c.l.b16 %v2868
        %v3074 = vunpack.c.h.b16 %v2868
        %v3075 = vunpack.c.l.b16 %v2869
        %v3076 = vunpack.c.h.b16 %v2869
        %v3077 = vunpack.c.l.b16 %v2870
        %v3078 = vunpack.c.h.b16 %v2870
        %v3079 = vunpack.c.l.b16 %v2871
        %v3080 = vunpack.c.h.b16 %v2871
        %v3081 = vunpack.c.l.b16 %v2872
        %v3082 = vunpack.c.h.b16 %v2872
        %v3083 = vunpack.c.l.b16 %v2873
        %v3084 = vunpack.c.h.b16 %v2873
        %v3085 = vunpack.c.l.b16 %v2874
        %v3086 = vunpack.c.h.b16 %v2874
        %v3087 = vunpack.c.l.b16 %v2875
        %v3088 = vunpack.c.h.b16 %v2875
        %v3089 = vunpack.c.l.b16 %v2876
        %v3090 = vunpack.c.h.b16 %v2876
        %v3091 = vunpack.c.l.b16 %v2877
        %v3092 = vunpack.c.h.b16 %v2877
        %v3093 = vunpack.c.l.b16 %v2878
        %v3094 = vunpack.c.h.b16 %v2878
        %v3095 = vunpack.c.l.b16 %v2879
        %v3096 = vunpack.c.h.b16 %v2879
        %v3097 = vunpack.c.l.b16 %v2880
        %v3098 = vunpack.c.h.b16 %v2880
        %v3099 = vunpack.c.l.b16 %v2881
        %v3100 = vunpack.c.h.b16 %v2881
        %v3101 = vunpack.c.l.b16 %v2882
        %v3102 = vunpack.c.h.b16 %v2882
        %v3103 = vunpack.c.l.b16 %v2883
        %v3104 = vunpack.c.h.b16 %v2883
        %v3105 = vunpack.c.l.b16 %v2884
        %v3106 = vunpack.c.h.b16 %v2884
        %v3107 = vunpack.c.l.b16 %v2885
        %v3108 = vunpack.c.h.b16 %v2885
        %v3109 = vunpack.c.l.b16 %v2886
        %v3110 = vunpack.c.h.b16 %v2886
        %v3111 = vunpack.c.l.b16 %v2887
        %v3112 = vunpack.c.h.b16 %v2887
        %v3113 = vunpack.c.l.b16 %v2888
        %v3114 = vunpack.c.h.b16 %v2888
        %v3115 = vunpack.c.l.b16 %v2889
        %v3116 = vunpack.c.h.b16 %v2889
        %v3117 = vunpack.c.l.b16 %v2890
        %v3118 = vunpack.c.h.b16 %v2890
        %v3119 = vpack.c.b16 %v2995, %v2991
        %v3120 = vpack.c.b16 %v2996, %v2992
        %v3121 = vpack.c.b16 %v2997, %v2993
        %v3122 = vpack.c.b16 %v2998, %v2994
        %v3123 = vpack.c.b16 %v3003, %v2999
        %v3124 = vpack.c.b16 %v3004, %v3000
        %v3125 = vpack.c.b16 %v3005, %v3001
        %v3126 = vpack.c.b16 %v3006, %v3002
        %v3127 = vpack.c.b16 %v3011, %v3007
        %v3128 = vpack.c.b16 %v3012, %v3008
        %v3129 = vpack.c.b16 %v3013, %v3009
        %v3130 = vpack.c.b16 %v3014, %v3010
        %v3131 = vpack.c.b16 %v3019, %v3015
        %v3132 = vpack.c.b16 %v3020, %v3016
        %v3133 = vpack.c.b16 %v3021, %v3017
        %v3134 = vpack.c.b16 %v3022, %v3018
        %v3135 = vpack.c.b16 %v3027, %v3023
        %v3136 = vpack.c.b16 %v3028, %v3024
        %v3137 = vpack.c.b16 %v3029, %v3025
        %v3138 = vpack.c.b16 %v3030, %v3026
        %v3139 = vpack.c.b16 %v3035, %v3031
        %v3140 = vpack.c.b16 %v3036, %v3032
        %v3141 = vpack.c.b16 %v3037, %v3033
        %v3142 = vpack.c.b16 %v3038, %v3034
        %v3143 = vpack.c.b16 %v3043, %v3039
        %v3144 = vpack.c.b16 %v3044, %v3040
        %v3145 = vpack.c.b16 %v3045, %v3041
        %v3146 = vpack.c.b16 %v3046, %v3042
        %v3147 = vpack.c.b16 %v3051, %v3047
        %v3148 = vpack.c.b16 %v3052, %v3048
        %v3149 = vpack.c.b16 %v3053, %v3049
        %v3150 = vpack.c.b16 %v3054, %v3050
        %v3151 = vpack.c.b16 %v3059, %v3055
        %v3152 = vpack.c.b16 %v3060, %v3056
        %v3153 = vpack.c.b16 %v3061, %v3057
        %v3154 = vpack.c.b16 %v3062, %v3058
        %v3155 = vpack.c.b16 %v3067, %v3063
        %v3156 = vpack.c.b16 %v3068, %v3064
        %v3157 = vpack.c.b16 %v3069, %v3065
        %v3158 = vpack.c.b16 %v3070, %v3066
        %v3159 = vpack.c.b16 %v3075, %v3071
        %v3160 = vpack.c.b16 %v3076, %v3072
        %v3161 = vpack.c.b16 %v3077, %v3073
        %v3162 = vpack.c.b16 %v3078, %v3074
        %v3163 = vpack.c.b16 %v3083, %v3079
        %v3164 = vpack.c.b16 %v3084, %v3080
        %v3165 = vpack.c.b16 %v3085, %v3081
        %v3166 = vpack.c.b16 %v3086, %v3082
        %v3167 = vpack.c.b16 %v3091, %v3087
        %v3168 = vpack.c.b16 %v3092, %v3088
        %v3169 = vpack.c.b16 %v3093, %v3089
        %v3170 = vpack.c.b16 %v3094, %v3090
        %v3171 = vpack.c.b16 %v3099, %v3095
        %v3172 = vpack.c.b16 %v3100, %v3096
        %v3173 = vpack.c.b16 %v3101, %v3097
        %v3174 = vpack.c.b16 %v3102, %v3098
        %v3175 = vpack.c.b16 %v3107, %v3103
        %v3176 = vpack.c.b16 %v3108, %v3104
        %v3177 = vpack.c.b16 %v3109, %v3105
        %v3178 = vpack.c.b16 %v3110, %v3106
        %v3179 = vpack.c.b16 %v3115, %v3111
        %v3180 = vpack.c.b16 %v3116, %v3112
        %v3181 = vpack.c.b16 %v3117, %v3113
        %v3182 = vpack.c.b16 %v3118, %v3114
        %3247 = vmatpush.bf16.msra.mxu0 %v2898
        %3248 = vmatpush.bf16.msra.mxu0 %v2897
        %3249 = vmatpush.bf16.msra.mxu0 %v2896
        %3250 = vmatpush.bf16.msra.mxu0 %v2895
        %3251 = vmatpush.bf16.msra.mxu0 %v2894
        %3252 = vmatpush.bf16.msra.mxu0 %v2893
        %3253 = vmatpush.bf16.msra.mxu0 %v2892
        %3254 = vmatpush.bf16.msra.mxu0 %v2891
        %3255 = vmatmul.bf16.gmra.mxu0 %v3119
        %v3256 = vpop.f32.mrf.mxu0
        %v3257 = vadd.f32 %v2925, %v3256
        %v3258 = vpop.f32.mrf.mxu0
        %v3259 = vadd.f32 %v2925, %v3258
        %3260 = vmatmul.bf16.gmra.mxu0 %v3123
        %v3261 = vpop.f32.mrf.mxu0
        %v3262 = vadd.f32 %v2925, %v3261
        %v3263 = vpop.f32.mrf.mxu0
        %v3264 = vadd.f32 %v2925, %v3263
        %3265 = vmatmul.bf16.gmra.mxu0 %v3127
        %v3266 = vpop.f32.mrf.mxu0
        %v3267 = vadd.f32 %v2925, %v3266
        %v3268 = vpop.f32.mrf.mxu0
        %v3269 = vadd.f32 %v2925, %v3268
        %3270 = vmatmul.bf16.gmra.mxu0 %v3131
        %v3271 = vpop.f32.mrf.mxu0
        %v3272 = vadd.f32 %v2925, %v3271
        %v3273 = vpop.f32.mrf.mxu0
        %v3274 = vadd.f32 %v2925, %v3273
        %3275 = vmatmul.bf16.gmra.mxu0 %v3135
        %v3276 = vpop.f32.mrf.mxu0
        %v3277 = vadd.f32 %v2925, %v3276
        %v3278 = vpop.f32.mrf.mxu0
        %v3279 = vadd.f32 %v2925, %v3278
        %3280 = vmatmul.bf16.gmra.mxu0 %v3139
        %v3281 = vpop.f32.mrf.mxu0
        %v3282 = vadd.f32 %v2925, %v3281
        %v3283 = vpop.f32.mrf.mxu0
        %v3284 = vadd.f32 %v2925, %v3283
        %3285 = vmatmul.bf16.gmra.mxu0 %v3143
        %v3286 = vpop.f32.mrf.mxu0
        %v3287 = vadd.f32 %v2925, %v3286
        %v3288 = vpop.f32.mrf.mxu0
        %v3289 = vadd.f32 %v2925, %v3288
        %3290 = vmatmul.bf16.gmra.mxu0 %v3147
        %v3291 = vpop.f32.mrf.mxu0
        %v3292 = vadd.f32 %v2925, %v3291
        %v3293 = vpop.f32.mrf.mxu0
        %v3294 = vadd.f32 %v2925, %v3293
        %3295 = vmatmul.bf16.gmra.mxu0 %v3151
        %v3296 = vpop.f32.mrf.mxu0
        %v3297 = vadd.f32 %v2925, %v3296
        %v3298 = vpop.f32.mrf.mxu0
        %v3299 = vadd.f32 %v2925, %v3298
        %3300 = vmatmul.bf16.gmra.mxu0 %v3155
        %v3301 = vpop.f32.mrf.mxu0
        %v3302 = vadd.f32 %v2925, %v3301
        %v3303 = vpop.f32.mrf.mxu0
        %v3304 = vadd.f32 %v2925, %v3303
        %3305 = vmatmul.bf16.gmra.mxu0 %v3159
        %v3306 = vpop.f32.mrf.mxu0
        %v3307 = vadd.f32 %v2925, %v3306
        %v3308 = vpop.f32.mrf.mxu0
        %v3309 = vadd.f32 %v2925, %v3308
        %3310 = vmatmul.bf16.gmra.mxu0 %v3163
        %v3311 = vpop.f32.mrf.mxu0
        %v3312 = vadd.f32 %v2925, %v3311
        %v3313 = vpop.f32.mrf.mxu0
        %v3314 = vadd.f32 %v2925, %v3313
        %3315 = vmatmul.bf16.gmra.mxu0 %v3167
        %v3316 = vpop.f32.mrf.mxu0
        %v3317 = vadd.f32 %v2925, %v3316
        %v3318 = vpop.f32.mrf.mxu0
        %v3319 = vadd.f32 %v2925, %v3318
        %3320 = vmatmul.bf16.gmra.mxu0 %v3171
        %v3321 = vpop.f32.mrf.mxu0
        %v3322 = vadd.f32 %v2925, %v3321
        %v3323 = vpop.f32.mrf.mxu0
        %v3324 = vadd.f32 %v2925, %v3323
        %3325 = vmatmul.bf16.gmra.mxu0 %v3175
        %v3326 = vpop.f32.mrf.mxu0
        %v3327 = vadd.f32 %v2925, %v3326
        %v3328 = vpop.f32.mrf.mxu0
        %v3329 = vadd.f32 %v2925, %v3328
        %3330 = vmatmul.bf16.gmra.mxu0 %v3179
        %v3331 = vpop.f32.mrf.mxu0
        %v3332 = vadd.f32 %v2925, %v3331
        %v3333 = vpop.f32.mrf.mxu0
        %v3334 = vadd.f32 %v2925, %v3333
        %3335 = vdwg.mxu0
        %3336 = vmatpush.bf16.msra.mxu0 %v2906
        %3337 = vmatpush.bf16.msra.mxu0 %v2905
        %3338 = vmatpush.bf16.msra.mxu0 %v2904
        %3339 = vmatpush.bf16.msra.mxu0 %v2903
        %3340 = vmatpush.bf16.msra.mxu0 %v2902
        %3341 = vmatpush.bf16.msra.mxu0 %v2901
        %3342 = vmatpush.bf16.msra.mxu0 %v2900
        %3343 = vmatpush.bf16.msra.mxu0 %v2899
        %3344 = vmatmul.bf16.gmra.mxu0 %v3120
        %v3345 = vpop.f32.mrf.mxu0
        %v3346 = vadd.f32 %v3257, %v3345
        %v3347 = vpop.f32.mrf.mxu0
        %v3348 = vadd.f32 %v3259, %v3347
        %3349 = vmatmul.bf16.gmra.mxu0 %v3124
        %v3350 = vpop.f32.mrf.mxu0
        %v3351 = vadd.f32 %v3262, %v3350
        %v3352 = vpop.f32.mrf.mxu0
        %v3353 = vadd.f32 %v3264, %v3352
        %3354 = vmatmul.bf16.gmra.mxu0 %v3128
        %v3355 = vpop.f32.mrf.mxu0
        %v3356 = vadd.f32 %v3267, %v3355
        %v3357 = vpop.f32.mrf.mxu0
        %v3358 = vadd.f32 %v3269, %v3357
        %3359 = vmatmul.bf16.gmra.mxu0 %v3132
        %v3360 = vpop.f32.mrf.mxu0
        %v3361 = vadd.f32 %v3272, %v3360
        %v3362 = vpop.f32.mrf.mxu0
        %v3363 = vadd.f32 %v3274, %v3362
        %3364 = vmatmul.bf16.gmra.mxu0 %v3136
        %v3365 = vpop.f32.mrf.mxu0
        %v3366 = vadd.f32 %v3277, %v3365
        %v3367 = vpop.f32.mrf.mxu0
        %v3368 = vadd.f32 %v3279, %v3367
        %3369 = vmatmul.bf16.gmra.mxu0 %v3140
        %v3370 = vpop.f32.mrf.mxu0
        %v3371 = vadd.f32 %v3282, %v3370
        %v3372 = vpop.f32.mrf.mxu0
        %v3373 = vadd.f32 %v3284, %v3372
        %3374 = vmatmul.bf16.gmra.mxu0 %v3144
        %v3375 = vpop.f32.mrf.mxu0
        %v3376 = vadd.f32 %v3287, %v3375
        %v3377 = vpop.f32.mrf.mxu0
        %v3378 = vadd.f32 %v3289, %v3377
        %3379 = vmatmul.bf16.gmra.mxu0 %v3148
        %v3380 = vpop.f32.mrf.mxu0
        %v3381 = vadd.f32 %v3292, %v3380
        %v3382 = vpop.f32.mrf.mxu0
        %v3383 = vadd.f32 %v3294, %v3382
        %3384 = vmatmul.bf16.gmra.mxu0 %v3152
        %v3385 = vpop.f32.mrf.mxu0
        %v3386 = vadd.f32 %v3297, %v3385
        %v3387 = vpop.f32.mrf.mxu0
        %v3388 = vadd.f32 %v3299, %v3387
        %3389 = vmatmul.bf16.gmra.mxu0 %v3156
        %v3390 = vpop.f32.mrf.mxu0
        %v3391 = vadd.f32 %v3302, %v3390
        %v3392 = vpop.f32.mrf.mxu0
        %v3393 = vadd.f32 %v3304, %v3392
        %3394 = vmatmul.bf16.gmra.mxu0 %v3160
        %v3395 = vpop.f32.mrf.mxu0
        %v3396 = vadd.f32 %v3307, %v3395
        %v3397 = vpop.f32.mrf.mxu0
        %v3398 = vadd.f32 %v3309, %v3397
        %3399 = vmatmul.bf16.gmra.mxu0 %v3164
        %v3400 = vpop.f32.mrf.mxu0
        %v3401 = vadd.f32 %v3312, %v3400
        %v3402 = vpop.f32.mrf.mxu0
        %v3403 = vadd.f32 %v3314, %v3402
        %3404 = vmatmul.bf16.gmra.mxu0 %v3168
        %v3405 = vpop.f32.mrf.mxu0
        %v3406 = vadd.f32 %v3317, %v3405
        %v3407 = vpop.f32.mrf.mxu0
        %v3408 = vadd.f32 %v3319, %v3407
        %3409 = vmatmul.bf16.gmra.mxu0 %v3172
        %v3410 = vpop.f32.mrf.mxu0
        %v3411 = vadd.f32 %v3322, %v3410
        %v3412 = vpop.f32.mrf.mxu0
        %v3413 = vadd.f32 %v3324, %v3412
        %3414 = vmatmul.bf16.gmra.mxu0 %v3176
        %v3415 = vpop.f32.mrf.mxu0
        %v3416 = vadd.f32 %v3327, %v3415
        %v3417 = vpop.f32.mrf.mxu0
        %v3418 = vadd.f32 %v3329, %v3417
        %3419 = vmatmul.bf16.gmra.mxu0 %v3180
        %v3420 = vpop.f32.mrf.mxu0
        %v3421 = vadd.f32 %v3332, %v3420
        %v3422 = vpop.f32.mrf.mxu0
        %v3423 = vadd.f32 %v3334, %v3422
        %3424 = vdwg.mxu0
        %3425 = vmatpush.bf16.msra.mxu0 %v2914
        %3426 = vmatpush.bf16.msra.mxu0 %v2913
        %3427 = vmatpush.bf16.msra.mxu0 %v2912
        %3428 = vmatpush.bf16.msra.mxu0 %v2911
        %3429 = vmatpush.bf16.msra.mxu0 %v2910
        %3430 = vmatpush.bf16.msra.mxu0 %v2909
        %3431 = vmatpush.bf16.msra.mxu0 %v2908
        %3432 = vmatpush.bf16.msra.mxu0 %v2907
        %3433 = vmatmul.bf16.gmra.mxu0 %v3121
        %v3434 = vpop.f32.mrf.mxu0
        %v3435 = vadd.f32 %v3346, %v3434
        %v3436 = vpop.f32.mrf.mxu0
        %v3437 = vadd.f32 %v3348, %v3436
        %3438 = vmatmul.bf16.gmra.mxu0 %v3125
        %v3439 = vpop.f32.mrf.mxu0
        %v3440 = vadd.f32 %v3351, %v3439
        %v3441 = vpop.f32.mrf.mxu0
        %v3442 = vadd.f32 %v3353, %v3441
        %3443 = vmatmul.bf16.gmra.mxu0 %v3129
        %v3444 = vpop.f32.mrf.mxu0
        %v3445 = vadd.f32 %v3356, %v3444
        %v3446 = vpop.f32.mrf.mxu0
        %v3447 = vadd.f32 %v3358, %v3446
        %3448 = vmatmul.bf16.gmra.mxu0 %v3133
        %v3449 = vpop.f32.mrf.mxu0
        %v3450 = vadd.f32 %v3361, %v3449
        %v3451 = vpop.f32.mrf.mxu0
        %v3452 = vadd.f32 %v3363, %v3451
        %3453 = vmatmul.bf16.gmra.mxu0 %v3137
        %v3454 = vpop.f32.mrf.mxu0
        %v3455 = vadd.f32 %v3366, %v3454
        %v3456 = vpop.f32.mrf.mxu0
        %v3457 = vadd.f32 %v3368, %v3456
        %3458 = vmatmul.bf16.gmra.mxu0 %v3141
        %v3459 = vpop.f32.mrf.mxu0
        %v3460 = vadd.f32 %v3371, %v3459
        %v3461 = vpop.f32.mrf.mxu0
        %v3462 = vadd.f32 %v3373, %v3461
        %3463 = vmatmul.bf16.gmra.mxu0 %v3145
        %v3464 = vpop.f32.mrf.mxu0
        %v3465 = vadd.f32 %v3376, %v3464
        %v3466 = vpop.f32.mrf.mxu0
        %v3467 = vadd.f32 %v3378, %v3466
        %3468 = vmatmul.bf16.gmra.mxu0 %v3149
        %v3469 = vpop.f32.mrf.mxu0
        %v3470 = vadd.f32 %v3381, %v3469
        %v3471 = vpop.f32.mrf.mxu0
        %v3472 = vadd.f32 %v3383, %v3471
        %3473 = vmatmul.bf16.gmra.mxu0 %v3153
        %v3474 = vpop.f32.mrf.mxu0
        %v3475 = vadd.f32 %v3386, %v3474
        %v3476 = vpop.f32.mrf.mxu0
        %v3477 = vadd.f32 %v3388, %v3476
        %3478 = vmatmul.bf16.gmra.mxu0 %v3157
        %v3479 = vpop.f32.mrf.mxu0
        %v3480 = vadd.f32 %v3391, %v3479
        %v3481 = vpop.f32.mrf.mxu0
        %v3482 = vadd.f32 %v3393, %v3481
        %3483 = vmatmul.bf16.gmra.mxu0 %v3161
        %v3484 = vpop.f32.mrf.mxu0
        %v3485 = vadd.f32 %v3396, %v3484
        %v3486 = vpop.f32.mrf.mxu0
        %v3487 = vadd.f32 %v3398, %v3486
        %3488 = vmatmul.bf16.gmra.mxu0 %v3165
        %v3489 = vpop.f32.mrf.mxu0
        %v3490 = vadd.f32 %v3401, %v3489
        %v3491 = vpop.f32.mrf.mxu0
        %v3492 = vadd.f32 %v3403, %v3491
        %3493 = vmatmul.bf16.gmra.mxu0 %v3169
        %v3494 = vpop.f32.mrf.mxu0
        %v3495 = vadd.f32 %v3406, %v3494
        %v3496 = vpop.f32.mrf.mxu0
        %v3497 = vadd.f32 %v3408, %v3496
        %3498 = vmatmul.bf16.gmra.mxu0 %v3173
        %v3499 = vpop.f32.mrf.mxu0
        %v3500 = vadd.f32 %v3411, %v3499
        %v3501 = vpop.f32.mrf.mxu0
        %v3502 = vadd.f32 %v3413, %v3501
        %3503 = vmatmul.bf16.gmra.mxu0 %v3177
        %v3504 = vpop.f32.mrf.mxu0
        %v3505 = vadd.f32 %v3416, %v3504
        %v3506 = vpop.f32.mrf.mxu0
        %v3507 = vadd.f32 %v3418, %v3506
        %3508 = vmatmul.bf16.gmra.mxu0 %v3181
        %v3509 = vpop.f32.mrf.mxu0
        %v3510 = vadd.f32 %v3421, %v3509
        %v3511 = vpop.f32.mrf.mxu0
        %v3512 = vadd.f32 %v3423, %v3511
        %3513 = vdwg.mxu0
        %3514 = vmatpush.bf16.msra.mxu0 %v2922
        %3515 = vmatpush.bf16.msra.mxu0 %v2921
        %3516 = vmatpush.bf16.msra.mxu0 %v2920
        %3517 = vmatpush.bf16.msra.mxu0 %v2919
        %3518 = vmatpush.bf16.msra.mxu0 %v2918
        %3519 = vmatpush.bf16.msra.mxu0 %v2917
        %3520 = vmatpush.bf16.msra.mxu0 %v2916
        %3521 = vmatpush.bf16.msra.mxu0 %v2915
        %3522 = vmatmul.bf16.gmra.mxu0 %v3122
        %v3523 = vpop.f32.mrf.mxu0
        %v3524 = vadd.f32 %v3435, %v3523
        %v3525 = vpop.f32.mrf.mxu0
        %v3526 = vadd.f32 %v3437, %v3525
        %3527 = vmatmul.bf16.gmra.mxu0 %v3126
        %v3528 = vpop.f32.mrf.mxu0
        %v3529 = vadd.f32 %v3440, %v3528
        %v3530 = vpop.f32.mrf.mxu0
        %v3531 = vadd.f32 %v3442, %v3530
        %3532 = vmatmul.bf16.gmra.mxu0 %v3130
        %v3533 = vpop.f32.mrf.mxu0
        %v3534 = vadd.f32 %v3445, %v3533
        %v3535 = vpop.f32.mrf.mxu0
        %v3536 = vadd.f32 %v3447, %v3535
        %3537 = vmatmul.bf16.gmra.mxu0 %v3134
        %v3538 = vpop.f32.mrf.mxu0
        %v3539 = vadd.f32 %v3450, %v3538
        %v3540 = vpop.f32.mrf.mxu0
        %v3541 = vadd.f32 %v3452, %v3540
        %3542 = vmatmul.bf16.gmra.mxu0 %v3138
        %v3543 = vpop.f32.mrf.mxu0
        %v3544 = vadd.f32 %v3455, %v3543
        %v3545 = vpop.f32.mrf.mxu0
        %v3546 = vadd.f32 %v3457, %v3545
        %3547 = vmatmul.bf16.gmra.mxu0 %v3142
        %v3548 = vpop.f32.mrf.mxu0
        %v3549 = vadd.f32 %v3460, %v3548
        %v3550 = vpop.f32.mrf.mxu0
        %v3551 = vadd.f32 %v3462, %v3550
        %3552 = vmatmul.bf16.gmra.mxu0 %v3146
        %v3553 = vpop.f32.mrf.mxu0
        %v3554 = vadd.f32 %v3465, %v3553
        %v3555 = vpop.f32.mrf.mxu0
        %v3556 = vadd.f32 %v3467, %v3555
        %3557 = vmatmul.bf16.gmra.mxu0 %v3150
        %v3558 = vpop.f32.mrf.mxu0
        %v3559 = vadd.f32 %v3470, %v3558
        %v3560 = vpop.f32.mrf.mxu0
        %v3561 = vadd.f32 %v3472, %v3560
        %3562 = vmatmul.bf16.gmra.mxu0 %v3154
        %v3563 = vpop.f32.mrf.mxu0
        %v3564 = vadd.f32 %v3475, %v3563
        %v3565 = vpop.f32.mrf.mxu0
        %v3566 = vadd.f32 %v3477, %v3565
        %3567 = vmatmul.bf16.gmra.mxu0 %v3158
        %v3568 = vpop.f32.mrf.mxu0
        %v3569 = vadd.f32 %v3480, %v3568
        %v3570 = vpop.f32.mrf.mxu0
        %v3571 = vadd.f32 %v3482, %v3570
        %3572 = vmatmul.bf16.gmra.mxu0 %v3162
        %v3573 = vpop.f32.mrf.mxu0
        %v3574 = vadd.f32 %v3485, %v3573
        %v3575 = vpop.f32.mrf.mxu0
        %v3576 = vadd.f32 %v3487, %v3575
        %3577 = vmatmul.bf16.gmra.mxu0 %v3166
        %v3578 = vpop.f32.mrf.mxu0
        %v3579 = vadd.f32 %v3490, %v3578
        %v3580 = vpop.f32.mrf.mxu0
        %v3581 = vadd.f32 %v3492, %v3580
        %3582 = vmatmul.bf16.gmra.mxu0 %v3170
        %v3583 = vpop.f32.mrf.mxu0
        %v3584 = vadd.f32 %v3495, %v3583
        %v3585 = vpop.f32.mrf.mxu0
        %v3586 = vadd.f32 %v3497, %v3585
        %3587 = vmatmul.bf16.gmra.mxu0 %v3174
        %v3588 = vpop.f32.mrf.mxu0
        %v3589 = vadd.f32 %v3500, %v3588
        %v3590 = vpop.f32.mrf.mxu0
        %v3591 = vadd.f32 %v3502, %v3590
        %3592 = vmatmul.bf16.gmra.mxu0 %v3178
        %v3593 = vpop.f32.mrf.mxu0
        %v3594 = vadd.f32 %v3505, %v3593
        %v3595 = vpop.f32.mrf.mxu0
        %v3596 = vadd.f32 %v3507, %v3595
        %3597 = vmatmul.bf16.gmra.mxu0 %v3182
        %v3598 = vpop.f32.mrf.mxu0
        %v3599 = vadd.f32 %v3510, %v3598
        %v3600 = vpop.f32.mrf.mxu0
        %v3601 = vadd.f32 %v3512, %v3600
        %3602 = vdwg.mxu0
        %v3603 = vsub.f32 0.0, %v3524
        %v3604 = vsub.f32 0.0, %v3526
        %v3605 = vsub.f32 0.0, %v3529
        %v3606 = vsub.f32 0.0, %v3531
        %v3607 = vsub.f32 0.0, %v3534
        %v3608 = vsub.f32 0.0, %v3536
        %v3609 = vsub.f32 0.0, %v3539
        %v3610 = vsub.f32 0.0, %v3541
        %v3611 = vsub.f32 0.0, %v3544
        %v3612 = vsub.f32 0.0, %v3546
        %v3613 = vsub.f32 0.0, %v3549
        %v3614 = vsub.f32 0.0, %v3551
        %v3615 = vsub.f32 0.0, %v3554
        %v3616 = vsub.f32 0.0, %v3556
        %v3617 = vsub.f32 0.0, %v3559
        %v3618 = vsub.f32 0.0, %v3561
        %v3619 = vsub.f32 0.0, %v3564
        %v3620 = vsub.f32 0.0, %v3566
        %v3621 = vsub.f32 0.0, %v3569
        %v3622 = vsub.f32 0.0, %v3571
        %v3623 = vsub.f32 0.0, %v3574
        %v3624 = vsub.f32 0.0, %v3576
        %v3625 = vsub.f32 0.0, %v3579
        %v3626 = vsub.f32 0.0, %v3581
        %v3627 = vsub.f32 0.0, %v3584
        %v3628 = vsub.f32 0.0, %v3586
        %v3629 = vsub.f32 0.0, %v3589
        %v3630 = vsub.f32 0.0, %v3591
        %v3631 = vsub.f32 0.0, %v3594
        %v3632 = vsub.f32 0.0, %v3596
        %v3633 = vsub.f32 0.0, %v3599
        %v3634 = vsub.f32 0.0, %v3601
        %v3635 = vmul.f32 %v3603, 1.442695
        %v3636 = vpow.pop %v3635
        %v3637 = vmul.f32 %v3604, 1.442695
        %v3638 = vpow.pop %v3637
        %v3639 = vmul.f32 %v3605, 1.442695
        %v3640 = vpow.pop %v3639
        %v3641 = vmul.f32 %v3606, 1.442695
        %v3642 = vpow.pop %v3641
        %v3643 = vmul.f32 %v3607, 1.442695
        %v3644 = vpow.pop %v3643
        %v3645 = vmul.f32 %v3608, 1.442695
        %v3646 = vpow.pop %v3645
        %v3647 = vmul.f32 %v3609, 1.442695
        %v3648 = vpow.pop %v3647
        %v3649 = vmul.f32 %v3610, 1.442695
        %v3650 = vpow.pop %v3649
        %v3651 = vmul.f32 %v3611, 1.442695
        %v3652 = vpow.pop %v3651
        %v3653 = vmul.f32 %v3612, 1.442695
        %v3654 = vpow.pop %v3653
        %v3655 = vmul.f32 %v3613, 1.442695
        %v3656 = vpow.pop %v3655
        %v3657 = vmul.f32 %v3614, 1.442695
        %v3658 = vpow.pop %v3657
        %v3659 = vmul.f32 %v3615, 1.442695
        %v3660 = vpow.pop %v3659
        %v3661 = vmul.f32 %v3616, 1.442695
        %v3662 = vpow.pop %v3661
        %v3663 = vmul.f32 %v3617, 1.442695
        %v3664 = vpow.pop %v3663
        %v3665 = vmul.f32 %v3618, 1.442695
        %v3666 = vpow.pop %v3665
        %v3667 = vmul.f32 %v3619, 1.442695
        %v3668 = vpow.pop %v3667
        %v3669 = vmul.f32 %v3620, 1.442695
        %v3670 = vpow.pop %v3669
        %v3671 = vmul.f32 %v3621, 1.442695
        %v3672 = vpow.pop %v3671
        %v3673 = vmul.f32 %v3622, 1.442695
        %v3674 = vpow.pop %v3673
        %v3675 = vmul.f32 %v3623, 1.442695
        %v3676 = vpow.pop %v3675
        %v3677 = vmul.f32 %v3624, 1.442695
        %v3678 = vpow.pop %v3677
        %v3679 = vmul.f32 %v3625, 1.442695
        %v3680 = vpow.pop %v3679
        %v3681 = vmul.f32 %v3626, 1.442695
        %v3682 = vpow.pop %v3681
        %v3683 = vmul.f32 %v3627, 1.442695
        %v3684 = vpow.pop %v3683
        %v3685 = vmul.f32 %v3628, 1.442695
        %v3686 = vpow.pop %v3685
        %v3687 = vmul.f32 %v3629, 1.442695
        %v3688 = vpow.pop %v3687
        %v3689 = vmul.f32 %v3630, 1.442695
        %v3690 = vpow.pop %v3689
        %v3691 = vmul.f32 %v3631, 1.442695
        %v3692 = vpow.pop %v3691
        %v3693 = vmul.f32 %v3632, 1.442695
        %v3694 = vpow.pop %v3693
        %v3695 = vmul.f32 %v3633, 1.442695
        %v3696 = vpow.pop %v3695
        %v3697 = vmul.f32 %v3634, 1.442695
        %v3698 = vpow.pop %v3697
        %v3699 = vadd.f32 %v3636, 1.0
        %v3700 = vadd.f32 %v3638, 1.0
        %v3701 = vadd.f32 %v3640, 1.0
        %v3702 = vadd.f32 %v3642, 1.0
        %v3703 = vadd.f32 %v3644, 1.0
        %v3704 = vadd.f32 %v3646, 1.0
        %v3705 = vadd.f32 %v3648, 1.0
        %v3706 = vadd.f32 %v3650, 1.0
        %v3707 = vadd.f32 %v3652, 1.0
        %v3708 = vadd.f32 %v3654, 1.0
        %v3709 = vadd.f32 %v3656, 1.0
        %v3710 = vadd.f32 %v3658, 1.0
        %v3711 = vadd.f32 %v3660, 1.0
        %v3712 = vadd.f32 %v3662, 1.0
        %v3713 = vadd.f32 %v3664, 1.0
        %v3714 = vadd.f32 %v3666, 1.0
        %v3715 = vadd.f32 %v3668, 1.0
        %v3716 = vadd.f32 %v3670, 1.0
        %v3717 = vadd.f32 %v3672, 1.0
        %v3718 = vadd.f32 %v3674, 1.0
        %v3719 = vadd.f32 %v3676, 1.0
        %v3720 = vadd.f32 %v3678, 1.0
        %v3721 = vadd.f32 %v3680, 1.0
        %v3722 = vadd.f32 %v3682, 1.0
        %v3723 = vadd.f32 %v3684, 1.0
        %v3724 = vadd.f32 %v3686, 1.0
        %v3725 = vadd.f32 %v3688, 1.0
        %v3726 = vadd.f32 %v3690, 1.0
        %v3727 = vadd.f32 %v3692, 1.0
        %v3728 = vadd.f32 %v3694, 1.0
        %v3729 = vadd.f32 %v3696, 1.0
        %v3730 = vadd.f32 %v3698, 1.0
        %v3731 = vrcp.pop %v3699
        %v3732 = vrcp.pop %v3700
        %v3733 = vrcp.pop %v3701
        %v3734 = vrcp.pop %v3702
        %v3735 = vrcp.pop %v3703
        %v3736 = vrcp.pop %v3704
        %v3737 = vrcp.pop %v3705
        %v3738 = vrcp.pop %v3706
        %v3739 = vrcp.pop %v3707
        %v3740 = vrcp.pop %v3708
        %v3741 = vrcp.pop %v3709
        %v3742 = vrcp.pop %v3710
        %v3743 = vrcp.pop %v3711
        %v3744 = vrcp.pop %v3712
        %v3745 = vrcp.pop %v3713
        %v3746 = vrcp.pop %v3714
        %v3747 = vrcp.pop %v3715
        %v3748 = vrcp.pop %v3716
        %v3749 = vrcp.pop %v3717
        %v3750 = vrcp.pop %v3718
        %v3751 = vrcp.pop %v3719
        %v3752 = vrcp.pop %v3720
        %v3753 = vrcp.pop %v3721
        %v3754 = vrcp.pop %v3722
        %v3755 = vrcp.pop %v3723
        %v3756 = vrcp.pop %v3724
        %v3757 = vrcp.pop %v3725
        %v3758 = vrcp.pop %v3726
        %v3759 = vrcp.pop %v3727
        %v3760 = vrcp.pop %v3728
        %v3761 = vrcp.pop %v3729
        %v3762 = vrcp.pop %v3730
        %3764 = vset.pattern.permute.xlu0 0
        %3765 = vperm.xlu0 %3764, %v3731
        %v3766 = vpop.permute.xlu0 %3765
        %3769 = vset.pattern.permute.xlu0 0
        %3770 = vperm.xlu0 %3769, %v3732
        %v3771 = vpop.permute.xlu0 %3770
        %3774 = vset.pattern.permute.xlu0 0
        %3775 = vperm.xlu0 %3774, %v3733
        %v3776 = vpop.permute.xlu0 %3775
        %3779 = vset.pattern.permute.xlu0 0
        %3780 = vperm.xlu0 %3779, %v3734
        %v3781 = vpop.permute.xlu0 %3780
        %3784 = vset.pattern.permute.xlu0 0
        %3785 = vperm.xlu0 %3784, %v3735
        %v3786 = vpop.permute.xlu0 %3785
        %3789 = vset.pattern.permute.xlu0 0
        %3790 = vperm.xlu0 %3789, %v3736
        %v3791 = vpop.permute.xlu0 %3790
        %3794 = vset.pattern.permute.xlu0 0
        %3795 = vperm.xlu0 %3794, %v3737
        %v3796 = vpop.permute.xlu0 %3795
        %3799 = vset.pattern.permute.xlu0 0
        %3800 = vperm.xlu0 %3799, %v3738
        %v3801 = vpop.permute.xlu0 %3800
        %3804 = vset.pattern.permute.xlu0 0
        %3805 = vperm.xlu0 %3804, %v3739
        %v3806 = vpop.permute.xlu0 %3805
        %3809 = vset.pattern.permute.xlu0 0
        %3810 = vperm.xlu0 %3809, %v3740
        %v3811 = vpop.permute.xlu0 %3810
        %3814 = vset.pattern.permute.xlu0 0
        %3815 = vperm.xlu0 %3814, %v3741
        %v3816 = vpop.permute.xlu0 %3815
        %3819 = vset.pattern.permute.xlu0 0
        %3820 = vperm.xlu0 %3819, %v3742
        %v3821 = vpop.permute.xlu0 %3820
        %3824 = vset.pattern.permute.xlu0 0
        %3825 = vperm.xlu0 %3824, %v3743
        %v3826 = vpop.permute.xlu0 %3825
        %3829 = vset.pattern.permute.xlu0 0
        %3830 = vperm.xlu0 %3829, %v3744
        %v3831 = vpop.permute.xlu0 %3830
        %3834 = vset.pattern.permute.xlu0 0
        %3835 = vperm.xlu0 %3834, %v3745
        %v3836 = vpop.permute.xlu0 %3835
        %3839 = vset.pattern.permute.xlu0 0
        %3840 = vperm.xlu0 %3839, %v3746
        %v3841 = vpop.permute.xlu0 %3840
        %3844 = vset.pattern.permute.xlu0 0
        %3845 = vperm.xlu0 %3844, %v3747
        %v3846 = vpop.permute.xlu0 %3845
        %3849 = vset.pattern.permute.xlu0 0
        %3850 = vperm.xlu0 %3849, %v3748
        %v3851 = vpop.permute.xlu0 %3850
        %3854 = vset.pattern.permute.xlu0 0
        %3855 = vperm.xlu0 %3854, %v3749
        %v3856 = vpop.permute.xlu0 %3855
        %3859 = vset.pattern.permute.xlu0 0
        %3860 = vperm.xlu0 %3859, %v3750
        %v3861 = vpop.permute.xlu0 %3860
        %3864 = vset.pattern.permute.xlu0 0
        %3865 = vperm.xlu0 %3864, %v3751
        %v3866 = vpop.permute.xlu0 %3865
        %3869 = vset.pattern.permute.xlu0 0
        %3870 = vperm.xlu0 %3869, %v3752
        %v3871 = vpop.permute.xlu0 %3870
        %3874 = vset.pattern.permute.xlu0 0
        %3875 = vperm.xlu0 %3874, %v3753
        %v3876 = vpop.permute.xlu0 %3875
        %3879 = vset.pattern.permute.xlu0 0
        %3880 = vperm.xlu0 %3879, %v3754
        %v3881 = vpop.permute.xlu0 %3880
        %3884 = vset.pattern.permute.xlu0 0
        %3885 = vperm.xlu0 %3884, %v3755
        %v3886 = vpop.permute.xlu0 %3885
        %3889 = vset.pattern.permute.xlu0 0
        %3890 = vperm.xlu0 %3889, %v3756
        %v3891 = vpop.permute.xlu0 %3890
        %3894 = vset.pattern.permute.xlu0 0
        %3895 = vperm.xlu0 %3894, %v3757
        %v3896 = vpop.permute.xlu0 %3895
        %3899 = vset.pattern.permute.xlu0 0
        %3900 = vperm.xlu0 %3899, %v3758
        %v3901 = vpop.permute.xlu0 %3900
        %3904 = vset.pattern.permute.xlu0 0
        %3905 = vperm.xlu0 %3904, %v3759
        %v3906 = vpop.permute.xlu0 %3905
        %3909 = vset.pattern.permute.xlu0 0
        %3910 = vperm.xlu0 %3909, %v3760
        %v3911 = vpop.permute.xlu0 %3910
        %3914 = vset.pattern.permute.xlu0 0
        %3915 = vperm.xlu0 %3914, %v3761
        %v3916 = vpop.permute.xlu0 %3915
        %3919 = vset.pattern.permute.xlu0 0
        %3920 = vperm.xlu0 %3919, %v3762
        %v3921 = vpop.permute.xlu0 %3920
        %v3923 = vmul.f32 %v2564, %v3766
        %v3924 = vmul.f32 %v2565, %v3771
        %v3925 = vmul.f32 %v2566, %v3776
        %v3926 = vmul.f32 %v2567, %v3781
        %v3927 = vmul.f32 %v2568, %v3786
        %v3928 = vmul.f32 %v2569, %v3791
        %v3929 = vmul.f32 %v2570, %v3796
        %v3930 = vmul.f32 %v2571, %v3801
        %v3931 = vmul.f32 %v2572, %v3806
        %v3932 = vmul.f32 %v2573, %v3811
        %v3933 = vmul.f32 %v2574, %v3816
        %v3934 = vmul.f32 %v2575, %v3821
        %v3935 = vmul.f32 %v2576, %v3826
        %v3936 = vmul.f32 %v2577, %v3831
        %v3937 = vmul.f32 %v2578, %v3836
        %v3938 = vmul.f32 %v2579, %v3841
        %v3939 = vmul.f32 %v2580, %v3846
        %v3940 = vmul.f32 %v2581, %v3851
        %v3941 = vmul.f32 %v2582, %v3856
        %v3942 = vmul.f32 %v2583, %v3861
        %v3943 = vmul.f32 %v2584, %v3866
        %v3944 = vmul.f32 %v2585, %v3871
        %v3945 = vmul.f32 %v2586, %v3876
        %v3946 = vmul.f32 %v2587, %v3881
        %v3947 = vmul.f32 %v2588, %v3886
        %v3948 = vmul.f32 %v2589, %v3891
        %v3949 = vmul.f32 %v2590, %v3896
        %v3950 = vmul.f32 %v2591, %v3901
        %v3951 = vmul.f32 %v2592, %v3906
        %v3952 = vmul.f32 %v2593, %v3911
        %v3953 = vmul.f32 %v2594, %v3916
        %v3954 = vmul.f32 %v2595, %v3921
        %3955 = vst.msk [vmem:[#allocation2] sm:$0xff] %vm2339, 0.0
        %vm3956 = vcmask 253952
        %3957 = vst.msk [vmem:[#allocation2 + $0x8] sm:$0x1] %vm3956, 0.0
        %3958 = vst.msk [vmem:[#allocation2 + $0x10] sm:$0xff] %vm2339, 0.0
        %3959 = vst.msk [vmem:[#allocation2 + $0x18] sm:$0x1] %vm3956, 0.0
        %3960 = vst.msk [vmem:[#allocation2 + $0x20] sm:$0xff] %vm2339, 0.0
        %3961 = vst.msk [vmem:[#allocation2 + $0x28] sm:$0x1] %vm3956, 0.0
        %3962 = vst.msk [vmem:[#allocation2 + $0x30] sm:$0xff] %vm2339, 0.0
        %3963 = vst.msk [vmem:[#allocation2 + $0x38] sm:$0x1] %vm3956, 0.0
        %3964 = vst.msk [vmem:[#allocation2 + $0x40] sm:$0xff] %vm2339, 0.0
        %3965 = vst.msk [vmem:[#allocation2 + $0x48] sm:$0x1] %vm3956, 0.0
        %3966 = vst.msk [vmem:[#allocation2 + $0x50] sm:$0xff] %vm2339, 0.0
        %3967 = vst.msk [vmem:[#allocation2 + $0x58] sm:$0x1] %vm3956, 0.0
        %3968 = vst.msk [vmem:[#allocation2 + $0x60] sm:$0xff] %vm2339, 0.0
        %3969 = vst.msk [vmem:[#allocation2 + $0x68] sm:$0x1] %vm3956, 0.0
        %3970 = vst.msk [vmem:[#allocation2 + $0x70] sm:$0xff] %vm2339, 0.0
        %3971 = vst.msk [vmem:[#allocation2 + $0x78] sm:$0x1] %vm3956, 0.0
        %3972 = vst.msk [vmem:[#allocation2 + $0x80] sm:$0xff] %vm2339, 0.0
        %3973 = vst.msk [vmem:[#allocation2 + $0x88] sm:$0x1] %vm3956, 0.0
        %3974 = vst.msk [vmem:[#allocation2 + $0x90] sm:$0xff] %vm2339, 0.0
        %3975 = vst.msk [vmem:[#allocation2 + $0x98] sm:$0x1] %vm3956, 0.0
        %3976 = vst.msk [vmem:[#allocation2 + $0xa0] sm:$0xff] %vm2339, 0.0
        %3977 = vst.msk [vmem:[#allocation2 + $0xa8] sm:$0x1] %vm3956, 0.0
        %3978 = vst.msk [vmem:[#allocation2 + $0xb0] sm:$0xff] %vm2339, 0.0
        %3979 = vst.msk [vmem:[#allocation2 + $0xb8] sm:$0x1] %vm3956, 0.0
        %3980 = vst.msk [vmem:[#allocation2 + $0xc0] sm:$0xff] %vm2339, 0.0
        %3981 = vst.msk [vmem:[#allocation2 + $0xc8] sm:$0x1] %vm3956, 0.0
        %3982 = vst.msk [vmem:[#allocation2 + $0xd0] sm:$0xff] %vm2339, 0.0
        %3983 = vst.msk [vmem:[#allocation2 + $0xd8] sm:$0x1] %vm3956, 0.0
        %3984 = vst.msk [vmem:[#allocation2 + $0xe0] sm:$0xff] %vm2339, 0.0
        %3985 = vst.msk [vmem:[#allocation2 + $0xe8] sm:$0x1] %vm3956, 0.0
        %3986 = vst.msk [vmem:[#allocation2 + $0xf0] sm:$0xff] %vm2339, 0.0
        %3987 = vst.msk [vmem:[#allocation2 + $0xf8] sm:$0x1] %vm3956, 0.0
        %3988 = vst.msk [vmem:[#allocation2 + $0x100] sm:$0xff] %vm2339, 0.0
        %3989 = vst.msk [vmem:[#allocation2 + $0x108] sm:$0x1] %vm3956, 0.0
        %3990 = vst.msk [vmem:[#allocation2 + $0x110] sm:$0xff] %vm2339, 0.0
        %3991 = vst.msk [vmem:[#allocation2 + $0x118] sm:$0x1] %vm3956, 0.0
        %3992 = vst.msk [vmem:[#allocation2 + $0x120] sm:$0xff] %vm2339, 0.0
        %3993 = vst.msk [vmem:[#allocation2 + $0x128] sm:$0x1] %vm3956, 0.0
        %3994 = vst.msk [vmem:[#allocation2 + $0x130] sm:$0xff] %vm2339, 0.0
        %3995 = vst.msk [vmem:[#allocation2 + $0x138] sm:$0x1] %vm3956, 0.0
        %3996 = vst.msk [vmem:[#allocation2 + $0x140] sm:$0xff] %vm2339, 0.0
        %3997 = vst.msk [vmem:[#allocation2 + $0x148] sm:$0x1] %vm3956, 0.0
        %3998 = vst.msk [vmem:[#allocation2 + $0x150] sm:$0xff] %vm2339, 0.0
        %3999 = vst.msk [vmem:[#allocation2 + $0x158] sm:$0x1] %vm3956, 0.0
        %4000 = vst.msk [vmem:[#allocation2 + $0x160] sm:$0xff] %vm2339, 0.0
        %4001 = vst.msk [vmem:[#allocation2 + $0x168] sm:$0x1] %vm3956, 0.0
        %4002 = vst.msk [vmem:[#allocation2 + $0x170] sm:$0xff] %vm2339, 0.0
        %4003 = vst.msk [vmem:[#allocation2 + $0x178] sm:$0x1] %vm3956, 0.0
        %4004 = vst.msk [vmem:[#allocation2 + $0x180] sm:$0xff] %vm2339, 0.0
        %4005 = vst.msk [vmem:[#allocation2 + $0x188] sm:$0x1] %vm3956, 0.0
        %4006 = vst.msk [vmem:[#allocation2 + $0x190] sm:$0xff] %vm2339, 0.0
        %4007 = vst.msk [vmem:[#allocation2 + $0x198] sm:$0x1] %vm3956, 0.0
        %4008 = vst.msk [vmem:[#allocation2 + $0x1a0] sm:$0xff] %vm2339, 0.0
        %4009 = vst.msk [vmem:[#allocation2 + $0x1a8] sm:$0x1] %vm3956, 0.0
        %4010 = vst.msk [vmem:[#allocation2 + $0x1b0] sm:$0xff] %vm2339, 0.0
        %4011 = vst.msk [vmem:[#allocation2 + $0x1b8] sm:$0x1] %vm3956, 0.0
        %4012 = vst.msk [vmem:[#allocation2 + $0x1c0] sm:$0xff] %vm2339, 0.0
        %4013 = vst.msk [vmem:[#allocation2 + $0x1c8] sm:$0x1] %vm3956, 0.0
        %4014 = vst.msk [vmem:[#allocation2 + $0x1d0] sm:$0xff] %vm2339, 0.0
        %4015 = vst.msk [vmem:[#allocation2 + $0x1d8] sm:$0x1] %vm3956, 0.0
        %4016 = vst.msk [vmem:[#allocation2 + $0x1e0] sm:$0xff] %vm2339, 0.0
        %4017 = vst.msk [vmem:[#allocation2 + $0x1e8] sm:$0x1] %vm3956, 0.0
        %4018 = vst.msk [vmem:[#allocation2 + $0x1f0] sm:$0xff] %vm2339, 0.0
        %4019 = vst.msk [vmem:[#allocation2 + $0x1f8] sm:$0x1] %vm3956, 0.0
        %4020 = vst.msk [vmem:[#allocation2 + $0x200] sm:$0xff] %vm2339, 0.0
        %4021 = vst.msk [vmem:[#allocation2 + $0x208] sm:$0x1] %vm3956, 0.0
        %4022 = vst.msk [vmem:[#allocation2 + $0x210] sm:$0xff] %vm2339, 0.0
        %4023 = vst.msk [vmem:[#allocation2 + $0x218] sm:$0x1] %vm3956, 0.0
        %4024 = vst.msk [vmem:[#allocation2 + $0x220] sm:$0xff] %vm2339, 0.0
        %4025 = vst.msk [vmem:[#allocation2 + $0x228] sm:$0x1] %vm3956, 0.0
        %4026 = vst.msk [vmem:[#allocation2 + $0x230] sm:$0xff] %vm2339, 0.0
        %4027 = vst.msk [vmem:[#allocation2 + $0x238] sm:$0x1] %vm3956, 0.0
        %4028 = vst.msk [vmem:[#allocation2 + $0x240] sm:$0xff] %vm2339, 0.0
        %4029 = vst.msk [vmem:[#allocation2 + $0x248] sm:$0x1] %vm3956, 0.0
        %4030 = vst.msk [vmem:[#allocation2 + $0x250] sm:$0xff] %vm2339, 0.0
        %4031 = vst.msk [vmem:[#allocation2 + $0x258] sm:$0x1] %vm3956, 0.0
        %s4032 = scalar_lea.vmem [#allocation2], 320
        %4033 = vst.msk [vmem:[%s4032] sm:$0x1] %vm3956, %v3923
        %4034 = vst.msk [vmem:[%s4032 + $0x10] sm:$0x1] %vm3956, %v3925
        %4035 = vst.msk [vmem:[%s4032 + $0x20] sm:$0x1] %vm3956, %v3927
        %4036 = vst.msk [vmem:[%s4032 + $0x30] sm:$0x1] %vm3956, %v3929
        %4037 = vst.msk [vmem:[%s4032 + $0x40] sm:$0x1] %vm3956, %v3931
        %4038 = vst.msk [vmem:[%s4032 + $0x50] sm:$0x1] %vm3956, %v3933
        %4039 = vst.msk [vmem:[%s4032 + $0x60] sm:$0x1] %vm3956, %v3935
        %4040 = vst.msk [vmem:[%s4032 + $0x70] sm:$0x1] %vm3956, %v3937
        %4041 = vst.msk [vmem:[%s4032 + $0x80] sm:$0x1] %vm3956, %v3939
        %4042 = vst.msk [vmem:[%s4032 + $0x90] sm:$0x1] %vm3956, %v3941
        %4043 = vst.msk [vmem:[%s4032 + $0xa0] sm:$0x1] %vm3956, %v3943
        %4044 = vst.msk [vmem:[%s4032 + $0xb0] sm:$0x1] %vm3956, %v3945
        %4045 = vst.msk [vmem:[%s4032 + $0xc0] sm:$0x1] %vm3956, %v3947
        %4046 = vst.msk [vmem:[%s4032 + $0xd0] sm:$0x1] %vm3956, %v3949
        %4047 = vst.msk [vmem:[%s4032 + $0xe0] sm:$0x1] %vm3956, %v3951
        %4048 = vst.msk [vmem:[%s4032 + $0xf0] sm:$0x1] %vm3956, %v3953
        %s4049 = scalar_lea.vmem [#allocation2], 16
        %vm4050 = vcmask 254977
        %4051 = vst.msk [vmem:[%s4049] sm:$0x2] %vm4050, %v3923
        %4052 = vst.msk [vmem:[%s4049 + $0x10] sm:$0x2] %vm4050, %v3925
        %4053 = vst.msk [vmem:[%s4049 + $0x20] sm:$0x2] %vm4050, %v3927
        %4054 = vst.msk [vmem:[%s4049 + $0x30] sm:$0x2] %vm4050, %v3929
        %4055 = vst.msk [vmem:[%s4049 + $0x40] sm:$0x2] %vm4050, %v3931
        %4056 = vst.msk [vmem:[%s4049 + $0x50] sm:$0x2] %vm4050, %v3933
        %4057 = vst.msk [vmem:[%s4049 + $0x60] sm:$0x2] %vm4050, %v3935
        %4058 = vst.msk [vmem:[%s4049 + $0x70] sm:$0x2] %vm4050, %v3937
        %4059 = vst.msk [vmem:[%s4049 + $0x80] sm:$0x2] %vm4050, %v3939
        %4060 = vst.msk [vmem:[%s4049 + $0x90] sm:$0x2] %vm4050, %v3941
        %4061 = vst.msk [vmem:[%s4049 + $0xa0] sm:$0x2] %vm4050, %v3943
        %4062 = vst.msk [vmem:[%s4049 + $0xb0] sm:$0x2] %vm4050, %v3945
        %4063 = vst.msk [vmem:[%s4049 + $0xc0] sm:$0x2] %vm4050, %v3947
        %4064 = vst.msk [vmem:[%s4049 + $0xd0] sm:$0x2] %vm4050, %v3949
        %4065 = vst.msk [vmem:[%s4049 + $0xe0] sm:$0x2] %vm4050, %v3951
        %4066 = vst.msk [vmem:[%s4049 + $0xf0] sm:$0x2] %vm4050, %v3953
        %vm4067 = vcmask 256002
        %4068 = vst.msk [vmem:[%s4032 - $0x1] sm:$0x4] %vm4067, %v3923
        %4069 = vst.msk [vmem:[%s4032 + $0xf] sm:$0x4] %vm4067, %v3925
        %4070 = vst.msk [vmem:[%s4032 + $0x1f] sm:$0x4] %vm4067, %v3927
        %4071 = vst.msk [vmem:[%s4032 + $0x2f] sm:$0x4] %vm4067, %v3929
        %4072 = vst.msk [vmem:[%s4032 + $0x3f] sm:$0x4] %vm4067, %v3931
        %4073 = vst.msk [vmem:[%s4032 + $0x4f] sm:$0x4] %vm4067, %v3933
        %4074 = vst.msk [vmem:[%s4032 + $0x5f] sm:$0x4] %vm4067, %v3935
        %4075 = vst.msk [vmem:[%s4032 + $0x6f] sm:$0x4] %vm4067, %v3937
        %4076 = vst.msk [vmem:[%s4032 + $0x7f] sm:$0x4] %vm4067, %v3939
        %4077 = vst.msk [vmem:[%s4032 + $0x8f] sm:$0x4] %vm4067, %v3941
        %4078 = vst.msk [vmem:[%s4032 + $0x9f] sm:$0x4] %vm4067, %v3943
        %4079 = vst.msk [vmem:[%s4032 + $0xaf] sm:$0x4] %vm4067, %v3945
        %4080 = vst.msk [vmem:[%s4032 + $0xbf] sm:$0x4] %vm4067, %v3947
        %4081 = vst.msk [vmem:[%s4032 + $0xcf] sm:$0x4] %vm4067, %v3949
        %4082 = vst.msk [vmem:[%s4032 + $0xdf] sm:$0x4] %vm4067, %v3951
        %4083 = vst.msk [vmem:[%s4032 + $0xef] sm:$0x4] %vm4067, %v3953
        %vm4084 = vcmask 257027
        %4085 = vst.msk [vmem:[%s4049 - $0x1] sm:$0x8] %vm4084, %v3923
        %4086 = vst.msk [vmem:[%s4049 + $0xf] sm:$0x8] %vm4084, %v3925
        %4087 = vst.msk [vmem:[%s4049 + $0x1f] sm:$0x8] %vm4084, %v3927
        %4088 = vst.msk [vmem:[%s4049 + $0x2f] sm:$0x8] %vm4084, %v3929
        %4089 = vst.msk [vmem:[%s4049 + $0x3f] sm:$0x8] %vm4084, %v3931
        %4090 = vst.msk [vmem:[%s4049 + $0x4f] sm:$0x8] %vm4084, %v3933
        %4091 = vst.msk [vmem:[%s4049 + $0x5f] sm:$0x8] %vm4084, %v3935
        %4092 = vst.msk [vmem:[%s4049 + $0x6f] sm:$0x8] %vm4084, %v3937
        %4093 = vst.msk [vmem:[%s4049 + $0x7f] sm:$0x8] %vm4084, %v3939
        %4094 = vst.msk [vmem:[%s4049 + $0x8f] sm:$0x8] %vm4084, %v3941
        %4095 = vst.msk [vmem:[%s4049 + $0x9f] sm:$0x8] %vm4084, %v3943
        %4096 = vst.msk [vmem:[%s4049 + $0xaf] sm:$0x8] %vm4084, %v3945
        %4097 = vst.msk [vmem:[%s4049 + $0xbf] sm:$0x8] %vm4084, %v3947
        %4098 = vst.msk [vmem:[%s4049 + $0xcf] sm:$0x8] %vm4084, %v3949
        %4099 = vst.msk [vmem:[%s4049 + $0xdf] sm:$0x8] %vm4084, %v3951
        %4100 = vst.msk [vmem:[%s4049 + $0xef] sm:$0x8] %vm4084, %v3953
        %vm4101 = vcmask 258052
        %4102 = vst.msk [vmem:[%s4032 - $0x2] sm:$0x10] %vm4101, %v3923
        %4103 = vst.msk [vmem:[%s4032 + $0xe] sm:$0x10] %vm4101, %v3925
        %4104 = vst.msk [vmem:[%s4032 + $0x1e] sm:$0x10] %vm4101, %v3927
        %4105 = vst.msk [vmem:[%s4032 + $0x2e] sm:$0x10] %vm4101, %v3929
        %4106 = vst.msk [vmem:[%s4032 + $0x3e] sm:$0x10] %vm4101, %v3931
        %4107 = vst.msk [vmem:[%s4032 + $0x4e] sm:$0x10] %vm4101, %v3933
        %4108 = vst.msk [vmem:[%s4032 + $0x5e] sm:$0x10] %vm4101, %v3935
        %4109 = vst.msk [vmem:[%s4032 + $0x6e] sm:$0x10] %vm4101, %v3937
        %4110 = vst.msk [vmem:[%s4032 + $0x7e] sm:$0x10] %vm4101, %v3939
        %4111 = vst.msk [vmem:[%s4032 + $0x8e] sm:$0x10] %vm4101, %v3941
        %4112 = vst.msk [vmem:[%s4032 + $0x9e] sm:$0x10] %vm4101, %v3943
        %4113 = vst.msk [vmem:[%s4032 + $0xae] sm:$0x10] %vm4101, %v3945
        %4114 = vst.msk [vmem:[%s4032 + $0xbe] sm:$0x10] %vm4101, %v3947
        %4115 = vst.msk [vmem:[%s4032 + $0xce] sm:$0x10] %vm4101, %v3949
        %4116 = vst.msk [vmem:[%s4032 + $0xde] sm:$0x10] %vm4101, %v3951
        %4117 = vst.msk [vmem:[%s4032 + $0xee] sm:$0x10] %vm4101, %v3953
        %vm4118 = vcmask 259077
        %4119 = vst.msk [vmem:[%s4049 - $0x2] sm:$0x20] %vm4118, %v3923
        %4120 = vst.msk [vmem:[%s4049 + $0xe] sm:$0x20] %vm4118, %v3925
        %4121 = vst.msk [vmem:[%s4049 + $0x1e] sm:$0x20] %vm4118, %v3927
        %4122 = vst.msk [vmem:[%s4049 + $0x2e] sm:$0x20] %vm4118, %v3929
        %4123 = vst.msk [vmem:[%s4049 + $0x3e] sm:$0x20] %vm4118, %v3931
        %4124 = vst.msk [vmem:[%s4049 + $0x4e] sm:$0x20] %vm4118, %v3933
        %4125 = vst.msk [vmem:[%s4049 + $0x5e] sm:$0x20] %vm4118, %v3935
        %4126 = vst.msk [vmem:[%s4049 + $0x6e] sm:$0x20] %vm4118, %v3937
        %4127 = vst.msk [vmem:[%s4049 + $0x7e] sm:$0x20] %vm4118, %v3939
        %4128 = vst.msk [vmem:[%s4049 + $0x8e] sm:$0x20] %vm4118, %v3941
        %4129 = vst.msk [vmem:[%s4049 + $0x9e] sm:$0x20] %vm4118, %v3943
        %4130 = vst.msk [vmem:[%s4049 + $0xae] sm:$0x20] %vm4118, %v3945
        %4131 = vst.msk [vmem:[%s4049 + $0xbe] sm:$0x20] %vm4118, %v3947
        %4132 = vst.msk [vmem:[%s4049 + $0xce] sm:$0x20] %vm4118, %v3949
        %4133 = vst.msk [vmem:[%s4049 + $0xde] sm:$0x20] %vm4118, %v3951
        %4134 = vst.msk [vmem:[%s4049 + $0xee] sm:$0x20] %vm4118, %v3953
        %vm4135 = vcmask 260102
        %4136 = vst.msk [vmem:[%s4032 - $0x3] sm:$0x40] %vm4135, %v3923
        %4137 = vst.msk [vmem:[%s4032 + $0xd] sm:$0x40] %vm4135, %v3925
        %4138 = vst.msk [vmem:[%s4032 + $0x1d] sm:$0x40] %vm4135, %v3927
        %4139 = vst.msk [vmem:[%s4032 + $0x2d] sm:$0x40] %vm4135, %v3929
        %4140 = vst.msk [vmem:[%s4032 + $0x3d] sm:$0x40] %vm4135, %v3931
        %4141 = vst.msk [vmem:[%s4032 + $0x4d] sm:$0x40] %vm4135, %v3933
        %4142 = vst.msk [vmem:[%s4032 + $0x5d] sm:$0x40] %vm4135, %v3935
        %4143 = vst.msk [vmem:[%s4032 + $0x6d] sm:$0x40] %vm4135, %v3937
        %4144 = vst.msk [vmem:[%s4032 + $0x7d] sm:$0x40] %vm4135, %v3939
        %4145 = vst.msk [vmem:[%s4032 + $0x8d] sm:$0x40] %vm4135, %v3941
        %4146 = vst.msk [vmem:[%s4032 + $0x9d] sm:$0x40] %vm4135, %v3943
        %4147 = vst.msk [vmem:[%s4032 + $0xad] sm:$0x40] %vm4135, %v3945
        %4148 = vst.msk [vmem:[%s4032 + $0xbd] sm:$0x40] %vm4135, %v3947
        %4149 = vst.msk [vmem:[%s4032 + $0xcd] sm:$0x40] %vm4135, %v3949
        %4150 = vst.msk [vmem:[%s4032 + $0xdd] sm:$0x40] %vm4135, %v3951
        %4151 = vst.msk [vmem:[%s4032 + $0xed] sm:$0x40] %vm4135, %v3953
        %vm4152 = vcmask 261127
        %4153 = vst.msk [vmem:[%s4049 - $0x3] sm:$0x80] %vm4152, %v3923
        %4154 = vst.msk [vmem:[%s4049 + $0xd] sm:$0x80] %vm4152, %v3925
        %4155 = vst.msk [vmem:[%s4049 + $0x1d] sm:$0x80] %vm4152, %v3927
        %4156 = vst.msk [vmem:[%s4049 + $0x2d] sm:$0x80] %vm4152, %v3929
        %4157 = vst.msk [vmem:[%s4049 + $0x3d] sm:$0x80] %vm4152, %v3931
        %4158 = vst.msk [vmem:[%s4049 + $0x4d] sm:$0x80] %vm4152, %v3933
        %4159 = vst.msk [vmem:[%s4049 + $0x5d] sm:$0x80] %vm4152, %v3935
        %4160 = vst.msk [vmem:[%s4049 + $0x6d] sm:$0x80] %vm4152, %v3937
        %4161 = vst.msk [vmem:[%s4049 + $0x7d] sm:$0x80] %vm4152, %v3939
        %4162 = vst.msk [vmem:[%s4049 + $0x8d] sm:$0x80] %vm4152, %v3941
        %4163 = vst.msk [vmem:[%s4049 + $0x9d] sm:$0x80] %vm4152, %v3943
        %4164 = vst.msk [vmem:[%s4049 + $0xad] sm:$0x80] %vm4152, %v3945
        %4165 = vst.msk [vmem:[%s4049 + $0xbd] sm:$0x80] %vm4152, %v3947
        %4166 = vst.msk [vmem:[%s4049 + $0xcd] sm:$0x80] %vm4152, %v3949
        %4167 = vst.msk [vmem:[%s4049 + $0xdd] sm:$0x80] %vm4152, %v3951
        %4168 = vst.msk [vmem:[%s4049 + $0xed] sm:$0x80] %vm4152, %v3953
        %4169 = vst.msk [vmem:[%s4032 + $0x4] sm:$0x1] %vm3956, %v3924
        %4170 = vst.msk [vmem:[%s4032 + $0x14] sm:$0x1] %vm3956, %v3926
        %4171 = vst.msk [vmem:[%s4032 + $0x24] sm:$0x1] %vm3956, %v3928
        %4172 = vst.msk [vmem:[%s4032 + $0x34] sm:$0x1] %vm3956, %v3930
        %4173 = vst.msk [vmem:[%s4032 + $0x44] sm:$0x1] %vm3956, %v3932
        %4174 = vst.msk [vmem:[%s4032 + $0x54] sm:$0x1] %vm3956, %v3934
        %4175 = vst.msk [vmem:[%s4032 + $0x64] sm:$0x1] %vm3956, %v3936
        %4176 = vst.msk [vmem:[%s4032 + $0x74] sm:$0x1] %vm3956, %v3938
        %4177 = vst.msk [vmem:[%s4032 + $0x84] sm:$0x1] %vm3956, %v3940
        %4178 = vst.msk [vmem:[%s4032 + $0x94] sm:$0x1] %vm3956, %v3942
        %4179 = vst.msk [vmem:[%s4032 + $0xa4] sm:$0x1] %vm3956, %v3944
        %4180 = vst.msk [vmem:[%s4032 + $0xb4] sm:$0x1] %vm3956, %v3946
        %4181 = vst.msk [vmem:[%s4032 + $0xc4] sm:$0x1] %vm3956, %v3948
        %4182 = vst.msk [vmem:[%s4032 + $0xd4] sm:$0x1] %vm3956, %v3950
        %4183 = vst.msk [vmem:[%s4032 + $0xe4] sm:$0x1] %vm3956, %v3952
        %4184 = vst.msk [vmem:[%s4032 + $0xf4] sm:$0x1] %vm3956, %v3954
        %4185 = vst.msk [vmem:[%s4049 + $0x4] sm:$0x2] %vm4050, %v3924
        %4186 = vst.msk [vmem:[%s4049 + $0x14] sm:$0x2] %vm4050, %v3926
        %4187 = vst.msk [vmem:[%s4049 + $0x24] sm:$0x2] %vm4050, %v3928
        %4188 = vst.msk [vmem:[%s4049 + $0x34] sm:$0x2] %vm4050, %v3930
        %4189 = vst.msk [vmem:[%s4049 + $0x44] sm:$0x2] %vm4050, %v3932
        %4190 = vst.msk [vmem:[%s4049 + $0x54] sm:$0x2] %vm4050, %v3934
        %4191 = vst.msk [vmem:[%s4049 + $0x64] sm:$0x2] %vm4050, %v3936
        %4192 = vst.msk [vmem:[%s4049 + $0x74] sm:$0x2] %vm4050, %v3938
        %4193 = vst.msk [vmem:[%s4049 + $0x84] sm:$0x2] %vm4050, %v3940
        %4194 = vst.msk [vmem:[%s4049 + $0x94] sm:$0x2] %vm4050, %v3942
        %4195 = vst.msk [vmem:[%s4049 + $0xa4] sm:$0x2] %vm4050, %v3944
        %4196 = vst.msk [vmem:[%s4049 + $0xb4] sm:$0x2] %vm4050, %v3946
        %4197 = vst.msk [vmem:[%s4049 + $0xc4] sm:$0x2] %vm4050, %v3948
        %4198 = vst.msk [vmem:[%s4049 + $0xd4] sm:$0x2] %vm4050, %v3950
        %4199 = vst.msk [vmem:[%s4049 + $0xe4] sm:$0x2] %vm4050, %v3952
        %4200 = vst.msk [vmem:[%s4049 + $0xf4] sm:$0x2] %vm4050, %v3954
        %4201 = vst.msk [vmem:[%s4032 + $0x3] sm:$0x4] %vm4067, %v3924
        %4202 = vst.msk [vmem:[%s4032 + $0x13] sm:$0x4] %vm4067, %v3926
        %4203 = vst.msk [vmem:[%s4032 + $0x23] sm:$0x4] %vm4067, %v3928
        %4204 = vst.msk [vmem:[%s4032 + $0x33] sm:$0x4] %vm4067, %v3930
        %4205 = vst.msk [vmem:[%s4032 + $0x43] sm:$0x4] %vm4067, %v3932
        %4206 = vst.msk [vmem:[%s4032 + $0x53] sm:$0x4] %vm4067, %v3934
        %4207 = vst.msk [vmem:[%s4032 + $0x63] sm:$0x4] %vm4067, %v3936
        %4208 = vst.msk [vmem:[%s4032 + $0x73] sm:$0x4] %vm4067, %v3938
        %4209 = vst.msk [vmem:[%s4032 + $0x83] sm:$0x4] %vm4067, %v3940
        %4210 = vst.msk [vmem:[%s4032 + $0x93] sm:$0x4] %vm4067, %v3942
        %4211 = vst.msk [vmem:[%s4032 + $0xa3] sm:$0x4] %vm4067, %v3944
        %4212 = vst.msk [vmem:[%s4032 + $0xb3] sm:$0x4] %vm4067, %v3946
        %4213 = vst.msk [vmem:[%s4032 + $0xc3] sm:$0x4] %vm4067, %v3948
        %4214 = vst.msk [vmem:[%s4032 + $0xd3] sm:$0x4] %vm4067, %v3950
        %4215 = vst.msk [vmem:[%s4032 + $0xe3] sm:$0x4] %vm4067, %v3952
        %4216 = vst.msk [vmem:[%s4032 + $0xf3] sm:$0x4] %vm4067, %v3954
        %4217 = vst.msk [vmem:[%s4049 + $0x3] sm:$0x8] %vm4084, %v3924
        %4218 = vst.msk [vmem:[%s4049 + $0x13] sm:$0x8] %vm4084, %v3926
        %4219 = vst.msk [vmem:[%s4049 + $0x23] sm:$0x8] %vm4084, %v3928
        %4220 = vst.msk [vmem:[%s4049 + $0x33] sm:$0x8] %vm4084, %v3930
        %4221 = vst.msk [vmem:[%s4049 + $0x43] sm:$0x8] %vm4084, %v3932
        %4222 = vst.msk [vmem:[%s4049 + $0x53] sm:$0x8] %vm4084, %v3934
        %4223 = vst.msk [vmem:[%s4049 + $0x63] sm:$0x8] %vm4084, %v3936
        %4224 = vst.msk [vmem:[%s4049 + $0x73] sm:$0x8] %vm4084, %v3938
        %4225 = vst.msk [vmem:[%s4049 + $0x83] sm:$0x8] %vm4084, %v3940
        %4226 = vst.msk [vmem:[%s4049 + $0x93] sm:$0x8] %vm4084, %v3942
        %4227 = vst.msk [vmem:[%s4049 + $0xa3] sm:$0x8] %vm4084, %v3944
        %4228 = vst.msk [vmem:[%s4049 + $0xb3] sm:$0x8] %vm4084, %v3946
        %4229 = vst.msk [vmem:[%s4049 + $0xc3] sm:$0x8] %vm4084, %v3948
        %4230 = vst.msk [vmem:[%s4049 + $0xd3] sm:$0x8] %vm4084, %v3950
        %4231 = vst.msk [vmem:[%s4049 + $0xe3] sm:$0x8] %vm4084, %v3952
        %4232 = vst.msk [vmem:[%s4049 + $0xf3] sm:$0x8] %vm4084, %v3954
        %4233 = vst.msk [vmem:[%s4032 + $0x2] sm:$0x10] %vm4101, %v3924
        %4234 = vst.msk [vmem:[%s4032 + $0x12] sm:$0x10] %vm4101, %v3926
        %4235 = vst.msk [vmem:[%s4032 + $0x22] sm:$0x10] %vm4101, %v3928
        %4236 = vst.msk [vmem:[%s4032 + $0x32] sm:$0x10] %vm4101, %v3930
        %4237 = vst.msk [vmem:[%s4032 + $0x42] sm:$0x10] %vm4101, %v3932
        %4238 = vst.msk [vmem:[%s4032 + $0x52] sm:$0x10] %vm4101, %v3934
        %4239 = vst.msk [vmem:[%s4032 + $0x62] sm:$0x10] %vm4101, %v3936
        %4240 = vst.msk [vmem:[%s4032 + $0x72] sm:$0x10] %vm4101, %v3938
        %4241 = vst.msk [vmem:[%s4032 + $0x82] sm:$0x10] %vm4101, %v3940
        %4242 = vst.msk [vmem:[%s4032 + $0x92] sm:$0x10] %vm4101, %v3942
        %4243 = vst.msk [vmem:[%s4032 + $0xa2] sm:$0x10] %vm4101, %v3944
        %4244 = vst.msk [vmem:[%s4032 + $0xb2] sm:$0x10] %vm4101, %v3946
        %4245 = vst.msk [vmem:[%s4032 + $0xc2] sm:$0x10] %vm4101, %v3948
        %4246 = vst.msk [vmem:[%s4032 + $0xd2] sm:$0x10] %vm4101, %v3950
        %4247 = vst.msk [vmem:[%s4032 + $0xe2] sm:$0x10] %vm4101, %v3952
        %4248 = vst.msk [vmem:[%s4032 + $0xf2] sm:$0x10] %vm4101, %v3954
        %4249 = vst.msk [vmem:[%s4049 + $0x2] sm:$0x20] %vm4118, %v3924
        %4250 = vst.msk [vmem:[%s4049 + $0x12] sm:$0x20] %vm4118, %v3926
        %4251 = vst.msk [vmem:[%s4049 + $0x22] sm:$0x20] %vm4118, %v3928
        %4252 = vst.msk [vmem:[%s4049 + $0x32] sm:$0x20] %vm4118, %v3930
        %4253 = vst.msk [vmem:[%s4049 + $0x42] sm:$0x20] %vm4118, %v3932
        %4254 = vst.msk [vmem:[%s4049 + $0x52] sm:$0x20] %vm4118, %v3934
        %4255 = vst.msk [vmem:[%s4049 + $0x62] sm:$0x20] %vm4118, %v3936
        %4256 = vst.msk [vmem:[%s4049 + $0x72] sm:$0x20] %vm4118, %v3938
        %4257 = vst.msk [vmem:[%s4049 + $0x82] sm:$0x20] %vm4118, %v3940
        %4258 = vst.msk [vmem:[%s4049 + $0x92] sm:$0x20] %vm4118, %v3942
        %4259 = vst.msk [vmem:[%s4049 + $0xa2] sm:$0x20] %vm4118, %v3944
        %4260 = vst.msk [vmem:[%s4049 + $0xb2] sm:$0x20] %vm4118, %v3946
        %4261 = vst.msk [vmem:[%s4049 + $0xc2] sm:$0x20] %vm4118, %v3948
        %4262 = vst.msk [vmem:[%s4049 + $0xd2] sm:$0x20] %vm4118, %v3950
        %4263 = vst.msk [vmem:[%s4049 + $0xe2] sm:$0x20] %vm4118, %v3952
        %4264 = vst.msk [vmem:[%s4049 + $0xf2] sm:$0x20] %vm4118, %v3954
        %4265 = vst.msk [vmem:[%s4032 + $0x1] sm:$0x40] %vm4135, %v3924
        %4266 = vst.msk [vmem:[%s4032 + $0x11] sm:$0x40] %vm4135, %v3926
        %4267 = vst.msk [vmem:[%s4032 + $0x21] sm:$0x40] %vm4135, %v3928
        %4268 = vst.msk [vmem:[%s4032 + $0x31] sm:$0x40] %vm4135, %v3930
        %4269 = vst.msk [vmem:[%s4032 + $0x41] sm:$0x40] %vm4135, %v3932
        %4270 = vst.msk [vmem:[%s4032 + $0x51] sm:$0x40] %vm4135, %v3934
        %4271 = vst.msk [vmem:[%s4032 + $0x61] sm:$0x40] %vm4135, %v3936
        %4272 = vst.msk [vmem:[%s4032 + $0x71] sm:$0x40] %vm4135, %v3938
        %4273 = vst.msk [vmem:[%s4032 + $0x81] sm:$0x40] %vm4135, %v3940
        %4274 = vst.msk [vmem:[%s4032 + $0x91] sm:$0x40] %vm4135, %v3942
        %4275 = vst.msk [vmem:[%s4032 + $0xa1] sm:$0x40] %vm4135, %v3944
        %4276 = vst.msk [vmem:[%s4032 + $0xb1] sm:$0x40] %vm4135, %v3946
        %4277 = vst.msk [vmem:[%s4032 + $0xc1] sm:$0x40] %vm4135, %v3948
        %4278 = vst.msk [vmem:[%s4032 + $0xd1] sm:$0x40] %vm4135, %v3950
        %4279 = vst.msk [vmem:[%s4032 + $0xe1] sm:$0x40] %vm4135, %v3952
        %4280 = vst.msk [vmem:[%s4032 + $0xf1] sm:$0x40] %vm4135, %v3954
        %4281 = vst.msk [vmem:[%s4049 + $0x1] sm:$0x80] %vm4152, %v3924
        %4282 = vst.msk [vmem:[%s4049 + $0x11] sm:$0x80] %vm4152, %v3926
        %4283 = vst.msk [vmem:[%s4049 + $0x21] sm:$0x80] %vm4152, %v3928
        %4284 = vst.msk [vmem:[%s4049 + $0x31] sm:$0x80] %vm4152, %v3930
        %4285 = vst.msk [vmem:[%s4049 + $0x41] sm:$0x80] %vm4152, %v3932
        %4286 = vst.msk [vmem:[%s4049 + $0x51] sm:$0x80] %vm4152, %v3934
        %4287 = vst.msk [vmem:[%s4049 + $0x61] sm:$0x80] %vm4152, %v3936
        %4288 = vst.msk [vmem:[%s4049 + $0x71] sm:$0x80] %vm4152, %v3938
        %4289 = vst.msk [vmem:[%s4049 + $0x81] sm:$0x80] %vm4152, %v3940
        %4290 = vst.msk [vmem:[%s4049 + $0x91] sm:$0x80] %vm4152, %v3942
        %4291 = vst.msk [vmem:[%s4049 + $0xa1] sm:$0x80] %vm4152, %v3944
        %4292 = vst.msk [vmem:[%s4049 + $0xb1] sm:$0x80] %vm4152, %v3946
        %4293 = vst.msk [vmem:[%s4049 + $0xc1] sm:$0x80] %vm4152, %v3948
        %4294 = vst.msk [vmem:[%s4049 + $0xd1] sm:$0x80] %vm4152, %v3950
        %4295 = vst.msk [vmem:[%s4049 + $0xe1] sm:$0x80] %vm4152, %v3952
        %4296 = vst.msk [vmem:[%s4049 + $0xf1] sm:$0x80] %vm4152, %v3954
        %v4297 = vld [vmem:[#allocation2] sm:$0xff]
        %v4298 = vld [vmem:[#allocation2 + $0x20] sm:$0xff]
        %v4299 = vld [vmem:[#allocation2 + $0x40] sm:$0xff]
        %v4300 = vld [vmem:[#allocation2 + $0x60] sm:$0xff]
        %v4301 = vld [vmem:[#allocation2 + $0x80] sm:$0xff]
        %v4302 = vld [vmem:[#allocation2 + $0xa0] sm:$0xff]
        %v4303 = vld [vmem:[#allocation2 + $0xc0] sm:$0xff]
        %v4304 = vld [vmem:[#allocation2 + $0xe0] sm:$0xff]
        %v4305 = vpack.c.bf16 %v4298, %v4297
        %v4306 = vpack.c.bf16 %v4300, %v4299
        %v4307 = vpack.c.bf16 %v4302, %v4301
        %v4308 = vpack.c.bf16 %v4304, %v4303
        %v4309 = vld [vmem:[%s8] sm:$0xf]
        %v4310 = vld [vmem:[%s8 + $0x4] sm:$0xf]
        %v4311 = vld [vmem:[%s8 + $0x8] sm:$0xf]
        %v4312 = vld [vmem:[%s8 + $0xc] sm:$0xf]
        %s4313 = scalar_lea.vmem [#allocation2], 304
        %v4314 = vld [vmem:[%s4313] sm:$0xff]
        %v4315 = vld [vmem:[%s4313 + $0x20] sm:$0xff]
        %v4316 = vld [vmem:[%s4313 + $0x40] sm:$0xff]
        %v4317 = vld [vmem:[%s4313 + $0x60] sm:$0xff]
        %v4318 = vld [vmem:[%s4313 + $0x80] sm:$0xff]
        %v4319 = vld [vmem:[%s4313 + $0xa0] sm:$0xff]
        %v4320 = vld [vmem:[%s4313 + $0xc0] sm:$0xff]
        %v4321 = vld [vmem:[%s4313 + $0xe0] sm:$0xff]
        %v4322 = vpack.c.bf16 %v4315, %v4314
        %v4323 = vpack.c.bf16 %v4317, %v4316
        %v4324 = vpack.c.bf16 %v4319, %v4318
        %v4325 = vpack.c.bf16 %v4321, %v4320
        %s4326 = scalar_lea.vmem %s8, 16
        %v4327 = vld [vmem:[%s4326] sm:$0xf]
        %v4328 = vld [vmem:[%s4326 + $0x4] sm:$0xf]
        %v4329 = vld [vmem:[%s4326 + $0x8] sm:$0xf]
        %v4330 = vld [vmem:[%s4326 + $0xc] sm:$0xf]
        %v4335 = vunpack.c.l.b16 %v4327
        %v4336 = vunpack.c.l.b16 %v4328
        %v4337 = vunpack.c.l.b16 %v4329
        %v4338 = vunpack.c.l.b16 %v4330
        %v4339 = vpack.c.b16 %v4336, %v4335
        %v4340 = vpack.c.b16 %v4338, %v4337
        %v4344 = vsel %vm2339, %v4322, 0
        %v4347 = vsel %vm2339, %v4323, 0
        %v4350 = vsel %vm2339, %v4324, 0
        %v4353 = vsel %vm2339, %v4325, 0
        %4355 = vmatpush.bf16.msra.mxu0 0
        %4356 = vmatpush.bf16.msra.mxu0 0
        %4357 = vmatpush.bf16.msra.mxu0 0
        %4358 = vmatpush.bf16.msra.mxu0 0
        %4359 = vmatpush.bf16.msra.mxu0 0
        %4360 = vmatpush.bf16.msra.mxu0 0
        %4361 = vmatpush.bf16.msra.mxu0 %v4340
        %4362 = vmatpush.bf16.msra.mxu0 %v4339
        %4363 = vmatmul.bf16.gmra.mxu0 %v4344
        %v4364 = vpop.f32.mrf.mxu0
        %v4365 = vadd.f32 0.0, %v4364
        %v4366 = vpop.f32.mrf.mxu0
        %v4367 = vadd.f32 0.0, %v4366
        %4368 = vmatmul.bf16.gmra.mxu0 %v4347
        %v4369 = vpop.f32.mrf.mxu0
        %v4370 = vadd.f32 0.0, %v4369
        %v4371 = vpop.f32.mrf.mxu0
        %v4372 = vadd.f32 0.0, %v4371
        %4373 = vmatmul.bf16.gmra.mxu0 %v4350
        %v4374 = vpop.f32.mrf.mxu0
        %v4375 = vadd.f32 0.0, %v4374
        %v4376 = vpop.f32.mrf.mxu0
        %v4377 = vadd.f32 0.0, %v4376
        %4378 = vmatmul.bf16.gmra.mxu0 %v4353
        %v4379 = vpop.f32.mrf.mxu0
        %v4380 = vadd.f32 0.0, %v4379
        %v4381 = vpop.f32.mrf.mxu0
        %v4382 = vadd.f32 0.0, %v4381
        %4383 = vdwg.mxu0
        %v4388 = vunpack.c.l.b16 %v4309
        %v4389 = vunpack.c.l.b16 %v4310
        %v4390 = vunpack.c.l.b16 %v4311
        %v4391 = vunpack.c.l.b16 %v4312
        %v4392 = vpack.c.b16 %v4389, %v4388
        %v4393 = vpack.c.b16 %v4391, %v4390
        %v4397 = vsel %vm2339, %v4305, 0
        %v4400 = vsel %vm2339, %v4306, 0
        %v4403 = vsel %vm2339, %v4307, 0
        %v4406 = vsel %vm2339, %v4308, 0
        %4408 = vmatpush.bf16.msra.mxu0 0
        %4409 = vmatpush.bf16.msra.mxu0 0
        %4410 = vmatpush.bf16.msra.mxu0 0
        %4411 = vmatpush.bf16.msra.mxu0 0
        %4412 = vmatpush.bf16.msra.mxu0 0
        %4413 = vmatpush.bf16.msra.mxu0 0
        %4414 = vmatpush.bf16.msra.mxu0 %v4393
        %4415 = vmatpush.bf16.msra.mxu0 %v4392
        %4416 = vmatmul.bf16.gmra.mxu0 %v4397
        %v4417 = vpop.f32.mrf.mxu0
        %v4418 = vadd.f32 %v4365, %v4417
        %v4419 = vpop.f32.mrf.mxu0
        %v4420 = vadd.f32 %v4367, %v4419
        %4421 = vmatmul.bf16.gmra.mxu0 %v4400
        %v4422 = vpop.f32.mrf.mxu0
        %v4423 = vadd.f32 %v4370, %v4422
        %v4424 = vpop.f32.mrf.mxu0
        %v4425 = vadd.f32 %v4372, %v4424
        %4426 = vmatmul.bf16.gmra.mxu0 %v4403
        %v4427 = vpop.f32.mrf.mxu0
        %v4428 = vadd.f32 %v4375, %v4427
        %v4429 = vpop.f32.mrf.mxu0
        %v4430 = vadd.f32 %v4377, %v4429
        %4431 = vmatmul.bf16.gmra.mxu0 %v4406
        %v4432 = vpop.f32.mrf.mxu0
        %v4433 = vadd.f32 %v4380, %v4432
        %v4434 = vpop.f32.mrf.mxu0
        %v4435 = vadd.f32 %v4382, %v4434
        %4436 = vdwg.mxu0
        %v4437 = vld [vmem:[#allocation2 + $0x1] sm:$0xff]
        %v4438 = vld [vmem:[#allocation2 + $0x21] sm:$0xff]
        %v4439 = vld [vmem:[#allocation2 + $0x41] sm:$0xff]
        %v4440 = vld [vmem:[#allocation2 + $0x61] sm:$0xff]
        %v4441 = vld [vmem:[#allocation2 + $0x81] sm:$0xff]
        %v4442 = vld [vmem:[#allocation2 + $0xa1] sm:$0xff]
        %v4443 = vld [vmem:[#allocation2 + $0xc1] sm:$0xff]
        %v4444 = vld [vmem:[#allocation2 + $0xe1] sm:$0xff]
        %v4445 = vpack.c.bf16 %v4438, %v4437
        %v4446 = vpack.c.bf16 %v4440, %v4439
        %v4447 = vpack.c.bf16 %v4442, %v4441
        %v4448 = vpack.c.bf16 %v4444, %v4443
        %s4449 = scalar_lea.vmem %s8, 32
        %v4450 = vld [vmem:[%s4449] sm:$0xf]
        %v4451 = vld [vmem:[%s4449 + $0x4] sm:$0xf]
        %v4452 = vld [vmem:[%s4449 + $0x8] sm:$0xf]
        %v4453 = vld [vmem:[%s4449 + $0xc] sm:$0xf]
        %v4458 = vunpack.c.l.b16 %v4450
        %v4459 = vunpack.c.l.b16 %v4451
        %v4460 = vunpack.c.l.b16 %v4452
        %v4461 = vunpack.c.l.b16 %v4453
        %v4462 = vpack.c.b16 %v4459, %v4458
        %v4463 = vpack.c.b16 %v4461, %v4460
        %v4467 = vsel %vm2339, %v4445, 0
        %v4470 = vsel %vm2339, %v4446, 0
        %v4473 = vsel %vm2339, %v4447, 0
        %v4476 = vsel %vm2339, %v4448, 0
        %4478 = vmatpush.bf16.msra.mxu0 0
        %4479 = vmatpush.bf16.msra.mxu0 0
        %4480 = vmatpush.bf16.msra.mxu0 0
        %4481 = vmatpush.bf16.msra.mxu0 0
        %4482 = vmatpush.bf16.msra.mxu0 0
        %4483 = vmatpush.bf16.msra.mxu0 0
        %4484 = vmatpush.bf16.msra.mxu0 %v4463
        %4485 = vmatpush.bf16.msra.mxu0 %v4462
        %4486 = vmatmul.bf16.gmra.mxu0 %v4467
        %v4487 = vpop.f32.mrf.mxu0
        %v4488 = vadd.f32 0.0, %v4487
        %v4489 = vpop.f32.mrf.mxu0
        %v4490 = vadd.f32 0.0, %v4489
        %4491 = vmatmul.bf16.gmra.mxu0 %v4470
        %v4492 = vpop.f32.mrf.mxu0
        %v4493 = vadd.f32 0.0, %v4492
        %v4494 = vpop.f32.mrf.mxu0
        %v4495 = vadd.f32 0.0, %v4494
        %4496 = vmatmul.bf16.gmra.mxu0 %v4473
        %v4497 = vpop.f32.mrf.mxu0
        %v4498 = vadd.f32 0.0, %v4497
        %v4499 = vpop.f32.mrf.mxu0
        %v4500 = vadd.f32 0.0, %v4499
        %4501 = vmatmul.bf16.gmra.mxu0 %v4476
        %v4502 = vpop.f32.mrf.mxu0
        %v4503 = vadd.f32 0.0, %v4502
        %v4504 = vpop.f32.mrf.mxu0
        %v4505 = vadd.f32 0.0, %v4504
        %4506 = vdwg.mxu0
        %v4507 = vadd.f32 %v4418, %v4488
        %v4508 = vadd.f32 %v4420, %v4490
        %v4509 = vadd.f32 %v4423, %v4493
        %v4510 = vadd.f32 %v4425, %v4495
        %v4511 = vadd.f32 %v4428, %v4498
        %v4512 = vadd.f32 %v4430, %v4500
        %v4513 = vadd.f32 %v4433, %v4503
        %v4514 = vadd.f32 %v4435, %v4505
        %v4515 = vld [vmem:[%s4313 + $0x1] sm:$0xff]
        %v4516 = vld [vmem:[%s4313 + $0x21] sm:$0xff]
        %v4517 = vld [vmem:[%s4313 + $0x41] sm:$0xff]
        %v4518 = vld [vmem:[%s4313 + $0x61] sm:$0xff]
        %v4519 = vld [vmem:[%s4313 + $0x81] sm:$0xff]
        %v4520 = vld [vmem:[%s4313 + $0xa1] sm:$0xff]
        %v4521 = vld [vmem:[%s4313 + $0xc1] sm:$0xff]
        %v4522 = vld [vmem:[%s4313 + $0xe1] sm:$0xff]
        %v4523 = vpack.c.bf16 %v4516, %v4515
        %v4524 = vpack.c.bf16 %v4518, %v4517
        %v4525 = vpack.c.bf16 %v4520, %v4519
        %v4526 = vpack.c.bf16 %v4522, %v4521
        %s4527 = scalar_lea.vmem %s8, 48
        %v4528 = vld [vmem:[%s4527] sm:$0xf]
        %v4529 = vld [vmem:[%s4527 + $0x4] sm:$0xf]
        %v4530 = vld [vmem:[%s4527 + $0x8] sm:$0xf]
        %v4531 = vld [vmem:[%s4527 + $0xc] sm:$0xf]
        %v4536 = vunpack.c.l.b16 %v4528
        %v4537 = vunpack.c.l.b16 %v4529
        %v4538 = vunpack.c.l.b16 %v4530
        %v4539 = vunpack.c.l.b16 %v4531
        %v4540 = vpack.c.b16 %v4537, %v4536
        %v4541 = vpack.c.b16 %v4539, %v4538
        %v4545 = vsel %vm2339, %v4523, 0
        %v4548 = vsel %vm2339, %v4524, 0
        %v4551 = vsel %vm2339, %v4525, 0
        %v4554 = vsel %vm2339, %v4526, 0
        %4556 = vmatpush.bf16.msra.mxu0 0
        %4557 = vmatpush.bf16.msra.mxu0 0
        %4558 = vmatpush.bf16.msra.mxu0 0
        %4559 = vmatpush.bf16.msra.mxu0 0
        %4560 = vmatpush.bf16.msra.mxu0 0
        %4561 = vmatpush.bf16.msra.mxu0 0
        %4562 = vmatpush.bf16.msra.mxu0 %v4541
        %4563 = vmatpush.bf16.msra.mxu0 %v4540
        %4564 = vmatmul.bf16.gmra.mxu0 %v4545
        %v4565 = vpop.f32.mrf.mxu0
        %v4566 = vadd.f32 0.0, %v4565
        %v4567 = vpop.f32.mrf.mxu0
        %v4568 = vadd.f32 0.0, %v4567
        %4569 = vmatmul.bf16.gmra.mxu0 %v4548
        %v4570 = vpop.f32.mrf.mxu0
        %v4571 = vadd.f32 0.0, %v4570
        %v4572 = vpop.f32.mrf.mxu0
        %v4573 = vadd.f32 0.0, %v4572
        %4574 = vmatmul.bf16.gmra.mxu0 %v4551
        %v4575 = vpop.f32.mrf.mxu0
        %v4576 = vadd.f32 0.0, %v4575
        %v4577 = vpop.f32.mrf.mxu0
        %v4578 = vadd.f32 0.0, %v4577
        %4579 = vmatmul.bf16.gmra.mxu0 %v4554
        %v4580 = vpop.f32.mrf.mxu0
        %v4581 = vadd.f32 0.0, %v4580
        %v4582 = vpop.f32.mrf.mxu0
        %v4583 = vadd.f32 0.0, %v4582
        %4584 = vdwg.mxu0
        %v4585 = vadd.f32 %v4507, %v4566
        %v4586 = vadd.f32 %v4508, %v4568
        %v4587 = vadd.f32 %v4509, %v4571
        %v4588 = vadd.f32 %v4510, %v4573
        %v4589 = vadd.f32 %v4511, %v4576
        %v4590 = vadd.f32 %v4512, %v4578
        %v4591 = vadd.f32 %v4513, %v4581
        %v4592 = vadd.f32 %v4514, %v4583
        %v4593 = vld [vmem:[%s4049] sm:$0xff]
        %v4594 = vld [vmem:[%s4049 + $0x20] sm:$0xff]
        %v4595 = vld [vmem:[%s4049 + $0x40] sm:$0xff]
        %v4596 = vld [vmem:[%s4049 + $0x60] sm:$0xff]
        %v4597 = vld [vmem:[%s4049 + $0x80] sm:$0xff]
        %v4598 = vld [vmem:[%s4049 + $0xa0] sm:$0xff]
        %v4599 = vld [vmem:[%s4049 + $0xc0] sm:$0xff]
        %v4600 = vld [vmem:[%s4049 + $0xe0] sm:$0xff]
        %v4601 = vpack.c.bf16 %v4594, %v4593
        %v4602 = vpack.c.bf16 %v4596, %v4595
        %v4603 = vpack.c.bf16 %v4598, %v4597
        %v4604 = vpack.c.bf16 %v4600, %v4599
        %s4605 = scalar_lea.vmem %s8, 64
        %v4606 = vld [vmem:[%s4605] sm:$0xf]
        %v4607 = vld [vmem:[%s4605 + $0x4] sm:$0xf]
        %v4608 = vld [vmem:[%s4605 + $0x8] sm:$0xf]
        %v4609 = vld [vmem:[%s4605 + $0xc] sm:$0xf]
        %v4614 = vunpack.c.l.b16 %v4606
        %v4615 = vunpack.c.l.b16 %v4607
        %v4616 = vunpack.c.l.b16 %v4608
        %v4617 = vunpack.c.l.b16 %v4609
        %v4618 = vpack.c.b16 %v4615, %v4614
        %v4619 = vpack.c.b16 %v4617, %v4616
        %v4623 = vsel %vm2339, %v4601, 0
        %v4626 = vsel %vm2339, %v4602, 0
        %v4629 = vsel %vm2339, %v4603, 0
        %v4632 = vsel %vm2339, %v4604, 0
        %4634 = vmatpush.bf16.msra.mxu0 0
        %4635 = vmatpush.bf16.msra.mxu0 0
        %4636 = vmatpush.bf16.msra.mxu0 0
        %4637 = vmatpush.bf16.msra.mxu0 0
        %4638 = vmatpush.bf16.msra.mxu0 0
        %4639 = vmatpush.bf16.msra.mxu0 0
        %4640 = vmatpush.bf16.msra.mxu0 %v4619
        %4641 = vmatpush.bf16.msra.mxu0 %v4618
        %4642 = vmatmul.bf16.gmra.mxu0 %v4623
        %v4643 = vpop.f32.mrf.mxu0
        %v4644 = vadd.f32 0.0, %v4643
        %v4645 = vpop.f32.mrf.mxu0
        %v4646 = vadd.f32 0.0, %v4645
        %4647 = vmatmul.bf16.gmra.mxu0 %v4626
        %v4648 = vpop.f32.mrf.mxu0
        %v4649 = vadd.f32 0.0, %v4648
        %v4650 = vpop.f32.mrf.mxu0
        %v4651 = vadd.f32 0.0, %v4650
        %4652 = vmatmul.bf16.gmra.mxu0 %v4629
        %v4653 = vpop.f32.mrf.mxu0
        %v4654 = vadd.f32 0.0, %v4653
        %v4655 = vpop.f32.mrf.mxu0
        %v4656 = vadd.f32 0.0, %v4655
        %4657 = vmatmul.bf16.gmra.mxu0 %v4632
        %v4658 = vpop.f32.mrf.mxu0
        %v4659 = vadd.f32 0.0, %v4658
        %v4660 = vpop.f32.mrf.mxu0
        %v4661 = vadd.f32 0.0, %v4660
        %4662 = vdwg.mxu0
        %v4663 = vadd.f32 %v4585, %v4644
        %v4664 = vadd.f32 %v4586, %v4646
        %v4665 = vadd.f32 %v4587, %v4649
        %v4666 = vadd.f32 %v4588, %v4651
        %v4667 = vadd.f32 %v4589, %v4654
        %v4668 = vadd.f32 %v4590, %v4656
        %v4669 = vadd.f32 %v4591, %v4659
        %v4670 = vadd.f32 %v4592, %v4661
        %v4671 = vld [vmem:[%s4032] sm:$0xff]
        %v4672 = vld [vmem:[%s4032 + $0x20] sm:$0xff]
        %v4673 = vld [vmem:[%s4032 + $0x40] sm:$0xff]
        %v4674 = vld [vmem:[%s4032 + $0x60] sm:$0xff]
        %v4675 = vld [vmem:[%s4032 + $0x80] sm:$0xff]
        %v4676 = vld [vmem:[%s4032 + $0xa0] sm:$0xff]
        %v4677 = vld [vmem:[%s4032 + $0xc0] sm:$0xff]
        %v4678 = vld [vmem:[%s4032 + $0xe0] sm:$0xff]
        %v4679 = vpack.c.bf16 %v4672, %v4671
        %v4680 = vpack.c.bf16 %v4674, %v4673
        %v4681 = vpack.c.bf16 %v4676, %v4675
        %v4682 = vpack.c.bf16 %v4678, %v4677
        %s4683 = scalar_lea.vmem %s8, 80
        %v4684 = vld [vmem:[%s4683] sm:$0xf]
        %v4685 = vld [vmem:[%s4683 + $0x4] sm:$0xf]
        %v4686 = vld [vmem:[%s4683 + $0x8] sm:$0xf]
        %v4687 = vld [vmem:[%s4683 + $0xc] sm:$0xf]
        %v4692 = vunpack.c.l.b16 %v4684
        %v4693 = vunpack.c.l.b16 %v4685
        %v4694 = vunpack.c.l.b16 %v4686
        %v4695 = vunpack.c.l.b16 %v4687
        %v4696 = vpack.c.b16 %v4693, %v4692
        %v4697 = vpack.c.b16 %v4695, %v4694
        %v4701 = vsel %vm2339, %v4679, 0
        %v4704 = vsel %vm2339, %v4680, 0
        %v4707 = vsel %vm2339, %v4681, 0
        %v4710 = vsel %vm2339, %v4682, 0
        %4712 = vmatpush.bf16.msra.mxu0 0
        %4713 = vmatpush.bf16.msra.mxu0 0
        %4714 = vmatpush.bf16.msra.mxu0 0
        %4715 = vmatpush.bf16.msra.mxu0 0
        %4716 = vmatpush.bf16.msra.mxu0 0
        %4717 = vmatpush.bf16.msra.mxu0 0
        %4718 = vmatpush.bf16.msra.mxu0 %v4697
        %4719 = vmatpush.bf16.msra.mxu0 %v4696
        %4720 = vmatmul.bf16.gmra.mxu0 %v4701
        %v4721 = vpop.f32.mrf.mxu0
        %v4722 = vadd.f32 0.0, %v4721
        %v4723 = vpop.f32.mrf.mxu0
        %v4724 = vadd.f32 0.0, %v4723
        %4725 = vmatmul.bf16.gmra.mxu0 %v4704
        %v4726 = vpop.f32.mrf.mxu0
        %v4727 = vadd.f32 0.0, %v4726
        %v4728 = vpop.f32.mrf.mxu0
        %v4729 = vadd.f32 0.0, %v4728
        %4730 = vmatmul.bf16.gmra.mxu0 %v4707
        %v4731 = vpop.f32.mrf.mxu0
        %v4732 = vadd.f32 0.0, %v4731
        %v4733 = vpop.f32.mrf.mxu0
        %v4734 = vadd.f32 0.0, %v4733
        %4735 = vmatmul.bf16.gmra.mxu0 %v4710
        %v4736 = vpop.f32.mrf.mxu0
        %v4737 = vadd.f32 0.0, %v4736
        %v4738 = vpop.f32.mrf.mxu0
        %v4739 = vadd.f32 0.0, %v4738
        %4740 = vdwg.mxu0
        %v4741 = vadd.f32 %v4663, %v4722
        %v4742 = vadd.f32 %v4664, %v4724
        %v4743 = vadd.f32 %v4665, %v4727
        %v4744 = vadd.f32 %v4666, %v4729
        %v4745 = vadd.f32 %v4667, %v4732
        %v4746 = vadd.f32 %v4668, %v4734
        %v4747 = vadd.f32 %v4669, %v4737
        %v4748 = vadd.f32 %v4670, %v4739
        %v4749 = vld [vmem:[%s4049 + $0x1] sm:$0xff]
        %v4750 = vld [vmem:[%s4049 + $0x21] sm:$0xff]
        %v4751 = vld [vmem:[%s4049 + $0x41] sm:$0xff]
        %v4752 = vld [vmem:[%s4049 + $0x61] sm:$0xff]
        %v4753 = vld [vmem:[%s4049 + $0x81] sm:$0xff]
        %v4754 = vld [vmem:[%s4049 + $0xa1] sm:$0xff]
        %v4755 = vld [vmem:[%s4049 + $0xc1] sm:$0xff]
        %v4756 = vld [vmem:[%s4049 + $0xe1] sm:$0xff]
        %v4757 = vpack.c.bf16 %v4750, %v4749
        %v4758 = vpack.c.bf16 %v4752, %v4751
        %v4759 = vpack.c.bf16 %v4754, %v4753
        %v4760 = vpack.c.bf16 %v4756, %v4755
        %s4761 = scalar_lea.vmem %s8, 96
        %v4762 = vld [vmem:[%s4761] sm:$0xf]
        %v4763 = vld [vmem:[%s4761 + $0x4] sm:$0xf]
        %v4764 = vld [vmem:[%s4761 + $0x8] sm:$0xf]
        %v4765 = vld [vmem:[%s4761 + $0xc] sm:$0xf]
        %v4770 = vunpack.c.l.b16 %v4762
        %v4771 = vunpack.c.l.b16 %v4763
        %v4772 = vunpack.c.l.b16 %v4764
        %v4773 = vunpack.c.l.b16 %v4765
        %v4774 = vpack.c.b16 %v4771, %v4770
        %v4775 = vpack.c.b16 %v4773, %v4772
        %v4779 = vsel %vm2339, %v4757, 0
        %v4782 = vsel %vm2339, %v4758, 0
        %v4785 = vsel %vm2339, %v4759, 0
        %v4788 = vsel %vm2339, %v4760, 0
        %4790 = vmatpush.bf16.msra.mxu0 0
        %4791 = vmatpush.bf16.msra.mxu0 0
        %4792 = vmatpush.bf16.msra.mxu0 0
        %4793 = vmatpush.bf16.msra.mxu0 0
        %4794 = vmatpush.bf16.msra.mxu0 0
        %4795 = vmatpush.bf16.msra.mxu0 0
        %4796 = vmatpush.bf16.msra.mxu0 %v4775
        %4797 = vmatpush.bf16.msra.mxu0 %v4774
        %4798 = vmatmul.bf16.gmra.mxu0 %v4779
        %v4799 = vpop.f32.mrf.mxu0
        %v4800 = vadd.f32 0.0, %v4799
        %v4801 = vpop.f32.mrf.mxu0
        %v4802 = vadd.f32 0.0, %v4801
        %4803 = vmatmul.bf16.gmra.mxu0 %v4782
        %v4804 = vpop.f32.mrf.mxu0
        %v4805 = vadd.f32 0.0, %v4804
        %v4806 = vpop.f32.mrf.mxu0
        %v4807 = vadd.f32 0.0, %v4806
        %4808 = vmatmul.bf16.gmra.mxu0 %v4785
        %v4809 = vpop.f32.mrf.mxu0
        %v4810 = vadd.f32 0.0, %v4809
        %v4811 = vpop.f32.mrf.mxu0
        %v4812 = vadd.f32 0.0, %v4811
        %4813 = vmatmul.bf16.gmra.mxu0 %v4788
        %v4814 = vpop.f32.mrf.mxu0
        %v4815 = vadd.f32 0.0, %v4814
        %v4816 = vpop.f32.mrf.mxu0
        %v4817 = vadd.f32 0.0, %v4816
        %4818 = vdwg.mxu0
        %v4819 = vadd.f32 %v4741, %v4800
        %v4820 = vadd.f32 %v4742, %v4802
        %v4821 = vadd.f32 %v4743, %v4805
        %v4822 = vadd.f32 %v4744, %v4807
        %v4823 = vadd.f32 %v4745, %v4810
        %v4824 = vadd.f32 %v4746, %v4812
        %v4825 = vadd.f32 %v4747, %v4815
        %v4826 = vadd.f32 %v4748, %v4817
        %v4827 = vld [vmem:[%s4032 + $0x1] sm:$0xff]
        %v4828 = vld [vmem:[%s4032 + $0x21] sm:$0xff]
        %v4829 = vld [vmem:[%s4032 + $0x41] sm:$0xff]
        %v4830 = vld [vmem:[%s4032 + $0x61] sm:$0xff]
        %v4831 = vld [vmem:[%s4032 + $0x81] sm:$0xff]
        %v4832 = vld [vmem:[%s4032 + $0xa1] sm:$0xff]
        %v4833 = vld [vmem:[%s4032 + $0xc1] sm:$0xff]
        %v4834 = vld [vmem:[%s4032 + $0xe1] sm:$0xff]
        %v4835 = vpack.c.bf16 %v4828, %v4827
        %v4836 = vpack.c.bf16 %v4830, %v4829
        %v4837 = vpack.c.bf16 %v4832, %v4831
        %v4838 = vpack.c.bf16 %v4834, %v4833
        %s4839 = scalar_lea.vmem %s8, 112
        %v4840 = vld [vmem:[%s4839] sm:$0xf]
        %v4841 = vld [vmem:[%s4839 + $0x4] sm:$0xf]
        %v4842 = vld [vmem:[%s4839 + $0x8] sm:$0xf]
        %v4843 = vld [vmem:[%s4839 + $0xc] sm:$0xf]
        %v4848 = vunpack.c.l.b16 %v4840
        %v4849 = vunpack.c.l.b16 %v4841
        %v4850 = vunpack.c.l.b16 %v4842
        %v4851 = vunpack.c.l.b16 %v4843
        %v4852 = vpack.c.b16 %v4849, %v4848
        %v4853 = vpack.c.b16 %v4851, %v4850
        %v4857 = vsel %vm2339, %v4835, 0
        %v4860 = vsel %vm2339, %v4836, 0
        %v4863 = vsel %vm2339, %v4837, 0
        %v4866 = vsel %vm2339, %v4838, 0
        %4868 = vmatpush.bf16.msra.mxu0 0
        %4869 = vmatpush.bf16.msra.mxu0 0
        %4870 = vmatpush.bf16.msra.mxu0 0
        %4871 = vmatpush.bf16.msra.mxu0 0
        %4872 = vmatpush.bf16.msra.mxu0 0
        %4873 = vmatpush.bf16.msra.mxu0 0
        %4874 = vmatpush.bf16.msra.mxu0 %v4853
        %4875 = vmatpush.bf16.msra.mxu0 %v4852
        %4876 = vmatmul.bf16.gmra.mxu0 %v4857
        %v4877 = vpop.f32.mrf.mxu0
        %v4878 = vadd.f32 0.0, %v4877
        %v4879 = vpop.f32.mrf.mxu0
        %v4880 = vadd.f32 0.0, %v4879
        %4881 = vmatmul.bf16.gmra.mxu0 %v4860
        %v4882 = vpop.f32.mrf.mxu0
        %v4883 = vadd.f32 0.0, %v4882
        %v4884 = vpop.f32.mrf.mxu0
        %v4885 = vadd.f32 0.0, %v4884
        %4886 = vmatmul.bf16.gmra.mxu0 %v4863
        %v4887 = vpop.f32.mrf.mxu0
        %v4888 = vadd.f32 0.0, %v4887
        %v4889 = vpop.f32.mrf.mxu0
        %v4890 = vadd.f32 0.0, %v4889
        %4891 = vmatmul.bf16.gmra.mxu0 %v4866
        %v4892 = vpop.f32.mrf.mxu0
        %v4893 = vadd.f32 0.0, %v4892
        %v4894 = vpop.f32.mrf.mxu0
        %v4895 = vadd.f32 0.0, %v4894
        %4896 = vdwg.mxu0
        %v4897 = vadd.f32 %v4819, %v4878
        %v4898 = vadd.f32 %v4820, %v4880
        %v4899 = vadd.f32 %v4821, %v4883
        %v4900 = vadd.f32 %v4822, %v4885
        %v4901 = vadd.f32 %v4823, %v4888
        %v4902 = vadd.f32 %v4824, %v4890
        %v4903 = vadd.f32 %v4825, %v4893
        %v4904 = vadd.f32 %v4826, %v4895
        %s4905 = scalar_lea.vmem [#allocation2], 32
        %v4906 = vld [vmem:[%s4905] sm:$0xff]
        %v4907 = vld [vmem:[%s4905 + $0x20] sm:$0xff]
        %v4908 = vld [vmem:[%s4905 + $0x40] sm:$0xff]
        %v4909 = vld [vmem:[%s4905 + $0x60] sm:$0xff]
        %v4910 = vld [vmem:[%s4905 + $0x80] sm:$0xff]
        %v4911 = vld [vmem:[%s4905 + $0xa0] sm:$0xff]
        %v4912 = vld [vmem:[%s4905 + $0xc0] sm:$0xff]
        %v4913 = vld [vmem:[%s4905 + $0xe0] sm:$0xff]
        %v4914 = vpack.c.bf16 %v4907, %v4906
        %v4915 = vpack.c.bf16 %v4909, %v4908
        %v4916 = vpack.c.bf16 %v4911, %v4910
        %v4917 = vpack.c.bf16 %v4913, %v4912
        %s4918 = scalar_lea.vmem %s8, 128
        %v4919 = vld [vmem:[%s4918] sm:$0xf]
        %v4920 = vld [vmem:[%s4918 + $0x4] sm:$0xf]
        %v4921 = vld [vmem:[%s4918 + $0x8] sm:$0xf]
        %v4922 = vld [vmem:[%s4918 + $0xc] sm:$0xf]
        %v4927 = vunpack.c.l.b16 %v4919
        %v4928 = vunpack.c.l.b16 %v4920
        %v4929 = vunpack.c.l.b16 %v4921
        %v4930 = vunpack.c.l.b16 %v4922
        %v4931 = vpack.c.b16 %v4928, %v4927
        %v4932 = vpack.c.b16 %v4930, %v4929
        %v4936 = vsel %vm2339, %v4914, 0
        %v4939 = vsel %vm2339, %v4915, 0
        %v4942 = vsel %vm2339, %v4916, 0
        %v4945 = vsel %vm2339, %v4917, 0
        %4947 = vmatpush.bf16.msra.mxu0 0
        %4948 = vmatpush.bf16.msra.mxu0 0
        %4949 = vmatpush.bf16.msra.mxu0 0
        %4950 = vmatpush.bf16.msra.mxu0 0
        %4951 = vmatpush.bf16.msra.mxu0 0
        %4952 = vmatpush.bf16.msra.mxu0 0
        %4953 = vmatpush.bf16.msra.mxu0 %v4932
        %4954 = vmatpush.bf16.msra.mxu0 %v4931
        %4955 = vmatmul.bf16.gmra.mxu0 %v4936
        %v4956 = vpop.f32.mrf.mxu0
        %v4957 = vadd.f32 0.0, %v4956
        %v4958 = vpop.f32.mrf.mxu0
        %v4959 = vadd.f32 0.0, %v4958
        %4960 = vmatmul.bf16.gmra.mxu0 %v4939
        %v4961 = vpop.f32.mrf.mxu0
        %v4962 = vadd.f32 0.0, %v4961
        %v4963 = vpop.f32.mrf.mxu0
        %v4964 = vadd.f32 0.0, %v4963
        %4965 = vmatmul.bf16.gmra.mxu0 %v4942
        %v4966 = vpop.f32.mrf.mxu0
        %v4967 = vadd.f32 0.0, %v4966
        %v4968 = vpop.f32.mrf.mxu0
        %v4969 = vadd.f32 0.0, %v4968
        %4970 = vmatmul.bf16.gmra.mxu0 %v4945
        %v4971 = vpop.f32.mrf.mxu0
        %v4972 = vadd.f32 0.0, %v4971
        %v4973 = vpop.f32.mrf.mxu0
        %v4974 = vadd.f32 0.0, %v4973
        %4975 = vdwg.mxu0
        %v4976 = vadd.f32 %v4897, %v4957
        %v4977 = vadd.f32 %v4898, %v4959
        %v4978 = vadd.f32 %v4899, %v4962
        %v4979 = vadd.f32 %v4900, %v4964
        %v4980 = vadd.f32 %v4901, %v4967
        %v4981 = vadd.f32 %v4902, %v4969
        %v4982 = vadd.f32 %v4903, %v4972
        %v4983 = vadd.f32 %v4904, %v4974
        %s4984 = scalar_lea.vmem [#allocation2], 336
        %v4985 = vld [vmem:[%s4984] sm:$0xff]
        %v4986 = vld [vmem:[%s4984 + $0x20] sm:$0xff]
        %v4987 = vld [vmem:[%s4984 + $0x40] sm:$0xff]
        %v4988 = vld [vmem:[%s4984 + $0x60] sm:$0xff]
        %v4989 = vld [vmem:[%s4984 + $0x80] sm:$0xff]
        %v4990 = vld [vmem:[%s4984 + $0xa0] sm:$0xff]
        %v4991 = vld [vmem:[%s4984 + $0xc0] sm:$0xff]
        %v4992 = vld [vmem:[%s4984 + $0xe0] sm:$0xff]
        %v4993 = vpack.c.bf16 %v4986, %v4985
        %v4994 = vpack.c.bf16 %v4988, %v4987
        %v4995 = vpack.c.bf16 %v4990, %v4989
        %v4996 = vpack.c.bf16 %v4992, %v4991
        %s4997 = scalar_lea.vmem %s8, 144
        %v4998 = vld [vmem:[%s4997] sm:$0xf]
        %v4999 = vld [vmem:[%s4997 + $0x4] sm:$0xf]
        %v5000 = vld [vmem:[%s4997 + $0x8] sm:$0xf]
        %v5001 = vld [vmem:[%s4997 + $0xc] sm:$0xf]
        %v5006 = vunpack.c.l.b16 %v4998
        %v5007 = vunpack.c.l.b16 %v4999
        %v5008 = vunpack.c.l.b16 %v5000
        %v5009 = vunpack.c.l.b16 %v5001
        %v5010 = vpack.c.b16 %v5007, %v5006
        %v5011 = vpack.c.b16 %v5009, %v5008
        %v5015 = vsel %vm2339, %v4993, 0
        %v5018 = vsel %vm2339, %v4994, 0
        %v5021 = vsel %vm2339, %v4995, 0
        %v5024 = vsel %vm2339, %v4996, 0
        %5026 = vmatpush.bf16.msra.mxu0 0
        %5027 = vmatpush.bf16.msra.mxu0 0
        %5028 = vmatpush.bf16.msra.mxu0 0
        %5029 = vmatpush.bf16.msra.mxu0 0
        %5030 = vmatpush.bf16.msra.mxu0 0
        %5031 = vmatpush.bf16.msra.mxu0 0
        %5032 = vmatpush.bf16.msra.mxu0 %v5011
        %5033 = vmatpush.bf16.msra.mxu0 %v5010
        %5034 = vmatmul.bf16.gmra.mxu0 %v5015
        %v5035 = vpop.f32.mrf.mxu0
        %v5036 = vadd.f32 0.0, %v5035
        %v5037 = vpop.f32.mrf.mxu0
        %v5038 = vadd.f32 0.0, %v5037
        %5039 = vmatmul.bf16.gmra.mxu0 %v5018
        %v5040 = vpop.f32.mrf.mxu0
        %v5041 = vadd.f32 0.0, %v5040
        %v5042 = vpop.f32.mrf.mxu0
        %v5043 = vadd.f32 0.0, %v5042
        %5044 = vmatmul.bf16.gmra.mxu0 %v5021
        %v5045 = vpop.f32.mrf.mxu0
        %v5046 = vadd.f32 0.0, %v5045
        %v5047 = vpop.f32.mrf.mxu0
        %v5048 = vadd.f32 0.0, %v5047
        %5049 = vmatmul.bf16.gmra.mxu0 %v5024
        %v5050 = vpop.f32.mrf.mxu0
        %v5051 = vadd.f32 0.0, %v5050
        %v5052 = vpop.f32.mrf.mxu0
        %v5053 = vadd.f32 0.0, %v5052
        %5054 = vdwg.mxu0
        %v5055 = vadd.f32 %v4976, %v5036
        %v5056 = vadd.f32 %v4977, %v5038
        %v5057 = vadd.f32 %v4978, %v5041
        %v5058 = vadd.f32 %v4979, %v5043
        %v5059 = vadd.f32 %v4980, %v5046
        %v5060 = vadd.f32 %v4981, %v5048
        %v5061 = vadd.f32 %v4982, %v5051
        %v5062 = vadd.f32 %v4983, %v5053
        %v5063 = vld [vmem:[%s4905 + $0x1] sm:$0xff]
        %v5064 = vld [vmem:[%s4905 + $0x21] sm:$0xff]
        %v5065 = vld [vmem:[%s4905 + $0x41] sm:$0xff]
        %v5066 = vld [vmem:[%s4905 + $0x61] sm:$0xff]
        %v5067 = vld [vmem:[%s4905 + $0x81] sm:$0xff]
        %v5068 = vld [vmem:[%s4905 + $0xa1] sm:$0xff]
        %v5069 = vld [vmem:[%s4905 + $0xc1] sm:$0xff]
        %v5070 = vld [vmem:[%s4905 + $0xe1] sm:$0xff]
        %v5071 = vpack.c.bf16 %v5064, %v5063
        %v5072 = vpack.c.bf16 %v5066, %v5065
        %v5073 = vpack.c.bf16 %v5068, %v5067
        %v5074 = vpack.c.bf16 %v5070, %v5069
        %s5075 = scalar_lea.vmem %s8, 160
        %v5076 = vld [vmem:[%s5075] sm:$0xf]
        %v5077 = vld [vmem:[%s5075 + $0x4] sm:$0xf]
        %v5078 = vld [vmem:[%s5075 + $0x8] sm:$0xf]
        %v5079 = vld [vmem:[%s5075 + $0xc] sm:$0xf]
        %v5084 = vunpack.c.l.b16 %v5076
        %v5085 = vunpack.c.l.b16 %v5077
        %v5086 = vunpack.c.l.b16 %v5078
        %v5087 = vunpack.c.l.b16 %v5079
        %v5088 = vpack.c.b16 %v5085, %v5084
        %v5089 = vpack.c.b16 %v5087, %v5086
        %v5093 = vsel %vm2339, %v5071, 0
        %v5096 = vsel %vm2339, %v5072, 0
        %v5099 = vsel %vm2339, %v5073, 0
        %v5102 = vsel %vm2339, %v5074, 0
        %5104 = vmatpush.bf16.msra.mxu0 0
        %5105 = vmatpush.bf16.msra.mxu0 0
        %5106 = vmatpush.bf16.msra.mxu0 0
        %5107 = vmatpush.bf16.msra.mxu0 0
        %5108 = vmatpush.bf16.msra.mxu0 0
        %5109 = vmatpush.bf16.msra.mxu0 0
        %5110 = vmatpush.bf16.msra.mxu0 %v5089
        %5111 = vmatpush.bf16.msra.mxu0 %v5088
        %5112 = vmatmul.bf16.gmra.mxu0 %v5093
        %v5113 = vpop.f32.mrf.mxu0
        %v5114 = vadd.f32 0.0, %v5113
        %v5115 = vpop.f32.mrf.mxu0
        %v5116 = vadd.f32 0.0, %v5115
        %5117 = vmatmul.bf16.gmra.mxu0 %v5096
        %v5118 = vpop.f32.mrf.mxu0
        %v5119 = vadd.f32 0.0, %v5118
        %v5120 = vpop.f32.mrf.mxu0
        %v5121 = vadd.f32 0.0, %v5120
        %5122 = vmatmul.bf16.gmra.mxu0 %v5099
        %v5123 = vpop.f32.mrf.mxu0
        %v5124 = vadd.f32 0.0, %v5123
        %v5125 = vpop.f32.mrf.mxu0
        %v5126 = vadd.f32 0.0, %v5125
        %5127 = vmatmul.bf16.gmra.mxu0 %v5102
        %v5128 = vpop.f32.mrf.mxu0
        %v5129 = vadd.f32 0.0, %v5128
        %v5130 = vpop.f32.mrf.mxu0
        %v5131 = vadd.f32 0.0, %v5130
        %5132 = vdwg.mxu0
        %v5133 = vadd.f32 %v5055, %v5114
        %v5134 = vadd.f32 %v5056, %v5116
        %v5135 = vadd.f32 %v5057, %v5119
        %v5136 = vadd.f32 %v5058, %v5121
        %v5137 = vadd.f32 %v5059, %v5124
        %v5138 = vadd.f32 %v5060, %v5126
        %v5139 = vadd.f32 %v5061, %v5129
        %v5140 = vadd.f32 %v5062, %v5131
        %v5141 = vld [vmem:[%s4984 + $0x1] sm:$0xff]
        %v5142 = vld [vmem:[%s4984 + $0x21] sm:$0xff]
        %v5143 = vld [vmem:[%s4984 + $0x41] sm:$0xff]
        %v5144 = vld [vmem:[%s4984 + $0x61] sm:$0xff]
        %v5145 = vld [vmem:[%s4984 + $0x81] sm:$0xff]
        %v5146 = vld [vmem:[%s4984 + $0xa1] sm:$0xff]
        %v5147 = vld [vmem:[%s4984 + $0xc1] sm:$0xff]
        %v5148 = vld [vmem:[%s4984 + $0xe1] sm:$0xff]
        %v5149 = vpack.c.bf16 %v5142, %v5141
        %v5150 = vpack.c.bf16 %v5144, %v5143
        %v5151 = vpack.c.bf16 %v5146, %v5145
        %v5152 = vpack.c.bf16 %v5148, %v5147
        %s5153 = scalar_lea.vmem %s8, 176
        %v5154 = vld [vmem:[%s5153] sm:$0xf]
        %v5155 = vld [vmem:[%s5153 + $0x4] sm:$0xf]
        %v5156 = vld [vmem:[%s5153 + $0x8] sm:$0xf]
        %v5157 = vld [vmem:[%s5153 + $0xc] sm:$0xf]
        %v5162 = vunpack.c.l.b16 %v5154
        %v5163 = vunpack.c.l.b16 %v5155
        %v5164 = vunpack.c.l.b16 %v5156
        %v5165 = vunpack.c.l.b16 %v5157
        %v5166 = vpack.c.b16 %v5163, %v5162
        %v5167 = vpack.c.b16 %v5165, %v5164
        %v5171 = vsel %vm2339, %v5149, 0
        %v5174 = vsel %vm2339, %v5150, 0
        %v5177 = vsel %vm2339, %v5151, 0
        %v5180 = vsel %vm2339, %v5152, 0
        %5182 = vmatpush.bf16.msra.mxu0 0
        %5183 = vmatpush.bf16.msra.mxu0 0
        %5184 = vmatpush.bf16.msra.mxu0 0
        %5185 = vmatpush.bf16.msra.mxu0 0
        %5186 = vmatpush.bf16.msra.mxu0 0
        %5187 = vmatpush.bf16.msra.mxu0 0
        %5188 = vmatpush.bf16.msra.mxu0 %v5167
        %5189 = vmatpush.bf16.msra.mxu0 %v5166
        %5190 = vmatmul.bf16.gmra.mxu0 %v5171
        %v5191 = vpop.f32.mrf.mxu0
        %v5192 = vadd.f32 0.0, %v5191
        %v5193 = vpop.f32.mrf.mxu0
        %v5194 = vadd.f32 0.0, %v5193
        %5195 = vmatmul.bf16.gmra.mxu0 %v5174
        %v5196 = vpop.f32.mrf.mxu0
        %v5197 = vadd.f32 0.0, %v5196
        %v5198 = vpop.f32.mrf.mxu0
        %v5199 = vadd.f32 0.0, %v5198
        %5200 = vmatmul.bf16.gmra.mxu0 %v5177
        %v5201 = vpop.f32.mrf.mxu0
        %v5202 = vadd.f32 0.0, %v5201
        %v5203 = vpop.f32.mrf.mxu0
        %v5204 = vadd.f32 0.0, %v5203
        %5205 = vmatmul.bf16.gmra.mxu0 %v5180
        %v5206 = vpop.f32.mrf.mxu0
        %v5207 = vadd.f32 0.0, %v5206
        %v5208 = vpop.f32.mrf.mxu0
        %v5209 = vadd.f32 0.0, %v5208
        %5210 = vdwg.mxu0
        %v5211 = vadd.f32 %v5133, %v5192
        %v5212 = vadd.f32 %v5134, %v5194
        %v5213 = vadd.f32 %v5135, %v5197
        %v5214 = vadd.f32 %v5136, %v5199
        %v5215 = vadd.f32 %v5137, %v5202
        %v5216 = vadd.f32 %v5138, %v5204
        %v5217 = vadd.f32 %v5139, %v5207
        %v5218 = vadd.f32 %v5140, %v5209
        %s5219 = scalar_lea.vmem [#allocation2], 48
        %v5220 = vld [vmem:[%s5219] sm:$0xff]
        %v5221 = vld [vmem:[%s5219 + $0x20] sm:$0xff]
        %v5222 = vld [vmem:[%s5219 + $0x40] sm:$0xff]
        %v5223 = vld [vmem:[%s5219 + $0x60] sm:$0xff]
        %v5224 = vld [vmem:[%s5219 + $0x80] sm:$0xff]
        %v5225 = vld [vmem:[%s5219 + $0xa0] sm:$0xff]
        %v5226 = vld [vmem:[%s5219 + $0xc0] sm:$0xff]
        %v5227 = vld [vmem:[%s5219 + $0xe0] sm:$0xff]
        %v5228 = vpack.c.bf16 %v5221, %v5220
        %v5229 = vpack.c.bf16 %v5223, %v5222
        %v5230 = vpack.c.bf16 %v5225, %v5224
        %v5231 = vpack.c.bf16 %v5227, %v5226
        %s5232 = scalar_lea.vmem %s8, 192
        %v5233 = vld [vmem:[%s5232] sm:$0xf]
        %v5234 = vld [vmem:[%s5232 + $0x4] sm:$0xf]
        %v5235 = vld [vmem:[%s5232 + $0x8] sm:$0xf]
        %v5236 = vld [vmem:[%s5232 + $0xc] sm:$0xf]
        %v5241 = vunpack.c.l.b16 %v5233
        %v5242 = vunpack.c.l.b16 %v5234
        %v5243 = vunpack.c.l.b16 %v5235
        %v5244 = vunpack.c.l.b16 %v5236
        %v5245 = vpack.c.b16 %v5242, %v5241
        %v5246 = vpack.c.b16 %v5244, %v5243
        %v5250 = vsel %vm2339, %v5228, 0
        %v5253 = vsel %vm2339, %v5229, 0
        %v5256 = vsel %vm2339, %v5230, 0
        %v5259 = vsel %vm2339, %v5231, 0
        %5261 = vmatpush.bf16.msra.mxu0 0
        %5262 = vmatpush.bf16.msra.mxu0 0
        %5263 = vmatpush.bf16.msra.mxu0 0
        %5264 = vmatpush.bf16.msra.mxu0 0
        %5265 = vmatpush.bf16.msra.mxu0 0
        %5266 = vmatpush.bf16.msra.mxu0 0
        %5267 = vmatpush.bf16.msra.mxu0 %v5246
        %5268 = vmatpush.bf16.msra.mxu0 %v5245
        %5269 = vmatmul.bf16.gmra.mxu0 %v5250
        %v5270 = vpop.f32.mrf.mxu0
        %v5271 = vadd.f32 0.0, %v5270
        %v5272 = vpop.f32.mrf.mxu0
        %v5273 = vadd.f32 0.0, %v5272
        %5274 = vmatmul.bf16.gmra.mxu0 %v5253
        %v5275 = vpop.f32.mrf.mxu0
        %v5276 = vadd.f32 0.0, %v5275
        %v5277 = vpop.f32.mrf.mxu0
        %v5278 = vadd.f32 0.0, %v5277
        %5279 = vmatmul.bf16.gmra.mxu0 %v5256
        %v5280 = vpop.f32.mrf.mxu0
        %v5281 = vadd.f32 0.0, %v5280
        %v5282 = vpop.f32.mrf.mxu0
        %v5283 = vadd.f32 0.0, %v5282
        %5284 = vmatmul.bf16.gmra.mxu0 %v5259
        %v5285 = vpop.f32.mrf.mxu0
        %v5286 = vadd.f32 0.0, %v5285
        %v5287 = vpop.f32.mrf.mxu0
        %v5288 = vadd.f32 0.0, %v5287
        %5289 = vdwg.mxu0
        %v5290 = vadd.f32 %v5211, %v5271
        %v5291 = vadd.f32 %v5212, %v5273
        %v5292 = vadd.f32 %v5213, %v5276
        %v5293 = vadd.f32 %v5214, %v5278
        %v5294 = vadd.f32 %v5215, %v5281
        %v5295 = vadd.f32 %v5216, %v5283
        %v5296 = vadd.f32 %v5217, %v5286
        %v5297 = vadd.f32 %v5218, %v5288
        %s5298 = scalar_lea.vmem [#allocation2], 352
        %v5299 = vld [vmem:[%s5298] sm:$0xff]
        %v5300 = vld [vmem:[%s5298 + $0x20] sm:$0xff]
        %v5301 = vld [vmem:[%s5298 + $0x40] sm:$0xff]
        %v5302 = vld [vmem:[%s5298 + $0x60] sm:$0xff]
        %v5303 = vld [vmem:[%s5298 + $0x80] sm:$0xff]
        %v5304 = vld [vmem:[%s5298 + $0xa0] sm:$0xff]
        %v5305 = vld [vmem:[%s5298 + $0xc0] sm:$0xff]
        %v5306 = vld [vmem:[%s5298 + $0xe0] sm:$0xff]
        %v5307 = vpack.c.bf16 %v5300, %v5299
        %v5308 = vpack.c.bf16 %v5302, %v5301
        %v5309 = vpack.c.bf16 %v5304, %v5303
        %v5310 = vpack.c.bf16 %v5306, %v5305
        %s5311 = scalar_lea.vmem %s8, 208
        %v5312 = vld [vmem:[%s5311] sm:$0xf]
        %v5313 = vld [vmem:[%s5311 + $0x4] sm:$0xf]
        %v5314 = vld [vmem:[%s5311 + $0x8] sm:$0xf]
        %v5315 = vld [vmem:[%s5311 + $0xc] sm:$0xf]
        %v5320 = vunpack.c.l.b16 %v5312
        %v5321 = vunpack.c.l.b16 %v5313
        %v5322 = vunpack.c.l.b16 %v5314
        %v5323 = vunpack.c.l.b16 %v5315
        %v5324 = vpack.c.b16 %v5321, %v5320
        %v5325 = vpack.c.b16 %v5323, %v5322
        %v5329 = vsel %vm2339, %v5307, 0
        %v5332 = vsel %vm2339, %v5308, 0
        %v5335 = vsel %vm2339, %v5309, 0
        %v5338 = vsel %vm2339, %v5310, 0
        %5340 = vmatpush.bf16.msra.mxu0 0
        %5341 = vmatpush.bf16.msra.mxu0 0
        %5342 = vmatpush.bf16.msra.mxu0 0
        %5343 = vmatpush.bf16.msra.mxu0 0
        %5344 = vmatpush.bf16.msra.mxu0 0
        %5345 = vmatpush.bf16.msra.mxu0 0
        %5346 = vmatpush.bf16.msra.mxu0 %v5325
        %5347 = vmatpush.bf16.msra.mxu0 %v5324
        %5348 = vmatmul.bf16.gmra.mxu0 %v5329
        %v5349 = vpop.f32.mrf.mxu0
        %v5350 = vadd.f32 0.0, %v5349
        %v5351 = vpop.f32.mrf.mxu0
        %v5352 = vadd.f32 0.0, %v5351
        %5353 = vmatmul.bf16.gmra.mxu0 %v5332
        %v5354 = vpop.f32.mrf.mxu0
        %v5355 = vadd.f32 0.0, %v5354
        %v5356 = vpop.f32.mrf.mxu0
        %v5357 = vadd.f32 0.0, %v5356
        %5358 = vmatmul.bf16.gmra.mxu0 %v5335
        %v5359 = vpop.f32.mrf.mxu0
        %v5360 = vadd.f32 0.0, %v5359
        %v5361 = vpop.f32.mrf.mxu0
        %v5362 = vadd.f32 0.0, %v5361
        %5363 = vmatmul.bf16.gmra.mxu0 %v5338
        %v5364 = vpop.f32.mrf.mxu0
        %v5365 = vadd.f32 0.0, %v5364
        %v5366 = vpop.f32.mrf.mxu0
        %v5367 = vadd.f32 0.0, %v5366
        %5368 = vdwg.mxu0
        %v5369 = vadd.f32 %v5290, %v5350
        %v5370 = vadd.f32 %v5291, %v5352
        %v5371 = vadd.f32 %v5292, %v5355
        %v5372 = vadd.f32 %v5293, %v5357
        %v5373 = vadd.f32 %v5294, %v5360
        %v5374 = vadd.f32 %v5295, %v5362
        %v5375 = vadd.f32 %v5296, %v5365
        %v5376 = vadd.f32 %v5297, %v5367
        %v5377 = vld [vmem:[%s5219 + $0x1] sm:$0xff]
        %v5378 = vld [vmem:[%s5219 + $0x21] sm:$0xff]
        %v5379 = vld [vmem:[%s5219 + $0x41] sm:$0xff]
        %v5380 = vld [vmem:[%s5219 + $0x61] sm:$0xff]
        %v5381 = vld [vmem:[%s5219 + $0x81] sm:$0xff]
        %v5382 = vld [vmem:[%s5219 + $0xa1] sm:$0xff]
        %v5383 = vld [vmem:[%s5219 + $0xc1] sm:$0xff]
        %v5384 = vld [vmem:[%s5219 + $0xe1] sm:$0xff]
        %v5385 = vpack.c.bf16 %v5378, %v5377
        %v5386 = vpack.c.bf16 %v5380, %v5379
        %v5387 = vpack.c.bf16 %v5382, %v5381
        %v5388 = vpack.c.bf16 %v5384, %v5383
        %s5389 = scalar_lea.vmem %s8, 224
        %v5390 = vld [vmem:[%s5389] sm:$0xf]
        %v5391 = vld [vmem:[%s5389 + $0x4] sm:$0xf]
        %v5392 = vld [vmem:[%s5389 + $0x8] sm:$0xf]
        %v5393 = vld [vmem:[%s5389 + $0xc] sm:$0xf]
        %v5398 = vunpack.c.l.b16 %v5390
        %v5399 = vunpack.c.l.b16 %v5391
        %v5400 = vunpack.c.l.b16 %v5392
        %v5401 = vunpack.c.l.b16 %v5393
        %v5402 = vpack.c.b16 %v5399, %v5398
        %v5403 = vpack.c.b16 %v5401, %v5400
        %v5407 = vsel %vm2339, %v5385, 0
        %v5410 = vsel %vm2339, %v5386, 0
        %v5413 = vsel %vm2339, %v5387, 0
        %v5416 = vsel %vm2339, %v5388, 0
        %5418 = vmatpush.bf16.msra.mxu0 0
        %5419 = vmatpush.bf16.msra.mxu0 0
        %5420 = vmatpush.bf16.msra.mxu0 0
        %5421 = vmatpush.bf16.msra.mxu0 0
        %5422 = vmatpush.bf16.msra.mxu0 0
        %5423 = vmatpush.bf16.msra.mxu0 0
        %5424 = vmatpush.bf16.msra.mxu0 %v5403
        %5425 = vmatpush.bf16.msra.mxu0 %v5402
        %5426 = vmatmul.bf16.gmra.mxu0 %v5407
        %v5427 = vpop.f32.mrf.mxu0
        %v5428 = vadd.f32 0.0, %v5427
        %v5429 = vpop.f32.mrf.mxu0
        %v5430 = vadd.f32 0.0, %v5429
        %5431 = vmatmul.bf16.gmra.mxu0 %v5410
        %v5432 = vpop.f32.mrf.mxu0
        %v5433 = vadd.f32 0.0, %v5432
        %v5434 = vpop.f32.mrf.mxu0
        %v5435 = vadd.f32 0.0, %v5434
        %5436 = vmatmul.bf16.gmra.mxu0 %v5413
        %v5437 = vpop.f32.mrf.mxu0
        %v5438 = vadd.f32 0.0, %v5437
        %v5439 = vpop.f32.mrf.mxu0
        %v5440 = vadd.f32 0.0, %v5439
        %5441 = vmatmul.bf16.gmra.mxu0 %v5416
        %v5442 = vpop.f32.mrf.mxu0
        %v5443 = vadd.f32 0.0, %v5442
        %v5444 = vpop.f32.mrf.mxu0
        %v5445 = vadd.f32 0.0, %v5444
        %5446 = vdwg.mxu0
        %v5447 = vadd.f32 %v5369, %v5428
        %v5448 = vadd.f32 %v5370, %v5430
        %v5449 = vadd.f32 %v5371, %v5433
        %v5450 = vadd.f32 %v5372, %v5435
        %v5451 = vadd.f32 %v5373, %v5438
        %v5452 = vadd.f32 %v5374, %v5440
        %v5453 = vadd.f32 %v5375, %v5443
        %v5454 = vadd.f32 %v5376, %v5445
        %v5455 = vld [vmem:[%s5298 + $0x1] sm:$0xff]
        %v5456 = vld [vmem:[%s5298 + $0x21] sm:$0xff]
        %v5457 = vld [vmem:[%s5298 + $0x41] sm:$0xff]
        %v5458 = vld [vmem:[%s5298 + $0x61] sm:$0xff]
        %v5459 = vld [vmem:[%s5298 + $0x81] sm:$0xff]
        %v5460 = vld [vmem:[%s5298 + $0xa1] sm:$0xff]
        %v5461 = vld [vmem:[%s5298 + $0xc1] sm:$0xff]
        %v5462 = vld [vmem:[%s5298 + $0xe1] sm:$0xff]
        %v5463 = vpack.c.bf16 %v5456, %v5455
        %v5464 = vpack.c.bf16 %v5458, %v5457
        %v5465 = vpack.c.bf16 %v5460, %v5459
        %v5466 = vpack.c.bf16 %v5462, %v5461
        %s5467 = scalar_lea.vmem %s8, 240
        %v5468 = vld [vmem:[%s5467] sm:$0xf]
        %v5469 = vld [vmem:[%s5467 + $0x4] sm:$0xf]
        %v5470 = vld [vmem:[%s5467 + $0x8] sm:$0xf]
        %v5471 = vld [vmem:[%s5467 + $0xc] sm:$0xf]
        %v5476 = vunpack.c.l.b16 %v5468
        %v5477 = vunpack.c.l.b16 %v5469
        %v5478 = vunpack.c.l.b16 %v5470
        %v5479 = vunpack.c.l.b16 %v5471
        %v5480 = vpack.c.b16 %v5477, %v5476
        %v5481 = vpack.c.b16 %v5479, %v5478
        %v5485 = vsel %vm2339, %v5463, 0
        %v5488 = vsel %vm2339, %v5464, 0
        %v5491 = vsel %vm2339, %v5465, 0
        %v5494 = vsel %vm2339, %v5466, 0
        %5496 = vmatpush.bf16.msra.mxu0 0
        %5497 = vmatpush.bf16.msra.mxu0 0
        %5498 = vmatpush.bf16.msra.mxu0 0
        %5499 = vmatpush.bf16.msra.mxu0 0
        %5500 = vmatpush.bf16.msra.mxu0 0
        %5501 = vmatpush.bf16.msra.mxu0 0
        %5502 = vmatpush.bf16.msra.mxu0 %v5481
        %5503 = vmatpush.bf16.msra.mxu0 %v5480
        %5504 = vmatmul.bf16.gmra.mxu0 %v5485
        %v5505 = vpop.f32.mrf.mxu0
        %v5506 = vadd.f32 0.0, %v5505
        %v5507 = vpop.f32.mrf.mxu0
        %v5508 = vadd.f32 0.0, %v5507
        %5509 = vmatmul.bf16.gmra.mxu0 %v5488
        %v5510 = vpop.f32.mrf.mxu0
        %v5511 = vadd.f32 0.0, %v5510
        %v5512 = vpop.f32.mrf.mxu0
        %v5513 = vadd.f32 0.0, %v5512
        %5514 = vmatmul.bf16.gmra.mxu0 %v5491
        %v5515 = vpop.f32.mrf.mxu0
        %v5516 = vadd.f32 0.0, %v5515
        %v5517 = vpop.f32.mrf.mxu0
        %v5518 = vadd.f32 0.0, %v5517
        %5519 = vmatmul.bf16.gmra.mxu0 %v5494
        %v5520 = vpop.f32.mrf.mxu0
        %v5521 = vadd.f32 0.0, %v5520
        %v5522 = vpop.f32.mrf.mxu0
        %v5523 = vadd.f32 0.0, %v5522
        %5524 = vdwg.mxu0
        %v5525 = vadd.f32 %v5447, %v5506
        %v5526 = vadd.f32 %v5448, %v5508
        %v5527 = vadd.f32 %v5449, %v5511
        %v5528 = vadd.f32 %v5450, %v5513
        %v5529 = vadd.f32 %v5451, %v5516
        %v5530 = vadd.f32 %v5452, %v5518
        %v5531 = vadd.f32 %v5453, %v5521
        %v5532 = vadd.f32 %v5454, %v5523
        %v5533 = vld [vmem:[%s9] sm:$0x1]
        %v5535 = vperm.slane %v5533, 0
        %v5537 = vadd.f32 %v5525, %v5535
        %v5538 = vadd.f32 %v5526, %v5535
        %v5539 = vadd.f32 %v5527, %v5535
        %v5540 = vadd.f32 %v5528, %v5535
        %v5541 = vadd.f32 %v5529, %v5535
        %v5542 = vadd.f32 %v5530, %v5535
        %v5543 = vadd.f32 %v5531, %v5535
        %v5544 = vadd.f32 %v5532, %v5535
        %vm5545 = vcmp.ge.f32.partialorder %v5537, 0.0
        %vm5546 = vcmp.ge.f32.partialorder %v5538, 0.0
        %vm5547 = vcmp.ge.f32.partialorder %v5539, 0.0
        %vm5548 = vcmp.ge.f32.partialorder %v5540, 0.0
        %vm5549 = vcmp.ge.f32.partialorder %v5541, 0.0
        %vm5550 = vcmp.ge.f32.partialorder %v5542, 0.0
        %vm5551 = vcmp.ge.f32.partialorder %v5543, 0.0
        %vm5552 = vcmp.ge.f32.partialorder %v5544, 0.0
        %v5553 = vmul.f32 %v5537, 0.2
        %v5554 = vmul.f32 %v5538, 0.2
        %v5555 = vmul.f32 %v5539, 0.2
        %v5556 = vmul.f32 %v5540, 0.2
        %v5557 = vmul.f32 %v5541, 0.2
        %v5558 = vmul.f32 %v5542, 0.2
        %v5559 = vmul.f32 %v5543, 0.2
        %v5560 = vmul.f32 %v5544, 0.2
        %v5561 = vsel %vm5545, %v5537, %v5553
        %v5562 = vsel %vm5546, %v5538, %v5554
        %v5563 = vsel %vm5547, %v5539, %v5555
        %v5564 = vsel %vm5548, %v5540, %v5556
        %v5565 = vsel %vm5549, %v5541, %v5557
        %v5566 = vsel %vm5550, %v5542, %v5558
        %v5567 = vsel %vm5551, %v5543, %v5559
        %v5568 = vsel %vm5552, %v5544, %v5560
        %vm5569 = vcmask 523264
        %v5570 = vsel %vm5569, %v5561, 0.0
        %v5571 = vsel %vm5569, %v5562, 0.0
        %v5572 = vadd.f32 %v5570, %v5571
        %v5573 = vsel %vm5569, %v5563, 0.0
        %v5574 = vadd.f32 %v5572, %v5573
        %v5575 = vsel %vm5569, %v5564, 0.0
        %v5576 = vadd.f32 %v5574, %v5575
        %v5577 = vsel %vm5569, %v5565, 0.0
        %v5578 = vadd.f32 %v5576, %v5577
        %v5579 = vsel %vm5569, %v5566, 0.0
        %v5580 = vadd.f32 %v5578, %v5579
        %v5581 = vsel %vm5569, %v5567, 0.0
        %v5582 = vadd.f32 %v5580, %v5581
        %v5583 = vsel %vm5569, %v5568, 0.0
        %v5584 = vadd.f32 %v5582, %v5583
        %v5585 = vrot.slane %v5584, 4
        %v5586 = vadd.f32 %v5584, %v5585
        %v5587 = vrot.slane %v5586, 2
        %v5588 = vadd.f32 %v5586, %v5587
        %v5589 = vrot.slane %v5588, 1
        %v5590 = vadd.f32 %v5588, %v5589
        %v5591 = vrcp.pop 64.0
        %v5592 = vmul.f32 64.0, %v5591
        %v5593 = vsub.f32 1.0, %v5592
        %v5594 = vmul.f32 %v5591, %v5593
        %v5595 = vadd.f32 %v5591, %v5594
        %vm5596 = vweird.f32 %v5591
        %v5597 = vsel %vm5596, %v5591, %v5595
        %v5598 = vmul.f32 %v5590, %v5597
        %v5599 = vsel %vm5569, %v5561, -inf
        %v5600 = vsel %vm5569, %v5562, -inf
        %v5601 = vsel %vm5569, %v5563, -inf
        %v5602 = vsel %vm5569, %v5564, -inf
        %v5603 = vsel %vm5569, %v5565, -inf
        %v5604 = vmax.f32 %v5599, %v5603
        %v5605 = vsel %vm5569, %v5566, -inf
        %v5606 = vmax.f32 %v5600, %v5605
        %v5607 = vsel %vm5569, %v5567, -inf
        %v5608 = vmax.f32 %v5601, %v5607
        %v5609 = vsel %vm5569, %v5568, -inf
        %v5610 = vmax.f32 %v5602, %v5609
        %v5611 = vmax.f32 %v5604, %v5606
        %v5612 = vmax.f32 %v5608, %v5610
        %v5613 = vmax.f32 %v5611, %v5612
        %v5614 = vrot.slane %v5613, 4
        %v5615 = vmax.f32 %v5613, %v5614
        %v5616 = vrot.slane %v5615, 2
        %v5617 = vmax.f32 %v5615, %v5616
        %v5618 = vrot.slane %v5617, 1
        %v5619 = vmax.f32 %v5617, %v5618
        %v5620 = vsel %vm2488, %v5598, %v5619
        %v5621 = vpack.c.bf16 %v5620, %v5620
        %v5622 = vld [vmem:[%s10] sm:$0xf]
        %v5623 = vld [vmem:[%s10 + $0x4] sm:$0xf]
        %v5624 = vld [vmem:[%s10 + $0x8] sm:$0xf]
        %v5625 = vld [vmem:[%s10 + $0xc] sm:$0xf]
        %v5626 = vld [vmem:[%s10 + $0x10] sm:$0xf]
        %v5627 = vld [vmem:[%s10 + $0x14] sm:$0xf]
        %v5628 = vld [vmem:[%s10 + $0x18] sm:$0xf]
        %v5629 = vld [vmem:[%s10 + $0x1c] sm:$0xf]
        %v5630 = vld [vmem:[%s11] sm:$0x1]
        %v5632 = vperm.slane %v5630, 0
        %v5642 = vunpack.c.l.b16 %v5622
        %v5643 = vunpack.c.l.b16 %v5623
        %v5644 = vunpack.c.l.b16 %v5624
        %v5645 = vunpack.c.l.b16 %v5625
        %v5646 = vunpack.c.l.b16 %v5626
        %v5647 = vunpack.c.l.b16 %v5627
        %v5648 = vunpack.c.l.b16 %v5628
        %v5649 = vunpack.c.l.b16 %v5629
        %v5650 = vpack.c.b16 %v5643, %v5642
        %v5651 = vpack.c.b16 %v5645, %v5644
        %v5652 = vpack.c.b16 %v5647, %v5646
        %v5653 = vpack.c.b16 %v5649, %v5648
        %v5659 = vsel %vm5569, %v5621, 0
        %5661 = vmatpush.bf16.msra.mxu0 0
        %5662 = vmatpush.bf16.msra.mxu0 0
        %5663 = vmatpush.bf16.msra.mxu0 0
        %5664 = vmatpush.bf16.msra.mxu0 0
        %5665 = vmatpush.bf16.msra.mxu0 %v5653
        %5666 = vmatpush.bf16.msra.mxu0 %v5652
        %5667 = vmatpush.bf16.msra.mxu0 %v5651
        %5668 = vmatpush.bf16.msra.mxu0 %v5650
        %5669 = vmatmul.bf16.gmra.mxu0 %v5659
        %v5670 = vpop.f32.mrf.mxu0
        %v5671 = vadd.f32 %v5632, %v5670
        %v5672 = vpop.f32.mrf.mxu0
        %5673 = vdwg.mxu0
        %v5674 = vmax.f32 %v5671, 0.0
        %v5675 = vpack.c.bf16 %v5674, %v5674
        %v5676 = vld [vmem:[%s12] sm:$0x3]
        %v5677 = vld [vmem:[%s13] sm:$0x1]
        %v5679 = vperm.slane %v5677, 0
        %vm5681 = vcmask 31744
        %v5683 = vsel %vm5681, %v5675, 0
        %v5686 = vsel %vm891, %v5676, 0
        %5688 = vmatpush.bf16.msra.mxu0 0
        %5689 = vmatpush.bf16.msra.mxu0 0
        %5690 = vmatpush.bf16.msra.mxu0 0
        %5691 = vmatpush.bf16.msra.mxu0 0
        %5692 = vmatpush.bf16.msra.mxu0 0
        %5693 = vmatpush.bf16.msra.mxu0 0
        %5694 = vmatpush.bf16.msra.mxu0 0
        %5695 = vmatpush.bf16.msra.mxu0 %v5686
        %5696 = vmatmul.bf16.gmra.mxu0 %v5683
        %v5697 = vpop.f32.mrf.mxu0
        %v5698 = vadd.f32 %v5679, %v5697
        %v5699 = vpop.f32.mrf.mxu0
        %5700 = vdwg.mxu0
        %v5702 = vrot.slane %v5698, 1
        %v5704 = vadd.f32 %v5698, %v5702
        %v5705 = vsub.f32 0.0, %v5704
        %v5706 = vmul.f32 %v5705, 1.442695
        %v5707 = vpow.pop %v5706
        %v5708 = vadd.f32 %v5707, 1.0
        %v5709 = vrcp.pop %v5708
        %v5710 = vperm.slane %v5709, 0
        %v5711 = vmul.f32 %v5561, %v5710
        %v5712 = vmul.f32 %v5562, %v5710
        %v5713 = vmul.f32 %v5563, %v5710
        %v5714 = vmul.f32 %v5564, %v5710
        %v5715 = vmul.f32 %v5565, %v5710
        %v5716 = vmul.f32 %v5566, %v5710
        %v5717 = vmul.f32 %v5567, %v5710
        %v5718 = vmul.f32 %v5568, %v5710
        %v5719 = vsel %vm5569, %v5711, 0.0
        %5720 = vadd.xlane.f32.xlu0 %v5719
        %v5721 = vpop.xlane.xlu0 %5720
        %v5722 = vsel %vm5569, %v5712, 0.0
        %5723 = vadd.xlane.f32.xlu0 %v5722
        %v5724 = vpop.xlane.xlu0 %5723
        %v5725 = vsel %vm5569, %v5713, 0.0
        %5726 = vadd.xlane.f32.xlu0 %v5725
        %v5727 = vpop.xlane.xlu0 %5726
        %v5728 = vsel %vm5569, %v5714, 0.0
        %5729 = vadd.xlane.f32.xlu0 %v5728
        %v5730 = vpop.xlane.xlu0 %5729
        %v5731 = vsel %vm5569, %v5715, 0.0
        %5732 = vadd.xlane.f32.xlu0 %v5731
        %v5733 = vpop.xlane.xlu0 %5732
        %v5734 = vsel %vm5569, %v5716, 0.0
        %5735 = vadd.xlane.f32.xlu0 %v5734
        %v5736 = vpop.xlane.xlu0 %5735
        %v5737 = vsel %vm5569, %v5717, 0.0
        %5738 = vadd.xlane.f32.xlu0 %v5737
        %v5739 = vpop.xlane.xlu0 %5738
        %v5740 = vsel %vm5569, %v5718, 0.0
        %5741 = vadd.xlane.f32.xlu0 %v5740
        %v5742 = vpop.xlane.xlu0 %5741
        %v5743 = vmul.f32 %v5721, %v5597
        %v5744 = vmul.f32 %v5724, %v5597
        %v5745 = vmul.f32 %v5727, %v5597
        %v5746 = vmul.f32 %v5730, %v5597
        %v5747 = vmul.f32 %v5733, %v5597
        %v5748 = vmul.f32 %v5736, %v5597
        %v5749 = vmul.f32 %v5739, %v5597
        %v5750 = vmul.f32 %v5742, %v5597
        %v5751 = vsel %vm5569, %v5711, -inf
        %5752 = vmax.xlane.f32.xlu0 %v5751
        %v5753 = vpop.xlane.xlu0 %5752
        %v5754 = vsel %vm5569, %v5712, -inf
        %5755 = vmax.xlane.f32.xlu0 %v5754
        %v5756 = vpop.xlane.xlu0 %5755
        %v5757 = vsel %vm5569, %v5713, -inf
        %5758 = vmax.xlane.f32.xlu0 %v5757
        %v5759 = vpop.xlane.xlu0 %5758
        %v5760 = vsel %vm5569, %v5714, -inf
        %5761 = vmax.xlane.f32.xlu0 %v5760
        %v5762 = vpop.xlane.xlu0 %5761
        %v5763 = vsel %vm5569, %v5715, -inf
        %5764 = vmax.xlane.f32.xlu0 %v5763
        %v5765 = vpop.xlane.xlu0 %5764
        %v5766 = vsel %vm5569, %v5716, -inf
        %5767 = vmax.xlane.f32.xlu0 %v5766
        %v5768 = vpop.xlane.xlu0 %5767
        %v5769 = vsel %vm5569, %v5717, -inf
        %5770 = vmax.xlane.f32.xlu0 %v5769
        %v5771 = vpop.xlane.xlu0 %5770
        %v5772 = vsel %vm5569, %v5718, -inf
        %5773 = vmax.xlane.f32.xlu0 %v5772
        %v5774 = vpop.xlane.xlu0 %5773
        %v5775 = vld [vmem:[%s14] sm:$0xf]
        %v5776 = vld [vmem:[%s14 + $0x4] sm:$0xf]
        %v5777 = vld [vmem:[%s14 + $0x8] sm:$0xf]
        %v5778 = vld [vmem:[%s14 + $0xc] sm:$0xf]
        %v5779 = vld [vmem:[%s14 + $0x10] sm:$0xf]
        %v5780 = vld [vmem:[%s14 + $0x14] sm:$0xf]
        %v5781 = vld [vmem:[%s14 + $0x18] sm:$0xf]
        %v5782 = vld [vmem:[%s14 + $0x1c] sm:$0xf]
        %v5783 = vpack.c.bf16 %v5744, %v5743
        %v5784 = vpack.c.bf16 %v5746, %v5745
        %v5785 = vpack.c.bf16 %v5748, %v5747
        %v5786 = vpack.c.bf16 %v5750, %v5749
        %v5787 = vpack.c.bf16 %v5756, %v5753
        %v5788 = vpack.c.bf16 %v5762, %v5759
        %v5789 = vpack.c.bf16 %v5768, %v5765
        %v5790 = vpack.c.bf16 %v5774, %v5771
        %v5791 = vld [vmem:[#allocation4] sm:$0x1]
        %v5793 = vperm.slane %v5791, 0
        %v5803 = vunpack.c.l.b16 %v5775
        %v5804 = vunpack.c.l.b16 %v5776
        %v5805 = vunpack.c.l.b16 %v5777
        %v5806 = vunpack.c.l.b16 %v5778
        %v5807 = vunpack.c.l.b16 %v5779
        %v5808 = vunpack.c.l.b16 %v5780
        %v5809 = vunpack.c.l.b16 %v5781
        %v5810 = vunpack.c.l.b16 %v5782
        %v5811 = vpack.c.b16 %v5804, %v5803
        %v5812 = vpack.c.b16 %v5806, %v5805
        %v5813 = vpack.c.b16 %v5808, %v5807
        %v5814 = vpack.c.b16 %v5810, %v5809
        %5819 = vmatpush.bf16.msra.mxu0 %v5790
        %5820 = vmatpush.bf16.msra.mxu0 %v5789
        %5821 = vmatpush.bf16.msra.mxu0 %v5788
        %5822 = vmatpush.bf16.msra.mxu0 %v5787
        %5823 = vmatpush.bf16.msra.mxu0 %v5786
        %5824 = vmatpush.bf16.msra.mxu0 %v5785
        %5825 = vmatpush.bf16.msra.mxu0 %v5784
        %5826 = vmatpush.bf16.msra.mxu0 %v5783
        %5827 = vmatmul.bf16.gmra.mxu0 %v5811
        %v5828 = vpop.f32.mrf.mxu0
        %v5829 = vadd.f32 %v5793, %v5828
        %v5830 = vpop.f32.mrf.mxu0
        %v5831 = vadd.f32 %v5793, %v5830
        %5832 = vmatmul.bf16.gmra.mxu0 %v5812
        %v5833 = vpop.f32.mrf.mxu0
        %v5834 = vadd.f32 %v5793, %v5833
        %v5835 = vpop.f32.mrf.mxu0
        %v5836 = vadd.f32 %v5793, %v5835
        %5837 = vmatmul.bf16.gmra.mxu0 %v5813
        %v5838 = vpop.f32.mrf.mxu0
        %v5839 = vadd.f32 %v5793, %v5838
        %v5840 = vpop.f32.mrf.mxu0
        %v5841 = vadd.f32 %v5793, %v5840
        %5842 = vmatmul.bf16.gmra.mxu0 %v5814
        %v5843 = vpop.f32.mrf.mxu0
        %v5844 = vadd.f32 %v5793, %v5843
        %v5845 = vpop.f32.mrf.mxu0
        %v5846 = vadd.f32 %v5793, %v5845
        %5847 = vdwg.mxu0
        %v5848 = vsub.f32 0.0, %v5829
        %v5849 = vsub.f32 0.0, %v5831
        %v5850 = vsub.f32 0.0, %v5834
        %v5851 = vsub.f32 0.0, %v5836
        %v5852 = vsub.f32 0.0, %v5839
        %v5853 = vsub.f32 0.0, %v5841
        %v5854 = vsub.f32 0.0, %v5844
        %v5855 = vsub.f32 0.0, %v5846
        %v5856 = vmul.f32 %v5848, 1.442695
        %v5857 = vpow.pop %v5856
        %v5858 = vmul.f32 %v5849, 1.442695
        %v5859 = vpow.pop %v5858
        %v5860 = vmul.f32 %v5850, 1.442695
        %v5861 = vpow.pop %v5860
        %v5862 = vmul.f32 %v5851, 1.442695
        %v5863 = vpow.pop %v5862
        %v5864 = vmul.f32 %v5852, 1.442695
        %v5865 = vpow.pop %v5864
        %v5866 = vmul.f32 %v5853, 1.442695
        %v5867 = vpow.pop %v5866
        %v5868 = vmul.f32 %v5854, 1.442695
        %v5869 = vpow.pop %v5868
        %v5870 = vmul.f32 %v5855, 1.442695
        %v5871 = vpow.pop %v5870
        %v5872 = vadd.f32 %v5857, 1.0
        %v5873 = vadd.f32 %v5859, 1.0
        %v5874 = vadd.f32 %v5861, 1.0
        %v5875 = vadd.f32 %v5863, 1.0
        %v5876 = vadd.f32 %v5865, 1.0
        %v5877 = vadd.f32 %v5867, 1.0
        %v5878 = vadd.f32 %v5869, 1.0
        %v5879 = vadd.f32 %v5871, 1.0
        %v5880 = vrcp.pop %v5872
        %v5881 = vrcp.pop %v5873
        %v5882 = vrcp.pop %v5874
        %v5883 = vrcp.pop %v5875
        %v5884 = vrcp.pop %v5876
        %v5885 = vrcp.pop %v5877
        %v5886 = vrcp.pop %v5878
        %v5887 = vrcp.pop %v5879
        %5889 = vset.pattern.permute.xlu0 0
        %5890 = vperm.xlu0 %5889, %v5880
        %v5891 = vpop.permute.xlu0 %5890
        %5894 = vset.pattern.permute.xlu0 0
        %5895 = vperm.xlu0 %5894, %v5881
        %v5896 = vpop.permute.xlu0 %5895
        %5899 = vset.pattern.permute.xlu0 0
        %5900 = vperm.xlu0 %5899, %v5882
        %v5901 = vpop.permute.xlu0 %5900
        %5904 = vset.pattern.permute.xlu0 0
        %5905 = vperm.xlu0 %5904, %v5883
        %v5906 = vpop.permute.xlu0 %5905
        %5909 = vset.pattern.permute.xlu0 0
        %5910 = vperm.xlu0 %5909, %v5884
        %v5911 = vpop.permute.xlu0 %5910
        %5914 = vset.pattern.permute.xlu0 0
        %5915 = vperm.xlu0 %5914, %v5885
        %v5916 = vpop.permute.xlu0 %5915
        %5919 = vset.pattern.permute.xlu0 0
        %5920 = vperm.xlu0 %5919, %v5886
        %v5921 = vpop.permute.xlu0 %5920
        %5924 = vset.pattern.permute.xlu0 0
        %5925 = vperm.xlu0 %5924, %v5887
        %v5926 = vpop.permute.xlu0 %5925
        %v5928 = vmul.f32 %v5711, %v5891
        %v5929 = vmul.f32 %v5712, %v5896
        %v5930 = vmul.f32 %v5713, %v5901
        %v5931 = vmul.f32 %v5714, %v5906
        %v5932 = vmul.f32 %v5715, %v5911
        %v5933 = vmul.f32 %v5716, %v5916
        %v5934 = vmul.f32 %v5717, %v5921
        %v5935 = vmul.f32 %v5718, %v5926
        %5936 = vst.msk [vmem:[%s573] sm:$0xff] %vm5569, %v5928
        %5937 = vst.msk [vmem:[%s573 + $0x8] sm:$0xff] %vm5569, %v5929
        %5938 = vst.msk [vmem:[%s573 + $0x10] sm:$0xff] %vm5569, %v5930
        %5939 = vst.msk [vmem:[%s573 + $0x18] sm:$0xff] %vm5569, %v5931
        %5940 = vst.msk [vmem:[%s573 + $0x20] sm:$0xff] %vm5569, %v5932
        %5941 = vst.msk [vmem:[%s573 + $0x28] sm:$0xff] %vm5569, %v5933
        %5942 = vst.msk [vmem:[%s573 + $0x30] sm:$0xff] %vm5569, %v5934
        %5943 = vst.msk [vmem:[%s573 + $0x38] sm:$0xff] %vm5569, %v5935
        %v5944 = vld [vmem:[%s16] sm:$0xff]
        %v5945 = vld [vmem:[%s16 + $0x8] sm:$0x1]
        %v5946 = vperm.slane %v5944, 0
        %v5947 = vmul.f32 %v5928, %v5946
        %v5948 = vmul.f32 %v5929, %v5946
        %v5949 = vmul.f32 %v5930, %v5946
        %v5950 = vmul.f32 %v5931, %v5946
        %v5951 = vmul.f32 %v5932, %v5946
        %v5952 = vmul.f32 %v5933, %v5946
        %vm5953 = vcmask 521216
        %v5954 = vsel %vm5953, %v5947, 0.0
        %5955 = vadd.xlane.f32.xlu0 %v5954
        %v5956 = vpop.xlane.xlu0 %5955
        %v5957 = vsel %vm5953, %v5948, 0.0
        %5958 = vadd.xlane.f32.xlu0 %v5957
        %v5959 = vpop.xlane.xlu0 %5958
        %v5960 = vsel %vm5953, %v5949, 0.0
        %5961 = vadd.xlane.f32.xlu0 %v5960
        %v5962 = vpop.xlane.xlu0 %5961
        %v5963 = vsel %vm5953, %v5950, 0.0
        %5964 = vadd.xlane.f32.xlu0 %v5963
        %v5965 = vpop.xlane.xlu0 %5964
        %v5966 = vsel %vm5953, %v5951, 0.0
        %5967 = vadd.xlane.f32.xlu0 %v5966
        %v5968 = vpop.xlane.xlu0 %5967
        %v5969 = vsel %vm5953, %v5952, 0.0
        %5970 = vadd.xlane.f32.xlu0 %v5969
        %v5971 = vpop.xlane.xlu0 %5970
        %v5972 = vadd.f32 %v5956, 0.0
        %v5973 = vadd.f32 %v5959, 0.0
        %v5974 = vadd.f32 %v5962, 0.0
        %v5975 = vadd.f32 %v5965, 0.0
        %v5976 = vadd.f32 %v5968, 0.0
        %v5977 = vadd.f32 %v5971, 0.0
        %v5978 = vperm.slane %v5944, 1
        %v5979 = vmul.f32 %v5928, %v5978
        %v5980 = vmul.f32 %v5929, %v5978
        %v5981 = vmul.f32 %v5930, %v5978
        %v5982 = vmul.f32 %v5931, %v5978
        %v5983 = vmul.f32 %v5932, %v5978
        %v5984 = vmul.f32 %v5933, %v5978
        %vm5985 = vcmask 522241
        %v5986 = vsel %vm5985, %v5979, 0.0
        %5987 = vadd.xlane.f32.xlu0 %v5986
        %v5988 = vpop.xlane.xlu0 %5987
        %v5989 = vsel %vm5985, %v5980, 0.0
        %5990 = vadd.xlane.f32.xlu0 %v5989
        %v5991 = vpop.xlane.xlu0 %5990
        %v5992 = vsel %vm5985, %v5981, 0.0
        %5993 = vadd.xlane.f32.xlu0 %v5992
        %v5994 = vpop.xlane.xlu0 %5993
        %v5995 = vsel %vm5985, %v5982, 0.0
        %5996 = vadd.xlane.f32.xlu0 %v5995
        %v5997 = vpop.xlane.xlu0 %5996
        %v5998 = vsel %vm5985, %v5983, 0.0
        %5999 = vadd.xlane.f32.xlu0 %v5998
        %v6000 = vpop.xlane.xlu0 %5999
        %v6001 = vsel %vm5985, %v5984, 0.0
        %6002 = vadd.xlane.f32.xlu0 %v6001
        %v6003 = vpop.xlane.xlu0 %6002
        %v6010 = vrot.slane %v5988, 1
        %v6011 = vrot.slane %v5991, 1
        %v6012 = vrot.slane %v5994, 1
        %v6013 = vrot.slane %v5997, 1
        %v6014 = vrot.slane %v6000, 1
        %v6015 = vrot.slane %v6003, 1
        %v6022 = vadd.f32 %v5972, %v6010
        %v6023 = vadd.f32 %v5973, %v6011
        %v6024 = vadd.f32 %v5974, %v6012
        %v6025 = vadd.f32 %v5975, %v6013
        %v6026 = vadd.f32 %v5976, %v6014
        %v6027 = vadd.f32 %v5977, %v6015
        %v6028 = vperm.slane %v5944, 2
        %v6029 = vmul.f32 %v5928, %v6028
        %v6030 = vmul.f32 %v5929, %v6028
        %v6031 = vmul.f32 %v5930, %v6028
        %v6032 = vmul.f32 %v5931, %v6028
        %v6033 = vmul.f32 %v5932, %v6028
        %v6034 = vmul.f32 %v5933, %v6028
        %vm6035 = vcmask 523266
        %v6036 = vsel %vm6035, %v6029, 0.0
        %6037 = vadd.xlane.f32.xlu0 %v6036
        %v6038 = vpop.xlane.xlu0 %6037
        %v6039 = vsel %vm6035, %v6030, 0.0
        %6040 = vadd.xlane.f32.xlu0 %v6039
        %v6041 = vpop.xlane.xlu0 %6040
        %v6042 = vsel %vm6035, %v6031, 0.0
        %6043 = vadd.xlane.f32.xlu0 %v6042
        %v6044 = vpop.xlane.xlu0 %6043
        %v6045 = vsel %vm6035, %v6032, 0.0
        %6046 = vadd.xlane.f32.xlu0 %v6045
        %v6047 = vpop.xlane.xlu0 %6046
        %v6048 = vsel %vm6035, %v6033, 0.0
        %6049 = vadd.xlane.f32.xlu0 %v6048
        %v6050 = vpop.xlane.xlu0 %6049
        %v6051 = vsel %vm6035, %v6034, 0.0
        %6052 = vadd.xlane.f32.xlu0 %v6051
        %v6053 = vpop.xlane.xlu0 %6052
        %v6060 = vrot.slane %v6038, 2
        %v6061 = vrot.slane %v6041, 2
        %v6062 = vrot.slane %v6044, 2
        %v6063 = vrot.slane %v6047, 2
        %v6064 = vrot.slane %v6050, 2
        %v6065 = vrot.slane %v6053, 2
        %v6072 = vadd.f32 %v6022, %v6060
        %v6073 = vadd.f32 %v6023, %v6061
        %v6074 = vadd.f32 %v6024, %v6062
        %v6075 = vadd.f32 %v6025, %v6063
        %v6076 = vadd.f32 %v6026, %v6064
        %v6077 = vadd.f32 %v6027, %v6065
        %v6078 = vperm.slane %v5944, 3
        %v6079 = vmul.f32 %v5929, %v6078
        %v6080 = vmul.f32 %v5930, %v6078
        %v6081 = vmul.f32 %v5931, %v6078
        %v6082 = vmul.f32 %v5932, %v6078
        %v6083 = vmul.f32 %v5933, %v6078
        %v6084 = vmul.f32 %v5934, %v6078
        %v6085 = vsel %vm5953, %v6079, 0.0
        %6086 = vadd.xlane.f32.xlu0 %v6085
        %v6087 = vpop.xlane.xlu0 %6086
        %v6088 = vsel %vm5953, %v6080, 0.0
        %6089 = vadd.xlane.f32.xlu0 %v6088
        %v6090 = vpop.xlane.xlu0 %6089
        %v6091 = vsel %vm5953, %v6081, 0.0
        %6092 = vadd.xlane.f32.xlu0 %v6091
        %v6093 = vpop.xlane.xlu0 %6092
        %v6094 = vsel %vm5953, %v6082, 0.0
        %6095 = vadd.xlane.f32.xlu0 %v6094
        %v6096 = vpop.xlane.xlu0 %6095
        %v6097 = vsel %vm5953, %v6083, 0.0
        %6098 = vadd.xlane.f32.xlu0 %v6097
        %v6099 = vpop.xlane.xlu0 %6098
        %v6100 = vsel %vm5953, %v6084, 0.0
        %6101 = vadd.xlane.f32.xlu0 %v6100
        %v6102 = vpop.xlane.xlu0 %6101
        %v6103 = vadd.f32 %v6072, %v6087
        %v6104 = vadd.f32 %v6073, %v6090
        %v6105 = vadd.f32 %v6074, %v6093
        %v6106 = vadd.f32 %v6075, %v6096
        %v6107 = vadd.f32 %v6076, %v6099
        %v6108 = vadd.f32 %v6077, %v6102
        %v6109 = vperm.slane %v5944, 4
        %v6110 = vmul.f32 %v5929, %v6109
        %v6111 = vmul.f32 %v5930, %v6109
        %v6112 = vmul.f32 %v5931, %v6109
        %v6113 = vmul.f32 %v5932, %v6109
        %v6114 = vmul.f32 %v5933, %v6109
        %v6115 = vmul.f32 %v5934, %v6109
        %v6116 = vsel %vm5985, %v6110, 0.0
        %6117 = vadd.xlane.f32.xlu0 %v6116
        %v6118 = vpop.xlane.xlu0 %6117
        %v6119 = vsel %vm5985, %v6111, 0.0
        %6120 = vadd.xlane.f32.xlu0 %v6119
        %v6121 = vpop.xlane.xlu0 %6120
        %v6122 = vsel %vm5985, %v6112, 0.0
        %6123 = vadd.xlane.f32.xlu0 %v6122
        %v6124 = vpop.xlane.xlu0 %6123
        %v6125 = vsel %vm5985, %v6113, 0.0
        %6126 = vadd.xlane.f32.xlu0 %v6125
        %v6127 = vpop.xlane.xlu0 %6126
        %v6128 = vsel %vm5985, %v6114, 0.0
        %6129 = vadd.xlane.f32.xlu0 %v6128
        %v6130 = vpop.xlane.xlu0 %6129
        %v6131 = vsel %vm5985, %v6115, 0.0
        %6132 = vadd.xlane.f32.xlu0 %v6131
        %v6133 = vpop.xlane.xlu0 %6132
        %v6140 = vrot.slane %v6118, 1
        %v6141 = vrot.slane %v6121, 1
        %v6142 = vrot.slane %v6124, 1
        %v6143 = vrot.slane %v6127, 1
        %v6144 = vrot.slane %v6130, 1
        %v6145 = vrot.slane %v6133, 1
        %v6152 = vadd.f32 %v6103, %v6140
        %v6153 = vadd.f32 %v6104, %v6141
        %v6154 = vadd.f32 %v6105, %v6142
        %v6155 = vadd.f32 %v6106, %v6143
        %v6156 = vadd.f32 %v6107, %v6144
        %v6157 = vadd.f32 %v6108, %v6145
        %v6158 = vperm.slane %v5944, 5
        %v6159 = vmul.f32 %v5929, %v6158
        %v6160 = vmul.f32 %v5930, %v6158
        %v6161 = vmul.f32 %v5931, %v6158
        %v6162 = vmul.f32 %v5932, %v6158
        %v6163 = vmul.f32 %v5933, %v6158
        %v6164 = vmul.f32 %v5934, %v6158
        %v6165 = vsel %vm6035, %v6159, 0.0
        %6166 = vadd.xlane.f32.xlu0 %v6165
        %v6167 = vpop.xlane.xlu0 %6166
        %v6168 = vsel %vm6035, %v6160, 0.0
        %6169 = vadd.xlane.f32.xlu0 %v6168
        %v6170 = vpop.xlane.xlu0 %6169
        %v6171 = vsel %vm6035, %v6161, 0.0
        %6172 = vadd.xlane.f32.xlu0 %v6171
        %v6173 = vpop.xlane.xlu0 %6172
        %v6174 = vsel %vm6035, %v6162, 0.0
        %6175 = vadd.xlane.f32.xlu0 %v6174
        %v6176 = vpop.xlane.xlu0 %6175
        %v6177 = vsel %vm6035, %v6163, 0.0
        %6178 = vadd.xlane.f32.xlu0 %v6177
        %v6179 = vpop.xlane.xlu0 %6178
        %v6180 = vsel %vm6035, %v6164, 0.0
        %6181 = vadd.xlane.f32.xlu0 %v6180
        %v6182 = vpop.xlane.xlu0 %6181
        %v6189 = vrot.slane %v6167, 2
        %v6190 = vrot.slane %v6170, 2
        %v6191 = vrot.slane %v6173, 2
        %v6192 = vrot.slane %v6176, 2
        %v6193 = vrot.slane %v6179, 2
        %v6194 = vrot.slane %v6182, 2
        %v6201 = vadd.f32 %v6152, %v6189
        %v6202 = vadd.f32 %v6153, %v6190
        %v6203 = vadd.f32 %v6154, %v6191
        %v6204 = vadd.f32 %v6155, %v6192
        %v6205 = vadd.f32 %v6156, %v6193
        %v6206 = vadd.f32 %v6157, %v6194
        %v6207 = vperm.slane %v5944, 6
        %v6208 = vmul.f32 %v5930, %v6207
        %v6209 = vmul.f32 %v5931, %v6207
        %v6210 = vmul.f32 %v5932, %v6207
        %v6211 = vmul.f32 %v5933, %v6207
        %v6212 = vmul.f32 %v5934, %v6207
        %v6213 = vmul.f32 %v5935, %v6207
        %v6214 = vsel %vm5953, %v6208, 0.0
        %6215 = vadd.xlane.f32.xlu0 %v6214
        %v6216 = vpop.xlane.xlu0 %6215
        %v6217 = vsel %vm5953, %v6209, 0.0
        %6218 = vadd.xlane.f32.xlu0 %v6217
        %v6219 = vpop.xlane.xlu0 %6218
        %v6220 = vsel %vm5953, %v6210, 0.0
        %6221 = vadd.xlane.f32.xlu0 %v6220
        %v6222 = vpop.xlane.xlu0 %6221
        %v6223 = vsel %vm5953, %v6211, 0.0
        %6224 = vadd.xlane.f32.xlu0 %v6223
        %v6225 = vpop.xlane.xlu0 %6224
        %v6226 = vsel %vm5953, %v6212, 0.0
        %6227 = vadd.xlane.f32.xlu0 %v6226
        %v6228 = vpop.xlane.xlu0 %6227
        %v6229 = vsel %vm5953, %v6213, 0.0
        %6230 = vadd.xlane.f32.xlu0 %v6229
        %v6231 = vpop.xlane.xlu0 %6230
        %v6232 = vadd.f32 %v6201, %v6216
        %v6233 = vadd.f32 %v6202, %v6219
        %v6234 = vadd.f32 %v6203, %v6222
        %v6235 = vadd.f32 %v6204, %v6225
        %v6236 = vadd.f32 %v6205, %v6228
        %v6237 = vadd.f32 %v6206, %v6231
        %v6238 = vperm.slane %v5944, 7
        %v6239 = vmul.f32 %v5930, %v6238
        %v6240 = vmul.f32 %v5931, %v6238
        %v6241 = vmul.f32 %v5932, %v6238
        %v6242 = vmul.f32 %v5933, %v6238
        %v6243 = vmul.f32 %v5934, %v6238
        %v6244 = vmul.f32 %v5935, %v6238
        %v6245 = vsel %vm5985, %v6239, 0.0
        %6246 = vadd.xlane.f32.xlu0 %v6245
        %v6247 = vpop.xlane.xlu0 %6246
        %v6248 = vsel %vm5985, %v6240, 0.0
        %6249 = vadd.xlane.f32.xlu0 %v6248
        %v6250 = vpop.xlane.xlu0 %6249
        %v6251 = vsel %vm5985, %v6241, 0.0
        %6252 = vadd.xlane.f32.xlu0 %v6251
        %v6253 = vpop.xlane.xlu0 %6252
        %v6254 = vsel %vm5985, %v6242, 0.0
        %6255 = vadd.xlane.f32.xlu0 %v6254
        %v6256 = vpop.xlane.xlu0 %6255
        %v6257 = vsel %vm5985, %v6243, 0.0
        %6258 = vadd.xlane.f32.xlu0 %v6257
        %v6259 = vpop.xlane.xlu0 %6258
        %v6260 = vsel %vm5985, %v6244, 0.0
        %6261 = vadd.xlane.f32.xlu0 %v6260
        %v6262 = vpop.xlane.xlu0 %6261
        %v6269 = vrot.slane %v6247, 1
        %v6270 = vrot.slane %v6250, 1
        %v6271 = vrot.slane %v6253, 1
        %v6272 = vrot.slane %v6256, 1
        %v6273 = vrot.slane %v6259, 1
        %v6274 = vrot.slane %v6262, 1
        %v6281 = vadd.f32 %v6232, %v6269
        %v6282 = vadd.f32 %v6233, %v6270
        %v6283 = vadd.f32 %v6234, %v6271
        %v6284 = vadd.f32 %v6235, %v6272
        %v6285 = vadd.f32 %v6236, %v6273
        %v6286 = vadd.f32 %v6237, %v6274
        %v6287 = vperm.slane %v5945, 0
        %v6288 = vmul.f32 %v5930, %v6287
        %v6289 = vmul.f32 %v5931, %v6287
        %v6290 = vmul.f32 %v5932, %v6287
        %v6291 = vmul.f32 %v5933, %v6287
        %v6292 = vmul.f32 %v5934, %v6287
        %v6293 = vmul.f32 %v5935, %v6287
        %v6294 = vsel %vm6035, %v6288, 0.0
        %6295 = vadd.xlane.f32.xlu0 %v6294
        %v6296 = vpop.xlane.xlu0 %6295
        %v6297 = vsel %vm6035, %v6289, 0.0
        %6298 = vadd.xlane.f32.xlu0 %v6297
        %v6299 = vpop.xlane.xlu0 %6298
        %v6300 = vsel %vm6035, %v6290, 0.0
        %6301 = vadd.xlane.f32.xlu0 %v6300
        %v6302 = vpop.xlane.xlu0 %6301
        %v6303 = vsel %vm6035, %v6291, 0.0
        %6304 = vadd.xlane.f32.xlu0 %v6303
        %v6305 = vpop.xlane.xlu0 %6304
        %v6306 = vsel %vm6035, %v6292, 0.0
        %6307 = vadd.xlane.f32.xlu0 %v6306
        %v6308 = vpop.xlane.xlu0 %6307
        %v6309 = vsel %vm6035, %v6293, 0.0
        %6310 = vadd.xlane.f32.xlu0 %v6309
        %v6311 = vpop.xlane.xlu0 %6310
        %v6318 = vrot.slane %v6296, 2
        %v6319 = vrot.slane %v6299, 2
        %v6320 = vrot.slane %v6302, 2
        %v6321 = vrot.slane %v6305, 2
        %v6322 = vrot.slane %v6308, 2
        %v6323 = vrot.slane %v6311, 2
        %v6330 = vadd.f32 %v6281, %v6318
        %v6331 = vadd.f32 %v6282, %v6319
        %v6332 = vadd.f32 %v6283, %v6320
        %v6333 = vadd.f32 %v6284, %v6321
        %v6334 = vadd.f32 %v6285, %v6322
        %v6335 = vadd.f32 %v6286, %v6323
        %v6336 = vsub.f32 0.0, %v6330
        %v6337 = vsub.f32 0.0, %v6331
        %v6338 = vsub.f32 0.0, %v6332
        %v6339 = vsub.f32 0.0, %v6333
        %v6340 = vsub.f32 0.0, %v6334
        %v6341 = vsub.f32 0.0, %v6335
        %v6342 = vmul.f32 %v6336, 1.442695
        %v6343 = vpow.pop %v6342
        %v6344 = vmul.f32 %v6337, 1.442695
        %v6345 = vpow.pop %v6344
        %v6346 = vmul.f32 %v6338, 1.442695
        %v6347 = vpow.pop %v6346
        %v6348 = vmul.f32 %v6339, 1.442695
        %v6349 = vpow.pop %v6348
        %v6350 = vmul.f32 %v6340, 1.442695
        %v6351 = vpow.pop %v6350
        %v6352 = vmul.f32 %v6341, 1.442695
        %v6353 = vpow.pop %v6352
        %v6354 = vadd.f32 %v6343, 1.0
        %v6355 = vadd.f32 %v6345, 1.0
        %v6356 = vadd.f32 %v6347, 1.0
        %v6357 = vadd.f32 %v6349, 1.0
        %v6358 = vadd.f32 %v6351, 1.0
        %v6359 = vadd.f32 %v6353, 1.0
        %v6360 = vrcp.pop %v6354
        %v6361 = vrcp.pop %v6355
        %v6362 = vrcp.pop %v6356
        %v6363 = vrcp.pop %v6357
        %v6364 = vrcp.pop %v6358
        %v6365 = vrcp.pop %v6359
        %6372 = vset.pattern.permute.xlu0 0
        %6373 = vperm.xlu0 %6372, %v6360
        %v6374 = vpop.permute.xlu0 %6373
        %6375 = vset.pattern.permute.xlu0 0
        %6376 = vperm.xlu0 %6375, %v6361
        %v6377 = vpop.permute.xlu0 %6376
        %6378 = vset.pattern.permute.xlu0 0
        %6379 = vperm.xlu0 %6378, %v6362
        %v6380 = vpop.permute.xlu0 %6379
        %6381 = vset.pattern.permute.xlu0 0
        %6382 = vperm.xlu0 %6381, %v6363
        %v6383 = vpop.permute.xlu0 %6382
        %6384 = vset.pattern.permute.xlu0 0
        %6385 = vperm.xlu0 %6384, %v6364
        %v6386 = vpop.permute.xlu0 %6385
        %6387 = vset.pattern.permute.xlu0 0
        %6388 = vperm.xlu0 %6387, %v6365
        %v6389 = vpop.permute.xlu0 %6388
        %v6390 = vlaneseq
        %v6391 = vand.u32 %v6390, 127
        %v6392 = vperm.slane %v6374, %v6391
        %v6393 = vperm.slane %v6377, %v6391
        %v6394 = vperm.slane %v6380, %v6391
        %v6395 = vperm.slane %v6383, %v6391
        %v6396 = vperm.slane %v6386, %v6391
        %v6397 = vperm.slane %v6389, %v6391
        %vm6398 = vcmask 1041409
        %v6399 = vsel %vm6398, %v6393, %v6392
        %vm6400 = vcmask 1042434
        %v6401 = vsel %vm6400, %v6394, %v6399
        %vm6402 = vcmask 1043459
        %v6403 = vsel %vm6402, %v6395, %v6401
        %vm6404 = vcmask 1044484
        %v6405 = vsel %vm6404, %v6396, %v6403
        %vm6406 = vcmask 1045509
        %v6407 = vsel %vm6406, %v6397, %v6405
        %vm6409 = vcmask 46080
        %6410 = vst.msk [vmem:[%s589] sm:$0x3f] %vm6409, %v6407
        %s6411 = sand.u32 %s407, 1
        %s6412 = scalar_lea.sflag [#allocation6], %s6411
        %s6413 = sand.u32 %s407, 1
        %s6414 = smul.addr %s6413, 64
        %s6415 = scalar_lea.vmem [#allocation5], %s6414
        %p6416 = scmp.lt.s32.totalorder %s37, 1
        %s6417 = scalar_select %p6416, %s37, 1
        %s6418 = smul.addr %s6417, 8
        %s6419 = scalar_lea.vmem %s18, %s6418
        // Predicated region
        $region89: #{discriminator_forward.1} parent=87 // pred_check
          %p6420 = pneg %p417
        $region90: #{discriminator_forward.1} parent=87 // pred_check_branch
          %6422 = sbr.rel (%p6420) target = $region92
        $region91: #{discriminator_forward.1} parent=87 // pred_region
          %s6423 = smul.u32 8, %s37
          %6425 = vsyncadd %s6412, 0
          %s6426 = smul.addr %s6423, 8
          %s6427 = scalar_lea.hbm %s17, %s6426
          %s6428 = sshll.u32 %s6415, 4
          %s6429 = int_to_ptr.vmem [resolvable:$true] %s6428
          %s6430 = sshll.u32 %s6427, 4
          %s6431 = int_to_ptr.hbm [resolvable:$true] %s6430
          %6436 = dma.vmem_to_hbm [thread:$0]  %s6429, 1024, %s6431, %s6412, 128, 128, 8
        $region92: #{discriminator_forward.1} parent=87 // pred_fallthru
          _
        // Predicated region
        $region93: #{discriminator_forward.1} parent=87 // pred_check
          %p6437 = pneg %p443
        $region94: #{discriminator_forward.1} parent=87 // pred_check_branch
          %6439 = sbr.rel (%p6437) target = $region96
        $region95: #{discriminator_forward.1} parent=87 // pred_region
          _
        $region96: #{discriminator_forward.1} parent=87 // pred_fallthru
          _
      $region88: #{discriminator_forward.1} parent=5 // pred_fallthru
        _
      %p6440 = scmp.le.s32.totalorder 2, %s32
      // Predicated region
      $region97: #{discriminator_forward.1} parent=5 // pred_check
        %p6441 = pneg %p6440
      $region98: #{discriminator_forward.1} parent=5 // pred_check_branch
        %6443 = sbr.rel (%p6441) target = $region100
      $region99: #{discriminator_forward.1} parent=5 // pred_region
        %s6444 = ssub.s32 %s32, 2
        // Predicated region
        $region101: #{discriminator_forward.1} parent=99 // pred_check
          %p6445 = pneg %p423
        $region102: #{discriminator_forward.1} parent=99 // pred_check_branch
          %6447 = sbr.rel (%p6445) target = $region104
        $region103: #{discriminator_forward.1} parent=99 // pred_region
          %s6448 = sand.u32 %s408, 1
          %s6449 = scalar_lea.sflag [#allocation6], %s6448
          %s6450 = sand.u32 %s408, 1
          %s6451 = smul.addr %s6450, 64
          %s6452 = scalar_lea.vmem [#allocation5], %s6451
          %6454 = dma.done %s6449, 1024
        $region104: #{discriminator_forward.1} parent=99 // pred_fallthru
          _
        // Predicated region
        $region105: #{discriminator_forward.1} parent=99 // pred_check
          %p6455 = pneg %p449
        $region106: #{discriminator_forward.1} parent=99 // pred_check_branch
          %6457 = sbr.rel (%p6455) target = $region108
        $region107: #{discriminator_forward.1} parent=99 // pred_region
          %p6458 = scmp.lt.s32.totalorder %s38, 1
          %s6459 = scalar_select %p6458, %s38, 1
          %s6460 = smul.addr %s6459, 8
          %s6461 = scalar_lea.vmem %s18, %s6460
        $region108: #{discriminator_forward.1} parent=99 // pred_fallthru
          _
      $region100: #{discriminator_forward.1} parent=5 // pred_fallthru
        _
    $region6: #{discriminator_forward.1} parent=1 // loop_footer
      %s36 = sadd.s32 1, %s32
    $region7: #{discriminator_forward.1} parent=1 // loop_footer_branch
      %31 = sbr.rel target = $region3
    $region8: #{discriminator_forward.1} parent=1 // loop_exit
      _
    %6462 = vsyncpa [#allocation6], 1
    %s6463 = scalar_lea.sflag [#allocation6], 1
    %6464 = vsyncpa %s6463, 1

</llo_original>
